<compile_context>
chip_gen: v7x
topology: tpu7x:2x2x1
jax: 0.10.0
libtpu: 0.0.40
codegen_flags: <defaults>
</compile_context>

<pallas_src>
import jax
import jax.numpy as jnp
from jax import lax
from jax.experimental import pallas as pl
from jax.experimental.pallas import tpu as pltpu


def _bilstm_crf_kernel(x_ref, mask_ref, tags_ref,
                       wih_ref, whh_ref, b_ref,
                       wlin_ref, blin_ref, trans_ref, transT_ref,
                       loss_ref,
                       gx_s, hs_s, emit_s):
    SB = x_ref.shape[0]                 # S * BT flattened rows (r = t*BT + j)
    BT = loss_ref.shape[0]              # batch tile (multiple of 16)
    S = SB // BT
    H = whh_ref.shape[0]
    T = trans_ref.shape[0]
    H4 = 4 * H
    unroll_lstm = min(S, 8)             # bounded unroll: full unroll blows vregs at large S
    unroll_crf = min(max(S - 1, 1), 8)

    # ---- (1) hoisted input->hidden projection for BOTH directions:
    #      one (S*BT, E) @ (E, 8H) MXU matmul, biases folded in, stored bf16.
    gx_s[...] = (jnp.dot(x_ref[...], wih_ref[...],
                         preferred_element_type=jnp.float32)
                 + b_ref[...]).astype(jnp.bfloat16)

    whh = whh_ref[...]                  # (H, 8H) bf16, hoisted once

    # ---- (2) BiLSTM recurrence: forward dir at time t, backward at S-1-t,
    #      fused 2-direction h @ Whh matmul, jnp.where carry blends
    #      (packed-sequence semantics: padded steps keep the carry).
    def lstm_step(t, carry):
        h, c = carry                                    # h: (2BT,H) bf16, c: (2BT,H) f32
        s = S - 1 - t
        rf = pl.multiple_of(t * BT, BT)
        rb = pl.multiple_of(s * BT, BT)
        gxf = gx_s[pl.ds(rf, BT), :]                    # (BT, 8H) bf16
        gxb = gx_s[pl.ds(rb, BT), :]
        m2 = jnp.concatenate([mask_ref[pl.ds(rf, BT), :],
                              mask_ref[pl.ds(rb, BT), :]], axis=0)   # (2BT, 1) f32
        keep = m2 > 0.5

        gh = jnp.dot(h, whh, preferred_element_type=jnp.float32)     # (2BT, 8H) f32
        gates = jnp.concatenate(
            [gh[:BT, :H4] + gxf[:, :H4].astype(jnp.float32),
             gh[BT:, H4:] + gxb[:, H4:].astype(jnp.float32)], axis=0)  # (2BT, 4H) f32

        # one full-width sigmoid pass; tanh only on g and on c_new (torch gate
        # order i, f, g, o).  Elementwise math stays f32 (v5e-friendly).
        sg = jax.nn.sigmoid(gates)
        i_g = sg[:, 0 * H:1 * H]
        f_g = sg[:, 1 * H:2 * H]
        o_g = sg[:, 3 * H:4 * H]
        g_g = jnp.tanh(gates[:, 2 * H:3 * H])
        c_new = f_g * c + i_g * g_g
        h_new = o_g * jnp.tanh(c_new)

        c = jnp.where(keep, c_new, c)
        h = jnp.where(keep, h_new, h).astype(jnp.bfloat16)
        # Store straight into the single bf16 hidden-state scratch.  Values at
        # padded positions are never consumed downstream (gold path is masked,
        # CRF update is where-gated), so no zeroing select is needed.
        hs_s[pl.ds(rf, BT), 0:H] = h[:BT, :]
        hs_s[pl.ds(rb, BT), H:2 * H] = h[BT:, :]
        return h, c

    h0 = jnp.zeros((2 * BT, H), jnp.bfloat16)
    c0 = jnp.zeros((2 * BT, H), jnp.float32)
    lax.fori_loop(0, S, lstm_step, (h0, c0), unroll=unroll_lstm)

    # ---- (3) hidden2emit_score: one (S*BT, 2H) @ (2H, T) matmul straight off
    #      the bf16 hidden-state scratch.  (Tag dim T left unpadded: tiny T.)
    emit_s[...] = (jnp.dot(hs_s[...], wlin_ref[...],
                           preferred_element_type=jnp.float32) + blin_ref[...])

    # ---- (4)+(5) fused gold-path score and CRF forward algorithm (log Z).
    #      (Reference model has no START/STOP transitions.)
    trans = trans_ref[...]                                        # (T, T) f32
    trans_b = jnp.broadcast_to(transT_ref[...][None, :, :], (BT, T, T))  # hoisted
    iota_t = lax.broadcasted_iota(jnp.int32, (BT, T), 1)

    e0 = emit_s[:BT, :]                                           # (BT, T)
    m0 = mask_ref[:BT, :]                                         # (BT, 1)
    oh0 = (tags_ref[:BT, :] == iota_t).astype(jnp.float32)        # one-hot of tag_0
    score0 = jnp.sum(e0 * oh0, axis=1, keepdims=True) * m0        # (BT, 1)

    def crf_step(t, carry):
        d, acc, oh_prev = carry
        r = pl.multiple_of(t * BT, BT)
        e_t = emit_s[pl.ds(r, BT), :]                             # (BT, T)
        m_t = mask_ref[pl.ds(r, BT), :]                           # (BT, 1)
        oh_t = (tags_ref[pl.ds(r, BT), :] == iota_t).astype(jnp.float32)
        # gold path: emit[b,t,tag_t] + trans[tag_{t-1}, tag_t], masked.
        unary = jnp.sum(e_t * oh_t, axis=1, keepdims=True)
        tr_rows = jnp.dot(oh_prev, trans, preferred_element_type=jnp.float32)
        tr = jnp.sum(tr_rows * oh_t, axis=1, keepdims=True)
        acc = acc + (unary + tr) * m_t
        # partition function: lsum[b,k,j] = d[b,j] + trans[j,k] + emit[b,t,k]
        lsum = d[:, None, :] + trans_b + e_t[:, :, None]
        maxv = jnp.max(lsum, axis=-1, keepdims=True)
        d_new = maxv[:, :, 0] + jnp.log(jnp.sum(jnp.exp(lsum - maxv), axis=-1))
        d = jnp.where(m_t > 0.5, d_new, d)
        return d, acc, oh_t

    d, acc, _ = lax.fori_loop(1, S, crf_step, (e0, score0, oh0),
                              unroll=unroll_crf)
    max_d = jnp.max(d, axis=-1, keepdims=True)                    # (BT, 1)
    log_z = max_d + jnp.log(jnp.sum(jnp.exp(d - max_d), axis=-1, keepdims=True))
    loss_ref[...] = log_z - acc                                   # per-sample NLL


def _round_up(x, m):
    return ((x + m - 1) // m) * m


def _vmem_limit_bytes(S, BT, E, H, T):
    bf, f4 = 2, 4
    sb = S * BT
    scratch = sb * (8 * H * bf + 2 * H * bf + T * f4)
    tiles = 2 * sb * (E * bf + f4 + f4)            # double-buffered x/mask/tags tiles
    weights = ((E + H) * 8 * H * bf + 8 * H * f4
               + 2 * H * T * bf + T * f4 + 2 * T * T * f4)
    need = 2 * (scratch + tiles + weights) + (4 << 20)   # 2x + 4 MiB headroom
    # Cap at 64 MiB (v7x physical VMEM).  v5e/v6e have 128 MiB: budget toward
    # ~100 MiB there if S/BT grow while keeping the full-sequence structure.
    return int(min(64 << 20, max(16 << 20, need)))


def bilstm_crf_loss(sentences, tags, params, pad_idx=0):
    """sentences, tags: (B, S) int32.  Returns per-sample loss (B,) float32."""
    B, S = sentences.shape
    emb = params["embedding"]
    E = emb.shape[1]
    H = params["whh_f"].shape[0]
    T = params["transition"].shape[0]

    # Batch tile: multiple of 16 (bf16 sublane packing); 128 once the batch is
    # large enough to fill the MXU M dimension (2*BT >= 256 on v6e/v7x).
    BT = 128 if B >= 128 else _round_up(B, 16)
    Bp = _round_up(B, BT)
    n_bt = Bp // BT
    pad = Bp - B

    sent_p = jnp.pad(sentences, ((0, pad), (0, 0)), constant_values=pad_idx)
    tags_p = jnp.pad(tags, ((0, pad), (0, 0)))
    mask = (sent_p != pad_idx).astype(jnp.float32)             # (Bp, S)

    x_emb = jnp.take(emb, sent_p, axis=0)                      # (Bp, S, E) glue gather

    def tile_rows(a):
        # (Bp, S, ...) -> rows r = bt*(S*BT) + t*BT + j  (batch tile contiguous)
        a = a.reshape(n_bt, BT, S, *a.shape[2:])
        a = jnp.swapaxes(a, 1, 2)                              # (n_bt, S, BT, ...)
        return a.reshape(n_bt * S * BT, *a.shape[3:])

    x2d = tile_rows(x_emb).astype(jnp.bfloat16)                # (n_bt*S*BT, E)
    mask2d = tile_rows(mask[..., None])                        # (n_bt*S*BT, 1)
    tags2d = tile_rows(tags_p[..., None]).astype(jnp.int32)    # (n_bt*S*BT, 1)

    # bf16 MXU operands (f32 accumulation / f32 elementwise inside the kernel).
    wih = jnp.concatenate([params["wih_f"], params["wih_b"]], axis=1).astype(jnp.bfloat16)
    whh = jnp.concatenate([params["whh_f"], params["whh_b"]], axis=1).astype(jnp.bfloat16)
    bias = jnp.concatenate([params["b_f"], params["b_b"]], axis=1)          # f32 (1, 8H)
    wlin = jnp.concatenate([params["wlin_f"], params["wlin_b"]], axis=0).astype(jnp.bfloat16)
    trans = params["transition"]
    transT = trans.T                                           # precomputed transpose

    SB = S * BT
    grid_spec = pltpu.PrefetchScalarGridSpec(
        num_scalar_prefetch=0,
        grid=(n_bt,),
        in_specs=[
            pl.BlockSpec((SB, E), lambda i: (i, 0)),           # x tile
            pl.BlockSpec((SB, 1), lambda i: (i, 0)),           # mask tile
            pl.BlockSpec((SB, 1), lambda i: (i, 0)),           # tags tile
            pl.BlockSpec((E, 8 * H), lambda i: (0, 0)),        # wih (resident)
            pl.BlockSpec((H, 8 * H), lambda i: (0, 0)),        # whh
            pl.BlockSpec((1, 8 * H), lambda i: (0, 0)),        # lstm bias
            pl.BlockSpec((2 * H, T), lambda i: (0, 0)),        # wlin
            pl.BlockSpec((1, T), lambda i: (0, 0)),            # blin
            pl.BlockSpec((T, T), lambda i: (0, 0)),            # transition
            pl.BlockSpec((T, T), lambda i: (0, 0)),            # transition.T
        ],
        out_specs=pl.BlockSpec((BT, 1), lambda i: (i, 0)),
        scratch_shapes=[
            pltpu.VMEM((SB, 8 * H), jnp.bfloat16),   # hoisted input-gate projections
            pltpu.VMEM((SB, 2 * H), jnp.bfloat16),   # [h_fwd | h_bwd] hidden states
            pltpu.VMEM((SB, T), jnp.float32),        # emit scores
        ],
    )
    kernel = pl.pallas_call(
        _bilstm_crf_kernel,
        out_shape=jax.ShapeDtypeStruct((Bp, 1), jnp.float32),
        grid_spec=grid_spec,
        compiler_params=pltpu.CompilerParams(
            dimension_semantics=("parallel",),       # batch tiles -> both TCs on v7x
            vmem_limit_bytes=_vmem_limit_bytes(S, BT, E, H, T)),
    )
    loss2d = kernel(x2d, mask2d, tags2d, wih, whh, bias, wlin, blin := params["blin"],
                    trans, transT)
    return loss2d[:B, 0]


def init_params(key, vocab_size, num_tags, embed_size, hidden_size):
    E, H, T = embed_size, hidden_size, num_tags
    ks = jax.random.split(key, 12)
    s_lstm = 1.0 / jnp.sqrt(jnp.float32(H))
    s_lin = 1.0 / jnp.sqrt(jnp.float32(2 * H))
    u = lambda k, shape, s: jax.random.uniform(k, shape, jnp.float32, -s, s)
    return {
        "embedding": jax.random.normal(ks[0], (vocab_size, E), jnp.float32),
        # LSTM weights stored transposed relative to torch: (in, 4H), (H, 4H).
        # Bias is b_ih + b_hh combined (mathematically identical).
        "wih_f": u(ks[1], (E, 4 * H), s_lstm),
        "whh_f": u(ks[2], (H, 4 * H), s_lstm),
        "b_f": u(ks[3], (1, 4 * H), s_lstm),
        "wih_b": u(ks[4], (E, 4 * H), s_lstm),
        "whh_b": u(ks[5], (H, 4 * H), s_lstm),
        "b_b": u(ks[6], (1, 4 * H), s_lstm),
        # hidden2emit_score (2H -> T), split into forward/backward halves.
        "wlin_f": u(ks[7], (H, T), s_lin),
        "wlin_b": u(ks[8], (H, T), s_lin),
        "blin": u(ks[9], (1, T), s_lin),
        "transition": jax.random.normal(ks[10], (T, T), jnp.float32),
    }


if __name__ == "__main__":
    B, S = 4, 8                 # batch, padded sequence length
    VOCAB, NUM_TAGS = 16, 8     # sentence vocab size, tag vocab size
    EMBED, HIDDEN = 32, 32
    PAD = 0

    key = jax.random.PRNGKey(0)
    kp, ktok, ktag = jax.random.split(key, 3)
    params = init_params(kp, VOCAB, NUM_TAGS, EMBED, HIDDEN)

    # lengths sorted descending (pack_padded_sequence requirement in torch).
    lengths = jnp.array([8, 6, 5, 3], dtype=jnp.int32)
    tok = jax.random.randint(ktok, (B, S), 1, VOCAB, dtype=jnp.int32)
    pos = jnp.arange(S)[None, :]
    sentences = jnp.where(pos < lengths[:, None], tok, PAD)          # (B, S)
    tags = jax.random.randint(ktag, (B, S), 0, NUM_TAGS, dtype=jnp.int32)

    loss = bilstm_crf_loss(sentences, tags, params, pad_idx=PAD)
    loss = jax.block_until_ready(loss)
    assert loss.shape == (B,)
    assert bool(jnp.all(jnp.isfinite(loss)))
    print("KERNEL_OK")
</pallas_src>

<mosaic_0001>
module attributes {stable_mosaic.version = 11 : i64} {
  func.func @_bilstm_crf_kernel(%arg0: i32, %arg1: memref<128x32xbf16, #tpu.memory_space<vmem>>, %arg2: memref<128x1xf32, #tpu.memory_space<vmem>>, %arg3: memref<128x1xi32, #tpu.memory_space<vmem>>, %arg4: memref<32x256xbf16, #tpu.memory_space<vmem>>, %arg5: memref<32x256xbf16, #tpu.memory_space<vmem>>, %arg6: memref<1x256xf32, #tpu.memory_space<vmem>>, %arg7: memref<64x8xbf16, #tpu.memory_space<vmem>>, %arg8: memref<1x8xf32, #tpu.memory_space<vmem>>, %arg9: memref<8x8xf32, #tpu.memory_space<vmem>>, %arg10: memref<8x8xf32, #tpu.memory_space<vmem>>, %arg11: memref<16x1xf32, #tpu.memory_space<vmem>>, %arg12: memref<128x256xbf16, #tpu.memory_space<vmem>>, %arg13: memref<128x64xbf16, #tpu.memory_space<vmem>>, %arg14: memref<128x8xf32, #tpu.memory_space<vmem>>) attributes {dimension_semantics = [#tpu.dimension_semantics<parallel>], iteration_bounds = array<i64: 1>, scalar_prefetch = 0 : i64, scratch_operands = 3 : i64, tpu.core_type = #tpu.core_type<tc>, window_params = [{transform_indices = @transform_0, window_bounds = array<i64: 128, 32>}, {transform_indices = @transform_1, window_bounds = array<i64: 128, 1>}, {transform_indices = @transform_2, window_bounds = array<i64: 128, 1>}, {pipeline_mode = #tpu.pipeline_mode<synchronous>, transform_indices = @transform_3, window_bounds = array<i64: 32, 256>}, {pipeline_mode = #tpu.pipeline_mode<synchronous>, transform_indices = @transform_4, window_bounds = array<i64: 32, 256>}, {pipeline_mode = #tpu.pipeline_mode<synchronous>, transform_indices = @transform_5, window_bounds = array<i64: 1, 256>}, {pipeline_mode = #tpu.pipeline_mode<synchronous>, transform_indices = @transform_6, window_bounds = array<i64: 64, 8>}, {pipeline_mode = #tpu.pipeline_mode<synchronous>, transform_indices = @transform_7, window_bounds = array<i64: 1, 8>}, {pipeline_mode = #tpu.pipeline_mode<synchronous>, transform_indices = @transform_8, window_bounds = array<i64: 8, 8>}, {pipeline_mode = #tpu.pipeline_mode<synchronous>, transform_indices = @transform_9, window_bounds = array<i64: 8, 8>}, {transform_indices = @transform_10, window_bounds = array<i64: 16, 1>}]} {
    %c0 = arith.constant 0 : index
    %c0_0 = arith.constant 0 : index
    %0 = vector.load %arg1[%c0, %c0_0] : memref<128x32xbf16, #tpu.memory_space<vmem>>, vector<128x32xbf16>
    %c0_1 = arith.constant 0 : index
    %c0_2 = arith.constant 0 : index
    %1 = vector.load %arg4[%c0_1, %c0_2] : memref<32x256xbf16, #tpu.memory_space<vmem>>, vector<32x256xbf16>
    %cst = arith.constant dense<0.000000e+00> : vector<128x256xf32>
    %2 = tpu.matmul %0, %1, %cst {dimension_numbers = #tpu.dot_dimension_numbers<[1], [0], [0], [1], [0, 0, 1, 1], [], []>} : vector<128x32xbf16>, vector<32x256xbf16>, vector<128x256xf32> -> vector<128x256xf32>
    %c0_3 = arith.constant 0 : index
    %c0_4 = arith.constant 0 : index
    %3 = vector.load %arg6[%c0_3, %c0_4] : memref<1x256xf32, #tpu.memory_space<vmem>>, vector<1x256xf32>
    %4 = vector.broadcast %3 : vector<1x256xf32> to vector<128x256xf32>
    %5 = arith.addf %2, %4 : vector<128x256xf32>
    %6 = arith.truncf %5 : vector<128x256xf32> to vector<128x256xbf16>
    %c0_5 = arith.constant 0 : index
    %c0_6 = arith.constant 0 : index
    %7 = vector.load %arg12[%c0_5, %c0_6] : memref<128x256xbf16, #tpu.memory_space<vmem>>, vector<128x256xbf16>
    tpu.vector_store %arg12[%c0_5, %c0_6], %6 {strides = array<i32>} : memref<128x256xbf16, #tpu.memory_space<vmem>>, vector<128x256xbf16>,
    %c0_7 = arith.constant 0 : index
    %c0_8 = arith.constant 0 : index
    %8 = vector.load %arg5[%c0_7, %c0_8] : memref<32x256xbf16, #tpu.memory_space<vmem>>, vector<32x256xbf16>
    %cst_9 = arith.constant 0.000000e+00 : bf16
    %9 = vector.broadcast %cst_9 : bf16 to vector<32x32xbf16>
    %cst_10 = arith.constant 0.000000e+00 : f32
    %10 = vector.broadcast %cst_10 : f32 to vector<32x32xf32>
    %c0_i32 = arith.constant 0 : i32
    %c7_i32 = arith.constant 7 : i32
    %11 = arith.subi %c7_i32, %c0_i32 : i32
    %c16_i32 = arith.constant 16 : i32
    %12 = arith.muli %c0_i32, %c16_i32 : i32
    %13 = tpu.assume_multiple %12, 16 : i32
    %c16_i32_11 = arith.constant 16 : i32
    %14 = arith.muli %11, %c16_i32_11 : i32
    %15 = tpu.assume_multiple %14, 16 : i32
    %16 = arith.index_cast %13 : i32 to index
    %c0_12 = arith.constant 0 : index
    %17 = vector.load %arg12[%16, %c0_12] : memref<128x256xbf16, #tpu.memory_space<vmem>>, vector<16x256xbf16>
    %18 = arith.index_cast %15 : i32 to index
    %c0_13 = arith.constant 0 : index
    %19 = vector.load %arg12[%18, %c0_13] : memref<128x256xbf16, #tpu.memory_space<vmem>>, vector<16x256xbf16>
    %20 = arith.index_cast %13 : i32 to index
    %c0_14 = arith.constant 0 : index
    %21 = vector.load %arg2[%20, %c0_14] : memref<128x1xf32, #tpu.memory_space<vmem>>, vector<16x1xf32>
    %22 = arith.index_cast %15 : i32 to index
    %c0_15 = arith.constant 0 : index
    %23 = vector.load %arg2[%22, %c0_15] : memref<128x1xf32, #tpu.memory_space<vmem>>, vector<16x1xf32>
    %24 = tpu.concatenate %21, %23 in 0 : vector<16x1xf32>, vector<16x1xf32> -> vector<32x1xf32>
    %cst_16 = arith.constant 5.000000e-01 : f32
    %25 = vector.broadcast %cst_16 : f32 to vector<32x1xf32>
    %26 = arith.cmpf ogt, %24, %25 : vector<32x1xf32>
    %cst_17 = arith.constant dense<0.000000e+00> : vector<32x256xf32>
    %27 = tpu.matmul %9, %8, %cst_17 {dimension_numbers = #tpu.dot_dimension_numbers<[1], [0], [0], [1], [0, 0, 1, 1], [], []>} : vector<32x32xbf16>, vector<32x256xbf16>, vector<32x256xf32> -> vector<32x256xf32>
    %28 = vector.extract_strided_slice %27 {offsets = [0, 0], sizes = [16, 128], strides = [1, 1]} : vector<32x256xf32> to vector<16x128xf32>
    %29 = vector.extract_strided_slice %17 {offsets = [0, 0], sizes = [16, 128], strides = [1, 1]} : vector<16x256xbf16> to vector<16x128xbf16>
    %30 = arith.extf %29 : vector<16x128xbf16> to vector<16x128xf32>
    %31 = arith.addf %28, %30 : vector<16x128xf32>
    %32 = vector.extract_strided_slice %27 {offsets = [16, 128], sizes = [16, 128], strides = [1, 1]} : vector<32x256xf32> to vector<16x128xf32>
    %33 = vector.extract_strided_slice %19 {offsets = [0, 128], sizes = [16, 128], strides = [1, 1]} : vector<16x256xbf16> to vector<16x128xbf16>
    %34 = arith.extf %33 : vector<16x128xbf16> to vector<16x128xf32>
    %35 = arith.addf %32, %34 : vector<16x128xf32>
    %36 = tpu.concatenate %31, %35 in 0 : vector<16x128xf32>, vector<16x128xf32> -> vector<32x128xf32>
    %37 = arith.negf %36 : vector<32x128xf32>
    %38 = math.exp %37 : vector<32x128xf32>
    %cst_18 = arith.constant 1.000000e+00 : f32
    %39 = vector.broadcast %cst_18 : f32 to vector<32x128xf32>
    %40 = arith.addf %39, %38 : vector<32x128xf32>
    %41 = arith.divf %39, %40 : vector<32x128xf32>
    %42 = vector.extract_strided_slice %41 {offsets = [0, 0], sizes = [32, 32], strides = [1, 1]} : vector<32x128xf32> to vector<32x32xf32>
    %43 = vector.extract_strided_slice %41 {offsets = [0, 32], sizes = [32, 32], strides = [1, 1]} : vector<32x128xf32> to vector<32x32xf32>
    %44 = vector.extract_strided_slice %41 {offsets = [0, 96], sizes = [32, 32], strides = [1, 1]} : vector<32x128xf32> to vector<32x32xf32>
    %45 = vector.extract_strided_slice %36 {offsets = [0, 64], sizes = [32, 32], strides = [1, 1]} : vector<32x128xf32> to vector<32x32xf32>
    %46 = math.tanh %45 : vector<32x32xf32>
    %47 = arith.mulf %43, %10 : vector<32x32xf32>
    %48 = arith.mulf %42, %46 : vector<32x32xf32>
    %49 = arith.addf %47, %48 : vector<32x32xf32>
    %50 = math.tanh %49 : vector<32x32xf32>
    %51 = arith.mulf %44, %50 : vector<32x32xf32>
    %52 = vector.shape_cast %26 : vector<32x1xi1> to vector<32x1xi1>
    %53 = vector.broadcast %52 : vector<32x1xi1> to vector<32x32xi1>
    %54 = arith.select %53, %49, %10 : vector<32x32xi1>, vector<32x32xf32>
    %55 = arith.extf %9 : vector<32x32xbf16> to vector<32x32xf32>
    %56 = vector.shape_cast %26 : vector<32x1xi1> to vector<32x1xi1>
    %57 = vector.broadcast %56 : vector<32x1xi1> to vector<32x32xi1>
    %58 = arith.select %57, %51, %55 : vector<32x32xi1>, vector<32x32xf32>
    %59 = arith.truncf %58 : vector<32x32xf32> to vector<32x32xbf16>
    %60 = vector.extract_strided_slice %59 {offsets = [0, 0], sizes = [16, 32], strides = [1, 1]} : vector<32x32xbf16> to vector<16x32xbf16>
    %61 = arith.index_cast %13 : i32 to index
    %c0_19 = arith.constant 0 : index
    %62 = vector.load %arg13[%61, %c0_19] : memref<128x64xbf16, #tpu.memory_space<vmem>>, vector<16x32xbf16>
    tpu.vector_store %arg13[%61, %c0_19], %60 {strides = array<i32>} : memref<128x64xbf16, #tpu.memory_space<vmem>>, vector<16x32xbf16>,
    %63 = vector.extract_strided_slice %59 {offsets = [16, 0], sizes = [16, 32], strides = [1, 1]} : vector<32x32xbf16> to vector<16x32xbf16>
    %64 = arith.index_cast %15 : i32 to index
    %c32 = arith.constant 32 : index
    %65 = vector.load %arg13[%64, %c32] : memref<128x64xbf16, #tpu.memory_space<vmem>>, vector<16x32xbf16>
    tpu.vector_store %arg13[%64, %c32], %63 {strides = array<i32>} : memref<128x64xbf16, #tpu.memory_space<vmem>>, vector<16x32xbf16>,
    %c1_i32 = arith.constant 1 : i32
    %c7_i32_20 = arith.constant 7 : i32
    %66 = arith.subi %c7_i32_20, %c1_i32 : i32
    %c16_i32_21 = arith.constant 16 : i32
    %67 = arith.muli %c1_i32, %c16_i32_21 : i32
    %68 = tpu.assume_multiple %67, 16 : i32
    %c16_i32_22 = arith.constant 16 : i32
    %69 = arith.muli %66, %c16_i32_22 : i32
    %70 = tpu.assume_multiple %69, 16 : i32
    %71 = arith.index_cast %68 : i32 to index
    %c0_23 = arith.constant 0 : index
    %72 = vector.load %arg12[%71, %c0_23] : memref<128x256xbf16, #tpu.memory_space<vmem>>, vector<16x256xbf16>
    %73 = arith.index_cast %70 : i32 to index
    %c0_24 = arith.constant 0 : index
    %74 = vector.load %arg12[%73, %c0_24] : memref<128x256xbf16, #tpu.memory_space<vmem>>, vector<16x256xbf16>
    %75 = arith.index_cast %68 : i32 to index
    %c0_25 = arith.constant 0 : index
    %76 = vector.load %arg2[%75, %c0_25] : memref<128x1xf32, #tpu.memory_space<vmem>>, vector<16x1xf32>
    %77 = arith.index_cast %70 : i32 to index
    %c0_26 = arith.constant 0 : index
    %78 = vector.load %arg2[%77, %c0_26] : memref<128x1xf32, #tpu.memory_space<vmem>>, vector<16x1xf32>
    %79 = tpu.concatenate %76, %78 in 0 : vector<16x1xf32>, vector<16x1xf32> -> vector<32x1xf32>
    %cst_27 = arith.constant 5.000000e-01 : f32
    %80 = vector.broadcast %cst_27 : f32 to vector<32x1xf32>
    %81 = arith.cmpf ogt, %79, %80 : vector<32x1xf32>
    %cst_28 = arith.constant dense<0.000000e+00> : vector<32x256xf32>
    %82 = tpu.matmul %59, %8, %cst_28 {dimension_numbers = #tpu.dot_dimension_numbers<[1], [0], [0], [1], [0, 0, 1, 1], [], []>} : vector<32x32xbf16>, vector<32x256xbf16>, vector<32x256xf32> -> vector<32x256xf32>
    %83 = vector.extract_strided_slice %82 {offsets = [0, 0], sizes = [16, 128], strides = [1, 1]} : vector<32x256xf32> to vector<16x128xf32>
    %84 = vector.extract_strided_slice %72 {offsets = [0, 0], sizes = [16, 128], strides = [1, 1]} : vector<16x256xbf16> to vector<16x128xbf16>
    %85 = arith.extf %84 : vector<16x128xbf16> to vector<16x128xf32>
    %86 = arith.addf %83, %85 : vector<16x128xf32>
    %87 = vector.extract_strided_slice %82 {offsets = [16, 128], sizes = [16, 128], strides = [1, 1]} : vector<32x256xf32> to vector<16x128xf32>
    %88 = vector.extract_strided_slice %74 {offsets = [0, 128], sizes = [16, 128], strides = [1, 1]} : vector<16x256xbf16> to vector<16x128xbf16>
    %89 = arith.extf %88 : vector<16x128xbf16> to vector<16x128xf32>
    %90 = arith.addf %87, %89 : vector<16x128xf32>
    %91 = tpu.concatenate %86, %90 in 0 : vector<16x128xf32>, vector<16x128xf32> -> vector<32x128xf32>
    %92 = arith.negf %91 : vector<32x128xf32>
    %93 = math.exp %92 : vector<32x128xf32>
    %cst_29 = arith.constant 1.000000e+00 : f32
    %94 = vector.broadcast %cst_29 : f32 to vector<32x128xf32>
    %95 = arith.addf %94, %93 : vector<32x128xf32>
    %96 = arith.divf %94, %95 : vector<32x128xf32>
    %97 = vector.extract_strided_slice %96 {offsets = [0, 0], sizes = [32, 32], strides = [1, 1]} : vector<32x128xf32> to vector<32x32xf32>
    %98 = vector.extract_strided_slice %96 {offsets = [0, 32], sizes = [32, 32], strides = [1, 1]} : vector<32x128xf32> to vector<32x32xf32>
    %99 = vector.extract_strided_slice %96 {offsets = [0, 96], sizes = [32, 32], strides = [1, 1]} : vector<32x128xf32> to vector<32x32xf32>
    %100 = vector.extract_strided_slice %91 {offsets = [0, 64], sizes = [32, 32], strides = [1, 1]} : vector<32x128xf32> to vector<32x32xf32>
    %101 = math.tanh %100 : vector<32x32xf32>
    %102 = arith.mulf %98, %54 : vector<32x32xf32>
    %103 = arith.mulf %97, %101 : vector<32x32xf32>
    %104 = arith.addf %102, %103 : vector<32x32xf32>
    %105 = math.tanh %104 : vector<32x32xf32>
    %106 = arith.mulf %99, %105 : vector<32x32xf32>
    %107 = vector.shape_cast %81 : vector<32x1xi1> to vector<32x1xi1>
    %108 = vector.broadcast %107 : vector<32x1xi1> to vector<32x32xi1>
    %109 = arith.select %108, %104, %54 : vector<32x32xi1>, vector<32x32xf32>
    %110 = arith.extf %59 : vector<32x32xbf16> to vector<32x32xf32>
    %111 = vector.shape_cast %81 : vector<32x1xi1> to vector<32x1xi1>
    %112 = vector.broadcast %111 : vector<32x1xi1> to vector<32x32xi1>
    %113 = arith.select %112, %106, %110 : vector<32x32xi1>, vector<32x32xf32>
    %114 = arith.truncf %113 : vector<32x32xf32> to vector<32x32xbf16>
    %115 = vector.extract_strided_slice %114 {offsets = [0, 0], sizes = [16, 32], strides = [1, 1]} : vector<32x32xbf16> to vector<16x32xbf16>
    %116 = arith.index_cast %68 : i32 to index
    %c0_30 = arith.constant 0 : index
    %117 = vector.load %arg13[%116, %c0_30] : memref<128x64xbf16, #tpu.memory_space<vmem>>, vector<16x32xbf16>
    tpu.vector_store %arg13[%116, %c0_30], %115 {strides = array<i32>} : memref<128x64xbf16, #tpu.memory_space<vmem>>, vector<16x32xbf16>,
    %118 = vector.extract_strided_slice %114 {offsets = [16, 0], sizes = [16, 32], strides = [1, 1]} : vector<32x32xbf16> to vector<16x32xbf16>
    %119 = arith.index_cast %70 : i32 to index
    %c32_31 = arith.constant 32 : index
    %120 = vector.load %arg13[%119, %c32_31] : memref<128x64xbf16, #tpu.memory_space<vmem>>, vector<16x32xbf16>
    tpu.vector_store %arg13[%119, %c32_31], %118 {strides = array<i32>} : memref<128x64xbf16, #tpu.memory_space<vmem>>, vector<16x32xbf16>,
    %c2_i32 = arith.constant 2 : i32
    %c7_i32_32 = arith.constant 7 : i32
    %121 = arith.subi %c7_i32_32, %c2_i32 : i32
    %c16_i32_33 = arith.constant 16 : i32
    %122 = arith.muli %c2_i32, %c16_i32_33 : i32
    %123 = tpu.assume_multiple %122, 16 : i32
    %c16_i32_34 = arith.constant 16 : i32
    %124 = arith.muli %121, %c16_i32_34 : i32
    %125 = tpu.assume_multiple %124, 16 : i32
    %126 = arith.index_cast %123 : i32 to index
    %c0_35 = arith.constant 0 : index
    %127 = vector.load %arg12[%126, %c0_35] : memref<128x256xbf16, #tpu.memory_space<vmem>>, vector<16x256xbf16>
    %128 = arith.index_cast %125 : i32 to index
    %c0_36 = arith.constant 0 : index
    %129 = vector.load %arg12[%128, %c0_36] : memref<128x256xbf16, #tpu.memory_space<vmem>>, vector<16x256xbf16>
    %130 = arith.index_cast %123 : i32 to index
    %c0_37 = arith.constant 0 : index
    %131 = vector.load %arg2[%130, %c0_37] : memref<128x1xf32, #tpu.memory_space<vmem>>, vector<16x1xf32>
    %132 = arith.index_cast %125 : i32 to index
    %c0_38 = arith.constant 0 : index
    %133 = vector.load %arg2[%132, %c0_38] : memref<128x1xf32, #tpu.memory_space<vmem>>, vector<16x1xf32>
    %134 = tpu.concatenate %131, %133 in 0 : vector<16x1xf32>, vector<16x1xf32> -> vector<32x1xf32>
    %cst_39 = arith.constant 5.000000e-01 : f32
    %135 = vector.broadcast %cst_39 : f32 to vector<32x1xf32>
    %136 = arith.cmpf ogt, %134, %135 : vector<32x1xf32>
    %cst_40 = arith.constant dense<0.000000e+00> : vector<32x256xf32>
    %137 = tpu.matmul %114, %8, %cst_40 {dimension_numbers = #tpu.dot_dimension_numbers<[1], [0], [0], [1], [0, 0, 1, 1], [], []>} : vector<32x32xbf16>, vector<32x256xbf16>, vector<32x256xf32> -> vector<32x256xf32>
    %138 = vector.extract_strided_slice %137 {offsets = [0, 0], sizes = [16, 128], strides = [1, 1]} : vector<32x256xf32> to vector<16x128xf32>
    %139 = vector.extract_strided_slice %127 {offsets = [0, 0], sizes = [16, 128], strides = [1, 1]} : vector<16x256xbf16> to vector<16x128xbf16>
    %140 = arith.extf %139 : vector<16x128xbf16> to vector<16x128xf32>
    %141 = arith.addf %138, %140 : vector<16x128xf32>
    %142 = vector.extract_strided_slice %137 {offsets = [16, 128], sizes = [16, 128], strides = [1, 1]} : vector<32x256xf32> to vector<16x128xf32>
    %143 = vector.extract_strided_slice %129 {offsets = [0, 128], sizes = [16, 128], strides = [1, 1]} : vector<16x256xbf16> to vector<16x128xbf16>
    %144 = arith.extf %143 : vector<16x128xbf16> to vector<16x128xf32>
    %145 = arith.addf %142, %144 : vector<16x128xf32>
    %146 = tpu.concatenate %141, %145 in 0 : vector<16x128xf32>, vector<16x128xf32> -> vector<32x128xf32>
    %147 = arith.negf %146 : vector<32x128xf32>
    %148 = math.exp %147 : vector<32x128xf32>
    %cst_41 = arith.constant 1.000000e+00 : f32
    %149 = vector.broadcast %cst_41 : f32 to vector<32x128xf32>
    %150 = arith.addf %149, %148 : vector<32x128xf32>
    %151 = arith.divf %149, %150 : vector<32x128xf32>
    %152 = vector.extract_strided_slice %151 {offsets = [0, 0], sizes = [32, 32], strides = [1, 1]} : vector<32x128xf32> to vector<32x32xf32>
    %153 = vector.extract_strided_slice %151 {offsets = [0, 32], sizes = [32, 32], strides = [1, 1]} : vector<32x128xf32> to vector<32x32xf32>
    %154 = vector.extract_strided_slice %151 {offsets = [0, 96], sizes = [32, 32], strides = [1, 1]} : vector<32x128xf32> to vector<32x32xf32>
    %155 = vector.extract_strided_slice %146 {offsets = [0, 64], sizes = [32, 32], strides = [1, 1]} : vector<32x128xf32> to vector<32x32xf32>
    %156 = math.tanh %155 : vector<32x32xf32>
    %157 = arith.mulf %153, %109 : vector<32x32xf32>
    %158 = arith.mulf %152, %156 : vector<32x32xf32>
    %159 = arith.addf %157, %158 : vector<32x32xf32>
    %160 = math.tanh %159 : vector<32x32xf32>
    %161 = arith.mulf %154, %160 : vector<32x32xf32>
    %162 = vector.shape_cast %136 : vector<32x1xi1> to vector<32x1xi1>
    %163 = vector.broadcast %162 : vector<32x1xi1> to vector<32x32xi1>
    %164 = arith.select %163, %159, %109 : vector<32x32xi1>, vector<32x32xf32>
    %165 = arith.extf %114 : vector<32x32xbf16> to vector<32x32xf32>
    %166 = vector.shape_cast %136 : vector<32x1xi1> to vector<32x1xi1>
    %167 = vector.broadcast %166 : vector<32x1xi1> to vector<32x32xi1>
    %168 = arith.select %167, %161, %165 : vector<32x32xi1>, vector<32x32xf32>
    %169 = arith.truncf %168 : vector<32x32xf32> to vector<32x32xbf16>
    %170 = vector.extract_strided_slice %169 {offsets = [0, 0], sizes = [16, 32], strides = [1, 1]} : vector<32x32xbf16> to vector<16x32xbf16>
    %171 = arith.index_cast %123 : i32 to index
    %c0_42 = arith.constant 0 : index
    %172 = vector.load %arg13[%171, %c0_42] : memref<128x64xbf16, #tpu.memory_space<vmem>>, vector<16x32xbf16>
    tpu.vector_store %arg13[%171, %c0_42], %170 {strides = array<i32>} : memref<128x64xbf16, #tpu.memory_space<vmem>>, vector<16x32xbf16>,
    %173 = vector.extract_strided_slice %169 {offsets = [16, 0], sizes = [16, 32], strides = [1, 1]} : vector<32x32xbf16> to vector<16x32xbf16>
    %174 = arith.index_cast %125 : i32 to index
    %c32_43 = arith.constant 32 : index
    %175 = vector.load %arg13[%174, %c32_43] : memref<128x64xbf16, #tpu.memory_space<vmem>>, vector<16x32xbf16>
    tpu.vector_store %arg13[%174, %c32_43], %173 {strides = array<i32>} : memref<128x64xbf16, #tpu.memory_space<vmem>>, vector<16x32xbf16>,
    %c3_i32 = arith.constant 3 : i32
    %c7_i32_44 = arith.constant 7 : i32
    %176 = arith.subi %c7_i32_44, %c3_i32 : i32
    %c16_i32_45 = arith.constant 16 : i32
    %177 = arith.muli %c3_i32, %c16_i32_45 : i32
    %178 = tpu.assume_multiple %177, 16 : i32
    %c16_i32_46 = arith.constant 16 : i32
    %179 = arith.muli %176, %c16_i32_46 : i32
    %180 = tpu.assume_multiple %179, 16 : i32
    %181 = arith.index_cast %178 : i32 to index
    %c0_47 = arith.constant 0 : index
    %182 = vector.load %arg12[%181, %c0_47] : memref<128x256xbf16, #tpu.memory_space<vmem>>, vector<16x256xbf16>
    %183 = arith.index_cast %180 : i32 to index
    %c0_48 = arith.constant 0 : index
    %184 = vector.load %arg12[%183, %c0_48] : memref<128x256xbf16, #tpu.memory_space<vmem>>, vector<16x256xbf16>
    %185 = arith.index_cast %178 : i32 to index
    %c0_49 = arith.constant 0 : index
    %186 = vector.load %arg2[%185, %c0_49] : memref<128x1xf32, #tpu.memory_space<vmem>>, vector<16x1xf32>
    %187 = arith.index_cast %180 : i32 to index
    %c0_50 = arith.constant 0 : index
    %188 = vector.load %arg2[%187, %c0_50] : memref<128x1xf32, #tpu.memory_space<vmem>>, vector<16x1xf32>
    %189 = tpu.concatenate %186, %188 in 0 : vector<16x1xf32>, vector<16x1xf32> -> vector<32x1xf32>
    %cst_51 = arith.constant 5.000000e-01 : f32
    %190 = vector.broadcast %cst_51 : f32 to vector<32x1xf32>
    %191 = arith.cmpf ogt, %189, %190 : vector<32x1xf32>
    %cst_52 = arith.constant dense<0.000000e+00> : vector<32x256xf32>
    %192 = tpu.matmul %169, %8, %cst_52 {dimension_numbers = #tpu.dot_dimension_numbers<[1], [0], [0], [1], [0, 0, 1, 1], [], []>} : vector<32x32xbf16>, vector<32x256xbf16>, vector<32x256xf32> -> vector<32x256xf32>
    %193 = vector.extract_strided_slice %192 {offsets = [0, 0], sizes = [16, 128], strides = [1, 1]} : vector<32x256xf32> to vector<16x128xf32>
    %194 = vector.extract_strided_slice %182 {offsets = [0, 0], sizes = [16, 128], strides = [1, 1]} : vector<16x256xbf16> to vector<16x128xbf16>
    %195 = arith.extf %194 : vector<16x128xbf16> to vector<16x128xf32>
    %196 = arith.addf %193, %195 : vector<16x128xf32>
    %197 = vector.extract_strided_slice %192 {offsets = [16, 128], sizes = [16, 128], strides = [1, 1]} : vector<32x256xf32> to vector<16x128xf32>
    %198 = vector.extract_strided_slice %184 {offsets = [0, 128], sizes = [16, 128], strides = [1, 1]} : vector<16x256xbf16> to vector<16x128xbf16>
    %199 = arith.extf %198 : vector<16x128xbf16> to vector<16x128xf32>
    %200 = arith.addf %197, %199 : vector<16x128xf32>
    %201 = tpu.concatenate %196, %200 in 0 : vector<16x128xf32>, vector<16x128xf32> -> vector<32x128xf32>
    %202 = arith.negf %201 : vector<32x128xf32>
    %203 = math.exp %202 : vector<32x128xf32>
    %cst_53 = arith.constant 1.000000e+00 : f32
    %204 = vector.broadcast %cst_53 : f32 to vector<32x128xf32>
    %205 = arith.addf %204, %203 : vector<32x128xf32>
    %206 = arith.divf %204, %205 : vector<32x128xf32>
    %207 = vector.extract_strided_slice %206 {offsets = [0, 0], sizes = [32, 32], strides = [1, 1]} : vector<32x128xf32> to vector<32x32xf32>
    %208 = vector.extract_strided_slice %206 {offsets = [0, 32], sizes = [32, 32], strides = [1, 1]} : vector<32x128xf32> to vector<32x32xf32>
    %209 = vector.extract_strided_slice %206 {offsets = [0, 96], sizes = [32, 32], strides = [1, 1]} : vector<32x128xf32> to vector<32x32xf32>
    %210 = vector.extract_strided_slice %201 {offsets = [0, 64], sizes = [32, 32], strides = [1, 1]} : vector<32x128xf32> to vector<32x32xf32>
    %211 = math.tanh %210 : vector<32x32xf32>
    %212 = arith.mulf %208, %164 : vector<32x32xf32>
    %213 = arith.mulf %207, %211 : vector<32x32xf32>
    %214 = arith.addf %212, %213 : vector<32x32xf32>
    %215 = math.tanh %214 : vector<32x32xf32>
    %216 = arith.mulf %209, %215 : vector<32x32xf32>
    %217 = vector.shape_cast %191 : vector<32x1xi1> to vector<32x1xi1>
    %218 = vector.broadcast %217 : vector<32x1xi1> to vector<32x32xi1>
    %219 = arith.select %218, %214, %164 : vector<32x32xi1>, vector<32x32xf32>
    %220 = arith.extf %169 : vector<32x32xbf16> to vector<32x32xf32>
    %221 = vector.shape_cast %191 : vector<32x1xi1> to vector<32x1xi1>
    %222 = vector.broadcast %221 : vector<32x1xi1> to vector<32x32xi1>
    %223 = arith.select %222, %216, %220 : vector<32x32xi1>, vector<32x32xf32>
    %224 = arith.truncf %223 : vector<32x32xf32> to vector<32x32xbf16>
    %225 = vector.extract_strided_slice %224 {offsets = [0, 0], sizes = [16, 32], strides = [1, 1]} : vector<32x32xbf16> to vector<16x32xbf16>
    %226 = arith.index_cast %178 : i32 to index
    %c0_54 = arith.constant 0 : index
    %227 = vector.load %arg13[%226, %c0_54] : memref<128x64xbf16, #tpu.memory_space<vmem>>, vector<16x32xbf16>
    tpu.vector_store %arg13[%226, %c0_54], %225 {strides = array<i32>} : memref<128x64xbf16, #tpu.memory_space<vmem>>, vector<16x32xbf16>,
    %228 = vector.extract_strided_slice %224 {offsets = [16, 0], sizes = [16, 32], strides = [1, 1]} : vector<32x32xbf16> to vector<16x32xbf16>
    %229 = arith.index_cast %180 : i32 to index
    %c32_55 = arith.constant 32 : index
    %230 = vector.load %arg13[%229, %c32_55] : memref<128x64xbf16, #tpu.memory_space<vmem>>, vector<16x32xbf16>
    tpu.vector_store %arg13[%229, %c32_55], %228 {strides = array<i32>} : memref<128x64xbf16, #tpu.memory_space<vmem>>, vector<16x32xbf16>,
    %c4_i32 = arith.constant 4 : i32
    %c7_i32_56 = arith.constant 7 : i32
    %231 = arith.subi %c7_i32_56, %c4_i32 : i32
    %c16_i32_57 = arith.constant 16 : i32
    %232 = arith.muli %c4_i32, %c16_i32_57 : i32
    %233 = tpu.assume_multiple %232, 16 : i32
    %c16_i32_58 = arith.constant 16 : i32
    %234 = arith.muli %231, %c16_i32_58 : i32
    %235 = tpu.assume_multiple %234, 16 : i32
    %236 = arith.index_cast %233 : i32 to index
    %c0_59 = arith.constant 0 : index
    %237 = vector.load %arg12[%236, %c0_59] : memref<128x256xbf16, #tpu.memory_space<vmem>>, vector<16x256xbf16>
    %238 = arith.index_cast %235 : i32 to index
    %c0_60 = arith.constant 0 : index
    %239 = vector.load %arg12[%238, %c0_60] : memref<128x256xbf16, #tpu.memory_space<vmem>>, vector<16x256xbf16>
    %240 = arith.index_cast %233 : i32 to index
    %c0_61 = arith.constant 0 : index
    %241 = vector.load %arg2[%240, %c0_61] : memref<128x1xf32, #tpu.memory_space<vmem>>, vector<16x1xf32>
    %242 = arith.index_cast %235 : i32 to index
    %c0_62 = arith.constant 0 : index
    %243 = vector.load %arg2[%242, %c0_62] : memref<128x1xf32, #tpu.memory_space<vmem>>, vector<16x1xf32>
    %244 = tpu.concatenate %241, %243 in 0 : vector<16x1xf32>, vector<16x1xf32> -> vector<32x1xf32>
    %cst_63 = arith.constant 5.000000e-01 : f32
    %245 = vector.broadcast %cst_63 : f32 to vector<32x1xf32>
    %246 = arith.cmpf ogt, %244, %245 : vector<32x1xf32>
    %cst_64 = arith.constant dense<0.000000e+00> : vector<32x256xf32>
    %247 = tpu.matmul %224, %8, %cst_64 {dimension_numbers = #tpu.dot_dimension_numbers<[1], [0], [0], [1], [0, 0, 1, 1], [], []>} : vector<32x32xbf16>, vector<32x256xbf16>, vector<32x256xf32> -> vector<32x256xf32>
    %248 = vector.extract_strided_slice %247 {offsets = [0, 0], sizes = [16, 128], strides = [1, 1]} : vector<32x256xf32> to vector<16x128xf32>
    %249 = vector.extract_strided_slice %237 {offsets = [0, 0], sizes = [16, 128], strides = [1, 1]} : vector<16x256xbf16> to vector<16x128xbf16>
    %250 = arith.extf %249 : vector<16x128xbf16> to vector<16x128xf32>
    %251 = arith.addf %248, %250 : vector<16x128xf32>
    %252 = vector.extract_strided_slice %247 {offsets = [16, 128], sizes = [16, 128], strides = [1, 1]} : vector<32x256xf32> to vector<16x128xf32>
    %253 = vector.extract_strided_slice %239 {offsets = [0, 128], sizes = [16, 128], strides = [1, 1]} : vector<16x256xbf16> to vector<16x128xbf16>
    %254 = arith.extf %253 : vector<16x128xbf16> to vector<16x128xf32>
    %255 = arith.addf %252, %254 : vector<16x128xf32>
    %256 = tpu.concatenate %251, %255 in 0 : vector<16x128xf32>, vector<16x128xf32> -> vector<32x128xf32>
    %257 = arith.negf %256 : vector<32x128xf32>
    %258 = math.exp %257 : vector<32x128xf32>
    %cst_65 = arith.constant 1.000000e+00 : f32
    %259 = vector.broadcast %cst_65 : f32 to vector<32x128xf32>
    %260 = arith.addf %259, %258 : vector<32x128xf32>
    %261 = arith.divf %259, %260 : vector<32x128xf32>
    %262 = vector.extract_strided_slice %261 {offsets = [0, 0], sizes = [32, 32], strides = [1, 1]} : vector<32x128xf32> to vector<32x32xf32>
    %263 = vector.extract_strided_slice %261 {offsets = [0, 32], sizes = [32, 32], strides = [1, 1]} : vector<32x128xf32> to vector<32x32xf32>
    %264 = vector.extract_strided_slice %261 {offsets = [0, 96], sizes = [32, 32], strides = [1, 1]} : vector<32x128xf32> to vector<32x32xf32>
    %265 = vector.extract_strided_slice %256 {offsets = [0, 64], sizes = [32, 32], strides = [1, 1]} : vector<32x128xf32> to vector<32x32xf32>
    %266 = math.tanh %265 : vector<32x32xf32>
    %267 = arith.mulf %263, %219 : vector<32x32xf32>
    %268 = arith.mulf %262, %266 : vector<32x32xf32>
    %269 = arith.addf %267, %268 : vector<32x32xf32>
    %270 = math.tanh %269 : vector<32x32xf32>
    %271 = arith.mulf %264, %270 : vector<32x32xf32>
    %272 = vector.shape_cast %246 : vector<32x1xi1> to vector<32x1xi1>
    %273 = vector.broadcast %272 : vector<32x1xi1> to vector<32x32xi1>
    %274 = arith.select %273, %269, %219 : vector<32x32xi1>, vector<32x32xf32>
    %275 = arith.extf %224 : vector<32x32xbf16> to vector<32x32xf32>
    %276 = vector.shape_cast %246 : vector<32x1xi1> to vector<32x1xi1>
    %277 = vector.broadcast %276 : vector<32x1xi1> to vector<32x32xi1>
    %278 = arith.select %277, %271, %275 : vector<32x32xi1>, vector<32x32xf32>
    %279 = arith.truncf %278 : vector<32x32xf32> to vector<32x32xbf16>
    %280 = vector.extract_strided_slice %279 {offsets = [0, 0], sizes = [16, 32], strides = [1, 1]} : vector<32x32xbf16> to vector<16x32xbf16>
    %281 = arith.index_cast %233 : i32 to index
    %c0_66 = arith.constant 0 : index
    %282 = vector.load %arg13[%281, %c0_66] : memref<128x64xbf16, #tpu.memory_space<vmem>>, vector<16x32xbf16>
    tpu.vector_store %arg13[%281, %c0_66], %280 {strides = array<i32>} : memref<128x64xbf16, #tpu.memory_space<vmem>>, vector<16x32xbf16>,
    %283 = vector.extract_strided_slice %279 {offsets = [16, 0], sizes = [16, 32], strides = [1, 1]} : vector<32x32xbf16> to vector<16x32xbf16>
    %284 = arith.index_cast %235 : i32 to index
    %c32_67 = arith.constant 32 : index
    %285 = vector.load %arg13[%284, %c32_67] : memref<128x64xbf16, #tpu.memory_space<vmem>>, vector<16x32xbf16>
    tpu.vector_store %arg13[%284, %c32_67], %283 {strides = array<i32>} : memref<128x64xbf16, #tpu.memory_space<vmem>>, vector<16x32xbf16>,
    %c5_i32 = arith.constant 5 : i32
    %c7_i32_68 = arith.constant 7 : i32
    %286 = arith.subi %c7_i32_68, %c5_i32 : i32
    %c16_i32_69 = arith.constant 16 : i32
    %287 = arith.muli %c5_i32, %c16_i32_69 : i32
    %288 = tpu.assume_multiple %287, 16 : i32
    %c16_i32_70 = arith.constant 16 : i32
    %289 = arith.muli %286, %c16_i32_70 : i32
    %290 = tpu.assume_multiple %289, 16 : i32
    %291 = arith.index_cast %288 : i32 to index
    %c0_71 = arith.constant 0 : index
    %292 = vector.load %arg12[%291, %c0_71] : memref<128x256xbf16, #tpu.memory_space<vmem>>, vector<16x256xbf16>
    %293 = arith.index_cast %290 : i32 to index
    %c0_72 = arith.constant 0 : index
    %294 = vector.load %arg12[%293, %c0_72] : memref<128x256xbf16, #tpu.memory_space<vmem>>, vector<16x256xbf16>
    %295 = arith.index_cast %288 : i32 to index
    %c0_73 = arith.constant 0 : index
    %296 = vector.load %arg2[%295, %c0_73] : memref<128x1xf32, #tpu.memory_space<vmem>>, vector<16x1xf32>
    %297 = arith.index_cast %290 : i32 to index
    %c0_74 = arith.constant 0 : index
    %298 = vector.load %arg2[%297, %c0_74] : memref<128x1xf32, #tpu.memory_space<vmem>>, vector<16x1xf32>
    %299 = tpu.concatenate %296, %298 in 0 : vector<16x1xf32>, vector<16x1xf32> -> vector<32x1xf32>
    %cst_75 = arith.constant 5.000000e-01 : f32
    %300 = vector.broadcast %cst_75 : f32 to vector<32x1xf32>
    %301 = arith.cmpf ogt, %299, %300 : vector<32x1xf32>
    %cst_76 = arith.constant dense<0.000000e+00> : vector<32x256xf32>
    %302 = tpu.matmul %279, %8, %cst_76 {dimension_numbers = #tpu.dot_dimension_numbers<[1], [0], [0], [1], [0, 0, 1, 1], [], []>} : vector<32x32xbf16>, vector<32x256xbf16>, vector<32x256xf32> -> vector<32x256xf32>
    %303 = vector.extract_strided_slice %302 {offsets = [0, 0], sizes = [16, 128], strides = [1, 1]} : vector<32x256xf32> to vector<16x128xf32>
    %304 = vector.extract_strided_slice %292 {offsets = [0, 0], sizes = [16, 128], strides = [1, 1]} : vector<16x256xbf16> to vector<16x128xbf16>
    %305 = arith.extf %304 : vector<16x128xbf16> to vector<16x128xf32>
    %306 = arith.addf %303, %305 : vector<16x128xf32>
    %307 = vector.extract_strided_slice %302 {offsets = [16, 128], sizes = [16, 128], strides = [1, 1]} : vector<32x256xf32> to vector<16x128xf32>
    %308 = vector.extract_strided_slice %294 {offsets = [0, 128], sizes = [16, 128], strides = [1, 1]} : vector<16x256xbf16> to vector<16x128xbf16>
    %309 = arith.extf %308 : vector<16x128xbf16> to vector<16x128xf32>
    %310 = arith.addf %307, %309 : vector<16x128xf32>
    %311 = tpu.concatenate %306, %310 in 0 : vector<16x128xf32>, vector<16x128xf32> -> vector<32x128xf32>
    %312 = arith.negf %311 : vector<32x128xf32>
    %313 = math.exp %312 : vector<32x128xf32>
    %cst_77 = arith.constant 1.000000e+00 : f32
    %314 = vector.broadcast %cst_77 : f32 to vector<32x128xf32>
    %315 = arith.addf %314, %313 : vector<32x128xf32>
    %316 = arith.divf %314, %315 : vector<32x128xf32>
    %317 = vector.extract_strided_slice %316 {offsets = [0, 0], sizes = [32, 32], strides = [1, 1]} : vector<32x128xf32> to vector<32x32xf32>
    %318 = vector.extract_strided_slice %316 {offsets = [0, 32], sizes = [32, 32], strides = [1, 1]} : vector<32x128xf32> to vector<32x32xf32>
    %319 = vector.extract_strided_slice %316 {offsets = [0, 96], sizes = [32, 32], strides = [1, 1]} : vector<32x128xf32> to vector<32x32xf32>
    %320 = vector.extract_strided_slice %311 {offsets = [0, 64], sizes = [32, 32], strides = [1, 1]} : vector<32x128xf32> to vector<32x32xf32>
    %321 = math.tanh %320 : vector<32x32xf32>
    %322 = arith.mulf %318, %274 : vector<32x32xf32>
    %323 = arith.mulf %317, %321 : vector<32x32xf32>
    %324 = arith.addf %322, %323 : vector<32x32xf32>
    %325 = math.tanh %324 : vector<32x32xf32>
    %326 = arith.mulf %319, %325 : vector<32x32xf32>
    %327 = vector.shape_cast %301 : vector<32x1xi1> to vector<32x1xi1>
    %328 = vector.broadcast %327 : vector<32x1xi1> to vector<32x32xi1>
    %329 = arith.select %328, %324, %274 : vector<32x32xi1>, vector<32x32xf32>
    %330 = arith.extf %279 : vector<32x32xbf16> to vector<32x32xf32>
    %331 = vector.shape_cast %301 : vector<32x1xi1> to vector<32x1xi1>
    %332 = vector.broadcast %331 : vector<32x1xi1> to vector<32x32xi1>
    %333 = arith.select %332, %326, %330 : vector<32x32xi1>, vector<32x32xf32>
    %334 = arith.truncf %333 : vector<32x32xf32> to vector<32x32xbf16>
    %335 = vector.extract_strided_slice %334 {offsets = [0, 0], sizes = [16, 32], strides = [1, 1]} : vector<32x32xbf16> to vector<16x32xbf16>
    %336 = arith.index_cast %288 : i32 to index
    %c0_78 = arith.constant 0 : index
    %337 = vector.load %arg13[%336, %c0_78] : memref<128x64xbf16, #tpu.memory_space<vmem>>, vector<16x32xbf16>
    tpu.vector_store %arg13[%336, %c0_78], %335 {strides = array<i32>} : memref<128x64xbf16, #tpu.memory_space<vmem>>, vector<16x32xbf16>,
    %338 = vector.extract_strided_slice %334 {offsets = [16, 0], sizes = [16, 32], strides = [1, 1]} : vector<32x32xbf16> to vector<16x32xbf16>
    %339 = arith.index_cast %290 : i32 to index
    %c32_79 = arith.constant 32 : index
    %340 = vector.load %arg13[%339, %c32_79] : memref<128x64xbf16, #tpu.memory_space<vmem>>, vector<16x32xbf16>
    tpu.vector_store %arg13[%339, %c32_79], %338 {strides = array<i32>} : memref<128x64xbf16, #tpu.memory_space<vmem>>, vector<16x32xbf16>,
    %c6_i32 = arith.constant 6 : i32
    %c7_i32_80 = arith.constant 7 : i32
    %341 = arith.subi %c7_i32_80, %c6_i32 : i32
    %c16_i32_81 = arith.constant 16 : i32
    %342 = arith.muli %c6_i32, %c16_i32_81 : i32
    %343 = tpu.assume_multiple %342, 16 : i32
    %c16_i32_82 = arith.constant 16 : i32
    %344 = arith.muli %341, %c16_i32_82 : i32
    %345 = tpu.assume_multiple %344, 16 : i32
    %346 = arith.index_cast %343 : i32 to index
    %c0_83 = arith.constant 0 : index
    %347 = vector.load %arg12[%346, %c0_83] : memref<128x256xbf16, #tpu.memory_space<vmem>>, vector<16x256xbf16>
    %348 = arith.index_cast %345 : i32 to index
    %c0_84 = arith.constant 0 : index
    %349 = vector.load %arg12[%348, %c0_84] : memref<128x256xbf16, #tpu.memory_space<vmem>>, vector<16x256xbf16>
    %350 = arith.index_cast %343 : i32 to index
    %c0_85 = arith.constant 0 : index
    %351 = vector.load %arg2[%350, %c0_85] : memref<128x1xf32, #tpu.memory_space<vmem>>, vector<16x1xf32>
    %352 = arith.index_cast %345 : i32 to index
    %c0_86 = arith.constant 0 : index
    %353 = vector.load %arg2[%352, %c0_86] : memref<128x1xf32, #tpu.memory_space<vmem>>, vector<16x1xf32>
    %354 = tpu.concatenate %351, %353 in 0 : vector<16x1xf32>, vector<16x1xf32> -> vector<32x1xf32>
    %cst_87 = arith.constant 5.000000e-01 : f32
    %355 = vector.broadcast %cst_87 : f32 to vector<32x1xf32>
    %356 = arith.cmpf ogt, %354, %355 : vector<32x1xf32>
    %cst_88 = arith.constant dense<0.000000e+00> : vector<32x256xf32>
    %357 = tpu.matmul %334, %8, %cst_88 {dimension_numbers = #tpu.dot_dimension_numbers<[1], [0], [0], [1], [0, 0, 1, 1], [], []>} : vector<32x32xbf16>, vector<32x256xbf16>, vector<32x256xf32> -> vector<32x256xf32>
    %358 = vector.extract_strided_slice %357 {offsets = [0, 0], sizes = [16, 128], strides = [1, 1]} : vector<32x256xf32> to vector<16x128xf32>
    %359 = vector.extract_strided_slice %347 {offsets = [0, 0], sizes = [16, 128], strides = [1, 1]} : vector<16x256xbf16> to vector<16x128xbf16>
    %360 = arith.extf %359 : vector<16x128xbf16> to vector<16x128xf32>
    %361 = arith.addf %358, %360 : vector<16x128xf32>
    %362 = vector.extract_strided_slice %357 {offsets = [16, 128], sizes = [16, 128], strides = [1, 1]} : vector<32x256xf32> to vector<16x128xf32>
    %363 = vector.extract_strided_slice %349 {offsets = [0, 128], sizes = [16, 128], strides = [1, 1]} : vector<16x256xbf16> to vector<16x128xbf16>
    %364 = arith.extf %363 : vector<16x128xbf16> to vector<16x128xf32>
    %365 = arith.addf %362, %364 : vector<16x128xf32>
    %366 = tpu.concatenate %361, %365 in 0 : vector<16x128xf32>, vector<16x128xf32> -> vector<32x128xf32>
    %367 = arith.negf %366 : vector<32x128xf32>
    %368 = math.exp %367 : vector<32x128xf32>
    %cst_89 = arith.constant 1.000000e+00 : f32
    %369 = vector.broadcast %cst_89 : f32 to vector<32x128xf32>
    %370 = arith.addf %369, %368 : vector<32x128xf32>
    %371 = arith.divf %369, %370 : vector<32x128xf32>
    %372 = vector.extract_strided_slice %371 {offsets = [0, 0], sizes = [32, 32], strides = [1, 1]} : vector<32x128xf32> to vector<32x32xf32>
    %373 = vector.extract_strided_slice %371 {offsets = [0, 32], sizes = [32, 32], strides = [1, 1]} : vector<32x128xf32> to vector<32x32xf32>
    %374 = vector.extract_strided_slice %371 {offsets = [0, 96], sizes = [32, 32], strides = [1, 1]} : vector<32x128xf32> to vector<32x32xf32>
    %375 = vector.extract_strided_slice %366 {offsets = [0, 64], sizes = [32, 32], strides = [1, 1]} : vector<32x128xf32> to vector<32x32xf32>
    %376 = math.tanh %375 : vector<32x32xf32>
    %377 = arith.mulf %373, %329 : vector<32x32xf32>
    %378 = arith.mulf %372, %376 : vector<32x32xf32>
    %379 = arith.addf %377, %378 : vector<32x32xf32>
    %380 = math.tanh %379 : vector<32x32xf32>
    %381 = arith.mulf %374, %380 : vector<32x32xf32>
    %382 = vector.shape_cast %356 : vector<32x1xi1> to vector<32x1xi1>
    %383 = vector.broadcast %382 : vector<32x1xi1> to vector<32x32xi1>
    %384 = arith.select %383, %379, %329 : vector<32x32xi1>, vector<32x32xf32>
    %385 = arith.extf %334 : vector<32x32xbf16> to vector<32x32xf32>
    %386 = vector.shape_cast %356 : vector<32x1xi1> to vector<32x1xi1>
    %387 = vector.broadcast %386 : vector<32x1xi1> to vector<32x32xi1>
    %388 = arith.select %387, %381, %385 : vector<32x32xi1>, vector<32x32xf32>
    %389 = arith.truncf %388 : vector<32x32xf32> to vector<32x32xbf16>
    %390 = vector.extract_strided_slice %389 {offsets = [0, 0], sizes = [16, 32], strides = [1, 1]} : vector<32x32xbf16> to vector<16x32xbf16>
    %391 = arith.index_cast %343 : i32 to index
    %c0_90 = arith.constant 0 : index
    %392 = vector.load %arg13[%391, %c0_90] : memref<128x64xbf16, #tpu.memory_space<vmem>>, vector<16x32xbf16>
    tpu.vector_store %arg13[%391, %c0_90], %390 {strides = array<i32>} : memref<128x64xbf16, #tpu.memory_space<vmem>>, vector<16x32xbf16>,
    %393 = vector.extract_strided_slice %389 {offsets = [16, 0], sizes = [16, 32], strides = [1, 1]} : vector<32x32xbf16> to vector<16x32xbf16>
    %394 = arith.index_cast %345 : i32 to index
    %c32_91 = arith.constant 32 : index
    %395 = vector.load %arg13[%394, %c32_91] : memref<128x64xbf16, #tpu.memory_space<vmem>>, vector<16x32xbf16>
    tpu.vector_store %arg13[%394, %c32_91], %393 {strides = array<i32>} : memref<128x64xbf16, #tpu.memory_space<vmem>>, vector<16x32xbf16>,
    %c7_i32_92 = arith.constant 7 : i32
    %c7_i32_93 = arith.constant 7 : i32
    %396 = arith.subi %c7_i32_93, %c7_i32_92 : i32
    %c16_i32_94 = arith.constant 16 : i32
    %397 = arith.muli %c7_i32_92, %c16_i32_94 : i32
    %398 = tpu.assume_multiple %397, 16 : i32
    %c16_i32_95 = arith.constant 16 : i32
    %399 = arith.muli %396, %c16_i32_95 : i32
    %400 = tpu.assume_multiple %399, 16 : i32
    %401 = arith.index_cast %398 : i32 to index
    %c0_96 = arith.constant 0 : index
    %402 = vector.load %arg12[%401, %c0_96] : memref<128x256xbf16, #tpu.memory_space<vmem>>, vector<16x256xbf16>
    %403 = arith.index_cast %400 : i32 to index
    %c0_97 = arith.constant 0 : index
    %404 = vector.load %arg12[%403, %c0_97] : memref<128x256xbf16, #tpu.memory_space<vmem>>, vector<16x256xbf16>
    %405 = arith.index_cast %398 : i32 to index
    %c0_98 = arith.constant 0 : index
    %406 = vector.load %arg2[%405, %c0_98] : memref<128x1xf32, #tpu.memory_space<vmem>>, vector<16x1xf32>
    %407 = arith.index_cast %400 : i32 to index
    %c0_99 = arith.constant 0 : index
    %408 = vector.load %arg2[%407, %c0_99] : memref<128x1xf32, #tpu.memory_space<vmem>>, vector<16x1xf32>
    %409 = tpu.concatenate %406, %408 in 0 : vector<16x1xf32>, vector<16x1xf32> -> vector<32x1xf32>
    %cst_100 = arith.constant 5.000000e-01 : f32
    %410 = vector.broadcast %cst_100 : f32 to vector<32x1xf32>
    %411 = arith.cmpf ogt, %409, %410 : vector<32x1xf32>
    %cst_101 = arith.constant dense<0.000000e+00> : vector<32x256xf32>
    %412 = tpu.matmul %389, %8, %cst_101 {dimension_numbers = #tpu.dot_dimension_numbers<[1], [0], [0], [1], [0, 0, 1, 1], [], []>} : vector<32x32xbf16>, vector<32x256xbf16>, vector<32x256xf32> -> vector<32x256xf32>
    %413 = vector.extract_strided_slice %412 {offsets = [0, 0], sizes = [16, 128], strides = [1, 1]} : vector<32x256xf32> to vector<16x128xf32>
    %414 = vector.extract_strided_slice %402 {offsets = [0, 0], sizes = [16, 128], strides = [1, 1]} : vector<16x256xbf16> to vector<16x128xbf16>
    %415 = arith.extf %414 : vector<16x128xbf16> to vector<16x128xf32>
    %416 = arith.addf %413, %415 : vector<16x128xf32>
    %417 = vector.extract_strided_slice %412 {offsets = [16, 128], sizes = [16, 128], strides = [1, 1]} : vector<32x256xf32> to vector<16x128xf32>
    %418 = vector.extract_strided_slice %404 {offsets = [0, 128], sizes = [16, 128], strides = [1, 1]} : vector<16x256xbf16> to vector<16x128xbf16>
    %419 = arith.extf %418 : vector<16x128xbf16> to vector<16x128xf32>
    %420 = arith.addf %417, %419 : vector<16x128xf32>
    %421 = tpu.concatenate %416, %420 in 0 : vector<16x128xf32>, vector<16x128xf32> -> vector<32x128xf32>
    %422 = arith.negf %421 : vector<32x128xf32>
    %423 = math.exp %422 : vector<32x128xf32>
    %cst_102 = arith.constant 1.000000e+00 : f32
    %424 = vector.broadcast %cst_102 : f32 to vector<32x128xf32>
    %425 = arith.addf %424, %423 : vector<32x128xf32>
    %426 = arith.divf %424, %425 : vector<32x128xf32>
    %427 = vector.extract_strided_slice %426 {offsets = [0, 0], sizes = [32, 32], strides = [1, 1]} : vector<32x128xf32> to vector<32x32xf32>
    %428 = vector.extract_strided_slice %426 {offsets = [0, 32], sizes = [32, 32], strides = [1, 1]} : vector<32x128xf32> to vector<32x32xf32>
    %429 = vector.extract_strided_slice %426 {offsets = [0, 96], sizes = [32, 32], strides = [1, 1]} : vector<32x128xf32> to vector<32x32xf32>
    %430 = vector.extract_strided_slice %421 {offsets = [0, 64], sizes = [32, 32], strides = [1, 1]} : vector<32x128xf32> to vector<32x32xf32>
    %431 = math.tanh %430 : vector<32x32xf32>
    %432 = arith.mulf %428, %384 : vector<32x32xf32>
    %433 = arith.mulf %427, %431 : vector<32x32xf32>
    %434 = arith.addf %432, %433 : vector<32x32xf32>
    %435 = math.tanh %434 : vector<32x32xf32>
    %436 = arith.mulf %429, %435 : vector<32x32xf32>
    %437 = vector.shape_cast %411 : vector<32x1xi1> to vector<32x1xi1>
    %438 = vector.broadcast %437 : vector<32x1xi1> to vector<32x32xi1>
    %439 = arith.select %438, %434, %384 : vector<32x32xi1>, vector<32x32xf32>
    %440 = arith.extf %389 : vector<32x32xbf16> to vector<32x32xf32>
    %441 = vector.shape_cast %411 : vector<32x1xi1> to vector<32x1xi1>
    %442 = vector.broadcast %441 : vector<32x1xi1> to vector<32x32xi1>
    %443 = arith.select %442, %436, %440 : vector<32x32xi1>, vector<32x32xf32>
    %444 = arith.truncf %443 : vector<32x32xf32> to vector<32x32xbf16>
    %445 = vector.extract_strided_slice %444 {offsets = [0, 0], sizes = [16, 32], strides = [1, 1]} : vector<32x32xbf16> to vector<16x32xbf16>
    %446 = arith.index_cast %398 : i32 to index
    %c0_103 = arith.constant 0 : index
    %447 = vector.load %arg13[%446, %c0_103] : memref<128x64xbf16, #tpu.memory_space<vmem>>, vector<16x32xbf16>
    tpu.vector_store %arg13[%446, %c0_103], %445 {strides = array<i32>} : memref<128x64xbf16, #tpu.memory_space<vmem>>, vector<16x32xbf16>,
    %448 = vector.extract_strided_slice %444 {offsets = [16, 0], sizes = [16, 32], strides = [1, 1]} : vector<32x32xbf16> to vector<16x32xbf16>
    %449 = arith.index_cast %400 : i32 to index
    %c32_104 = arith.constant 32 : index
    %450 = vector.load %arg13[%449, %c32_104] : memref<128x64xbf16, #tpu.memory_space<vmem>>, vector<16x32xbf16>
    tpu.vector_store %arg13[%449, %c32_104], %448 {strides = array<i32>} : memref<128x64xbf16, #tpu.memory_space<vmem>>, vector<16x32xbf16>,
    %c8_i32 = arith.constant 8 : i32
    %c0_105 = arith.constant 0 : index
    %c0_106 = arith.constant 0 : index
    %451 = vector.load %arg13[%c0_105, %c0_106] : memref<128x64xbf16, #tpu.memory_space<vmem>>, vector<128x64xbf16>
    %c0_107 = arith.constant 0 : index
    %c0_108 = arith.constant 0 : index
    %452 = vector.load %arg7[%c0_107, %c0_108] : memref<64x8xbf16, #tpu.memory_space<vmem>>, vector<64x8xbf16>
    %cst_109 = arith.constant dense<0.000000e+00> : vector<128x8xf32>
    %453 = tpu.matmul %451, %452, %cst_109 {dimension_numbers = #tpu.dot_dimension_numbers<[1], [0], [0], [1], [0, 0, 1, 1], [], []>} : vector<128x64xbf16>, vector<64x8xbf16>, vector<128x8xf32> -> vector<128x8xf32>
    %c0_110 = arith.constant 0 : index
    %c0_111 = arith.constant 0 : index
    %454 = vector.load %arg8[%c0_110, %c0_111] : memref<1x8xf32, #tpu.memory_space<vmem>>, vector<1x8xf32>
    %455 = vector.broadcast %454 : vector<1x8xf32> to vector<128x8xf32>
    %456 = arith.addf %453, %455 : vector<128x8xf32>
    %c0_112 = arith.constant 0 : index
    %c0_113 = arith.constant 0 : index
    %457 = vector.load %arg14[%c0_112, %c0_113] : memref<128x8xf32, #tpu.memory_space<vmem>>, vector<128x8xf32>
    tpu.vector_store %arg14[%c0_112, %c0_113], %456 {strides = array<i32>} : memref<128x8xf32, #tpu.memory_space<vmem>>, vector<128x8xf32>,
    %c0_114 = arith.constant 0 : index
    %c0_115 = arith.constant 0 : index
    %458 = vector.load %arg9[%c0_114, %c0_115] : memref<8x8xf32, #tpu.memory_space<vmem>>, vector<8x8xf32>
    %c0_116 = arith.constant 0 : index
    %c0_117 = arith.constant 0 : index
    %459 = vector.load %arg10[%c0_116, %c0_117] : memref<8x8xf32, #tpu.memory_space<vmem>>, vector<8x8xf32>
    %460 = vector.shape_cast %459 : vector<8x8xf32> to vector<1x8x8xf32>
    %461 = vector.shape_cast %460 : vector<1x8x8xf32> to vector<1x8x8xf32>
    %462 = vector.broadcast %461 : vector<1x8x8xf32> to vector<16x8x8xf32>
    %463 = tpu.iota {dimensions = array<i32: 1>} : vector<16x8xi32>
    %c0_118 = arith.constant 0 : index
    %c0_119 = arith.constant 0 : index
    %464 = vector.load %arg14[%c0_118, %c0_119] : memref<128x8xf32, #tpu.memory_space<vmem>>, vector<16x8xf32>
    %c0_120 = arith.constant 0 : index
    %c0_121 = arith.constant 0 : index
    %465 = vector.load %arg2[%c0_120, %c0_121] : memref<128x1xf32, #tpu.memory_space<vmem>>, vector<16x1xf32>
    %c0_122 = arith.constant 0 : index
    %c0_123 = arith.constant 0 : index
    %466 = vector.load %arg3[%c0_122, %c0_123] : memref<128x1xi32, #tpu.memory_space<vmem>>, vector<16x1xi32>
    %467 = vector.broadcast %466 : vector<16x1xi32> to vector<16x8xi32>
    %468 = arith.cmpi eq, %467, %463 : vector<16x8xi32>
    %469 = arith.extui %468 : vector<16x8xi1> to vector<16x8xi32>
    %470 = arith.sitofp %469 : vector<16x8xi32> to vector<16x8xf32>
    %471 = arith.mulf %464, %470 : vector<16x8xf32>
    %cst_124 = arith.constant dense<0.000000e+00> : vector<16xf32>
    %472 = vector.multi_reduction <add>, %471, %cst_124 [1] : vector<16x8xf32> to vector<16xf32>
    %473 = vector.shape_cast %472 : vector<16xf32> to vector<16x1xf32>
    %474 = arith.mulf %473, %465 : vector<16x1xf32>
    %c1_i32_125 = arith.constant 1 : i32
    %c16_i32_126 = arith.constant 16 : i32
    %475 = arith.muli %c1_i32_125, %c16_i32_126 : i32
    %476 = tpu.assume_multiple %475, 16 : i32
    %477 = arith.index_cast %476 : i32 to index
    %c0_127 = arith.constant 0 : index
    %478 = vector.load %arg14[%477, %c0_127] : memref<128x8xf32, #tpu.memory_space<vmem>>, vector<16x8xf32>
    %479 = arith.index_cast %476 : i32 to index
    %c0_128 = arith.constant 0 : index
    %480 = vector.load %arg2[%479, %c0_128] : memref<128x1xf32, #tpu.memory_space<vmem>>, vector<16x1xf32>
    %481 = arith.index_cast %476 : i32 to index
    %c0_129 = arith.constant 0 : index
    %482 = vector.load %arg3[%481, %c0_129] : memref<128x1xi32, #tpu.memory_space<vmem>>, vector<16x1xi32>
    %483 = vector.broadcast %482 : vector<16x1xi32> to vector<16x8xi32>
    %484 = arith.cmpi eq, %483, %463 : vector<16x8xi32>
    %485 = arith.extui %484 : vector<16x8xi1> to vector<16x8xi32>
    %486 = arith.sitofp %485 : vector<16x8xi32> to vector<16x8xf32>
    %487 = arith.mulf %478, %486 : vector<16x8xf32>
    %cst_130 = arith.constant dense<0.000000e+00> : vector<16xf32>
    %488 = vector.multi_reduction <add>, %487, %cst_130 [1] : vector<16x8xf32> to vector<16xf32>
    %489 = vector.shape_cast %488 : vector<16xf32> to vector<16x1xf32>
    %cst_131 = arith.constant dense<0.000000e+00> : vector<16x8xf32>
    %490 = tpu.matmul %470, %458, %cst_131 {dimension_numbers = #tpu.dot_dimension_numbers<[1], [0], [0], [1], [0, 0, 1, 1], [], []>} : vector<16x8xf32>, vector<8x8xf32>, vector<16x8xf32> -> vector<16x8xf32>
    %491 = arith.mulf %490, %486 : vector<16x8xf32>
    %cst_132 = arith.constant dense<0.000000e+00> : vector<16xf32>
    %492 = vector.multi_reduction <add>, %491, %cst_132 [1] : vector<16x8xf32> to vector<16xf32>
    %493 = vector.shape_cast %492 : vector<16xf32> to vector<16x1xf32>
    %494 = arith.addf %489, %493 : vector<16x1xf32>
    %495 = arith.mulf %494, %480 : vector<16x1xf32>
    %496 = arith.addf %474, %495 : vector<16x1xf32>
    %497 = vector.shape_cast %464 : vector<16x8xf32> to vector<16x1x8xf32>
    %498 = vector.broadcast %497 : vector<16x1x8xf32> to vector<16x8x8xf32>
    %499 = arith.addf %498, %462 : vector<16x8x8xf32>
    %500 = vector.shape_cast %478 : vector<16x8xf32> to vector<16x8x1xf32>
    %501 = vector.broadcast %500 : vector<16x8x1xf32> to vector<16x8x8xf32>
    %502 = arith.addf %499, %501 : vector<16x8x8xf32>
    %cst_133 = arith.constant dense<0xFF800000> : vector<16x8xf32>
    %503 = vector.multi_reduction <maximumf>, %502, %cst_133 [2] : vector<16x8x8xf32> to vector<16x8xf32>
    %504 = vector.shape_cast %503 : vector<16x8xf32> to vector<16x8x1xf32>
    %505 = vector.shape_cast %504 : vector<16x8x1xf32> to vector<16x8xf32>
    %506 = vector.broadcast %504 : vector<16x8x1xf32> to vector<16x8x8xf32>
    %507 = arith.subf %502, %506 : vector<16x8x8xf32>
    %508 = math.exp %507 : vector<16x8x8xf32>
    %cst_134 = arith.constant dense<0.000000e+00> : vector<16x8xf32>
    %509 = vector.multi_reduction <add>, %508, %cst_134 [2] : vector<16x8x8xf32> to vector<16x8xf32>
    %510 = math.log %509 : vector<16x8xf32>
    %511 = arith.addf %505, %510 : vector<16x8xf32>
    %cst_135 = arith.constant 5.000000e-01 : f32
    %512 = vector.broadcast %cst_135 : f32 to vector<16x1xf32>
    %513 = arith.cmpf ogt, %480, %512 : vector<16x1xf32>
    %514 = vector.shape_cast %513 : vector<16x1xi1> to vector<16x1xi1>
    %515 = vector.broadcast %514 : vector<16x1xi1> to vector<16x8xi1>
    %516 = arith.select %515, %511, %464 : vector<16x8xi1>, vector<16x8xf32>
    %c2_i32_136 = arith.constant 2 : i32
    %c16_i32_137 = arith.constant 16 : i32
    %517 = arith.muli %c2_i32_136, %c16_i32_137 : i32
    %518 = tpu.assume_multiple %517, 16 : i32
    %519 = arith.index_cast %518 : i32 to index
    %c0_138 = arith.constant 0 : index
    %520 = vector.load %arg14[%519, %c0_138] : memref<128x8xf32, #tpu.memory_space<vmem>>, vector<16x8xf32>
    %521 = arith.index_cast %518 : i32 to index
    %c0_139 = arith.constant 0 : index
    %522 = vector.load %arg2[%521, %c0_139] : memref<128x1xf32, #tpu.memory_space<vmem>>, vector<16x1xf32>
    %523 = arith.index_cast %518 : i32 to index
    %c0_140 = arith.constant 0 : index
    %524 = vector.load %arg3[%523, %c0_140] : memref<128x1xi32, #tpu.memory_space<vmem>>, vector<16x1xi32>
    %525 = vector.broadcast %524 : vector<16x1xi32> to vector<16x8xi32>
    %526 = arith.cmpi eq, %525, %463 : vector<16x8xi32>
    %527 = arith.extui %526 : vector<16x8xi1> to vector<16x8xi32>
    %528 = arith.sitofp %527 : vector<16x8xi32> to vector<16x8xf32>
    %529 = arith.mulf %520, %528 : vector<16x8xf32>
    %cst_141 = arith.constant dense<0.000000e+00> : vector<16xf32>
    %530 = vector.multi_reduction <add>, %529, %cst_141 [1] : vector<16x8xf32> to vector<16xf32>
    %531 = vector.shape_cast %530 : vector<16xf32> to vector<16x1xf32>
    %cst_142 = arith.constant dense<0.000000e+00> : vector<16x8xf32>
    %532 = tpu.matmul %486, %458, %cst_142 {dimension_numbers = #tpu.dot_dimension_numbers<[1], [0], [0], [1], [0, 0, 1, 1], [], []>} : vector<16x8xf32>, vector<8x8xf32>, vector<16x8xf32> -> vector<16x8xf32>
    %533 = arith.mulf %532, %528 : vector<16x8xf32>
    %cst_143 = arith.constant dense<0.000000e+00> : vector<16xf32>
    %534 = vector.multi_reduction <add>, %533, %cst_143 [1] : vector<16x8xf32> to vector<16xf32>
    %535 = vector.shape_cast %534 : vector<16xf32> to vector<16x1xf32>
    %536 = arith.addf %531, %535 : vector<16x1xf32>
    %537 = arith.mulf %536, %522 : vector<16x1xf32>
    %538 = arith.addf %496, %537 : vector<16x1xf32>
    %539 = vector.shape_cast %516 : vector<16x8xf32> to vector<16x1x8xf32>
    %540 = vector.broadcast %539 : vector<16x1x8xf32> to vector<16x8x8xf32>
    %541 = arith.addf %540, %462 : vector<16x8x8xf32>
    %542 = vector.shape_cast %520 : vector<16x8xf32> to vector<16x8x1xf32>
    %543 = vector.broadcast %542 : vector<16x8x1xf32> to vector<16x8x8xf32>
    %544 = arith.addf %541, %543 : vector<16x8x8xf32>
    %cst_144 = arith.constant dense<0xFF800000> : vector<16x8xf32>
    %545 = vector.multi_reduction <maximumf>, %544, %cst_144 [2] : vector<16x8x8xf32> to vector<16x8xf32>
    %546 = vector.shape_cast %545 : vector<16x8xf32> to vector<16x8x1xf32>
    %547 = vector.shape_cast %546 : vector<16x8x1xf32> to vector<16x8xf32>
    %548 = vector.broadcast %546 : vector<16x8x1xf32> to vector<16x8x8xf32>
    %549 = arith.subf %544, %548 : vector<16x8x8xf32>
    %550 = math.exp %549 : vector<16x8x8xf32>
    %cst_145 = arith.constant dense<0.000000e+00> : vector<16x8xf32>
    %551 = vector.multi_reduction <add>, %550, %cst_145 [2] : vector<16x8x8xf32> to vector<16x8xf32>
    %552 = math.log %551 : vector<16x8xf32>
    %553 = arith.addf %547, %552 : vector<16x8xf32>
    %cst_146 = arith.constant 5.000000e-01 : f32
    %554 = vector.broadcast %cst_146 : f32 to vector<16x1xf32>
    %555 = arith.cmpf ogt, %522, %554 : vector<16x1xf32>
    %556 = vector.shape_cast %555 : vector<16x1xi1> to vector<16x1xi1>
    %557 = vector.broadcast %556 : vector<16x1xi1> to vector<16x8xi1>
    %558 = arith.select %557, %553, %516 : vector<16x8xi1>, vector<16x8xf32>
    %c3_i32_147 = arith.constant 3 : i32
    %c16_i32_148 = arith.constant 16 : i32
    %559 = arith.muli %c3_i32_147, %c16_i32_148 : i32
    %560 = tpu.assume_multiple %559, 16 : i32
    %561 = arith.index_cast %560 : i32 to index
    %c0_149 = arith.constant 0 : index
    %562 = vector.load %arg14[%561, %c0_149] : memref<128x8xf32, #tpu.memory_space<vmem>>, vector<16x8xf32>
    %563 = arith.index_cast %560 : i32 to index
    %c0_150 = arith.constant 0 : index
    %564 = vector.load %arg2[%563, %c0_150] : memref<128x1xf32, #tpu.memory_space<vmem>>, vector<16x1xf32>
    %565 = arith.index_cast %560 : i32 to index
    %c0_151 = arith.constant 0 : index
    %566 = vector.load %arg3[%565, %c0_151] : memref<128x1xi32, #tpu.memory_space<vmem>>, vector<16x1xi32>
    %567 = vector.broadcast %566 : vector<16x1xi32> to vector<16x8xi32>
    %568 = arith.cmpi eq, %567, %463 : vector<16x8xi32>
    %569 = arith.extui %568 : vector<16x8xi1> to vector<16x8xi32>
    %570 = arith.sitofp %569 : vector<16x8xi32> to vector<16x8xf32>
    %571 = arith.mulf %562, %570 : vector<16x8xf32>
    %cst_152 = arith.constant dense<0.000000e+00> : vector<16xf32>
    %572 = vector.multi_reduction <add>, %571, %cst_152 [1] : vector<16x8xf32> to vector<16xf32>
    %573 = vector.shape_cast %572 : vector<16xf32> to vector<16x1xf32>
    %cst_153 = arith.constant dense<0.000000e+00> : vector<16x8xf32>
    %574 = tpu.matmul %528, %458, %cst_153 {dimension_numbers = #tpu.dot_dimension_numbers<[1], [0], [0], [1], [0, 0, 1, 1], [], []>} : vector<16x8xf32>, vector<8x8xf32>, vector<16x8xf32> -> vector<16x8xf32>
    %575 = arith.mulf %574, %570 : vector<16x8xf32>
    %cst_154 = arith.constant dense<0.000000e+00> : vector<16xf32>
    %576 = vector.multi_reduction <add>, %575, %cst_154 [1] : vector<16x8xf32> to vector<16xf32>
    %577 = vector.shape_cast %576 : vector<16xf32> to vector<16x1xf32>
    %578 = arith.addf %573, %577 : vector<16x1xf32>
    %579 = arith.mulf %578, %564 : vector<16x1xf32>
    %580 = arith.addf %538, %579 : vector<16x1xf32>
    %581 = vector.shape_cast %558 : vector<16x8xf32> to vector<16x1x8xf32>
    %582 = vector.broadcast %581 : vector<16x1x8xf32> to vector<16x8x8xf32>
    %583 = arith.addf %582, %462 : vector<16x8x8xf32>
    %584 = vector.shape_cast %562 : vector<16x8xf32> to vector<16x8x1xf32>
    %585 = vector.broadcast %584 : vector<16x8x1xf32> to vector<16x8x8xf32>
    %586 = arith.addf %583, %585 : vector<16x8x8xf32>
    %cst_155 = arith.constant dense<0xFF800000> : vector<16x8xf32>
    %587 = vector.multi_reduction <maximumf>, %586, %cst_155 [2] : vector<16x8x8xf32> to vector<16x8xf32>
    %588 = vector.shape_cast %587 : vector<16x8xf32> to vector<16x8x1xf32>
    %589 = vector.shape_cast %588 : vector<16x8x1xf32> to vector<16x8xf32>
    %590 = vector.broadcast %588 : vector<16x8x1xf32> to vector<16x8x8xf32>
    %591 = arith.subf %586, %590 : vector<16x8x8xf32>
    %592 = math.exp %591 : vector<16x8x8xf32>
    %cst_156 = arith.constant dense<0.000000e+00> : vector<16x8xf32>
    %593 = vector.multi_reduction <add>, %592, %cst_156 [2] : vector<16x8x8xf32> to vector<16x8xf32>
    %594 = math.log %593 : vector<16x8xf32>
    %595 = arith.addf %589, %594 : vector<16x8xf32>
    %cst_157 = arith.constant 5.000000e-01 : f32
    %596 = vector.broadcast %cst_157 : f32 to vector<16x1xf32>
    %597 = arith.cmpf ogt, %564, %596 : vector<16x1xf32>
    %598 = vector.shape_cast %597 : vector<16x1xi1> to vector<16x1xi1>
    %599 = vector.broadcast %598 : vector<16x1xi1> to vector<16x8xi1>
    %600 = arith.select %599, %595, %558 : vector<16x8xi1>, vector<16x8xf32>
    %c4_i32_158 = arith.constant 4 : i32
    %c16_i32_159 = arith.constant 16 : i32
    %601 = arith.muli %c4_i32_158, %c16_i32_159 : i32
    %602 = tpu.assume_multiple %601, 16 : i32
    %603 = arith.index_cast %602 : i32 to index
    %c0_160 = arith.constant 0 : index
    %604 = vector.load %arg14[%603, %c0_160] : memref<128x8xf32, #tpu.memory_space<vmem>>, vector<16x8xf32>
    %605 = arith.index_cast %602 : i32 to index
    %c0_161 = arith.constant 0 : index
    %606 = vector.load %arg2[%605, %c0_161] : memref<128x1xf32, #tpu.memory_space<vmem>>, vector<16x1xf32>
    %607 = arith.index_cast %602 : i32 to index
    %c0_162 = arith.constant 0 : index
    %608 = vector.load %arg3[%607, %c0_162] : memref<128x1xi32, #tpu.memory_space<vmem>>, vector<16x1xi32>
    %609 = vector.broadcast %608 : vector<16x1xi32> to vector<16x8xi32>
    %610 = arith.cmpi eq, %609, %463 : vector<16x8xi32>
    %611 = arith.extui %610 : vector<16x8xi1> to vector<16x8xi32>
    %612 = arith.sitofp %611 : vector<16x8xi32> to vector<16x8xf32>
    %613 = arith.mulf %604, %612 : vector<16x8xf32>
    %cst_163 = arith.constant dense<0.000000e+00> : vector<16xf32>
    %614 = vector.multi_reduction <add>, %613, %cst_163 [1] : vector<16x8xf32> to vector<16xf32>
    %615 = vector.shape_cast %614 : vector<16xf32> to vector<16x1xf32>
    %cst_164 = arith.constant dense<0.000000e+00> : vector<16x8xf32>
    %616 = tpu.matmul %570, %458, %cst_164 {dimension_numbers = #tpu.dot_dimension_numbers<[1], [0], [0], [1], [0, 0, 1, 1], [], []>} : vector<16x8xf32>, vector<8x8xf32>, vector<16x8xf32> -> vector<16x8xf32>
    %617 = arith.mulf %616, %612 : vector<16x8xf32>
    %cst_165 = arith.constant dense<0.000000e+00> : vector<16xf32>
    %618 = vector.multi_reduction <add>, %617, %cst_165 [1] : vector<16x8xf32> to vector<16xf32>
    %619 = vector.shape_cast %618 : vector<16xf32> to vector<16x1xf32>
    %620 = arith.addf %615, %619 : vector<16x1xf32>
    %621 = arith.mulf %620, %606 : vector<16x1xf32>
    %622 = arith.addf %580, %621 : vector<16x1xf32>
    %623 = vector.shape_cast %600 : vector<16x8xf32> to vector<16x1x8xf32>
    %624 = vector.broadcast %623 : vector<16x1x8xf32> to vector<16x8x8xf32>
    %625 = arith.addf %624, %462 : vector<16x8x8xf32>
    %626 = vector.shape_cast %604 : vector<16x8xf32> to vector<16x8x1xf32>
    %627 = vector.broadcast %626 : vector<16x8x1xf32> to vector<16x8x8xf32>
    %628 = arith.addf %625, %627 : vector<16x8x8xf32>
    %cst_166 = arith.constant dense<0xFF800000> : vector<16x8xf32>
    %629 = vector.multi_reduction <maximumf>, %628, %cst_166 [2] : vector<16x8x8xf32> to vector<16x8xf32>
    %630 = vector.shape_cast %629 : vector<16x8xf32> to vector<16x8x1xf32>
    %631 = vector.shape_cast %630 : vector<16x8x1xf32> to vector<16x8xf32>
    %632 = vector.broadcast %630 : vector<16x8x1xf32> to vector<16x8x8xf32>
    %633 = arith.subf %628, %632 : vector<16x8x8xf32>
    %634 = math.exp %633 : vector<16x8x8xf32>
    %cst_167 = arith.constant dense<0.000000e+00> : vector<16x8xf32>
    %635 = vector.multi_reduction <add>, %634, %cst_167 [2] : vector<16x8x8xf32> to vector<16x8xf32>
    %636 = math.log %635 : vector<16x8xf32>
    %637 = arith.addf %631, %636 : vector<16x8xf32>
    %cst_168 = arith.constant 5.000000e-01 : f32
    %638 = vector.broadcast %cst_168 : f32 to vector<16x1xf32>
    %639 = arith.cmpf ogt, %606, %638 : vector<16x1xf32>
    %640 = vector.shape_cast %639 : vector<16x1xi1> to vector<16x1xi1>
    %641 = vector.broadcast %640 : vector<16x1xi1> to vector<16x8xi1>
    %642 = arith.select %641, %637, %600 : vector<16x8xi1>, vector<16x8xf32>
    %c5_i32_169 = arith.constant 5 : i32
    %c16_i32_170 = arith.constant 16 : i32
    %643 = arith.muli %c5_i32_169, %c16_i32_170 : i32
    %644 = tpu.assume_multiple %643, 16 : i32
    %645 = arith.index_cast %644 : i32 to index
    %c0_171 = arith.constant 0 : index
    %646 = vector.load %arg14[%645, %c0_171] : memref<128x8xf32, #tpu.memory_space<vmem>>, vector<16x8xf32>
    %647 = arith.index_cast %644 : i32 to index
    %c0_172 = arith.constant 0 : index
    %648 = vector.load %arg2[%647, %c0_172] : memref<128x1xf32, #tpu.memory_space<vmem>>, vector<16x1xf32>
    %649 = arith.index_cast %644 : i32 to index
    %c0_173 = arith.constant 0 : index
    %650 = vector.load %arg3[%649, %c0_173] : memref<128x1xi32, #tpu.memory_space<vmem>>, vector<16x1xi32>
    %651 = vector.broadcast %650 : vector<16x1xi32> to vector<16x8xi32>
    %652 = arith.cmpi eq, %651, %463 : vector<16x8xi32>
    %653 = arith.extui %652 : vector<16x8xi1> to vector<16x8xi32>
    %654 = arith.sitofp %653 : vector<16x8xi32> to vector<16x8xf32>
    %655 = arith.mulf %646, %654 : vector<16x8xf32>
    %cst_174 = arith.constant dense<0.000000e+00> : vector<16xf32>
    %656 = vector.multi_reduction <add>, %655, %cst_174 [1] : vector<16x8xf32> to vector<16xf32>
    %657 = vector.shape_cast %656 : vector<16xf32> to vector<16x1xf32>
    %cst_175 = arith.constant dense<0.000000e+00> : vector<16x8xf32>
    %658 = tpu.matmul %612, %458, %cst_175 {dimension_numbers = #tpu.dot_dimension_numbers<[1], [0], [0], [1], [0, 0, 1, 1], [], []>} : vector<16x8xf32>, vector<8x8xf32>, vector<16x8xf32> -> vector<16x8xf32>
    %659 = arith.mulf %658, %654 : vector<16x8xf32>
    %cst_176 = arith.constant dense<0.000000e+00> : vector<16xf32>
    %660 = vector.multi_reduction <add>, %659, %cst_176 [1] : vector<16x8xf32> to vector<16xf32>
    %661 = vector.shape_cast %660 : vector<16xf32> to vector<16x1xf32>
    %662 = arith.addf %657, %661 : vector<16x1xf32>
    %663 = arith.mulf %662, %648 : vector<16x1xf32>
    %664 = arith.addf %622, %663 : vector<16x1xf32>
    %665 = vector.shape_cast %642 : vector<16x8xf32> to vector<16x1x8xf32>
    %666 = vector.broadcast %665 : vector<16x1x8xf32> to vector<16x8x8xf32>
    %667 = arith.addf %666, %462 : vector<16x8x8xf32>
    %668 = vector.shape_cast %646 : vector<16x8xf32> to vector<16x8x1xf32>
    %669 = vector.broadcast %668 : vector<16x8x1xf32> to vector<16x8x8xf32>
    %670 = arith.addf %667, %669 : vector<16x8x8xf32>
    %cst_177 = arith.constant dense<0xFF800000> : vector<16x8xf32>
    %671 = vector.multi_reduction <maximumf>, %670, %cst_177 [2] : vector<16x8x8xf32> to vector<16x8xf32>
    %672 = vector.shape_cast %671 : vector<16x8xf32> to vector<16x8x1xf32>
    %673 = vector.shape_cast %672 : vector<16x8x1xf32> to vector<16x8xf32>
    %674 = vector.broadcast %672 : vector<16x8x1xf32> to vector<16x8x8xf32>
    %675 = arith.subf %670, %674 : vector<16x8x8xf32>
    %676 = math.exp %675 : vector<16x8x8xf32>
    %cst_178 = arith.constant dense<0.000000e+00> : vector<16x8xf32>
    %677 = vector.multi_reduction <add>, %676, %cst_178 [2] : vector<16x8x8xf32> to vector<16x8xf32>
    %678 = math.log %677 : vector<16x8xf32>
    %679 = arith.addf %673, %678 : vector<16x8xf32>
    %cst_179 = arith.constant 5.000000e-01 : f32
    %680 = vector.broadcast %cst_179 : f32 to vector<16x1xf32>
    %681 = arith.cmpf ogt, %648, %680 : vector<16x1xf32>
    %682 = vector.shape_cast %681 : vector<16x1xi1> to vector<16x1xi1>
    %683 = vector.broadcast %682 : vector<16x1xi1> to vector<16x8xi1>
    %684 = arith.select %683, %679, %642 : vector<16x8xi1>, vector<16x8xf32>
    %c6_i32_180 = arith.constant 6 : i32
    %c16_i32_181 = arith.constant 16 : i32
    %685 = arith.muli %c6_i32_180, %c16_i32_181 : i32
    %686 = tpu.assume_multiple %685, 16 : i32
    %687 = arith.index_cast %686 : i32 to index
    %c0_182 = arith.constant 0 : index
    %688 = vector.load %arg14[%687, %c0_182] : memref<128x8xf32, #tpu.memory_space<vmem>>, vector<16x8xf32>
    %689 = arith.index_cast %686 : i32 to index
    %c0_183 = arith.constant 0 : index
    %690 = vector.load %arg2[%689, %c0_183] : memref<128x1xf32, #tpu.memory_space<vmem>>, vector<16x1xf32>
    %691 = arith.index_cast %686 : i32 to index
    %c0_184 = arith.constant 0 : index
    %692 = vector.load %arg3[%691, %c0_184] : memref<128x1xi32, #tpu.memory_space<vmem>>, vector<16x1xi32>
    %693 = vector.broadcast %692 : vector<16x1xi32> to vector<16x8xi32>
    %694 = arith.cmpi eq, %693, %463 : vector<16x8xi32>
    %695 = arith.extui %694 : vector<16x8xi1> to vector<16x8xi32>
    %696 = arith.sitofp %695 : vector<16x8xi32> to vector<16x8xf32>
    %697 = arith.mulf %688, %696 : vector<16x8xf32>
    %cst_185 = arith.constant dense<0.000000e+00> : vector<16xf32>
    %698 = vector.multi_reduction <add>, %697, %cst_185 [1] : vector<16x8xf32> to vector<16xf32>
    %699 = vector.shape_cast %698 : vector<16xf32> to vector<16x1xf32>
    %cst_186 = arith.constant dense<0.000000e+00> : vector<16x8xf32>
    %700 = tpu.matmul %654, %458, %cst_186 {dimension_numbers = #tpu.dot_dimension_numbers<[1], [0], [0], [1], [0, 0, 1, 1], [], []>} : vector<16x8xf32>, vector<8x8xf32>, vector<16x8xf32> -> vector<16x8xf32>
    %701 = arith.mulf %700, %696 : vector<16x8xf32>
    %cst_187 = arith.constant dense<0.000000e+00> : vector<16xf32>
    %702 = vector.multi_reduction <add>, %701, %cst_187 [1] : vector<16x8xf32> to vector<16xf32>
    %703 = vector.shape_cast %702 : vector<16xf32> to vector<16x1xf32>
    %704 = arith.addf %699, %703 : vector<16x1xf32>
    %705 = arith.mulf %704, %690 : vector<16x1xf32>
    %706 = arith.addf %664, %705 : vector<16x1xf32>
    %707 = vector.shape_cast %684 : vector<16x8xf32> to vector<16x1x8xf32>
    %708 = vector.broadcast %707 : vector<16x1x8xf32> to vector<16x8x8xf32>
    %709 = arith.addf %708, %462 : vector<16x8x8xf32>
    %710 = vector.shape_cast %688 : vector<16x8xf32> to vector<16x8x1xf32>
    %711 = vector.broadcast %710 : vector<16x8x1xf32> to vector<16x8x8xf32>
    %712 = arith.addf %709, %711 : vector<16x8x8xf32>
    %cst_188 = arith.constant dense<0xFF800000> : vector<16x8xf32>
    %713 = vector.multi_reduction <maximumf>, %712, %cst_188 [2] : vector<16x8x8xf32> to vector<16x8xf32>
    %714 = vector.shape_cast %713 : vector<16x8xf32> to vector<16x8x1xf32>
    %715 = vector.shape_cast %714 : vector<16x8x1xf32> to vector<16x8xf32>
    %716 = vector.broadcast %714 : vector<16x8x1xf32> to vector<16x8x8xf32>
    %717 = arith.subf %712, %716 : vector<16x8x8xf32>
    %718 = math.exp %717 : vector<16x8x8xf32>
    %cst_189 = arith.constant dense<0.000000e+00> : vector<16x8xf32>
    %719 = vector.multi_reduction <add>, %718, %cst_189 [2] : vector<16x8x8xf32> to vector<16x8xf32>
    %720 = math.log %719 : vector<16x8xf32>
    %721 = arith.addf %715, %720 : vector<16x8xf32>
    %cst_190 = arith.constant 5.000000e-01 : f32
    %722 = vector.broadcast %cst_190 : f32 to vector<16x1xf32>
    %723 = arith.cmpf ogt, %690, %722 : vector<16x1xf32>
    %724 = vector.shape_cast %723 : vector<16x1xi1> to vector<16x1xi1>
    %725 = vector.broadcast %724 : vector<16x1xi1> to vector<16x8xi1>
    %726 = arith.select %725, %721, %684 : vector<16x8xi1>, vector<16x8xf32>
    %c7_i32_191 = arith.constant 7 : i32
    %c16_i32_192 = arith.constant 16 : i32
    %727 = arith.muli %c7_i32_191, %c16_i32_192 : i32
    %728 = tpu.assume_multiple %727, 16 : i32
    %729 = arith.index_cast %728 : i32 to index
    %c0_193 = arith.constant 0 : index
    %730 = vector.load %arg14[%729, %c0_193] : memref<128x8xf32, #tpu.memory_space<vmem>>, vector<16x8xf32>
    %731 = arith.index_cast %728 : i32 to index
    %c0_194 = arith.constant 0 : index
    %732 = vector.load %arg2[%731, %c0_194] : memref<128x1xf32, #tpu.memory_space<vmem>>, vector<16x1xf32>
    %733 = arith.index_cast %728 : i32 to index
    %c0_195 = arith.constant 0 : index
    %734 = vector.load %arg3[%733, %c0_195] : memref<128x1xi32, #tpu.memory_space<vmem>>, vector<16x1xi32>
    %735 = vector.broadcast %734 : vector<16x1xi32> to vector<16x8xi32>
    %736 = arith.cmpi eq, %735, %463 : vector<16x8xi32>
    %737 = arith.extui %736 : vector<16x8xi1> to vector<16x8xi32>
    %738 = arith.sitofp %737 : vector<16x8xi32> to vector<16x8xf32>
    %739 = arith.mulf %730, %738 : vector<16x8xf32>
    %cst_196 = arith.constant dense<0.000000e+00> : vector<16xf32>
    %740 = vector.multi_reduction <add>, %739, %cst_196 [1] : vector<16x8xf32> to vector<16xf32>
    %741 = vector.shape_cast %740 : vector<16xf32> to vector<16x1xf32>
    %cst_197 = arith.constant dense<0.000000e+00> : vector<16x8xf32>
    %742 = tpu.matmul %696, %458, %cst_197 {dimension_numbers = #tpu.dot_dimension_numbers<[1], [0], [0], [1], [0, 0, 1, 1], [], []>} : vector<16x8xf32>, vector<8x8xf32>, vector<16x8xf32> -> vector<16x8xf32>
    %743 = arith.mulf %742, %738 : vector<16x8xf32>
    %cst_198 = arith.constant dense<0.000000e+00> : vector<16xf32>
    %744 = vector.multi_reduction <add>, %743, %cst_198 [1] : vector<16x8xf32> to vector<16xf32>
    %745 = vector.shape_cast %744 : vector<16xf32> to vector<16x1xf32>
    %746 = arith.addf %741, %745 : vector<16x1xf32>
    %747 = arith.mulf %746, %732 : vector<16x1xf32>
    %748 = arith.addf %706, %747 : vector<16x1xf32>
    %749 = vector.shape_cast %726 : vector<16x8xf32> to vector<16x1x8xf32>
    %750 = vector.broadcast %749 : vector<16x1x8xf32> to vector<16x8x8xf32>
    %751 = arith.addf %750, %462 : vector<16x8x8xf32>
    %752 = vector.shape_cast %730 : vector<16x8xf32> to vector<16x8x1xf32>
    %753 = vector.broadcast %752 : vector<16x8x1xf32> to vector<16x8x8xf32>
    %754 = arith.addf %751, %753 : vector<16x8x8xf32>
    %cst_199 = arith.constant dense<0xFF800000> : vector<16x8xf32>
    %755 = vector.multi_reduction <maximumf>, %754, %cst_199 [2] : vector<16x8x8xf32> to vector<16x8xf32>
    %756 = vector.shape_cast %755 : vector<16x8xf32> to vector<16x8x1xf32>
    %757 = vector.shape_cast %756 : vector<16x8x1xf32> to vector<16x8xf32>
    %758 = vector.broadcast %756 : vector<16x8x1xf32> to vector<16x8x8xf32>
    %759 = arith.subf %754, %758 : vector<16x8x8xf32>
    %760 = math.exp %759 : vector<16x8x8xf32>
    %cst_200 = arith.constant dense<0.000000e+00> : vector<16x8xf32>
    %761 = vector.multi_reduction <add>, %760, %cst_200 [2] : vector<16x8x8xf32> to vector<16x8xf32>
    %762 = math.log %761 : vector<16x8xf32>
    %763 = arith.addf %757, %762 : vector<16x8xf32>
    %cst_201 = arith.constant 5.000000e-01 : f32
    %764 = vector.broadcast %cst_201 : f32 to vector<16x1xf32>
    %765 = arith.cmpf ogt, %732, %764 : vector<16x1xf32>
    %766 = vector.shape_cast %765 : vector<16x1xi1> to vector<16x1xi1>
    %767 = vector.broadcast %766 : vector<16x1xi1> to vector<16x8xi1>
    %768 = arith.select %767, %763, %726 : vector<16x8xi1>, vector<16x8xf32>
    %c7_i32_202 = arith.constant 7 : i32
    %cst_203 = arith.constant dense<0xFF800000> : vector<16xf32>
    %769 = vector.multi_reduction <maximumf>, %768, %cst_203 [1] : vector<16x8xf32> to vector<16xf32>
    %770 = vector.shape_cast %769 : vector<16xf32> to vector<16x1xf32>
    %771 = vector.broadcast %770 : vector<16x1xf32> to vector<16x8xf32>
    %772 = arith.subf %768, %771 : vector<16x8xf32>
    %773 = math.exp %772 : vector<16x8xf32>
    %cst_204 = arith.constant dense<0.000000e+00> : vector<16xf32>
    %774 = vector.multi_reduction <add>, %773, %cst_204 [1] : vector<16x8xf32> to vector<16xf32>
    %775 = vector.shape_cast %774 : vector<16xf32> to vector<16x1xf32>
    %776 = math.log %775 : vector<16x1xf32>
    %777 = arith.addf %770, %776 : vector<16x1xf32>
    %778 = arith.subf %777, %748 : vector<16x1xf32>
    %c0_205 = arith.constant 0 : index
    %c0_206 = arith.constant 0 : index
    %779 = vector.load %arg11[%c0_205, %c0_206] : memref<16x1xf32, #tpu.memory_space<vmem>>, vector<16x1xf32>
    tpu.vector_store %arg11[%c0_205, %c0_206], %778 {strides = array<i32>} : memref<16x1xf32, #tpu.memory_space<vmem>>, vector<16x1xf32>,
    return
  }
  func.func @transform_0(%arg0: i32) -> (i32, i32) {
    %c0_i32 = arith.constant 0 : i32
    %c0_i32_0 = arith.constant 0 : i32
    return %arg0, %c0_i32 : i32, i32
  }
  func.func @transform_1(%arg0: i32) -> (i32, i32) {
    %c0_i32 = arith.constant 0 : i32
    %c0_i32_0 = arith.constant 0 : i32
    return %arg0, %c0_i32 : i32, i32
  }
  func.func @transform_2(%arg0: i32) -> (i32, i32) {
    %c0_i32 = arith.constant 0 : i32
    %c0_i32_0 = arith.constant 0 : i32
    return %arg0, %c0_i32 : i32, i32
  }
  func.func @transform_3(%arg0: i32) -> (i32, i32) {
    %c0_i32 = arith.constant 0 : i32
    %c0_i32_0 = arith.constant 0 : i32
    %c0_i32_1 = arith.constant 0 : i32
    return %c0_i32, %c0_i32_0 : i32, i32
  }
  func.func @transform_4(%arg0: i32) -> (i32, i32) {
    %c0_i32 = arith.constant 0 : i32
    %c0_i32_0 = arith.constant 0 : i32
    %c0_i32_1 = arith.constant 0 : i32
    return %c0_i32, %c0_i32_0 : i32, i32
  }
  func.func @transform_5(%arg0: i32) -> (i32, i32) {
    %c0_i32 = arith.constant 0 : i32
    %c0_i32_0 = arith.constant 0 : i32
    %c0_i32_1 = arith.constant 0 : i32
    return %c0_i32, %c0_i32_0 : i32, i32
  }
  func.func @transform_6(%arg0: i32) -> (i32, i32) {
    %c0_i32 = arith.constant 0 : i32
    %c0_i32_0 = arith.constant 0 : i32
    %c0_i32_1 = arith.constant 0 : i32
    return %c0_i32, %c0_i32_0 : i32, i32
  }
  func.func @transform_7(%arg0: i32) -> (i32, i32) {
    %c0_i32 = arith.constant 0 : i32
    %c0_i32_0 = arith.constant 0 : i32
    %c0_i32_1 = arith.constant 0 : i32
    return %c0_i32, %c0_i32_0 : i32, i32
  }
  func.func @transform_8(%arg0: i32) -> (i32, i32) {
    %c0_i32 = arith.constant 0 : i32
    %c0_i32_0 = arith.constant 0 : i32
    %c0_i32_1 = arith.constant 0 : i32
    return %c0_i32, %c0_i32_0 : i32, i32
  }
  func.func @transform_9(%arg0: i32) -> (i32, i32) {
    %c0_i32 = arith.constant 0 : i32
    %c0_i32_0 = arith.constant 0 : i32
    %c0_i32_1 = arith.constant 0 : i32
    return %c0_i32, %c0_i32_0 : i32, i32
  }
  func.func @transform_10(%arg0: i32) -> (i32, i32) {
    %c0_i32 = arith.constant 0 : i32
    %c0_i32_0 = arith.constant 0 : i32
    return %arg0, %c0_i32 : i32, i32
  }
}

</mosaic_0001>

<llo_original>
// kernel: tpu_custom_call.1
$region0: #{tpu_custom_call.1}
  #allocation0 [shape = 'u32[]', space=smem, size = 0x4, offset = 0x4, fixed_abs, tag = 'smem constant byte address 0x4 - core index']
  #allocation1 [shape = 'u32[144,128]{1,0:T(1,128)}', space=vmem, size = 0x12000, scoped, tag = 'internal scratch']
  #allocation2 [shape = 'bf16[128,256]{1,0:T(16,128)(2,1)}', space=vmem, size = 0x10000, scoped, tag = 'scratch operand']
  #allocation3 [shape = 'bf16[128,64]{1,0:T(16,128)(2,1)}', space=vmem, size = 0x8000, scoped, tag = 'scratch operand']
  #allocation4 [shape = 'f32[128,8]{1,0:T(8,128)}', space=vmem, size = 0x10000, scoped, tag = 'scratch operand']
  %s0 = inlined_call_operand.vmem [shape: bf16[128,32], index: 0, kind: input, shape index: {}]
  %s1 = inlined_call_operand.vmem [shape: f32[128,1], index: 1, kind: input, shape index: {}]
  %s2 = inlined_call_operand.vmem [shape: s32[128,1], index: 2, kind: input, shape index: {}]
  %s3 = inlined_call_operand.vmem [shape: bf16[32,256], index: 3, kind: input, shape index: {}]
  %s4 = inlined_call_operand.vmem [shape: bf16[32,256], index: 4, kind: input, shape index: {}]
  %s5 = inlined_call_operand.vmem [shape: f32[1,256], index: 5, kind: input, shape index: {}]
  %s6 = inlined_call_operand.vmem [shape: bf16[64,8], index: 6, kind: input, shape index: {}]
  %s7 = inlined_call_operand.vmem [shape: f32[1,8], index: 7, kind: input, shape index: {}]
  %s8 = inlined_call_operand.vmem [shape: f32[8,8], index: 8, kind: input, shape index: {}]
  %s9 = inlined_call_operand.vmem [shape: f32[8,8], index: 9, kind: input, shape index: {}]
  %s10 = inlined_call_operand.vmem [shape: f32[16,1], index: 10, kind: output, shape index: {}]
  %s11 = sld [smem:[#allocation0]]
  $region50: #{tpu_custom_call.1} parent=0
    _
  %s13 = ssub.s32 1, %s11
  %s14 = scalar_select 0, %s13, %s11
  // Predicated region
  $region2: #{tpu_custom_call.1} parent=0 // pred_check
    _
  $region3: #{tpu_custom_call.1} parent=0 // pred_check_branch
    %16 = sbr.rel (0) target = $region5
  $region4: #{tpu_custom_call.1} parent=0 // pred_region
    _
  $region5: #{tpu_custom_call.1} parent=0 // pred_fallthru
    _
  // Predicated region
  $region6: #{tpu_custom_call.1} parent=0 // pred_check
    _
  $region7: #{tpu_custom_call.1} parent=0 // pred_check_branch
    %18 = sbr.rel (0) target = $region9
  $region8: #{tpu_custom_call.1} parent=0 // pred_region
    _
  $region9: #{tpu_custom_call.1} parent=0 // pred_fallthru
    _
  // Predicated region
  $region10: #{tpu_custom_call.1} parent=0 // pred_check
    _
  $region11: #{tpu_custom_call.1} parent=0 // pred_check_branch
    %20 = sbr.rel (0) target = $region13
  $region12: #{tpu_custom_call.1} parent=0 // pred_region
    _
  $region13: #{tpu_custom_call.1} parent=0 // pred_fallthru
    _
  // Predicated region
  $region14: #{tpu_custom_call.1} parent=0 // pred_check
    _
  $region15: #{tpu_custom_call.1} parent=0 // pred_check_branch
    %22 = sbr.rel (0) target = $region17
  $region16: #{tpu_custom_call.1} parent=0 // pred_region
    _
  $region17: #{tpu_custom_call.1} parent=0 // pred_fallthru
    _
  // Predicated region
  $region18: #{tpu_custom_call.1} parent=0 // pred_check
    _
  $region19: #{tpu_custom_call.1} parent=0 // pred_check_branch
    %24 = sbr.rel (0) target = $region21
  $region20: #{tpu_custom_call.1} parent=0 // pred_region
    _
  $region21: #{tpu_custom_call.1} parent=0 // pred_fallthru
    _
  // Predicated region
  $region22: #{tpu_custom_call.1} parent=0 // pred_check
    _
  $region23: #{tpu_custom_call.1} parent=0 // pred_check_branch
    %26 = sbr.rel (0) target = $region25
  $region24: #{tpu_custom_call.1} parent=0 // pred_region
    _
  $region25: #{tpu_custom_call.1} parent=0 // pred_fallthru
    _
  // Predicated region
  $region26: #{tpu_custom_call.1} parent=0 // pred_check
    _
  $region27: #{tpu_custom_call.1} parent=0 // pred_check_branch
    %28 = sbr.rel (0) target = $region29
  $region28: #{tpu_custom_call.1} parent=0 // pred_region
    _
  $region29: #{tpu_custom_call.1} parent=0 // pred_fallthru
    _
  // Predicated region
  $region30: #{tpu_custom_call.1} parent=0 // pred_check
    _
  $region31: #{tpu_custom_call.1} parent=0 // pred_check_branch
    %30 = sbr.rel (0) target = $region33
  $region32: #{tpu_custom_call.1} parent=0 // pred_region
    _
  $region33: #{tpu_custom_call.1} parent=0 // pred_fallthru
    _
  // Predicated region
  $region34: #{tpu_custom_call.1} parent=0 // pred_check
    _
  $region35: #{tpu_custom_call.1} parent=0 // pred_check_branch
    %32 = sbr.rel (0) target = $region37
  $region36: #{tpu_custom_call.1} parent=0 // pred_region
    _
  $region37: #{tpu_custom_call.1} parent=0 // pred_fallthru
    _
  // Predicated region
  $region38: #{tpu_custom_call.1} parent=0 // pred_check
    _
  $region39: #{tpu_custom_call.1} parent=0 // pred_check_branch
    %34 = sbr.rel (0) target = $region41
  $region40: #{tpu_custom_call.1} parent=0 // pred_region
    _
  $region41: #{tpu_custom_call.1} parent=0 // pred_fallthru
    _
  %v36 = vld [vmem:[%s0] sm:$0xf]
  %v37 = vld [vmem:[%s0 + $0x4] sm:$0xf]
  %v38 = vld [vmem:[%s0 + $0x8] sm:$0xf]
  %v39 = vld [vmem:[%s0 + $0xc] sm:$0xf]
  %v40 = vld [vmem:[%s0 + $0x10] sm:$0xf]
  %v41 = vld [vmem:[%s0 + $0x14] sm:$0xf]
  %v42 = vld [vmem:[%s0 + $0x18] sm:$0xf]
  %v43 = vld [vmem:[%s0 + $0x1c] sm:$0xf]
  %v44 = vld [vmem:[%s0 + $0x20] sm:$0xf]
  %v45 = vld [vmem:[%s0 + $0x24] sm:$0xf]
  %v46 = vld [vmem:[%s0 + $0x28] sm:$0xf]
  %v47 = vld [vmem:[%s0 + $0x2c] sm:$0xf]
  %v48 = vld [vmem:[%s0 + $0x30] sm:$0xf]
  %v49 = vld [vmem:[%s0 + $0x34] sm:$0xf]
  %v50 = vld [vmem:[%s0 + $0x38] sm:$0xf]
  %v51 = vld [vmem:[%s0 + $0x3c] sm:$0xf]
  %v52 = vld [vmem:[%s3] sm:$0xff]
  %v53 = vld [vmem:[%s3 + $0x8] sm:$0xff]
  %v54 = vld [vmem:[%s3 + $0x10] sm:$0xff]
  %v55 = vld [vmem:[%s3 + $0x18] sm:$0xff]
  %v56 = vld [vmem:[%s5] sm:$0x3]
  %v58 = vlaneseq
  %v59 = vshrl.u32 %v58, 7
  %v60 = vsub.s32 0, %v59
  %v61 = vrot.slane %v56, %v60
  %v62 = vlaneseq
  %v63 = vshrl.u32 %v62, 7
  %v64 = vsub.s32 1, %v63
  %v65 = vrot.slane %v56, %v64
  %v84 = vunpack.c.l.b16 %v36
  %v85 = vunpack.c.l.b16 %v37
  %v86 = vunpack.c.l.b16 %v38
  %v87 = vunpack.c.l.b16 %v39
  %v88 = vunpack.c.l.b16 %v40
  %v89 = vunpack.c.l.b16 %v41
  %v90 = vunpack.c.l.b16 %v42
  %v91 = vunpack.c.l.b16 %v43
  %v92 = vunpack.c.l.b16 %v44
  %v93 = vunpack.c.l.b16 %v45
  %v94 = vunpack.c.l.b16 %v46
  %v95 = vunpack.c.l.b16 %v47
  %v96 = vunpack.c.l.b16 %v48
  %v97 = vunpack.c.l.b16 %v49
  %v98 = vunpack.c.l.b16 %v50
  %v99 = vunpack.c.l.b16 %v51
  %v100 = vpack.c.b16 %v85, %v84
  %v101 = vpack.c.b16 %v87, %v86
  %v102 = vpack.c.b16 %v89, %v88
  %v103 = vpack.c.b16 %v91, %v90
  %v104 = vpack.c.b16 %v93, %v92
  %v105 = vpack.c.b16 %v95, %v94
  %v106 = vpack.c.b16 %v97, %v96
  %v107 = vpack.c.b16 %v99, %v98
  %v112 = vunpack.c.l.b16 %v52
  %v113 = vunpack.c.h.b16 %v52
  %v114 = vunpack.c.l.b16 %v53
  %v115 = vunpack.c.h.b16 %v53
  %v116 = vunpack.c.l.b16 %v54
  %v117 = vunpack.c.h.b16 %v54
  %v118 = vunpack.c.l.b16 %v55
  %v119 = vunpack.c.h.b16 %v55
  %v120 = vpack.c.b16 %v114, %v112
  %v121 = vpack.c.b16 %v115, %v113
  %v122 = vpack.c.b16 %v118, %v116
  %v123 = vpack.c.b16 %v119, %v117
  %vm128 = vcmask 261120
  %v130 = vsel %vm128, %v100, 0
  %v133 = vsel %vm128, %v101, 0
  %v136 = vsel %vm128, %v102, 0
  %v139 = vsel %vm128, %v103, 0
  %v142 = vsel %vm128, %v104, 0
  %v145 = vsel %vm128, %v105, 0
  %v148 = vsel %vm128, %v106, 0
  %v151 = vsel %vm128, %v107, 0
  %153 = vmatprep.subr.bf16.mxu0 %v121
  %154 = vmatpush1.bf16.msra.mxu0 %v120
  %155 = vmatprep.subr.bf16.mxu0 %v123
  %156 = vmatpush1.bf16.msra.mxu0 %v122
  %157 = vmatprep.subr.bf16.mxu0 0
  %158 = vmatpush1.bf16.msra.mxu0 0
  %159 = vmatprep.subr.bf16.mxu0 0
  %160 = vmatpush1.bf16.msra.mxu0 0
  %161 = vmatprep.subr.bf16.mxu0 0
  %162 = vmatpush1.bf16.msra.mxu0 0
  %163 = vmatprep.subr.bf16.mxu0 0
  %164 = vmatpush1.bf16.msra.mxu0 0
  %165 = vmatprep.subr.bf16.mxu0 0
  %166 = vmatpush1.bf16.msra.mxu0 0
  %167 = vmatprep.subr.bf16.mxu0 0
  %168 = vmatpush1.bf16.msra.mxu0 0
  %169 = vmatprep.subr.bf16.mxu0 0
  %170 = vmatpush1.bf16.msra.mxu0 0
  %171 = vmatprep.subr.bf16.mxu0 0
  %172 = vmatpush1.bf16.msra.mxu0 0
  %173 = vmatprep.subr.bf16.mxu0 0
  %174 = vmatpush1.bf16.msra.mxu0 0
  %175 = vmatprep.subr.bf16.mxu0 0
  %176 = vmatpush1.bf16.msra.mxu0 0
  %177 = vmatprep.subr.bf16.mxu0 0
  %178 = vmatpush1.bf16.msra.mxu0 0
  %179 = vmatprep.subr.bf16.mxu0 0
  %180 = vmatpush1.bf16.msra.mxu0 0
  %181 = vmatprep.subr.bf16.mxu0 0
  %182 = vmatpush1.bf16.msra.mxu0 0
  %183 = vmatprep.subr.bf16.mxu0 0
  %184 = vmatpush1.bf16.msra.mxu0 0
  %185 = vmatprep.mubr.bf16.mxu0 0
  %186 = vmatmul.mubr.bf16.gmra.mrb[0].mxu0 %v130
  %v187 = vpop.f32.mrb[0].mxu0
  %v188 = vadd.f32 %v61, %v187
  %v189 = vpop.f32.mrb[0].mxu0
  %v190 = vadd.f32 %v65, %v189
  %v191 = vpop.f32.mrb[0].mxu0
  %v192 = vadd.f32 %v61, %v191
  %v193 = vpop.f32.mrb[0].mxu0
  %v194 = vadd.f32 %v65, %v193
  %195 = vmatprep.mubr.bf16.mxu0 0
  %196 = vmatmul.mubr.bf16.gmra.mrb[0].mxu0 %v133
  %v197 = vpop.f32.mrb[0].mxu0
  %v198 = vadd.f32 %v61, %v197
  %v199 = vpop.f32.mrb[0].mxu0
  %v200 = vadd.f32 %v65, %v199
  %v201 = vpop.f32.mrb[0].mxu0
  %v202 = vadd.f32 %v61, %v201
  %v203 = vpop.f32.mrb[0].mxu0
  %v204 = vadd.f32 %v65, %v203
  %205 = vmatprep.mubr.bf16.mxu0 0
  %206 = vmatmul.mubr.bf16.gmra.mrb[0].mxu0 %v136
  %v207 = vpop.f32.mrb[0].mxu0
  %v208 = vadd.f32 %v61, %v207
  %v209 = vpop.f32.mrb[0].mxu0
  %v210 = vadd.f32 %v65, %v209
  %v211 = vpop.f32.mrb[0].mxu0
  %v212 = vadd.f32 %v61, %v211
  %v213 = vpop.f32.mrb[0].mxu0
  %v214 = vadd.f32 %v65, %v213
  %215 = vmatprep.mubr.bf16.mxu0 0
  %216 = vmatmul.mubr.bf16.gmra.mrb[0].mxu0 %v139
  %v217 = vpop.f32.mrb[0].mxu0
  %v218 = vadd.f32 %v61, %v217
  %v219 = vpop.f32.mrb[0].mxu0
  %v220 = vadd.f32 %v65, %v219
  %v221 = vpop.f32.mrb[0].mxu0
  %v222 = vadd.f32 %v61, %v221
  %v223 = vpop.f32.mrb[0].mxu0
  %v224 = vadd.f32 %v65, %v223
  %225 = vmatprep.mubr.bf16.mxu0 0
  %226 = vmatmul.mubr.bf16.gmra.mrb[0].mxu0 %v142
  %v227 = vpop.f32.mrb[0].mxu0
  %v228 = vadd.f32 %v61, %v227
  %v229 = vpop.f32.mrb[0].mxu0
  %v230 = vadd.f32 %v65, %v229
  %v231 = vpop.f32.mrb[0].mxu0
  %v232 = vadd.f32 %v61, %v231
  %v233 = vpop.f32.mrb[0].mxu0
  %v234 = vadd.f32 %v65, %v233
  %235 = vmatprep.mubr.bf16.mxu0 0
  %236 = vmatmul.mubr.bf16.gmra.mrb[0].mxu0 %v145
  %v237 = vpop.f32.mrb[0].mxu0
  %v238 = vadd.f32 %v61, %v237
  %v239 = vpop.f32.mrb[0].mxu0
  %v240 = vadd.f32 %v65, %v239
  %v241 = vpop.f32.mrb[0].mxu0
  %v242 = vadd.f32 %v61, %v241
  %v243 = vpop.f32.mrb[0].mxu0
  %v244 = vadd.f32 %v65, %v243
  %245 = vmatprep.mubr.bf16.mxu0 0
  %246 = vmatmul.mubr.bf16.gmra.mrb[0].mxu0 %v148
  %v247 = vpop.f32.mrb[0].mxu0
  %v248 = vadd.f32 %v61, %v247
  %v249 = vpop.f32.mrb[0].mxu0
  %v250 = vadd.f32 %v65, %v249
  %v251 = vpop.f32.mrb[0].mxu0
  %v252 = vadd.f32 %v61, %v251
  %v253 = vpop.f32.mrb[0].mxu0
  %v254 = vadd.f32 %v65, %v253
  %255 = vmatprep.mubr.bf16.mxu0 0
  %256 = vmatmul.mubr.bf16.gmra.mrb[0].mxu0 %v151
  %v257 = vpop.f32.mrb[0].mxu0
  %v258 = vadd.f32 %v61, %v257
  %v259 = vpop.f32.mrb[0].mxu0
  %v260 = vadd.f32 %v65, %v259
  %v261 = vpop.f32.mrb[0].mxu0
  %v262 = vadd.f32 %v61, %v261
  %v263 = vpop.f32.mrb[0].mxu0
  %v264 = vadd.f32 %v65, %v263
  %265 = vdwg.mxu0
  %v266 = vpack.c.bf16 %v192, %v188
  %v267 = vpack.c.bf16 %v194, %v190
  %v268 = vpack.c.bf16 %v202, %v198
  %v269 = vpack.c.bf16 %v204, %v200
  %v270 = vpack.c.bf16 %v212, %v208
  %v271 = vpack.c.bf16 %v214, %v210
  %v272 = vpack.c.bf16 %v222, %v218
  %v273 = vpack.c.bf16 %v224, %v220
  %v274 = vpack.c.bf16 %v232, %v228
  %v275 = vpack.c.bf16 %v234, %v230
  %v276 = vpack.c.bf16 %v242, %v238
  %v277 = vpack.c.bf16 %v244, %v240
  %v278 = vpack.c.bf16 %v252, %v248
  %v279 = vpack.c.bf16 %v254, %v250
  %v280 = vpack.c.bf16 %v262, %v258
  %v281 = vpack.c.bf16 %v264, %v260
  %282 = vst [vmem:[#allocation2] sm:$0xff] %v266
  %283 = vst [vmem:[#allocation2 + $0x8] sm:$0xff] %v267
  %284 = vst [vmem:[#allocation2 + $0x10] sm:$0xff] %v268
  %285 = vst [vmem:[#allocation2 + $0x18] sm:$0xff] %v269
  %286 = vst [vmem:[#allocation2 + $0x20] sm:$0xff] %v270
  %287 = vst [vmem:[#allocation2 + $0x28] sm:$0xff] %v271
  %288 = vst [vmem:[#allocation2 + $0x30] sm:$0xff] %v272
  %289 = vst [vmem:[#allocation2 + $0x38] sm:$0xff] %v273
  %290 = vst [vmem:[#allocation2 + $0x40] sm:$0xff] %v274
  %291 = vst [vmem:[#allocation2 + $0x48] sm:$0xff] %v275
  %292 = vst [vmem:[#allocation2 + $0x50] sm:$0xff] %v276
  %293 = vst [vmem:[#allocation2 + $0x58] sm:$0xff] %v277
  %294 = vst [vmem:[#allocation2 + $0x60] sm:$0xff] %v278
  %295 = vst [vmem:[#allocation2 + $0x68] sm:$0xff] %v279
  %296 = vst [vmem:[#allocation2 + $0x70] sm:$0xff] %v280
  %297 = vst [vmem:[#allocation2 + $0x78] sm:$0xff] %v281
  %v298 = vld [vmem:[%s4] sm:$0xff]
  %v299 = vld [vmem:[%s4 + $0x8] sm:$0xff]
  %v300 = vld [vmem:[%s4 + $0x10] sm:$0xff]
  %v301 = vld [vmem:[%s4 + $0x18] sm:$0xff]
  %s302 = smul.u32 0, 2
  %s303 = smul.addr %s302, 8
  %s304 = scalar_lea.vmem [#allocation2], %s303
  %v305 = vld [vmem:[%s304] sm:$0xff]
  %s306 = smul.u32 7, 2
  %s307 = smul.addr %s306, 8
  %s308 = scalar_lea.vmem [#allocation2], %s307
  %v309 = vld [vmem:[%s308 + $0x8] sm:$0xff]
  %v310 = vld [vmem:[%s1] sm:$0xff]
  %v311 = vld [vmem:[%s1 + $0x8] sm:$0xff]
  %s312 = scalar_lea.vmem %s1, 112
  %v313 = vld [vmem:[%s312] sm:$0xff]
  %v314 = vld [vmem:[%s312 + $0x8] sm:$0xff]
  %vm315 = vcmp.gt.f32.partialorder %v310, 0.5
  %vm316 = vcmp.gt.f32.partialorder %v311, 0.5
  %vm317 = vcmp.gt.f32.partialorder %v313, 0.5
  %vm318 = vcmp.gt.f32.partialorder %v314, 0.5
  %v323 = vunpack.c.l.b16 %v298
  %v324 = vunpack.c.h.b16 %v298
  %v325 = vunpack.c.l.b16 %v299
  %v326 = vunpack.c.h.b16 %v299
  %v327 = vunpack.c.l.b16 %v300
  %v328 = vunpack.c.h.b16 %v300
  %v329 = vunpack.c.l.b16 %v301
  %v330 = vunpack.c.h.b16 %v301
  %v331 = vpack.c.b16 %v325, %v323
  %v332 = vpack.c.b16 %v326, %v324
  %v333 = vpack.c.b16 %v329, %v327
  %v334 = vpack.c.b16 %v330, %v328
  %v340 = vsel %vm128, 0, 0
  %342 = vmatprep.subr.bf16.mxu0 %v332
  %343 = vmatpush1.bf16.msra.mxu0 %v331
  %344 = vmatprep.subr.bf16.mxu0 %v334
  %345 = vmatpush1.bf16.msra.mxu0 %v333
  %346 = vmatprep.subr.bf16.mxu0 0
  %347 = vmatpush1.bf16.msra.mxu0 0
  %348 = vmatprep.subr.bf16.mxu0 0
  %349 = vmatpush1.bf16.msra.mxu0 0
  %350 = vmatprep.subr.bf16.mxu0 0
  %351 = vmatpush1.bf16.msra.mxu0 0
  %352 = vmatprep.subr.bf16.mxu0 0
  %353 = vmatpush1.bf16.msra.mxu0 0
  %354 = vmatprep.subr.bf16.mxu0 0
  %355 = vmatpush1.bf16.msra.mxu0 0
  %356 = vmatprep.subr.bf16.mxu0 0
  %357 = vmatpush1.bf16.msra.mxu0 0
  %358 = vmatprep.subr.bf16.mxu0 0
  %359 = vmatpush1.bf16.msra.mxu0 0
  %360 = vmatprep.subr.bf16.mxu0 0
  %361 = vmatpush1.bf16.msra.mxu0 0
  %362 = vmatprep.subr.bf16.mxu0 0
  %363 = vmatpush1.bf16.msra.mxu0 0
  %364 = vmatprep.subr.bf16.mxu0 0
  %365 = vmatpush1.bf16.msra.mxu0 0
  %366 = vmatprep.subr.bf16.mxu0 0
  %367 = vmatpush1.bf16.msra.mxu0 0
  %368 = vmatprep.subr.bf16.mxu0 0
  %369 = vmatpush1.bf16.msra.mxu0 0
  %370 = vmatprep.subr.bf16.mxu0 0
  %371 = vmatpush1.bf16.msra.mxu0 0
  %372 = vmatprep.subr.bf16.mxu0 0
  %373 = vmatpush1.bf16.msra.mxu0 0
  %374 = vmatprep.mubr.bf16.mxu0 0
  %375 = vmatmul.mubr.bf16.gmra.mrb[0].mxu0 %v340
  %v376 = vpop.f32.mrb[0].mxu0
  %v377 = vadd.f32 0.0, %v376
  %v378 = vpop.f32.mrb[0].mxu0
  %v379 = vpop.f32.mrb[0].mxu0
  %v380 = vadd.f32 0.0, %v379
  %v381 = vpop.f32.mrb[0].mxu0
  %382 = vmatprep.mubr.bf16.mxu0 0
  %383 = vmatmul.mubr.bf16.gmra.mrb[0].mxu0 %v340
  %v384 = vpop.f32.mrb[0].mxu0
  %v385 = vpop.f32.mrb[0].mxu0
  %v386 = vadd.f32 0.0, %v385
  %v387 = vpop.f32.mrb[0].mxu0
  %v388 = vpop.f32.mrb[0].mxu0
  %v389 = vadd.f32 0.0, %v388
  %390 = vdwg.mxu0
  %v391 = vunpack.c.l.bf16 %v305
  %v392 = vunpack.c.h.bf16 %v305
  %v393 = vadd.f32 %v377, %v391
  %v394 = vadd.f32 %v380, %v392
  %v395 = vunpack.c.l.bf16 %v309
  %v396 = vunpack.c.h.bf16 %v309
  %v397 = vadd.f32 %v386, %v395
  %v398 = vadd.f32 %v389, %v396
  %v399 = vxor.u32 %v393, 2147483648
  %v400 = vxor.u32 %v394, 2147483648
  %v401 = vxor.u32 %v397, 2147483648
  %v402 = vxor.u32 %v398, 2147483648
  %v403 = vmul.f32 %v399, 1.442695
  %v404 = vpow.pop %v403
  %v405 = vmul.f32 %v400, 1.442695
  %v406 = vpow.pop %v405
  %v407 = vmul.f32 %v401, 1.442695
  %v408 = vpow.pop %v407
  %v409 = vmul.f32 %v402, 1.442695
  %v410 = vpow.pop %v409
  %v411 = vadd.f32 %v404, 1.0
  %v412 = vadd.f32 %v406, 1.0
  %v413 = vadd.f32 %v408, 1.0
  %v414 = vadd.f32 %v410, 1.0
  %v415 = vrcp.pop %v411
  %v416 = vmul.f32 1.0, %v415
  %v417 = vrcp.pop %v412
  %v418 = vmul.f32 1.0, %v417
  %v419 = vrcp.pop %v413
  %v420 = vmul.f32 1.0, %v419
  %v421 = vrcp.pop %v414
  %v422 = vmul.f32 1.0, %v421
  %v423 = vtanh.pop %v393
  %v424 = vtanh.pop %v394
  %v425 = vtanh.pop %v397
  %v426 = vtanh.pop %v398
  %v427 = vmul.f32 %v416, 0.0
  %v428 = vmul.f32 %v418, 0.0
  %v429 = vmul.f32 %v420, 0.0
  %v430 = vmul.f32 %v422, 0.0
  %435 = vrot.lane.b32.xlu0 %v423, 64
  %v436 = vpop.permute.xlu0 %435
  %437 = vrot.lane.b32.xlu0 %v424, 64
  %v438 = vpop.permute.xlu0 %437
  %439 = vrot.lane.b32.xlu0 %v425, 64
  %v440 = vpop.permute.xlu0 %439
  %441 = vrot.lane.b32.xlu0 %v426, 64
  %v442 = vpop.permute.xlu0 %441
  %v447 = vmul.f32 %v416, %v436
  %v448 = vmul.f32 %v418, %v438
  %v449 = vmul.f32 %v420, %v440
  %v450 = vmul.f32 %v422, %v442
  %455 = vrot.lane.b32.xlu0 %v447, 32
  %v456 = vpop.permute.xlu0 %455
  %457 = vrot.lane.b32.xlu0 %v448, 32
  %v458 = vpop.permute.xlu0 %457
  %459 = vrot.lane.b32.xlu0 %v449, 32
  %v460 = vpop.permute.xlu0 %459
  %461 = vrot.lane.b32.xlu0 %v450, 32
  %v462 = vpop.permute.xlu0 %461
  %v467 = vadd.f32 %v427, %v456
  %v468 = vadd.f32 %v428, %v458
  %v469 = vadd.f32 %v429, %v460
  %v470 = vadd.f32 %v430, %v462
  %v471 = vtanh.pop %v467
  %v472 = vtanh.pop %v468
  %v473 = vtanh.pop %v469
  %v474 = vtanh.pop %v470
  %479 = vrot.lane.b32.xlu0 %v471, 64
  %v480 = vpop.permute.xlu0 %479
  %481 = vrot.lane.b32.xlu0 %v472, 64
  %v482 = vpop.permute.xlu0 %481
  %483 = vrot.lane.b32.xlu0 %v473, 64
  %v484 = vpop.permute.xlu0 %483
  %485 = vrot.lane.b32.xlu0 %v474, 64
  %v486 = vpop.permute.xlu0 %485
  %v491 = vmul.f32 %v416, %v480
  %v492 = vmul.f32 %v418, %v482
  %v493 = vmul.f32 %v420, %v484
  %v494 = vmul.f32 %v422, %v486
  %v495 = vsel %vm315, 1, 0
  %v496 = vsel %vm316, 1, 0
  %v497 = vsel %vm317, 1, 0
  %v498 = vsel %vm318, 1, 0
  %499 = vset.pattern.permute.xlu0 0
  %500 = vperm.xlu0 %499, %v495
  %v501 = vpop.permute.xlu0 %500
  %502 = vset.pattern.permute.xlu0 0
  %503 = vperm.xlu0 %502, %v496
  %v504 = vpop.permute.xlu0 %503
  %505 = vset.pattern.permute.xlu0 0
  %506 = vperm.xlu0 %505, %v497
  %v507 = vpop.permute.xlu0 %506
  %508 = vset.pattern.permute.xlu0 0
  %509 = vperm.xlu0 %508, %v498
  %v510 = vpop.permute.xlu0 %509
  %vm511 = vcmp.eq.s32.totalorder %v501, 1
  %vm512 = vcmp.eq.s32.totalorder %v504, 1
  %vm513 = vcmp.eq.s32.totalorder %v507, 1
  %vm514 = vcmp.eq.s32.totalorder %v510, 1
  %v515 = vsel %vm511, %v467, 0.0
  %v516 = vsel %vm512, %v468, 0.0
  %v517 = vsel %vm513, %v469, 0.0
  %v518 = vsel %vm514, %v470, 0.0
  %v519 = vsel %vm511, %v491, 0.0
  %v520 = vsel %vm512, %v492, 0.0
  %v521 = vsel %vm513, %v493, 0.0
  %v522 = vsel %vm514, %v494, 0.0
  %v523 = vpack.c.bf16 %v520, %v519
  %v524 = vpack.c.bf16 %v522, %v521
  %526 = vrot.lane.b32.xlu0 %v523, 32
  %v527 = vpop.permute.xlu0 %526
  %529 = vst.msk [vmem:[#allocation3] sm:$0xff] %vm128, %v527
  %531 = vrot.lane.b32.xlu0 %v524, 64
  %v532 = vpop.permute.xlu0 %531
  %s534 = scalar_lea.vmem [#allocation3], 56
  %vm535 = vcmask 523520
  %536 = vst.msk [vmem:[%s534] sm:$0xff] %vm535, %v532
  %s537 = smul.u32 1, 2
  %s538 = smul.addr %s537, 8
  %s539 = scalar_lea.vmem [#allocation2], %s538
  %v540 = vld [vmem:[%s539] sm:$0xff]
  %s541 = smul.u32 6, 2
  %s542 = smul.addr %s541, 8
  %s543 = scalar_lea.vmem [#allocation2], %s542
  %v544 = vld [vmem:[%s543 + $0x8] sm:$0xff]
  %s545 = scalar_lea.vmem %s1, 16
  %v546 = vld [vmem:[%s545] sm:$0xff]
  %v547 = vld [vmem:[%s545 + $0x8] sm:$0xff]
  %s548 = scalar_lea.vmem %s1, 96
  %v549 = vld [vmem:[%s548] sm:$0xff]
  %v550 = vld [vmem:[%s548 + $0x8] sm:$0xff]
  %vm551 = vcmp.gt.f32.partialorder %v546, 0.5
  %vm552 = vcmp.gt.f32.partialorder %v547, 0.5
  %vm553 = vcmp.gt.f32.partialorder %v549, 0.5
  %vm554 = vcmp.gt.f32.partialorder %v550, 0.5
  %555 = vrot.lane.b32.xlu0 %v524, 32
  %v556 = vpop.permute.xlu0 %555
  %v558 = vsel %vm128, %v527, 0
  %v561 = vsel %vm128, %v556, 0
  %563 = vmatprep.subr.bf16.mxu0 %v332
  %564 = vmatpush1.bf16.msra.mxu0 %v331
  %565 = vmatprep.subr.bf16.mxu0 %v334
  %566 = vmatpush1.bf16.msra.mxu0 %v333
  %567 = vmatprep.subr.bf16.mxu0 0
  %568 = vmatpush1.bf16.msra.mxu0 0
  %569 = vmatprep.subr.bf16.mxu0 0
  %570 = vmatpush1.bf16.msra.mxu0 0
  %571 = vmatprep.subr.bf16.mxu0 0
  %572 = vmatpush1.bf16.msra.mxu0 0
  %573 = vmatprep.subr.bf16.mxu0 0
  %574 = vmatpush1.bf16.msra.mxu0 0
  %575 = vmatprep.subr.bf16.mxu0 0
  %576 = vmatpush1.bf16.msra.mxu0 0
  %577 = vmatprep.subr.bf16.mxu0 0
  %578 = vmatpush1.bf16.msra.mxu0 0
  %579 = vmatprep.subr.bf16.mxu0 0
  %580 = vmatpush1.bf16.msra.mxu0 0
  %581 = vmatprep.subr.bf16.mxu0 0
  %582 = vmatpush1.bf16.msra.mxu0 0
  %583 = vmatprep.subr.bf16.mxu0 0
  %584 = vmatpush1.bf16.msra.mxu0 0
  %585 = vmatprep.subr.bf16.mxu0 0
  %586 = vmatpush1.bf16.msra.mxu0 0
  %587 = vmatprep.subr.bf16.mxu0 0
  %588 = vmatpush1.bf16.msra.mxu0 0
  %589 = vmatprep.subr.bf16.mxu0 0
  %590 = vmatpush1.bf16.msra.mxu0 0
  %591 = vmatprep.subr.bf16.mxu0 0
  %592 = vmatpush1.bf16.msra.mxu0 0
  %593 = vmatprep.subr.bf16.mxu0 0
  %594 = vmatpush1.bf16.msra.mxu0 0
  %595 = vmatprep.mubr.bf16.mxu0 0
  %596 = vmatmul.mubr.bf16.gmra.mrb[0].mxu0 %v558
  %v597 = vpop.f32.mrb[0].mxu0
  %v598 = vadd.f32 0.0, %v597
  %v599 = vpop.f32.mrb[0].mxu0
  %v600 = vpop.f32.mrb[0].mxu0
  %v601 = vadd.f32 0.0, %v600
  %v602 = vpop.f32.mrb[0].mxu0
  %603 = vmatprep.mubr.bf16.mxu0 0
  %604 = vmatmul.mubr.bf16.gmra.mrb[0].mxu0 %v561
  %v605 = vpop.f32.mrb[0].mxu0
  %v606 = vpop.f32.mrb[0].mxu0
  %v607 = vadd.f32 0.0, %v606
  %v608 = vpop.f32.mrb[0].mxu0
  %v609 = vpop.f32.mrb[0].mxu0
  %v610 = vadd.f32 0.0, %v609
  %611 = vdwg.mxu0
  %v612 = vunpack.c.l.bf16 %v540
  %v613 = vunpack.c.h.bf16 %v540
  %v614 = vadd.f32 %v598, %v612
  %v615 = vadd.f32 %v601, %v613
  %v616 = vunpack.c.l.bf16 %v544
  %v617 = vunpack.c.h.bf16 %v544
  %v618 = vadd.f32 %v607, %v616
  %v619 = vadd.f32 %v610, %v617
  %v620 = vxor.u32 %v614, 2147483648
  %v621 = vxor.u32 %v615, 2147483648
  %v622 = vxor.u32 %v618, 2147483648
  %v623 = vxor.u32 %v619, 2147483648
  %v624 = vmul.f32 %v620, 1.442695
  %v625 = vpow.pop %v624
  %v626 = vmul.f32 %v621, 1.442695
  %v627 = vpow.pop %v626
  %v628 = vmul.f32 %v622, 1.442695
  %v629 = vpow.pop %v628
  %v630 = vmul.f32 %v623, 1.442695
  %v631 = vpow.pop %v630
  %v632 = vadd.f32 %v625, 1.0
  %v633 = vadd.f32 %v627, 1.0
  %v634 = vadd.f32 %v629, 1.0
  %v635 = vadd.f32 %v631, 1.0
  %v636 = vrcp.pop %v632
  %v637 = vmul.f32 1.0, %v636
  %v638 = vrcp.pop %v633
  %v639 = vmul.f32 1.0, %v638
  %v640 = vrcp.pop %v634
  %v641 = vmul.f32 1.0, %v640
  %v642 = vrcp.pop %v635
  %v643 = vmul.f32 1.0, %v642
  %v644 = vtanh.pop %v614
  %v645 = vtanh.pop %v615
  %v646 = vtanh.pop %v618
  %v647 = vtanh.pop %v619
  %v648 = vmul.f32 %v637, %v515
  %v649 = vmul.f32 %v639, %v516
  %v650 = vmul.f32 %v641, %v517
  %v651 = vmul.f32 %v643, %v518
  %656 = vrot.lane.b32.xlu0 %v644, 64
  %v657 = vpop.permute.xlu0 %656
  %658 = vrot.lane.b32.xlu0 %v645, 64
  %v659 = vpop.permute.xlu0 %658
  %660 = vrot.lane.b32.xlu0 %v646, 64
  %v661 = vpop.permute.xlu0 %660
  %662 = vrot.lane.b32.xlu0 %v647, 64
  %v663 = vpop.permute.xlu0 %662
  %v668 = vmul.f32 %v637, %v657
  %v669 = vmul.f32 %v639, %v659
  %v670 = vmul.f32 %v641, %v661
  %v671 = vmul.f32 %v643, %v663
  %676 = vrot.lane.b32.xlu0 %v668, 32
  %v677 = vpop.permute.xlu0 %676
  %678 = vrot.lane.b32.xlu0 %v669, 32
  %v679 = vpop.permute.xlu0 %678
  %680 = vrot.lane.b32.xlu0 %v670, 32
  %v681 = vpop.permute.xlu0 %680
  %682 = vrot.lane.b32.xlu0 %v671, 32
  %v683 = vpop.permute.xlu0 %682
  %v688 = vadd.f32 %v648, %v677
  %v689 = vadd.f32 %v649, %v679
  %v690 = vadd.f32 %v650, %v681
  %v691 = vadd.f32 %v651, %v683
  %v692 = vtanh.pop %v688
  %v693 = vtanh.pop %v689
  %v694 = vtanh.pop %v690
  %v695 = vtanh.pop %v691
  %700 = vrot.lane.b32.xlu0 %v692, 64
  %v701 = vpop.permute.xlu0 %700
  %702 = vrot.lane.b32.xlu0 %v693, 64
  %v703 = vpop.permute.xlu0 %702
  %704 = vrot.lane.b32.xlu0 %v694, 64
  %v705 = vpop.permute.xlu0 %704
  %706 = vrot.lane.b32.xlu0 %v695, 64
  %v707 = vpop.permute.xlu0 %706
  %v712 = vmul.f32 %v637, %v701
  %v713 = vmul.f32 %v639, %v703
  %v714 = vmul.f32 %v641, %v705
  %v715 = vmul.f32 %v643, %v707
  %v716 = vsel %vm551, 1, 0
  %v717 = vsel %vm552, 1, 0
  %v718 = vsel %vm553, 1, 0
  %v719 = vsel %vm554, 1, 0
  %720 = vset.pattern.permute.xlu0 0
  %721 = vperm.xlu0 %720, %v716
  %v722 = vpop.permute.xlu0 %721
  %723 = vset.pattern.permute.xlu0 0
  %724 = vperm.xlu0 %723, %v717
  %v725 = vpop.permute.xlu0 %724
  %726 = vset.pattern.permute.xlu0 0
  %727 = vperm.xlu0 %726, %v718
  %v728 = vpop.permute.xlu0 %727
  %729 = vset.pattern.permute.xlu0 0
  %730 = vperm.xlu0 %729, %v719
  %v731 = vpop.permute.xlu0 %730
  %vm732 = vcmp.eq.s32.totalorder %v722, 1
  %vm733 = vcmp.eq.s32.totalorder %v725, 1
  %vm734 = vcmp.eq.s32.totalorder %v728, 1
  %vm735 = vcmp.eq.s32.totalorder %v731, 1
  %v736 = vsel %vm732, %v688, %v515
  %v737 = vsel %vm733, %v689, %v516
  %v738 = vsel %vm734, %v690, %v517
  %v739 = vsel %vm735, %v691, %v518
  %v740 = vunpack.c.l.bf16 %v523
  %v741 = vunpack.c.h.bf16 %v523
  %v742 = vunpack.c.l.bf16 %v524
  %v743 = vunpack.c.h.bf16 %v524
  %v744 = vsel %vm732, %v712, %v740
  %v745 = vsel %vm733, %v713, %v741
  %v746 = vsel %vm734, %v714, %v742
  %v747 = vsel %vm735, %v715, %v743
  %v748 = vpack.c.bf16 %v745, %v744
  %v749 = vpack.c.bf16 %v747, %v746
  %751 = vrot.lane.b32.xlu0 %v748, 32
  %v752 = vpop.permute.xlu0 %751
  %s754 = scalar_lea.vmem [#allocation3], 8
  %755 = vst.msk [vmem:[%s754] sm:$0xff] %vm128, %v752
  %757 = vrot.lane.b32.xlu0 %v749, 64
  %v758 = vpop.permute.xlu0 %757
  %s760 = scalar_lea.vmem [#allocation3], 48
  %761 = vst.msk [vmem:[%s760] sm:$0xff] %vm535, %v758
  %s762 = smul.u32 2, 2
  %s763 = smul.addr %s762, 8
  %s764 = scalar_lea.vmem [#allocation2], %s763
  %v765 = vld [vmem:[%s764] sm:$0xff]
  %s766 = smul.u32 5, 2
  %s767 = smul.addr %s766, 8
  %s768 = scalar_lea.vmem [#allocation2], %s767
  %v769 = vld [vmem:[%s768 + $0x8] sm:$0xff]
  %s770 = scalar_lea.vmem %s1, 32
  %v771 = vld [vmem:[%s770] sm:$0xff]
  %v772 = vld [vmem:[%s770 + $0x8] sm:$0xff]
  %s773 = scalar_lea.vmem %s1, 80
  %v774 = vld [vmem:[%s773] sm:$0xff]
  %v775 = vld [vmem:[%s773 + $0x8] sm:$0xff]
  %vm776 = vcmp.gt.f32.partialorder %v771, 0.5
  %vm777 = vcmp.gt.f32.partialorder %v772, 0.5
  %vm778 = vcmp.gt.f32.partialorder %v774, 0.5
  %vm779 = vcmp.gt.f32.partialorder %v775, 0.5
  %780 = vrot.lane.b32.xlu0 %v749, 32
  %v781 = vpop.permute.xlu0 %780
  %v783 = vsel %vm128, %v752, 0
  %v786 = vsel %vm128, %v781, 0
  %788 = vmatprep.subr.bf16.mxu0 %v332
  %789 = vmatpush1.bf16.msra.mxu0 %v331
  %790 = vmatprep.subr.bf16.mxu0 %v334
  %791 = vmatpush1.bf16.msra.mxu0 %v333
  %792 = vmatprep.subr.bf16.mxu0 0
  %793 = vmatpush1.bf16.msra.mxu0 0
  %794 = vmatprep.subr.bf16.mxu0 0
  %795 = vmatpush1.bf16.msra.mxu0 0
  %796 = vmatprep.subr.bf16.mxu0 0
  %797 = vmatpush1.bf16.msra.mxu0 0
  %798 = vmatprep.subr.bf16.mxu0 0
  %799 = vmatpush1.bf16.msra.mxu0 0
  %800 = vmatprep.subr.bf16.mxu0 0
  %801 = vmatpush1.bf16.msra.mxu0 0
  %802 = vmatprep.subr.bf16.mxu0 0
  %803 = vmatpush1.bf16.msra.mxu0 0
  %804 = vmatprep.subr.bf16.mxu0 0
  %805 = vmatpush1.bf16.msra.mxu0 0
  %806 = vmatprep.subr.bf16.mxu0 0
  %807 = vmatpush1.bf16.msra.mxu0 0
  %808 = vmatprep.subr.bf16.mxu0 0
  %809 = vmatpush1.bf16.msra.mxu0 0
  %810 = vmatprep.subr.bf16.mxu0 0
  %811 = vmatpush1.bf16.msra.mxu0 0
  %812 = vmatprep.subr.bf16.mxu0 0
  %813 = vmatpush1.bf16.msra.mxu0 0
  %814 = vmatprep.subr.bf16.mxu0 0
  %815 = vmatpush1.bf16.msra.mxu0 0
  %816 = vmatprep.subr.bf16.mxu0 0
  %817 = vmatpush1.bf16.msra.mxu0 0
  %818 = vmatprep.subr.bf16.mxu0 0
  %819 = vmatpush1.bf16.msra.mxu0 0
  %820 = vmatprep.mubr.bf16.mxu0 0
  %821 = vmatmul.mubr.bf16.gmra.mrb[0].mxu0 %v783
  %v822 = vpop.f32.mrb[0].mxu0
  %v823 = vadd.f32 0.0, %v822
  %v824 = vpop.f32.mrb[0].mxu0
  %v825 = vpop.f32.mrb[0].mxu0
  %v826 = vadd.f32 0.0, %v825
  %v827 = vpop.f32.mrb[0].mxu0
  %828 = vmatprep.mubr.bf16.mxu0 0
  %829 = vmatmul.mubr.bf16.gmra.mrb[0].mxu0 %v786
  %v830 = vpop.f32.mrb[0].mxu0
  %v831 = vpop.f32.mrb[0].mxu0
  %v832 = vadd.f32 0.0, %v831
  %v833 = vpop.f32.mrb[0].mxu0
  %v834 = vpop.f32.mrb[0].mxu0
  %v835 = vadd.f32 0.0, %v834
  %836 = vdwg.mxu0
  %v837 = vunpack.c.l.bf16 %v765
  %v838 = vunpack.c.h.bf16 %v765
  %v839 = vadd.f32 %v823, %v837
  %v840 = vadd.f32 %v826, %v838
  %v841 = vunpack.c.l.bf16 %v769
  %v842 = vunpack.c.h.bf16 %v769
  %v843 = vadd.f32 %v832, %v841
  %v844 = vadd.f32 %v835, %v842
  %v845 = vxor.u32 %v839, 2147483648
  %v846 = vxor.u32 %v840, 2147483648
  %v847 = vxor.u32 %v843, 2147483648
  %v848 = vxor.u32 %v844, 2147483648
  %v849 = vmul.f32 %v845, 1.442695
  %v850 = vpow.pop %v849
  %v851 = vmul.f32 %v846, 1.442695
  %v852 = vpow.pop %v851
  %v853 = vmul.f32 %v847, 1.442695
  %v854 = vpow.pop %v853
  %v855 = vmul.f32 %v848, 1.442695
  %v856 = vpow.pop %v855
  %v857 = vadd.f32 %v850, 1.0
  %v858 = vadd.f32 %v852, 1.0
  %v859 = vadd.f32 %v854, 1.0
  %v860 = vadd.f32 %v856, 1.0
  %v861 = vrcp.pop %v857
  %v862 = vmul.f32 1.0, %v861
  %v863 = vrcp.pop %v858
  %v864 = vmul.f32 1.0, %v863
  %v865 = vrcp.pop %v859
  %v866 = vmul.f32 1.0, %v865
  %v867 = vrcp.pop %v860
  %v868 = vmul.f32 1.0, %v867
  %v869 = vtanh.pop %v839
  %v870 = vtanh.pop %v840
  %v871 = vtanh.pop %v843
  %v872 = vtanh.pop %v844
  %v873 = vmul.f32 %v862, %v736
  %v874 = vmul.f32 %v864, %v737
  %v875 = vmul.f32 %v866, %v738
  %v876 = vmul.f32 %v868, %v739
  %881 = vrot.lane.b32.xlu0 %v869, 64
  %v882 = vpop.permute.xlu0 %881
  %883 = vrot.lane.b32.xlu0 %v870, 64
  %v884 = vpop.permute.xlu0 %883
  %885 = vrot.lane.b32.xlu0 %v871, 64
  %v886 = vpop.permute.xlu0 %885
  %887 = vrot.lane.b32.xlu0 %v872, 64
  %v888 = vpop.permute.xlu0 %887
  %v893 = vmul.f32 %v862, %v882
  %v894 = vmul.f32 %v864, %v884
  %v895 = vmul.f32 %v866, %v886
  %v896 = vmul.f32 %v868, %v888
  %901 = vrot.lane.b32.xlu0 %v893, 32
  %v902 = vpop.permute.xlu0 %901
  %903 = vrot.lane.b32.xlu0 %v894, 32
  %v904 = vpop.permute.xlu0 %903
  %905 = vrot.lane.b32.xlu0 %v895, 32
  %v906 = vpop.permute.xlu0 %905
  %907 = vrot.lane.b32.xlu0 %v896, 32
  %v908 = vpop.permute.xlu0 %907
  %v913 = vadd.f32 %v873, %v902
  %v914 = vadd.f32 %v874, %v904
  %v915 = vadd.f32 %v875, %v906
  %v916 = vadd.f32 %v876, %v908
  %v917 = vtanh.pop %v913
  %v918 = vtanh.pop %v914
  %v919 = vtanh.pop %v915
  %v920 = vtanh.pop %v916
  %925 = vrot.lane.b32.xlu0 %v917, 64
  %v926 = vpop.permute.xlu0 %925
  %927 = vrot.lane.b32.xlu0 %v918, 64
  %v928 = vpop.permute.xlu0 %927
  %929 = vrot.lane.b32.xlu0 %v919, 64
  %v930 = vpop.permute.xlu0 %929
  %931 = vrot.lane.b32.xlu0 %v920, 64
  %v932 = vpop.permute.xlu0 %931
  %v937 = vmul.f32 %v862, %v926
  %v938 = vmul.f32 %v864, %v928
  %v939 = vmul.f32 %v866, %v930
  %v940 = vmul.f32 %v868, %v932
  %v941 = vsel %vm776, 1, 0
  %v942 = vsel %vm777, 1, 0
  %v943 = vsel %vm778, 1, 0
  %v944 = vsel %vm779, 1, 0
  %945 = vset.pattern.permute.xlu0 0
  %946 = vperm.xlu0 %945, %v941
  %v947 = vpop.permute.xlu0 %946
  %948 = vset.pattern.permute.xlu0 0
  %949 = vperm.xlu0 %948, %v942
  %v950 = vpop.permute.xlu0 %949
  %951 = vset.pattern.permute.xlu0 0
  %952 = vperm.xlu0 %951, %v943
  %v953 = vpop.permute.xlu0 %952
  %954 = vset.pattern.permute.xlu0 0
  %955 = vperm.xlu0 %954, %v944
  %v956 = vpop.permute.xlu0 %955
  %vm957 = vcmp.eq.s32.totalorder %v947, 1
  %vm958 = vcmp.eq.s32.totalorder %v950, 1
  %vm959 = vcmp.eq.s32.totalorder %v953, 1
  %vm960 = vcmp.eq.s32.totalorder %v956, 1
  %v961 = vsel %vm957, %v913, %v736
  %v962 = vsel %vm958, %v914, %v737
  %v963 = vsel %vm959, %v915, %v738
  %v964 = vsel %vm960, %v916, %v739
  %v965 = vunpack.c.l.bf16 %v748
  %v966 = vunpack.c.h.bf16 %v748
  %v967 = vunpack.c.l.bf16 %v749
  %v968 = vunpack.c.h.bf16 %v749
  %v969 = vsel %vm957, %v937, %v965
  %v970 = vsel %vm958, %v938, %v966
  %v971 = vsel %vm959, %v939, %v967
  %v972 = vsel %vm960, %v940, %v968
  %v973 = vpack.c.bf16 %v970, %v969
  %v974 = vpack.c.bf16 %v972, %v971
  %976 = vrot.lane.b32.xlu0 %v973, 32
  %v977 = vpop.permute.xlu0 %976
  %s979 = scalar_lea.vmem [#allocation3], 16
  %980 = vst.msk [vmem:[%s979] sm:$0xff] %vm128, %v977
  %982 = vrot.lane.b32.xlu0 %v974, 64
  %v983 = vpop.permute.xlu0 %982
  %s985 = scalar_lea.vmem [#allocation3], 40
  %986 = vst.msk [vmem:[%s985] sm:$0xff] %vm535, %v983
  %s987 = smul.u32 3, 2
  %s988 = smul.addr %s987, 8
  %s989 = scalar_lea.vmem [#allocation2], %s988
  %v990 = vld [vmem:[%s989] sm:$0xff]
  %s991 = smul.u32 4, 2
  %s992 = smul.addr %s991, 8
  %s993 = scalar_lea.vmem [#allocation2], %s992
  %v994 = vld [vmem:[%s993 + $0x8] sm:$0xff]
  %s995 = scalar_lea.vmem %s1, 48
  %v996 = vld [vmem:[%s995] sm:$0xff]
  %v997 = vld [vmem:[%s995 + $0x8] sm:$0xff]
  %s998 = scalar_lea.vmem %s1, 64
  %v999 = vld [vmem:[%s998] sm:$0xff]
  %v1000 = vld [vmem:[%s998 + $0x8] sm:$0xff]
  %vm1001 = vcmp.gt.f32.partialorder %v996, 0.5
  %vm1002 = vcmp.gt.f32.partialorder %v997, 0.5
  %vm1003 = vcmp.gt.f32.partialorder %v999, 0.5
  %vm1004 = vcmp.gt.f32.partialorder %v1000, 0.5
  %1005 = vrot.lane.b32.xlu0 %v974, 32
  %v1006 = vpop.permute.xlu0 %1005
  %v1008 = vsel %vm128, %v977, 0
  %v1011 = vsel %vm128, %v1006, 0
  %1013 = vmatprep.subr.bf16.mxu0 %v332
  %1014 = vmatpush1.bf16.msra.mxu0 %v331
  %1015 = vmatprep.subr.bf16.mxu0 %v334
  %1016 = vmatpush1.bf16.msra.mxu0 %v333
  %1017 = vmatprep.subr.bf16.mxu0 0
  %1018 = vmatpush1.bf16.msra.mxu0 0
  %1019 = vmatprep.subr.bf16.mxu0 0
  %1020 = vmatpush1.bf16.msra.mxu0 0
  %1021 = vmatprep.subr.bf16.mxu0 0
  %1022 = vmatpush1.bf16.msra.mxu0 0
  %1023 = vmatprep.subr.bf16.mxu0 0
  %1024 = vmatpush1.bf16.msra.mxu0 0
  %1025 = vmatprep.subr.bf16.mxu0 0
  %1026 = vmatpush1.bf16.msra.mxu0 0
  %1027 = vmatprep.subr.bf16.mxu0 0
  %1028 = vmatpush1.bf16.msra.mxu0 0
  %1029 = vmatprep.subr.bf16.mxu0 0
  %1030 = vmatpush1.bf16.msra.mxu0 0
  %1031 = vmatprep.subr.bf16.mxu0 0
  %1032 = vmatpush1.bf16.msra.mxu0 0
  %1033 = vmatprep.subr.bf16.mxu0 0
  %1034 = vmatpush1.bf16.msra.mxu0 0
  %1035 = vmatprep.subr.bf16.mxu0 0
  %1036 = vmatpush1.bf16.msra.mxu0 0
  %1037 = vmatprep.subr.bf16.mxu0 0
  %1038 = vmatpush1.bf16.msra.mxu0 0
  %1039 = vmatprep.subr.bf16.mxu0 0
  %1040 = vmatpush1.bf16.msra.mxu0 0
  %1041 = vmatprep.subr.bf16.mxu0 0
  %1042 = vmatpush1.bf16.msra.mxu0 0
  %1043 = vmatprep.subr.bf16.mxu0 0
  %1044 = vmatpush1.bf16.msra.mxu0 0
  %1045 = vmatprep.mubr.bf16.mxu0 0
  %1046 = vmatmul.mubr.bf16.gmra.mrb[0].mxu0 %v1008
  %v1047 = vpop.f32.mrb[0].mxu0
  %v1048 = vadd.f32 0.0, %v1047
  %v1049 = vpop.f32.mrb[0].mxu0
  %v1050 = vpop.f32.mrb[0].mxu0
  %v1051 = vadd.f32 0.0, %v1050
  %v1052 = vpop.f32.mrb[0].mxu0
  %1053 = vmatprep.mubr.bf16.mxu0 0
  %1054 = vmatmul.mubr.bf16.gmra.mrb[0].mxu0 %v1011
  %v1055 = vpop.f32.mrb[0].mxu0
  %v1056 = vpop.f32.mrb[0].mxu0
  %v1057 = vadd.f32 0.0, %v1056
  %v1058 = vpop.f32.mrb[0].mxu0
  %v1059 = vpop.f32.mrb[0].mxu0
  %v1060 = vadd.f32 0.0, %v1059
  %1061 = vdwg.mxu0
  %v1062 = vunpack.c.l.bf16 %v990
  %v1063 = vunpack.c.h.bf16 %v990
  %v1064 = vadd.f32 %v1048, %v1062
  %v1065 = vadd.f32 %v1051, %v1063
  %v1066 = vunpack.c.l.bf16 %v994
  %v1067 = vunpack.c.h.bf16 %v994
  %v1068 = vadd.f32 %v1057, %v1066
  %v1069 = vadd.f32 %v1060, %v1067
  %v1070 = vxor.u32 %v1064, 2147483648
  %v1071 = vxor.u32 %v1065, 2147483648
  %v1072 = vxor.u32 %v1068, 2147483648
  %v1073 = vxor.u32 %v1069, 2147483648
  %v1074 = vmul.f32 %v1070, 1.442695
  %v1075 = vpow.pop %v1074
  %v1076 = vmul.f32 %v1071, 1.442695
  %v1077 = vpow.pop %v1076
  %v1078 = vmul.f32 %v1072, 1.442695
  %v1079 = vpow.pop %v1078
  %v1080 = vmul.f32 %v1073, 1.442695
  %v1081 = vpow.pop %v1080
  %v1082 = vadd.f32 %v1075, 1.0
  %v1083 = vadd.f32 %v1077, 1.0
  %v1084 = vadd.f32 %v1079, 1.0
  %v1085 = vadd.f32 %v1081, 1.0
  %v1086 = vrcp.pop %v1082
  %v1087 = vmul.f32 1.0, %v1086
  %v1088 = vrcp.pop %v1083
  %v1089 = vmul.f32 1.0, %v1088
  %v1090 = vrcp.pop %v1084
  %v1091 = vmul.f32 1.0, %v1090
  %v1092 = vrcp.pop %v1085
  %v1093 = vmul.f32 1.0, %v1092
  %v1094 = vtanh.pop %v1064
  %v1095 = vtanh.pop %v1065
  %v1096 = vtanh.pop %v1068
  %v1097 = vtanh.pop %v1069
  %v1098 = vmul.f32 %v1087, %v961
  %v1099 = vmul.f32 %v1089, %v962
  %v1100 = vmul.f32 %v1091, %v963
  %v1101 = vmul.f32 %v1093, %v964
  %1106 = vrot.lane.b32.xlu0 %v1094, 64
  %v1107 = vpop.permute.xlu0 %1106
  %1108 = vrot.lane.b32.xlu0 %v1095, 64
  %v1109 = vpop.permute.xlu0 %1108
  %1110 = vrot.lane.b32.xlu0 %v1096, 64
  %v1111 = vpop.permute.xlu0 %1110
  %1112 = vrot.lane.b32.xlu0 %v1097, 64
  %v1113 = vpop.permute.xlu0 %1112
  %v1118 = vmul.f32 %v1087, %v1107
  %v1119 = vmul.f32 %v1089, %v1109
  %v1120 = vmul.f32 %v1091, %v1111
  %v1121 = vmul.f32 %v1093, %v1113
  %1126 = vrot.lane.b32.xlu0 %v1118, 32
  %v1127 = vpop.permute.xlu0 %1126
  %1128 = vrot.lane.b32.xlu0 %v1119, 32
  %v1129 = vpop.permute.xlu0 %1128
  %1130 = vrot.lane.b32.xlu0 %v1120, 32
  %v1131 = vpop.permute.xlu0 %1130
  %1132 = vrot.lane.b32.xlu0 %v1121, 32
  %v1133 = vpop.permute.xlu0 %1132
  %v1138 = vadd.f32 %v1098, %v1127
  %v1139 = vadd.f32 %v1099, %v1129
  %v1140 = vadd.f32 %v1100, %v1131
  %v1141 = vadd.f32 %v1101, %v1133
  %v1142 = vtanh.pop %v1138
  %v1143 = vtanh.pop %v1139
  %v1144 = vtanh.pop %v1140
  %v1145 = vtanh.pop %v1141
  %1150 = vrot.lane.b32.xlu0 %v1142, 64
  %v1151 = vpop.permute.xlu0 %1150
  %1152 = vrot.lane.b32.xlu0 %v1143, 64
  %v1153 = vpop.permute.xlu0 %1152
  %1154 = vrot.lane.b32.xlu0 %v1144, 64
  %v1155 = vpop.permute.xlu0 %1154
  %1156 = vrot.lane.b32.xlu0 %v1145, 64
  %v1157 = vpop.permute.xlu0 %1156
  %v1162 = vmul.f32 %v1087, %v1151
  %v1163 = vmul.f32 %v1089, %v1153
  %v1164 = vmul.f32 %v1091, %v1155
  %v1165 = vmul.f32 %v1093, %v1157
  %v1166 = vsel %vm1001, 1, 0
  %v1167 = vsel %vm1002, 1, 0
  %v1168 = vsel %vm1003, 1, 0
  %v1169 = vsel %vm1004, 1, 0
  %1170 = vset.pattern.permute.xlu0 0
  %1171 = vperm.xlu0 %1170, %v1166
  %v1172 = vpop.permute.xlu0 %1171
  %1173 = vset.pattern.permute.xlu0 0
  %1174 = vperm.xlu0 %1173, %v1167
  %v1175 = vpop.permute.xlu0 %1174
  %1176 = vset.pattern.permute.xlu0 0
  %1177 = vperm.xlu0 %1176, %v1168
  %v1178 = vpop.permute.xlu0 %1177
  %1179 = vset.pattern.permute.xlu0 0
  %1180 = vperm.xlu0 %1179, %v1169
  %v1181 = vpop.permute.xlu0 %1180
  %vm1182 = vcmp.eq.s32.totalorder %v1172, 1
  %vm1183 = vcmp.eq.s32.totalorder %v1175, 1
  %vm1184 = vcmp.eq.s32.totalorder %v1178, 1
  %vm1185 = vcmp.eq.s32.totalorder %v1181, 1
  %v1186 = vsel %vm1182, %v1138, %v961
  %v1187 = vsel %vm1183, %v1139, %v962
  %v1188 = vsel %vm1184, %v1140, %v963
  %v1189 = vsel %vm1185, %v1141, %v964
  %v1190 = vunpack.c.l.bf16 %v973
  %v1191 = vunpack.c.h.bf16 %v973
  %v1192 = vunpack.c.l.bf16 %v974
  %v1193 = vunpack.c.h.bf16 %v974
  %v1194 = vsel %vm1182, %v1162, %v1190
  %v1195 = vsel %vm1183, %v1163, %v1191
  %v1196 = vsel %vm1184, %v1164, %v1192
  %v1197 = vsel %vm1185, %v1165, %v1193
  %v1198 = vpack.c.bf16 %v1195, %v1194
  %v1199 = vpack.c.bf16 %v1197, %v1196
  %1201 = vrot.lane.b32.xlu0 %v1198, 32
  %v1202 = vpop.permute.xlu0 %1201
  %s1204 = scalar_lea.vmem [#allocation3], 24
  %1205 = vst.msk [vmem:[%s1204] sm:$0xff] %vm128, %v1202
  %1207 = vrot.lane.b32.xlu0 %v1199, 64
  %v1208 = vpop.permute.xlu0 %1207
  %s1210 = scalar_lea.vmem [#allocation3], 32
  %1211 = vst.msk [vmem:[%s1210] sm:$0xff] %vm535, %v1208
  %v1212 = vld [vmem:[%s993] sm:$0xff]
  %v1213 = vld [vmem:[%s989 + $0x8] sm:$0xff]
  %v1214 = vld [vmem:[%s998] sm:$0xff]
  %v1215 = vld [vmem:[%s998 + $0x8] sm:$0xff]
  %v1216 = vld [vmem:[%s995] sm:$0xff]
  %v1217 = vld [vmem:[%s995 + $0x8] sm:$0xff]
  %vm1218 = vcmp.gt.f32.partialorder %v1214, 0.5
  %vm1219 = vcmp.gt.f32.partialorder %v1215, 0.5
  %vm1220 = vcmp.gt.f32.partialorder %v1216, 0.5
  %vm1221 = vcmp.gt.f32.partialorder %v1217, 0.5
  %1222 = vrot.lane.b32.xlu0 %v1199, 32
  %v1223 = vpop.permute.xlu0 %1222
  %v1225 = vsel %vm128, %v1202, 0
  %v1228 = vsel %vm128, %v1223, 0
  %1230 = vmatprep.subr.bf16.mxu0 %v332
  %1231 = vmatpush1.bf16.msra.mxu0 %v331
  %1232 = vmatprep.subr.bf16.mxu0 %v334
  %1233 = vmatpush1.bf16.msra.mxu0 %v333
  %1234 = vmatprep.subr.bf16.mxu0 0
  %1235 = vmatpush1.bf16.msra.mxu0 0
  %1236 = vmatprep.subr.bf16.mxu0 0
  %1237 = vmatpush1.bf16.msra.mxu0 0
  %1238 = vmatprep.subr.bf16.mxu0 0
  %1239 = vmatpush1.bf16.msra.mxu0 0
  %1240 = vmatprep.subr.bf16.mxu0 0
  %1241 = vmatpush1.bf16.msra.mxu0 0
  %1242 = vmatprep.subr.bf16.mxu0 0
  %1243 = vmatpush1.bf16.msra.mxu0 0
  %1244 = vmatprep.subr.bf16.mxu0 0
  %1245 = vmatpush1.bf16.msra.mxu0 0
  %1246 = vmatprep.subr.bf16.mxu0 0
  %1247 = vmatpush1.bf16.msra.mxu0 0
  %1248 = vmatprep.subr.bf16.mxu0 0
  %1249 = vmatpush1.bf16.msra.mxu0 0
  %1250 = vmatprep.subr.bf16.mxu0 0
  %1251 = vmatpush1.bf16.msra.mxu0 0
  %1252 = vmatprep.subr.bf16.mxu0 0
  %1253 = vmatpush1.bf16.msra.mxu0 0
  %1254 = vmatprep.subr.bf16.mxu0 0
  %1255 = vmatpush1.bf16.msra.mxu0 0
  %1256 = vmatprep.subr.bf16.mxu0 0
  %1257 = vmatpush1.bf16.msra.mxu0 0
  %1258 = vmatprep.subr.bf16.mxu0 0
  %1259 = vmatpush1.bf16.msra.mxu0 0
  %1260 = vmatprep.subr.bf16.mxu0 0
  %1261 = vmatpush1.bf16.msra.mxu0 0
  %1262 = vmatprep.mubr.bf16.mxu0 0
  %1263 = vmatmul.mubr.bf16.gmra.mrb[0].mxu0 %v1225
  %v1264 = vpop.f32.mrb[0].mxu0
  %v1265 = vadd.f32 0.0, %v1264
  %v1266 = vpop.f32.mrb[0].mxu0
  %v1267 = vpop.f32.mrb[0].mxu0
  %v1268 = vadd.f32 0.0, %v1267
  %v1269 = vpop.f32.mrb[0].mxu0
  %1270 = vmatprep.mubr.bf16.mxu0 0
  %1271 = vmatmul.mubr.bf16.gmra.mrb[0].mxu0 %v1228
  %v1272 = vpop.f32.mrb[0].mxu0
  %v1273 = vpop.f32.mrb[0].mxu0
  %v1274 = vadd.f32 0.0, %v1273
  %v1275 = vpop.f32.mrb[0].mxu0
  %v1276 = vpop.f32.mrb[0].mxu0
  %v1277 = vadd.f32 0.0, %v1276
  %1278 = vdwg.mxu0
  %v1279 = vunpack.c.l.bf16 %v1212
  %v1280 = vunpack.c.h.bf16 %v1212
  %v1281 = vadd.f32 %v1265, %v1279
  %v1282 = vadd.f32 %v1268, %v1280
  %v1283 = vunpack.c.l.bf16 %v1213
  %v1284 = vunpack.c.h.bf16 %v1213
  %v1285 = vadd.f32 %v1274, %v1283
  %v1286 = vadd.f32 %v1277, %v1284
  %v1287 = vxor.u32 %v1281, 2147483648
  %v1288 = vxor.u32 %v1282, 2147483648
  %v1289 = vxor.u32 %v1285, 2147483648
  %v1290 = vxor.u32 %v1286, 2147483648
  %v1291 = vmul.f32 %v1287, 1.442695
  %v1292 = vpow.pop %v1291
  %v1293 = vmul.f32 %v1288, 1.442695
  %v1294 = vpow.pop %v1293
  %v1295 = vmul.f32 %v1289, 1.442695
  %v1296 = vpow.pop %v1295
  %v1297 = vmul.f32 %v1290, 1.442695
  %v1298 = vpow.pop %v1297
  %v1299 = vadd.f32 %v1292, 1.0
  %v1300 = vadd.f32 %v1294, 1.0
  %v1301 = vadd.f32 %v1296, 1.0
  %v1302 = vadd.f32 %v1298, 1.0
  %v1303 = vrcp.pop %v1299
  %v1304 = vmul.f32 1.0, %v1303
  %v1305 = vrcp.pop %v1300
  %v1306 = vmul.f32 1.0, %v1305
  %v1307 = vrcp.pop %v1301
  %v1308 = vmul.f32 1.0, %v1307
  %v1309 = vrcp.pop %v1302
  %v1310 = vmul.f32 1.0, %v1309
  %v1311 = vtanh.pop %v1281
  %v1312 = vtanh.pop %v1282
  %v1313 = vtanh.pop %v1285
  %v1314 = vtanh.pop %v1286
  %v1315 = vmul.f32 %v1304, %v1186
  %v1316 = vmul.f32 %v1306, %v1187
  %v1317 = vmul.f32 %v1308, %v1188
  %v1318 = vmul.f32 %v1310, %v1189
  %1323 = vrot.lane.b32.xlu0 %v1311, 64
  %v1324 = vpop.permute.xlu0 %1323
  %1325 = vrot.lane.b32.xlu0 %v1312, 64
  %v1326 = vpop.permute.xlu0 %1325
  %1327 = vrot.lane.b32.xlu0 %v1313, 64
  %v1328 = vpop.permute.xlu0 %1327
  %1329 = vrot.lane.b32.xlu0 %v1314, 64
  %v1330 = vpop.permute.xlu0 %1329
  %v1335 = vmul.f32 %v1304, %v1324
  %v1336 = vmul.f32 %v1306, %v1326
  %v1337 = vmul.f32 %v1308, %v1328
  %v1338 = vmul.f32 %v1310, %v1330
  %1343 = vrot.lane.b32.xlu0 %v1335, 32
  %v1344 = vpop.permute.xlu0 %1343
  %1345 = vrot.lane.b32.xlu0 %v1336, 32
  %v1346 = vpop.permute.xlu0 %1345
  %1347 = vrot.lane.b32.xlu0 %v1337, 32
  %v1348 = vpop.permute.xlu0 %1347
  %1349 = vrot.lane.b32.xlu0 %v1338, 32
  %v1350 = vpop.permute.xlu0 %1349
  %v1355 = vadd.f32 %v1315, %v1344
  %v1356 = vadd.f32 %v1316, %v1346
  %v1357 = vadd.f32 %v1317, %v1348
  %v1358 = vadd.f32 %v1318, %v1350
  %v1359 = vtanh.pop %v1355
  %v1360 = vtanh.pop %v1356
  %v1361 = vtanh.pop %v1357
  %v1362 = vtanh.pop %v1358
  %1367 = vrot.lane.b32.xlu0 %v1359, 64
  %v1368 = vpop.permute.xlu0 %1367
  %1369 = vrot.lane.b32.xlu0 %v1360, 64
  %v1370 = vpop.permute.xlu0 %1369
  %1371 = vrot.lane.b32.xlu0 %v1361, 64
  %v1372 = vpop.permute.xlu0 %1371
  %1373 = vrot.lane.b32.xlu0 %v1362, 64
  %v1374 = vpop.permute.xlu0 %1373
  %v1379 = vmul.f32 %v1304, %v1368
  %v1380 = vmul.f32 %v1306, %v1370
  %v1381 = vmul.f32 %v1308, %v1372
  %v1382 = vmul.f32 %v1310, %v1374
  %v1383 = vsel %vm1218, 1, 0
  %v1384 = vsel %vm1219, 1, 0
  %v1385 = vsel %vm1220, 1, 0
  %v1386 = vsel %vm1221, 1, 0
  %1387 = vset.pattern.permute.xlu0 0
  %1388 = vperm.xlu0 %1387, %v1383
  %v1389 = vpop.permute.xlu0 %1388
  %1390 = vset.pattern.permute.xlu0 0
  %1391 = vperm.xlu0 %1390, %v1384
  %v1392 = vpop.permute.xlu0 %1391
  %1393 = vset.pattern.permute.xlu0 0
  %1394 = vperm.xlu0 %1393, %v1385
  %v1395 = vpop.permute.xlu0 %1394
  %1396 = vset.pattern.permute.xlu0 0
  %1397 = vperm.xlu0 %1396, %v1386
  %v1398 = vpop.permute.xlu0 %1397
  %vm1399 = vcmp.eq.s32.totalorder %v1389, 1
  %vm1400 = vcmp.eq.s32.totalorder %v1392, 1
  %vm1401 = vcmp.eq.s32.totalorder %v1395, 1
  %vm1402 = vcmp.eq.s32.totalorder %v1398, 1
  %v1403 = vsel %vm1399, %v1355, %v1186
  %v1404 = vsel %vm1400, %v1356, %v1187
  %v1405 = vsel %vm1401, %v1357, %v1188
  %v1406 = vsel %vm1402, %v1358, %v1189
  %v1407 = vunpack.c.l.bf16 %v1198
  %v1408 = vunpack.c.h.bf16 %v1198
  %v1409 = vunpack.c.l.bf16 %v1199
  %v1410 = vunpack.c.h.bf16 %v1199
  %v1411 = vsel %vm1399, %v1379, %v1407
  %v1412 = vsel %vm1400, %v1380, %v1408
  %v1413 = vsel %vm1401, %v1381, %v1409
  %v1414 = vsel %vm1402, %v1382, %v1410
  %v1415 = vpack.c.bf16 %v1412, %v1411
  %v1416 = vpack.c.bf16 %v1414, %v1413
  %1418 = vrot.lane.b32.xlu0 %v1415, 32
  %v1419 = vpop.permute.xlu0 %1418
  %1421 = vst.msk [vmem:[%s1210] sm:$0xff] %vm128, %v1419
  %1423 = vrot.lane.b32.xlu0 %v1416, 64
  %v1424 = vpop.permute.xlu0 %1423
  %1426 = vst.msk [vmem:[%s1204] sm:$0xff] %vm535, %v1424
  %v1427 = vld [vmem:[%s768] sm:$0xff]
  %v1428 = vld [vmem:[%s764 + $0x8] sm:$0xff]
  %v1429 = vld [vmem:[%s773] sm:$0xff]
  %v1430 = vld [vmem:[%s773 + $0x8] sm:$0xff]
  %v1431 = vld [vmem:[%s770] sm:$0xff]
  %v1432 = vld [vmem:[%s770 + $0x8] sm:$0xff]
  %vm1433 = vcmp.gt.f32.partialorder %v1429, 0.5
  %vm1434 = vcmp.gt.f32.partialorder %v1430, 0.5
  %vm1435 = vcmp.gt.f32.partialorder %v1431, 0.5
  %vm1436 = vcmp.gt.f32.partialorder %v1432, 0.5
  %1437 = vrot.lane.b32.xlu0 %v1416, 32
  %v1438 = vpop.permute.xlu0 %1437
  %v1440 = vsel %vm128, %v1419, 0
  %v1443 = vsel %vm128, %v1438, 0
  %1445 = vmatprep.subr.bf16.mxu0 %v332
  %1446 = vmatpush1.bf16.msra.mxu0 %v331
  %1447 = vmatprep.subr.bf16.mxu0 %v334
  %1448 = vmatpush1.bf16.msra.mxu0 %v333
  %1449 = vmatprep.subr.bf16.mxu0 0
  %1450 = vmatpush1.bf16.msra.mxu0 0
  %1451 = vmatprep.subr.bf16.mxu0 0
  %1452 = vmatpush1.bf16.msra.mxu0 0
  %1453 = vmatprep.subr.bf16.mxu0 0
  %1454 = vmatpush1.bf16.msra.mxu0 0
  %1455 = vmatprep.subr.bf16.mxu0 0
  %1456 = vmatpush1.bf16.msra.mxu0 0
  %1457 = vmatprep.subr.bf16.mxu0 0
  %1458 = vmatpush1.bf16.msra.mxu0 0
  %1459 = vmatprep.subr.bf16.mxu0 0
  %1460 = vmatpush1.bf16.msra.mxu0 0
  %1461 = vmatprep.subr.bf16.mxu0 0
  %1462 = vmatpush1.bf16.msra.mxu0 0
  %1463 = vmatprep.subr.bf16.mxu0 0
  %1464 = vmatpush1.bf16.msra.mxu0 0
  %1465 = vmatprep.subr.bf16.mxu0 0
  %1466 = vmatpush1.bf16.msra.mxu0 0
  %1467 = vmatprep.subr.bf16.mxu0 0
  %1468 = vmatpush1.bf16.msra.mxu0 0
  %1469 = vmatprep.subr.bf16.mxu0 0
  %1470 = vmatpush1.bf16.msra.mxu0 0
  %1471 = vmatprep.subr.bf16.mxu0 0
  %1472 = vmatpush1.bf16.msra.mxu0 0
  %1473 = vmatprep.subr.bf16.mxu0 0
  %1474 = vmatpush1.bf16.msra.mxu0 0
  %1475 = vmatprep.subr.bf16.mxu0 0
  %1476 = vmatpush1.bf16.msra.mxu0 0
  %1477 = vmatprep.mubr.bf16.mxu0 0
  %1478 = vmatmul.mubr.bf16.gmra.mrb[0].mxu0 %v1440
  %v1479 = vpop.f32.mrb[0].mxu0
  %v1480 = vadd.f32 0.0, %v1479
  %v1481 = vpop.f32.mrb[0].mxu0
  %v1482 = vpop.f32.mrb[0].mxu0
  %v1483 = vadd.f32 0.0, %v1482
  %v1484 = vpop.f32.mrb[0].mxu0
  %1485 = vmatprep.mubr.bf16.mxu0 0
  %1486 = vmatmul.mubr.bf16.gmra.mrb[0].mxu0 %v1443
  %v1487 = vpop.f32.mrb[0].mxu0
  %v1488 = vpop.f32.mrb[0].mxu0
  %v1489 = vadd.f32 0.0, %v1488
  %v1490 = vpop.f32.mrb[0].mxu0
  %v1491 = vpop.f32.mrb[0].mxu0
  %v1492 = vadd.f32 0.0, %v1491
  %1493 = vdwg.mxu0
  %v1494 = vunpack.c.l.bf16 %v1427
  %v1495 = vunpack.c.h.bf16 %v1427
  %v1496 = vadd.f32 %v1480, %v1494
  %v1497 = vadd.f32 %v1483, %v1495
  %v1498 = vunpack.c.l.bf16 %v1428
  %v1499 = vunpack.c.h.bf16 %v1428
  %v1500 = vadd.f32 %v1489, %v1498
  %v1501 = vadd.f32 %v1492, %v1499
  %v1502 = vxor.u32 %v1496, 2147483648
  %v1503 = vxor.u32 %v1497, 2147483648
  %v1504 = vxor.u32 %v1500, 2147483648
  %v1505 = vxor.u32 %v1501, 2147483648
  %v1506 = vmul.f32 %v1502, 1.442695
  %v1507 = vpow.pop %v1506
  %v1508 = vmul.f32 %v1503, 1.442695
  %v1509 = vpow.pop %v1508
  %v1510 = vmul.f32 %v1504, 1.442695
  %v1511 = vpow.pop %v1510
  %v1512 = vmul.f32 %v1505, 1.442695
  %v1513 = vpow.pop %v1512
  %v1514 = vadd.f32 %v1507, 1.0
  %v1515 = vadd.f32 %v1509, 1.0
  %v1516 = vadd.f32 %v1511, 1.0
  %v1517 = vadd.f32 %v1513, 1.0
  %v1518 = vrcp.pop %v1514
  %v1519 = vmul.f32 1.0, %v1518
  %v1520 = vrcp.pop %v1515
  %v1521 = vmul.f32 1.0, %v1520
  %v1522 = vrcp.pop %v1516
  %v1523 = vmul.f32 1.0, %v1522
  %v1524 = vrcp.pop %v1517
  %v1525 = vmul.f32 1.0, %v1524
  %v1526 = vtanh.pop %v1496
  %v1527 = vtanh.pop %v1497
  %v1528 = vtanh.pop %v1500
  %v1529 = vtanh.pop %v1501
  %v1530 = vmul.f32 %v1519, %v1403
  %v1531 = vmul.f32 %v1521, %v1404
  %v1532 = vmul.f32 %v1523, %v1405
  %v1533 = vmul.f32 %v1525, %v1406
  %1538 = vrot.lane.b32.xlu0 %v1526, 64
  %v1539 = vpop.permute.xlu0 %1538
  %1540 = vrot.lane.b32.xlu0 %v1527, 64
  %v1541 = vpop.permute.xlu0 %1540
  %1542 = vrot.lane.b32.xlu0 %v1528, 64
  %v1543 = vpop.permute.xlu0 %1542
  %1544 = vrot.lane.b32.xlu0 %v1529, 64
  %v1545 = vpop.permute.xlu0 %1544
  %v1550 = vmul.f32 %v1519, %v1539
  %v1551 = vmul.f32 %v1521, %v1541
  %v1552 = vmul.f32 %v1523, %v1543
  %v1553 = vmul.f32 %v1525, %v1545
  %1558 = vrot.lane.b32.xlu0 %v1550, 32
  %v1559 = vpop.permute.xlu0 %1558
  %1560 = vrot.lane.b32.xlu0 %v1551, 32
  %v1561 = vpop.permute.xlu0 %1560
  %1562 = vrot.lane.b32.xlu0 %v1552, 32
  %v1563 = vpop.permute.xlu0 %1562
  %1564 = vrot.lane.b32.xlu0 %v1553, 32
  %v1565 = vpop.permute.xlu0 %1564
  %v1570 = vadd.f32 %v1530, %v1559
  %v1571 = vadd.f32 %v1531, %v1561
  %v1572 = vadd.f32 %v1532, %v1563
  %v1573 = vadd.f32 %v1533, %v1565
  %v1574 = vtanh.pop %v1570
  %v1575 = vtanh.pop %v1571
  %v1576 = vtanh.pop %v1572
  %v1577 = vtanh.pop %v1573
  %1582 = vrot.lane.b32.xlu0 %v1574, 64
  %v1583 = vpop.permute.xlu0 %1582
  %1584 = vrot.lane.b32.xlu0 %v1575, 64
  %v1585 = vpop.permute.xlu0 %1584
  %1586 = vrot.lane.b32.xlu0 %v1576, 64
  %v1587 = vpop.permute.xlu0 %1586
  %1588 = vrot.lane.b32.xlu0 %v1577, 64
  %v1589 = vpop.permute.xlu0 %1588
  %v1594 = vmul.f32 %v1519, %v1583
  %v1595 = vmul.f32 %v1521, %v1585
  %v1596 = vmul.f32 %v1523, %v1587
  %v1597 = vmul.f32 %v1525, %v1589
  %v1598 = vsel %vm1433, 1, 0
  %v1599 = vsel %vm1434, 1, 0
  %v1600 = vsel %vm1435, 1, 0
  %v1601 = vsel %vm1436, 1, 0
  %1602 = vset.pattern.permute.xlu0 0
  %1603 = vperm.xlu0 %1602, %v1598
  %v1604 = vpop.permute.xlu0 %1603
  %1605 = vset.pattern.permute.xlu0 0
  %1606 = vperm.xlu0 %1605, %v1599
  %v1607 = vpop.permute.xlu0 %1606
  %1608 = vset.pattern.permute.xlu0 0
  %1609 = vperm.xlu0 %1608, %v1600
  %v1610 = vpop.permute.xlu0 %1609
  %1611 = vset.pattern.permute.xlu0 0
  %1612 = vperm.xlu0 %1611, %v1601
  %v1613 = vpop.permute.xlu0 %1612
  %vm1614 = vcmp.eq.s32.totalorder %v1604, 1
  %vm1615 = vcmp.eq.s32.totalorder %v1607, 1
  %vm1616 = vcmp.eq.s32.totalorder %v1610, 1
  %vm1617 = vcmp.eq.s32.totalorder %v1613, 1
  %v1618 = vsel %vm1614, %v1570, %v1403
  %v1619 = vsel %vm1615, %v1571, %v1404
  %v1620 = vsel %vm1616, %v1572, %v1405
  %v1621 = vsel %vm1617, %v1573, %v1406
  %v1622 = vunpack.c.l.bf16 %v1415
  %v1623 = vunpack.c.h.bf16 %v1415
  %v1624 = vunpack.c.l.bf16 %v1416
  %v1625 = vunpack.c.h.bf16 %v1416
  %v1626 = vsel %vm1614, %v1594, %v1622
  %v1627 = vsel %vm1615, %v1595, %v1623
  %v1628 = vsel %vm1616, %v1596, %v1624
  %v1629 = vsel %vm1617, %v1597, %v1625
  %v1630 = vpack.c.bf16 %v1627, %v1626
  %v1631 = vpack.c.bf16 %v1629, %v1628
  %1633 = vrot.lane.b32.xlu0 %v1630, 32
  %v1634 = vpop.permute.xlu0 %1633
  %1636 = vst.msk [vmem:[%s985] sm:$0xff] %vm128, %v1634
  %1638 = vrot.lane.b32.xlu0 %v1631, 64
  %v1639 = vpop.permute.xlu0 %1638
  %1641 = vst.msk [vmem:[%s979] sm:$0xff] %vm535, %v1639
  %v1642 = vld [vmem:[%s543] sm:$0xff]
  %v1643 = vld [vmem:[%s539 + $0x8] sm:$0xff]
  %v1644 = vld [vmem:[%s548] sm:$0xff]
  %v1645 = vld [vmem:[%s548 + $0x8] sm:$0xff]
  %v1646 = vld [vmem:[%s545] sm:$0xff]
  %v1647 = vld [vmem:[%s545 + $0x8] sm:$0xff]
  %vm1648 = vcmp.gt.f32.partialorder %v1644, 0.5
  %vm1649 = vcmp.gt.f32.partialorder %v1645, 0.5
  %vm1650 = vcmp.gt.f32.partialorder %v1646, 0.5
  %vm1651 = vcmp.gt.f32.partialorder %v1647, 0.5
  %1652 = vrot.lane.b32.xlu0 %v1631, 32
  %v1653 = vpop.permute.xlu0 %1652
  %v1655 = vsel %vm128, %v1634, 0
  %v1658 = vsel %vm128, %v1653, 0
  %1660 = vmatprep.subr.bf16.mxu0 %v332
  %1661 = vmatpush1.bf16.msra.mxu0 %v331
  %1662 = vmatprep.subr.bf16.mxu0 %v334
  %1663 = vmatpush1.bf16.msra.mxu0 %v333
  %1664 = vmatprep.subr.bf16.mxu0 0
  %1665 = vmatpush1.bf16.msra.mxu0 0
  %1666 = vmatprep.subr.bf16.mxu0 0
  %1667 = vmatpush1.bf16.msra.mxu0 0
  %1668 = vmatprep.subr.bf16.mxu0 0
  %1669 = vmatpush1.bf16.msra.mxu0 0
  %1670 = vmatprep.subr.bf16.mxu0 0
  %1671 = vmatpush1.bf16.msra.mxu0 0
  %1672 = vmatprep.subr.bf16.mxu0 0
  %1673 = vmatpush1.bf16.msra.mxu0 0
  %1674 = vmatprep.subr.bf16.mxu0 0
  %1675 = vmatpush1.bf16.msra.mxu0 0
  %1676 = vmatprep.subr.bf16.mxu0 0
  %1677 = vmatpush1.bf16.msra.mxu0 0
  %1678 = vmatprep.subr.bf16.mxu0 0
  %1679 = vmatpush1.bf16.msra.mxu0 0
  %1680 = vmatprep.subr.bf16.mxu0 0
  %1681 = vmatpush1.bf16.msra.mxu0 0
  %1682 = vmatprep.subr.bf16.mxu0 0
  %1683 = vmatpush1.bf16.msra.mxu0 0
  %1684 = vmatprep.subr.bf16.mxu0 0
  %1685 = vmatpush1.bf16.msra.mxu0 0
  %1686 = vmatprep.subr.bf16.mxu0 0
  %1687 = vmatpush1.bf16.msra.mxu0 0
  %1688 = vmatprep.subr.bf16.mxu0 0
  %1689 = vmatpush1.bf16.msra.mxu0 0
  %1690 = vmatprep.subr.bf16.mxu0 0
  %1691 = vmatpush1.bf16.msra.mxu0 0
  %1692 = vmatprep.mubr.bf16.mxu0 0
  %1693 = vmatmul.mubr.bf16.gmra.mrb[0].mxu0 %v1655
  %v1694 = vpop.f32.mrb[0].mxu0
  %v1695 = vadd.f32 0.0, %v1694
  %v1696 = vpop.f32.mrb[0].mxu0
  %v1697 = vpop.f32.mrb[0].mxu0
  %v1698 = vadd.f32 0.0, %v1697
  %v1699 = vpop.f32.mrb[0].mxu0
  %1700 = vmatprep.mubr.bf16.mxu0 0
  %1701 = vmatmul.mubr.bf16.gmra.mrb[0].mxu0 %v1658
  %v1702 = vpop.f32.mrb[0].mxu0
  %v1703 = vpop.f32.mrb[0].mxu0
  %v1704 = vadd.f32 0.0, %v1703
  %v1705 = vpop.f32.mrb[0].mxu0
  %v1706 = vpop.f32.mrb[0].mxu0
  %v1707 = vadd.f32 0.0, %v1706
  %1708 = vdwg.mxu0
  %v1709 = vunpack.c.l.bf16 %v1642
  %v1710 = vunpack.c.h.bf16 %v1642
  %v1711 = vadd.f32 %v1695, %v1709
  %v1712 = vadd.f32 %v1698, %v1710
  %v1713 = vunpack.c.l.bf16 %v1643
  %v1714 = vunpack.c.h.bf16 %v1643
  %v1715 = vadd.f32 %v1704, %v1713
  %v1716 = vadd.f32 %v1707, %v1714
  %v1717 = vxor.u32 %v1711, 2147483648
  %v1718 = vxor.u32 %v1712, 2147483648
  %v1719 = vxor.u32 %v1715, 2147483648
  %v1720 = vxor.u32 %v1716, 2147483648
  %v1721 = vmul.f32 %v1717, 1.442695
  %v1722 = vpow.pop %v1721
  %v1723 = vmul.f32 %v1718, 1.442695
  %v1724 = vpow.pop %v1723
  %v1725 = vmul.f32 %v1719, 1.442695
  %v1726 = vpow.pop %v1725
  %v1727 = vmul.f32 %v1720, 1.442695
  %v1728 = vpow.pop %v1727
  %v1729 = vadd.f32 %v1722, 1.0
  %v1730 = vadd.f32 %v1724, 1.0
  %v1731 = vadd.f32 %v1726, 1.0
  %v1732 = vadd.f32 %v1728, 1.0
  %v1733 = vrcp.pop %v1729
  %v1734 = vmul.f32 1.0, %v1733
  %v1735 = vrcp.pop %v1730
  %v1736 = vmul.f32 1.0, %v1735
  %v1737 = vrcp.pop %v1731
  %v1738 = vmul.f32 1.0, %v1737
  %v1739 = vrcp.pop %v1732
  %v1740 = vmul.f32 1.0, %v1739
  %v1741 = vtanh.pop %v1711
  %v1742 = vtanh.pop %v1712
  %v1743 = vtanh.pop %v1715
  %v1744 = vtanh.pop %v1716
  %v1745 = vmul.f32 %v1734, %v1618
  %v1746 = vmul.f32 %v1736, %v1619
  %v1747 = vmul.f32 %v1738, %v1620
  %v1748 = vmul.f32 %v1740, %v1621
  %1753 = vrot.lane.b32.xlu0 %v1741, 64
  %v1754 = vpop.permute.xlu0 %1753
  %1755 = vrot.lane.b32.xlu0 %v1742, 64
  %v1756 = vpop.permute.xlu0 %1755
  %1757 = vrot.lane.b32.xlu0 %v1743, 64
  %v1758 = vpop.permute.xlu0 %1757
  %1759 = vrot.lane.b32.xlu0 %v1744, 64
  %v1760 = vpop.permute.xlu0 %1759
  %v1765 = vmul.f32 %v1734, %v1754
  %v1766 = vmul.f32 %v1736, %v1756
  %v1767 = vmul.f32 %v1738, %v1758
  %v1768 = vmul.f32 %v1740, %v1760
  %1773 = vrot.lane.b32.xlu0 %v1765, 32
  %v1774 = vpop.permute.xlu0 %1773
  %1775 = vrot.lane.b32.xlu0 %v1766, 32
  %v1776 = vpop.permute.xlu0 %1775
  %1777 = vrot.lane.b32.xlu0 %v1767, 32
  %v1778 = vpop.permute.xlu0 %1777
  %1779 = vrot.lane.b32.xlu0 %v1768, 32
  %v1780 = vpop.permute.xlu0 %1779
  %v1785 = vadd.f32 %v1745, %v1774
  %v1786 = vadd.f32 %v1746, %v1776
  %v1787 = vadd.f32 %v1747, %v1778
  %v1788 = vadd.f32 %v1748, %v1780
  %v1789 = vtanh.pop %v1785
  %v1790 = vtanh.pop %v1786
  %v1791 = vtanh.pop %v1787
  %v1792 = vtanh.pop %v1788
  %1797 = vrot.lane.b32.xlu0 %v1789, 64
  %v1798 = vpop.permute.xlu0 %1797
  %1799 = vrot.lane.b32.xlu0 %v1790, 64
  %v1800 = vpop.permute.xlu0 %1799
  %1801 = vrot.lane.b32.xlu0 %v1791, 64
  %v1802 = vpop.permute.xlu0 %1801
  %1803 = vrot.lane.b32.xlu0 %v1792, 64
  %v1804 = vpop.permute.xlu0 %1803
  %v1809 = vmul.f32 %v1734, %v1798
  %v1810 = vmul.f32 %v1736, %v1800
  %v1811 = vmul.f32 %v1738, %v1802
  %v1812 = vmul.f32 %v1740, %v1804
  %v1813 = vsel %vm1648, 1, 0
  %v1814 = vsel %vm1649, 1, 0
  %v1815 = vsel %vm1650, 1, 0
  %v1816 = vsel %vm1651, 1, 0
  %1817 = vset.pattern.permute.xlu0 0
  %1818 = vperm.xlu0 %1817, %v1813
  %v1819 = vpop.permute.xlu0 %1818
  %1820 = vset.pattern.permute.xlu0 0
  %1821 = vperm.xlu0 %1820, %v1814
  %v1822 = vpop.permute.xlu0 %1821
  %1823 = vset.pattern.permute.xlu0 0
  %1824 = vperm.xlu0 %1823, %v1815
  %v1825 = vpop.permute.xlu0 %1824
  %1826 = vset.pattern.permute.xlu0 0
  %1827 = vperm.xlu0 %1826, %v1816
  %v1828 = vpop.permute.xlu0 %1827
  %vm1829 = vcmp.eq.s32.totalorder %v1819, 1
  %vm1830 = vcmp.eq.s32.totalorder %v1822, 1
  %vm1831 = vcmp.eq.s32.totalorder %v1825, 1
  %vm1832 = vcmp.eq.s32.totalorder %v1828, 1
  %v1833 = vsel %vm1829, %v1785, %v1618
  %v1834 = vsel %vm1830, %v1786, %v1619
  %v1835 = vsel %vm1831, %v1787, %v1620
  %v1836 = vsel %vm1832, %v1788, %v1621
  %v1837 = vunpack.c.l.bf16 %v1630
  %v1838 = vunpack.c.h.bf16 %v1630
  %v1839 = vunpack.c.l.bf16 %v1631
  %v1840 = vunpack.c.h.bf16 %v1631
  %v1841 = vsel %vm1829, %v1809, %v1837
  %v1842 = vsel %vm1830, %v1810, %v1838
  %v1843 = vsel %vm1831, %v1811, %v1839
  %v1844 = vsel %vm1832, %v1812, %v1840
  %v1845 = vpack.c.bf16 %v1842, %v1841
  %v1846 = vpack.c.bf16 %v1844, %v1843
  %1848 = vrot.lane.b32.xlu0 %v1845, 32
  %v1849 = vpop.permute.xlu0 %1848
  %1851 = vst.msk [vmem:[%s760] sm:$0xff] %vm128, %v1849
  %1853 = vrot.lane.b32.xlu0 %v1846, 64
  %v1854 = vpop.permute.xlu0 %1853
  %1856 = vst.msk [vmem:[%s754] sm:$0xff] %vm535, %v1854
  %v1857 = vld [vmem:[%s308] sm:$0xff]
  %v1858 = vld [vmem:[%s304 + $0x8] sm:$0xff]
  %v1859 = vld [vmem:[%s312] sm:$0xff]
  %v1860 = vld [vmem:[%s312 + $0x8] sm:$0xff]
  %v1861 = vld [vmem:[%s1] sm:$0xff]
  %v1862 = vld [vmem:[%s1 + $0x8] sm:$0xff]
  %vm1863 = vcmp.gt.f32.partialorder %v1859, 0.5
  %vm1864 = vcmp.gt.f32.partialorder %v1860, 0.5
  %vm1865 = vcmp.gt.f32.partialorder %v1861, 0.5
  %vm1866 = vcmp.gt.f32.partialorder %v1862, 0.5
  %1867 = vrot.lane.b32.xlu0 %v1846, 32
  %v1868 = vpop.permute.xlu0 %1867
  %v1870 = vsel %vm128, %v1849, 0
  %v1873 = vsel %vm128, %v1868, 0
  %1875 = vmatprep.subr.bf16.mxu0 %v332
  %1876 = vmatpush1.bf16.msra.mxu0 %v331
  %1877 = vmatprep.subr.bf16.mxu0 %v334
  %1878 = vmatpush1.bf16.msra.mxu0 %v333
  %1879 = vmatprep.subr.bf16.mxu0 0
  %1880 = vmatpush1.bf16.msra.mxu0 0
  %1881 = vmatprep.subr.bf16.mxu0 0
  %1882 = vmatpush1.bf16.msra.mxu0 0
  %1883 = vmatprep.subr.bf16.mxu0 0
  %1884 = vmatpush1.bf16.msra.mxu0 0
  %1885 = vmatprep.subr.bf16.mxu0 0
  %1886 = vmatpush1.bf16.msra.mxu0 0
  %1887 = vmatprep.subr.bf16.mxu0 0
  %1888 = vmatpush1.bf16.msra.mxu0 0
  %1889 = vmatprep.subr.bf16.mxu0 0
  %1890 = vmatpush1.bf16.msra.mxu0 0
  %1891 = vmatprep.subr.bf16.mxu0 0
  %1892 = vmatpush1.bf16.msra.mxu0 0
  %1893 = vmatprep.subr.bf16.mxu0 0
  %1894 = vmatpush1.bf16.msra.mxu0 0
  %1895 = vmatprep.subr.bf16.mxu0 0
  %1896 = vmatpush1.bf16.msra.mxu0 0
  %1897 = vmatprep.subr.bf16.mxu0 0
  %1898 = vmatpush1.bf16.msra.mxu0 0
  %1899 = vmatprep.subr.bf16.mxu0 0
  %1900 = vmatpush1.bf16.msra.mxu0 0
  %1901 = vmatprep.subr.bf16.mxu0 0
  %1902 = vmatpush1.bf16.msra.mxu0 0
  %1903 = vmatprep.subr.bf16.mxu0 0
  %1904 = vmatpush1.bf16.msra.mxu0 0
  %1905 = vmatprep.subr.bf16.mxu0 0
  %1906 = vmatpush1.bf16.msra.mxu0 0
  %1907 = vmatprep.mubr.bf16.mxu0 0
  %1908 = vmatmul.mubr.bf16.gmra.mrb[0].mxu0 %v1870
  %v1909 = vpop.f32.mrb[0].mxu0
  %v1910 = vadd.f32 0.0, %v1909
  %v1911 = vpop.f32.mrb[0].mxu0
  %v1912 = vpop.f32.mrb[0].mxu0
  %v1913 = vadd.f32 0.0, %v1912
  %v1914 = vpop.f32.mrb[0].mxu0
  %1915 = vmatprep.mubr.bf16.mxu0 0
  %1916 = vmatmul.mubr.bf16.gmra.mrb[0].mxu0 %v1873
  %v1917 = vpop.f32.mrb[0].mxu0
  %v1918 = vpop.f32.mrb[0].mxu0
  %v1919 = vadd.f32 0.0, %v1918
  %v1920 = vpop.f32.mrb[0].mxu0
  %v1921 = vpop.f32.mrb[0].mxu0
  %v1922 = vadd.f32 0.0, %v1921
  %1923 = vdwg.mxu0
  %v1924 = vunpack.c.l.bf16 %v1857
  %v1925 = vunpack.c.h.bf16 %v1857
  %v1926 = vadd.f32 %v1910, %v1924
  %v1927 = vadd.f32 %v1913, %v1925
  %v1928 = vunpack.c.l.bf16 %v1858
  %v1929 = vunpack.c.h.bf16 %v1858
  %v1930 = vadd.f32 %v1919, %v1928
  %v1931 = vadd.f32 %v1922, %v1929
  %v1932 = vxor.u32 %v1926, 2147483648
  %v1933 = vxor.u32 %v1927, 2147483648
  %v1934 = vxor.u32 %v1930, 2147483648
  %v1935 = vxor.u32 %v1931, 2147483648
  %v1936 = vmul.f32 %v1932, 1.442695
  %v1937 = vpow.pop %v1936
  %v1938 = vmul.f32 %v1933, 1.442695
  %v1939 = vpow.pop %v1938
  %v1940 = vmul.f32 %v1934, 1.442695
  %v1941 = vpow.pop %v1940
  %v1942 = vmul.f32 %v1935, 1.442695
  %v1943 = vpow.pop %v1942
  %v1944 = vadd.f32 %v1937, 1.0
  %v1945 = vadd.f32 %v1939, 1.0
  %v1946 = vadd.f32 %v1941, 1.0
  %v1947 = vadd.f32 %v1943, 1.0
  %v1948 = vrcp.pop %v1944
  %v1949 = vmul.f32 1.0, %v1948
  %v1950 = vrcp.pop %v1945
  %v1951 = vmul.f32 1.0, %v1950
  %v1952 = vrcp.pop %v1946
  %v1953 = vmul.f32 1.0, %v1952
  %v1954 = vrcp.pop %v1947
  %v1955 = vmul.f32 1.0, %v1954
  %v1956 = vtanh.pop %v1926
  %v1957 = vtanh.pop %v1927
  %v1958 = vtanh.pop %v1930
  %v1959 = vtanh.pop %v1931
  %v1960 = vmul.f32 %v1949, %v1833
  %v1961 = vmul.f32 %v1951, %v1834
  %v1962 = vmul.f32 %v1953, %v1835
  %v1963 = vmul.f32 %v1955, %v1836
  %1968 = vrot.lane.b32.xlu0 %v1956, 64
  %v1969 = vpop.permute.xlu0 %1968
  %1970 = vrot.lane.b32.xlu0 %v1957, 64
  %v1971 = vpop.permute.xlu0 %1970
  %1972 = vrot.lane.b32.xlu0 %v1958, 64
  %v1973 = vpop.permute.xlu0 %1972
  %1974 = vrot.lane.b32.xlu0 %v1959, 64
  %v1975 = vpop.permute.xlu0 %1974
  %v1980 = vmul.f32 %v1949, %v1969
  %v1981 = vmul.f32 %v1951, %v1971
  %v1982 = vmul.f32 %v1953, %v1973
  %v1983 = vmul.f32 %v1955, %v1975
  %1988 = vrot.lane.b32.xlu0 %v1980, 32
  %v1989 = vpop.permute.xlu0 %1988
  %1990 = vrot.lane.b32.xlu0 %v1981, 32
  %v1991 = vpop.permute.xlu0 %1990
  %1992 = vrot.lane.b32.xlu0 %v1982, 32
  %v1993 = vpop.permute.xlu0 %1992
  %1994 = vrot.lane.b32.xlu0 %v1983, 32
  %v1995 = vpop.permute.xlu0 %1994
  %v2000 = vadd.f32 %v1960, %v1989
  %v2001 = vadd.f32 %v1961, %v1991
  %v2002 = vadd.f32 %v1962, %v1993
  %v2003 = vadd.f32 %v1963, %v1995
  %v2004 = vtanh.pop %v2000
  %v2005 = vtanh.pop %v2001
  %v2006 = vtanh.pop %v2002
  %v2007 = vtanh.pop %v2003
  %2012 = vrot.lane.b32.xlu0 %v2004, 64
  %v2013 = vpop.permute.xlu0 %2012
  %2014 = vrot.lane.b32.xlu0 %v2005, 64
  %v2015 = vpop.permute.xlu0 %2014
  %2016 = vrot.lane.b32.xlu0 %v2006, 64
  %v2017 = vpop.permute.xlu0 %2016
  %2018 = vrot.lane.b32.xlu0 %v2007, 64
  %v2019 = vpop.permute.xlu0 %2018
  %v2024 = vmul.f32 %v1949, %v2013
  %v2025 = vmul.f32 %v1951, %v2015
  %v2026 = vmul.f32 %v1953, %v2017
  %v2027 = vmul.f32 %v1955, %v2019
  %v2028 = vunpack.c.l.bf16 %v1845
  %v2029 = vunpack.c.h.bf16 %v1845
  %v2030 = vunpack.c.l.bf16 %v1846
  %v2031 = vunpack.c.h.bf16 %v1846
  %v2032 = vsel %vm1863, 1, 0
  %v2033 = vsel %vm1864, 1, 0
  %v2034 = vsel %vm1865, 1, 0
  %v2035 = vsel %vm1866, 1, 0
  %2036 = vset.pattern.permute.xlu0 0
  %2037 = vperm.xlu0 %2036, %v2032
  %v2038 = vpop.permute.xlu0 %2037
  %2039 = vset.pattern.permute.xlu0 0
  %2040 = vperm.xlu0 %2039, %v2033
  %v2041 = vpop.permute.xlu0 %2040
  %2042 = vset.pattern.permute.xlu0 0
  %2043 = vperm.xlu0 %2042, %v2034
  %v2044 = vpop.permute.xlu0 %2043
  %2045 = vset.pattern.permute.xlu0 0
  %2046 = vperm.xlu0 %2045, %v2035
  %v2047 = vpop.permute.xlu0 %2046
  %vm2048 = vcmp.eq.s32.totalorder %v2038, 1
  %vm2049 = vcmp.eq.s32.totalorder %v2041, 1
  %vm2050 = vcmp.eq.s32.totalorder %v2044, 1
  %vm2051 = vcmp.eq.s32.totalorder %v2047, 1
  %v2052 = vsel %vm2048, %v2024, %v2028
  %v2053 = vsel %vm2049, %v2025, %v2029
  %v2054 = vsel %vm2050, %v2026, %v2030
  %v2055 = vsel %vm2051, %v2027, %v2031
  %v2056 = vpack.c.bf16 %v2053, %v2052
  %v2057 = vpack.c.bf16 %v2055, %v2054
  %2059 = vrot.lane.b32.xlu0 %v2056, 32
  %v2060 = vpop.permute.xlu0 %2059
  %2062 = vst.msk [vmem:[%s534] sm:$0xff] %vm128, %v2060
  %2064 = vrot.lane.b32.xlu0 %v2057, 64
  %v2065 = vpop.permute.xlu0 %2064
  %2067 = vst.msk [vmem:[#allocation3] sm:$0xff] %vm535, %v2065
  %v2068 = vld [vmem:[#allocation3] sm:$0xff]
  %v2069 = vld [vmem:[#allocation3 + $0x8] sm:$0xff]
  %v2070 = vld [vmem:[#allocation3 + $0x10] sm:$0xff]
  %v2071 = vld [vmem:[#allocation3 + $0x18] sm:$0xff]
  %v2072 = vld [vmem:[#allocation3 + $0x20] sm:$0xff]
  %v2073 = vld [vmem:[#allocation3 + $0x28] sm:$0xff]
  %v2074 = vld [vmem:[#allocation3 + $0x30] sm:$0xff]
  %v2075 = vld [vmem:[#allocation3 + $0x38] sm:$0xff]
  %v2076 = vld [vmem:[%s6] sm:$0xf]
  %v2077 = vld [vmem:[%s6 + $0x4] sm:$0xf]
  %v2078 = vld [vmem:[%s6 + $0x8] sm:$0xf]
  %v2079 = vld [vmem:[%s6 + $0xc] sm:$0xf]
  %v2080 = vld [vmem:[%s6 + $0x10] sm:$0xf]
  %v2081 = vld [vmem:[%s6 + $0x14] sm:$0xf]
  %v2082 = vld [vmem:[%s6 + $0x18] sm:$0xf]
  %v2083 = vld [vmem:[%s6 + $0x1c] sm:$0xf]
  %v2084 = vld [vmem:[%s7] sm:$0x1]
  %v2086 = vlaneseq
  %v2087 = vshrl.u32 %v2086, 7
  %v2088 = vsub.s32 0, %v2087
  %v2089 = vrot.slane %v2084, %v2088
  %v2099 = vunpack.c.l.b16 %v2076
  %v2100 = vunpack.c.l.b16 %v2077
  %v2101 = vunpack.c.l.b16 %v2078
  %v2102 = vunpack.c.l.b16 %v2079
  %v2103 = vunpack.c.l.b16 %v2080
  %v2104 = vunpack.c.l.b16 %v2081
  %v2105 = vunpack.c.l.b16 %v2082
  %v2106 = vunpack.c.l.b16 %v2083
  %v2107 = vpack.c.b16 %v2100, %v2099
  %v2108 = vpack.c.b16 %v2102, %v2101
  %v2109 = vpack.c.b16 %v2104, %v2103
  %v2110 = vpack.c.b16 %v2106, %v2105
  %vm2115 = vcmask 523264
  %v2117 = vsel %vm2115, %v2068, 0
  %v2120 = vsel %vm2115, %v2069, 0
  %v2123 = vsel %vm2115, %v2070, 0
  %v2126 = vsel %vm2115, %v2071, 0
  %v2129 = vsel %vm2115, %v2072, 0
  %v2132 = vsel %vm2115, %v2073, 0
  %v2135 = vsel %vm2115, %v2074, 0
  %v2138 = vsel %vm2115, %v2075, 0
  %2140 = vmatprep.subr.bf16.mxu0 0
  %2141 = vmatpush1.bf16.msra.mxu0 %v2107
  %2142 = vmatprep.subr.bf16.mxu0 0
  %2143 = vmatpush1.bf16.msra.mxu0 %v2108
  %2144 = vmatprep.subr.bf16.mxu0 0
  %2145 = vmatpush1.bf16.msra.mxu0 %v2109
  %2146 = vmatprep.subr.bf16.mxu0 0
  %2147 = vmatpush1.bf16.msra.mxu0 %v2110
  %2148 = vmatprep.subr.bf16.mxu0 0
  %2149 = vmatpush1.bf16.msra.mxu0 0
  %2150 = vmatprep.subr.bf16.mxu0 0
  %2151 = vmatpush1.bf16.msra.mxu0 0
  %2152 = vmatprep.subr.bf16.mxu0 0
  %2153 = vmatpush1.bf16.msra.mxu0 0
  %2154 = vmatprep.subr.bf16.mxu0 0
  %2155 = vmatpush1.bf16.msra.mxu0 0
  %2156 = vmatprep.subr.bf16.mxu0 0
  %2157 = vmatpush1.bf16.msra.mxu0 0
  %2158 = vmatprep.subr.bf16.mxu0 0
  %2159 = vmatpush1.bf16.msra.mxu0 0
  %2160 = vmatprep.subr.bf16.mxu0 0
  %2161 = vmatpush1.bf16.msra.mxu0 0
  %2162 = vmatprep.subr.bf16.mxu0 0
  %2163 = vmatpush1.bf16.msra.mxu0 0
  %2164 = vmatprep.subr.bf16.mxu0 0
  %2165 = vmatpush1.bf16.msra.mxu0 0
  %2166 = vmatprep.subr.bf16.mxu0 0
  %2167 = vmatpush1.bf16.msra.mxu0 0
  %2168 = vmatprep.subr.bf16.mxu0 0
  %2169 = vmatpush1.bf16.msra.mxu0 0
  %2170 = vmatprep.subr.bf16.mxu0 0
  %2171 = vmatpush1.bf16.msra.mxu0 0
  %2172 = vmatprep.mubr.bf16.mxu0 0
  %2173 = vmatmul.mubr.bf16.gmra.mrb[0].mxu0 %v2117
  %v2174 = vpop.f32.mrb[0].mxu0
  %v2175 = vadd.f32 %v2089, %v2174
  %v2176 = vpop.f32.mrb[0].mxu0
  %v2177 = vpop.f32.mrb[0].mxu0
  %v2178 = vadd.f32 %v2089, %v2177
  %v2179 = vpop.f32.mrb[0].mxu0
  %2180 = vmatprep.mubr.bf16.mxu0 0
  %2181 = vmatmul.mubr.bf16.gmra.mrb[0].mxu0 %v2120
  %v2182 = vpop.f32.mrb[0].mxu0
  %v2183 = vadd.f32 %v2089, %v2182
  %v2184 = vpop.f32.mrb[0].mxu0
  %v2185 = vpop.f32.mrb[0].mxu0
  %v2186 = vadd.f32 %v2089, %v2185
  %v2187 = vpop.f32.mrb[0].mxu0
  %2188 = vmatprep.mubr.bf16.mxu0 0
  %2189 = vmatmul.mubr.bf16.gmra.mrb[0].mxu0 %v2123
  %v2190 = vpop.f32.mrb[0].mxu0
  %v2191 = vadd.f32 %v2089, %v2190
  %v2192 = vpop.f32.mrb[0].mxu0
  %v2193 = vpop.f32.mrb[0].mxu0
  %v2194 = vadd.f32 %v2089, %v2193
  %v2195 = vpop.f32.mrb[0].mxu0
  %2196 = vmatprep.mubr.bf16.mxu0 0
  %2197 = vmatmul.mubr.bf16.gmra.mrb[0].mxu0 %v2126
  %v2198 = vpop.f32.mrb[0].mxu0
  %v2199 = vadd.f32 %v2089, %v2198
  %v2200 = vpop.f32.mrb[0].mxu0
  %v2201 = vpop.f32.mrb[0].mxu0
  %v2202 = vadd.f32 %v2089, %v2201
  %v2203 = vpop.f32.mrb[0].mxu0
  %2204 = vmatprep.mubr.bf16.mxu0 0
  %2205 = vmatmul.mubr.bf16.gmra.mrb[0].mxu0 %v2129
  %v2206 = vpop.f32.mrb[0].mxu0
  %v2207 = vadd.f32 %v2089, %v2206
  %v2208 = vpop.f32.mrb[0].mxu0
  %v2209 = vpop.f32.mrb[0].mxu0
  %v2210 = vadd.f32 %v2089, %v2209
  %v2211 = vpop.f32.mrb[0].mxu0
  %2212 = vmatprep.mubr.bf16.mxu0 0
  %2213 = vmatmul.mubr.bf16.gmra.mrb[0].mxu0 %v2132
  %v2214 = vpop.f32.mrb[0].mxu0
  %v2215 = vadd.f32 %v2089, %v2214
  %v2216 = vpop.f32.mrb[0].mxu0
  %v2217 = vpop.f32.mrb[0].mxu0
  %v2218 = vadd.f32 %v2089, %v2217
  %v2219 = vpop.f32.mrb[0].mxu0
  %2220 = vmatprep.mubr.bf16.mxu0 0
  %2221 = vmatmul.mubr.bf16.gmra.mrb[0].mxu0 %v2135
  %v2222 = vpop.f32.mrb[0].mxu0
  %v2223 = vadd.f32 %v2089, %v2222
  %v2224 = vpop.f32.mrb[0].mxu0
  %v2225 = vpop.f32.mrb[0].mxu0
  %v2226 = vadd.f32 %v2089, %v2225
  %v2227 = vpop.f32.mrb[0].mxu0
  %2228 = vmatprep.mubr.bf16.mxu0 0
  %2229 = vmatmul.mubr.bf16.gmra.mrb[0].mxu0 %v2138
  %v2230 = vpop.f32.mrb[0].mxu0
  %v2231 = vadd.f32 %v2089, %v2230
  %v2232 = vpop.f32.mrb[0].mxu0
  %v2233 = vpop.f32.mrb[0].mxu0
  %v2234 = vadd.f32 %v2089, %v2233
  %v2235 = vpop.f32.mrb[0].mxu0
  %2236 = vdwg.mxu0
  %vm2237 = vcmask 64512
  %2238 = vst.msk [vmem:[#allocation4] sm:$0xff] %vm2237, %v2175
  %2239 = vst.msk [vmem:[#allocation4 + $0x8] sm:$0xff] %vm2237, %v2178
  %2240 = vst.msk [vmem:[#allocation4 + $0x10] sm:$0xff] %vm2237, %v2183
  %2241 = vst.msk [vmem:[#allocation4 + $0x18] sm:$0xff] %vm2237, %v2186
  %2242 = vst.msk [vmem:[#allocation4 + $0x20] sm:$0xff] %vm2237, %v2191
  %2243 = vst.msk [vmem:[#allocation4 + $0x28] sm:$0xff] %vm2237, %v2194
  %2244 = vst.msk [vmem:[#allocation4 + $0x30] sm:$0xff] %vm2237, %v2199
  %2245 = vst.msk [vmem:[#allocation4 + $0x38] sm:$0xff] %vm2237, %v2202
  %2246 = vst.msk [vmem:[#allocation4 + $0x40] sm:$0xff] %vm2237, %v2207
  %2247 = vst.msk [vmem:[#allocation4 + $0x48] sm:$0xff] %vm2237, %v2210
  %2248 = vst.msk [vmem:[#allocation4 + $0x50] sm:$0xff] %vm2237, %v2215
  %2249 = vst.msk [vmem:[#allocation4 + $0x58] sm:$0xff] %vm2237, %v2218
  %2250 = vst.msk [vmem:[#allocation4 + $0x60] sm:$0xff] %vm2237, %v2223
  %2251 = vst.msk [vmem:[#allocation4 + $0x68] sm:$0xff] %vm2237, %v2226
  %2252 = vst.msk [vmem:[#allocation4 + $0x70] sm:$0xff] %vm2237, %v2231
  %2253 = vst.msk [vmem:[#allocation4 + $0x78] sm:$0xff] %vm2237, %v2234
  %v2254 = vld [vmem:[%s8] sm:$0xff]
  %v2255 = vld [vmem:[%s9] sm:$0xff]
  %v2256 = vlaneseq
  %v2257 = vand.u32 %v2256, 127
  %v2258 = vld [vmem:[#allocation4] sm:$0xff]
  %v2259 = vld [vmem:[#allocation4 + $0x8] sm:$0xff]
  %v2260 = vld [vmem:[%s1] sm:$0xff]
  %v2261 = vld [vmem:[%s1 + $0x8] sm:$0xff]
  %v2262 = vld [vmem:[%s2] sm:$0xff]
  %v2263 = vld [vmem:[%s2 + $0x8] sm:$0xff]
  %2264 = vset.pattern.permute.xlu0 0
  %2265 = vperm.xlu0 %2264, %v2262
  %v2266 = vpop.permute.xlu0 %2265
  %2267 = vset.pattern.permute.xlu0 0
  %2268 = vperm.xlu0 %2267, %v2263
  %v2269 = vpop.permute.xlu0 %2268
  %vm2270 = vcmp.eq.s32.totalorder %v2266, %v2257
  %vm2271 = vcmp.eq.s32.totalorder %v2269, %v2257
  %v2272 = vsel %vm2270, 1, 0
  %v2273 = vsel %vm2271, 1, 0
  %v2274 = vcvt.s32.f32 %v2272
  %v2275 = vcvt.s32.f32 %v2273
  %v2276 = vmul.f32 %v2258, %v2274
  %v2277 = vmul.f32 %v2259, %v2275
  %v2278 = vsel %vm2237, %v2276, 0.0
  %2279 = vadd.xlane.f32.xlu0 %v2278
  %v2280 = vpop.xlane.xlu0 %2279
  %v2281 = vsel %vm2237, %v2277, 0.0
  %2282 = vadd.xlane.f32.xlu0 %v2281
  %v2283 = vpop.xlane.xlu0 %2282
  %v2284 = vmul.f32 %v2280, %v2260
  %v2285 = vmul.f32 %v2283, %v2261
  %s2286 = scalar_lea.vmem [#allocation4], 16
  %v2287 = vld [vmem:[%s2286] sm:$0xff]
  %v2288 = vld [vmem:[%s2286 + $0x8] sm:$0xff]
  %v2289 = vld [vmem:[%s545] sm:$0xff]
  %v2290 = vld [vmem:[%s545 + $0x8] sm:$0xff]
  %s2291 = scalar_lea.vmem %s2, 16
  %v2292 = vld [vmem:[%s2291] sm:$0xff]
  %v2293 = vld [vmem:[%s2291 + $0x8] sm:$0xff]
  %2294 = vset.pattern.permute.xlu0 0
  %2295 = vperm.xlu0 %2294, %v2292
  %v2296 = vpop.permute.xlu0 %2295
  %2297 = vset.pattern.permute.xlu0 0
  %2298 = vperm.xlu0 %2297, %v2293
  %v2299 = vpop.permute.xlu0 %2298
  %vm2300 = vcmp.eq.s32.totalorder %v2296, %v2257
  %vm2301 = vcmp.eq.s32.totalorder %v2299, %v2257
  %v2302 = vsel %vm2300, 1, 0
  %v2303 = vsel %vm2301, 1, 0
  %v2304 = vcvt.s32.f32 %v2302
  %v2305 = vcvt.s32.f32 %v2303
  %v2306 = vmul.f32 %v2287, %v2304
  %v2307 = vmul.f32 %v2288, %v2305
  %v2308 = vsel %vm2237, %v2306, 0.0
  %2309 = vadd.xlane.f32.xlu0 %v2308
  %v2310 = vpop.xlane.xlu0 %2309
  %v2311 = vsel %vm2237, %v2307, 0.0
  %2312 = vadd.xlane.f32.xlu0 %v2311
  %v2313 = vpop.xlane.xlu0 %2312
  %v2315 = vsel %vm2237, %v2274, 0
  %v2318 = vsel %vm2237, %v2275, 0
  %2320 = vmatprep.subr.mxu0 0.0
  %2321 = vmatpush1.msra.mxu0 %v2254
  %2322 = vmatprep.subr.mxu0 0.0
  %2323 = vmatpush1.msra.mxu0 0.0
  %2324 = vmatprep.subr.mxu0 0.0
  %2325 = vmatpush1.msra.mxu0 0.0
  %2326 = vmatprep.subr.mxu0 0.0
  %2327 = vmatpush1.msra.mxu0 0.0
  %2328 = vmatprep.subr.mxu0 0.0
  %2329 = vmatpush1.msra.mxu0 0.0
  %2330 = vmatprep.subr.mxu0 0.0
  %2331 = vmatpush1.msra.mxu0 0.0
  %2332 = vmatprep.subr.mxu0 0.0
  %2333 = vmatpush1.msra.mxu0 0.0
  %2334 = vmatprep.subr.mxu0 0.0
  %2335 = vmatpush1.msra.mxu0 0.0
  %2336 = vmatprep.subr.mxu0 0.0
  %2337 = vmatpush1.msra.mxu0 0.0
  %2338 = vmatprep.subr.mxu0 0.0
  %2339 = vmatpush1.msra.mxu0 0.0
  %2340 = vmatprep.subr.mxu0 0.0
  %2341 = vmatpush1.msra.mxu0 0.0
  %2342 = vmatprep.subr.mxu0 0.0
  %2343 = vmatpush1.msra.mxu0 0.0
  %2344 = vmatprep.subr.mxu0 0.0
  %2345 = vmatpush1.msra.mxu0 0.0
  %2346 = vmatprep.subr.mxu0 0.0
  %2347 = vmatpush1.msra.mxu0 0.0
  %2348 = vmatprep.subr.mxu0 0.0
  %2349 = vmatpush1.msra.mxu0 0.0
  %2350 = vmatprep.subr.mxu0 0.0
  %2351 = vmatpush1.msra.mxu0 0.0
  %2352 = vmatprep.subr.mxu0 0.0
  %2353 = vmatpush1.msra.mxu0 0.0
  %2354 = vmatprep.subr.mxu0 0.0
  %2355 = vmatpush1.msra.mxu0 0.0
  %2356 = vmatprep.subr.mxu0 0.0
  %2357 = vmatpush1.msra.mxu0 0.0
  %2358 = vmatprep.subr.mxu0 0.0
  %2359 = vmatpush1.msra.mxu0 0.0
  %2360 = vmatprep.subr.mxu0 0.0
  %2361 = vmatpush1.msra.mxu0 0.0
  %2362 = vmatprep.subr.mxu0 0.0
  %2363 = vmatpush1.msra.mxu0 0.0
  %2364 = vmatprep.subr.mxu0 0.0
  %2365 = vmatpush1.msra.mxu0 0.0
  %2366 = vmatprep.subr.mxu0 0.0
  %2367 = vmatpush1.msra.mxu0 0.0
  %2368 = vmatprep.subr.mxu0 0.0
  %2369 = vmatpush1.msra.mxu0 0.0
  %2370 = vmatprep.subr.mxu0 0.0
  %2371 = vmatpush1.msra.mxu0 0.0
  %2372 = vmatprep.subr.mxu0 0.0
  %2373 = vmatpush1.msra.mxu0 0.0
  %2374 = vmatprep.subr.mxu0 0.0
  %2375 = vmatpush1.msra.mxu0 0.0
  %2376 = vmatprep.subr.mxu0 0.0
  %2377 = vmatpush1.msra.mxu0 0.0
  %2378 = vmatprep.subr.mxu0 0.0
  %2379 = vmatpush1.msra.mxu0 0.0
  %2380 = vmatprep.subr.mxu0 0.0
  %2381 = vmatpush1.msra.mxu0 0.0
  %2382 = vmatprep.subr.mxu0 0.0
  %2383 = vmatpush1.msra.mxu0 0.0
  %2384 = vmatprep.mubr.f32.mxu0 0.0
  %2385 = vmatmul.mubr.f32.gmra.mrb[0].mxu0 %v2315
  %v2386 = vpop.f32.mrb[0].mxu0
  %v2387 = vadd.f32 0.0, %v2386
  %v2388 = vpop.f32.mrb[0].mxu0
  %2389 = vmatprep.mubr.f32.mxu0 0.0
  %2390 = vmatmul.mubr.f32.gmra.mrb[0].mxu0 %v2318
  %v2391 = vpop.f32.mrb[0].mxu0
  %v2392 = vadd.f32 0.0, %v2391
  %v2393 = vpop.f32.mrb[0].mxu0
  %2394 = vdwg.mxu0
  %v2395 = vmul.f32 %v2387, %v2304
  %v2396 = vmul.f32 %v2392, %v2305
  %v2397 = vsel %vm2237, %v2395, 0.0
  %2398 = vadd.xlane.f32.xlu0 %v2397
  %v2399 = vpop.xlane.xlu0 %2398
  %v2400 = vsel %vm2237, %v2396, 0.0
  %2401 = vadd.xlane.f32.xlu0 %v2400
  %v2402 = vpop.xlane.xlu0 %2401
  %v2403 = vadd.f32 %v2310, %v2399
  %v2404 = vadd.f32 %v2313, %v2402
  %v2405 = vmul.f32 %v2403, %v2289
  %v2406 = vmul.f32 %v2404, %v2290
  %v2407 = vadd.f32 %v2284, %v2405
  %v2408 = vadd.f32 %v2285, %v2406
  %v2411 = vcombine.high %v2258, %v2258
  %v2413 = vunpack.c.l.s4 1966171168
  %v2414 = vunpack.c.0.s8 %v2413
  %v2415 = vlaneseq
  %v2416 = vshrl.u32 %v2415, 7
  %v2417 = vsub.s32 %v2414, %v2416
  %v2418 = vrot.slane %v2258, %v2417
  %v2420 = vunpack.c.l.s4 1966171168
  %v2421 = vunpack.c.0.s8 %v2420
  %v2422 = vlaneseq
  %v2423 = vshrl.u32 %v2422, 7
  %v2424 = vsub.s32 %v2421, %v2423
  %v2425 = vrot.slane %v2411, %v2424
  %v2426 = vcombine.high %v2418, %v2418
  %v2427 = vcombine.high %v2425, %v2425
  %v2429 = vunpack.c.l.s4 1966171168
  %v2430 = vunpack.c.0.s8 %v2429
  %v2431 = vlaneseq
  %v2432 = vshrl.u32 %v2431, 7
  %v2433 = vsub.s32 %v2430, %v2432
  %v2434 = vrot.slane %v2418, %v2433
  %v2436 = vunpack.c.l.s4 1966171168
  %v2437 = vunpack.c.0.s8 %v2436
  %v2438 = vlaneseq
  %v2439 = vshrl.u32 %v2438, 7
  %v2440 = vsub.s32 %v2437, %v2439
  %v2441 = vrot.slane %v2425, %v2440
  %v2443 = vunpack.c.l.s4 1966171168
  %v2444 = vunpack.c.0.s8 %v2443
  %v2445 = vlaneseq
  %v2446 = vshrl.u32 %v2445, 7
  %v2447 = vsub.s32 %v2444, %v2446
  %v2448 = vrot.slane %v2426, %v2447
  %v2450 = vunpack.c.l.s4 1966171168
  %v2451 = vunpack.c.0.s8 %v2450
  %v2452 = vlaneseq
  %v2453 = vshrl.u32 %v2452, 7
  %v2454 = vsub.s32 %v2451, %v2453
  %v2455 = vrot.slane %v2427, %v2454
  %v2456 = vcombine.high %v2434, %v2434
  %v2457 = vcombine.high %v2441, %v2441
  %v2458 = vcombine.high %v2448, %v2448
  %v2459 = vcombine.high %v2455, %v2455
  %v2460 = vcombine.high %v2259, %v2259
  %v2462 = vunpack.c.l.s4 1966171168
  %v2463 = vunpack.c.0.s8 %v2462
  %v2464 = vlaneseq
  %v2465 = vshrl.u32 %v2464, 7
  %v2466 = vsub.s32 %v2463, %v2465
  %v2467 = vrot.slane %v2259, %v2466
  %v2469 = vunpack.c.l.s4 1966171168
  %v2470 = vunpack.c.0.s8 %v2469
  %v2471 = vlaneseq
  %v2472 = vshrl.u32 %v2471, 7
  %v2473 = vsub.s32 %v2470, %v2472
  %v2474 = vrot.slane %v2460, %v2473
  %v2475 = vcombine.high %v2467, %v2467
  %v2476 = vcombine.high %v2474, %v2474
  %v2478 = vunpack.c.l.s4 1966171168
  %v2479 = vunpack.c.0.s8 %v2478
  %v2480 = vlaneseq
  %v2481 = vshrl.u32 %v2480, 7
  %v2482 = vsub.s32 %v2479, %v2481
  %v2483 = vrot.slane %v2467, %v2482
  %v2485 = vunpack.c.l.s4 1966171168
  %v2486 = vunpack.c.0.s8 %v2485
  %v2487 = vlaneseq
  %v2488 = vshrl.u32 %v2487, 7
  %v2489 = vsub.s32 %v2486, %v2488
  %v2490 = vrot.slane %v2474, %v2489
  %v2492 = vunpack.c.l.s4 1966171168
  %v2493 = vunpack.c.0.s8 %v2492
  %v2494 = vlaneseq
  %v2495 = vshrl.u32 %v2494, 7
  %v2496 = vsub.s32 %v2493, %v2495
  %v2497 = vrot.slane %v2475, %v2496
  %v2499 = vunpack.c.l.s4 1966171168
  %v2500 = vunpack.c.0.s8 %v2499
  %v2501 = vlaneseq
  %v2502 = vshrl.u32 %v2501, 7
  %v2503 = vsub.s32 %v2500, %v2502
  %v2504 = vrot.slane %v2476, %v2503
  %v2505 = vcombine.high %v2483, %v2483
  %v2506 = vcombine.high %v2490, %v2490
  %v2507 = vcombine.high %v2497, %v2497
  %v2508 = vcombine.high %v2504, %v2504
  %v2509 = vlaneseq
  %v2510 = vshrl.u32 %v2509, 7
  %v2511 = vsub.s32 0, %v2510
  %v2512 = vrot.slane %v2434, %v2511
  %v2513 = vlaneseq
  %v2514 = vshrl.u32 %v2513, 7
  %v2515 = vsub.s32 0, %v2514
  %v2516 = vrot.slane %v2448, %v2515
  %v2517 = vlaneseq
  %v2518 = vshrl.u32 %v2517, 7
  %v2519 = vsub.s32 0, %v2518
  %v2520 = vrot.slane %v2456, %v2519
  %v2521 = vlaneseq
  %v2522 = vshrl.u32 %v2521, 7
  %v2523 = vsub.s32 0, %v2522
  %v2524 = vrot.slane %v2458, %v2523
  %v2525 = vlaneseq
  %v2526 = vshrl.u32 %v2525, 7
  %v2527 = vsub.s32 0, %v2526
  %v2528 = vrot.slane %v2441, %v2527
  %v2529 = vlaneseq
  %v2530 = vshrl.u32 %v2529, 7
  %v2531 = vsub.s32 0, %v2530
  %v2532 = vrot.slane %v2455, %v2531
  %v2533 = vlaneseq
  %v2534 = vshrl.u32 %v2533, 7
  %v2535 = vsub.s32 0, %v2534
  %v2536 = vrot.slane %v2457, %v2535
  %v2537 = vlaneseq
  %v2538 = vshrl.u32 %v2537, 7
  %v2539 = vsub.s32 0, %v2538
  %v2540 = vrot.slane %v2459, %v2539
  %v2541 = vlaneseq
  %v2542 = vshrl.u32 %v2541, 7
  %v2543 = vsub.s32 0, %v2542
  %v2544 = vrot.slane %v2483, %v2543
  %v2545 = vlaneseq
  %v2546 = vshrl.u32 %v2545, 7
  %v2547 = vsub.s32 0, %v2546
  %v2548 = vrot.slane %v2497, %v2547
  %v2549 = vlaneseq
  %v2550 = vshrl.u32 %v2549, 7
  %v2551 = vsub.s32 0, %v2550
  %v2552 = vrot.slane %v2505, %v2551
  %v2553 = vlaneseq
  %v2554 = vshrl.u32 %v2553, 7
  %v2555 = vsub.s32 0, %v2554
  %v2556 = vrot.slane %v2507, %v2555
  %v2557 = vlaneseq
  %v2558 = vshrl.u32 %v2557, 7
  %v2559 = vsub.s32 0, %v2558
  %v2560 = vrot.slane %v2490, %v2559
  %v2561 = vlaneseq
  %v2562 = vshrl.u32 %v2561, 7
  %v2563 = vsub.s32 0, %v2562
  %v2564 = vrot.slane %v2504, %v2563
  %v2565 = vlaneseq
  %v2566 = vshrl.u32 %v2565, 7
  %v2567 = vsub.s32 0, %v2566
  %v2568 = vrot.slane %v2506, %v2567
  %v2569 = vlaneseq
  %v2570 = vshrl.u32 %v2569, 7
  %v2571 = vsub.s32 0, %v2570
  %v2572 = vrot.slane %v2508, %v2571
  %v2589 = vadd.f32 %v2512, %v2255
  %v2590 = vadd.f32 %v2516, %v2255
  %v2591 = vadd.f32 %v2520, %v2255
  %v2592 = vadd.f32 %v2524, %v2255
  %v2593 = vadd.f32 %v2528, %v2255
  %v2594 = vadd.f32 %v2532, %v2255
  %v2595 = vadd.f32 %v2536, %v2255
  %v2596 = vadd.f32 %v2540, %v2255
  %v2597 = vadd.f32 %v2544, %v2255
  %v2598 = vadd.f32 %v2548, %v2255
  %v2599 = vadd.f32 %v2552, %v2255
  %v2600 = vadd.f32 %v2556, %v2255
  %v2601 = vadd.f32 %v2560, %v2255
  %v2602 = vadd.f32 %v2564, %v2255
  %v2603 = vadd.f32 %v2568, %v2255
  %v2604 = vadd.f32 %v2572, %v2255
  %v2605 = vlaneseq
  %v2606 = vshrl.u32 %v2605, 7
  %v2607 = vsub.s32 0, %v2606
  %v2608 = vrot.slane %v2287, %v2607
  %2610 = vbcast.lane.b32.xlu0 %v2608, 256
  %v2611 = vpop.permute.xlu0 %2610
  %v2612 = vlaneseq
  %v2613 = vshrl.u32 %v2612, 7
  %v2614 = vsub.s32 1, %v2613
  %v2615 = vrot.slane %v2287, %v2614
  %2617 = vbcast.lane.b32.xlu0 %v2615, 256
  %v2618 = vpop.permute.xlu0 %2617
  %v2619 = vlaneseq
  %v2620 = vshrl.u32 %v2619, 7
  %v2621 = vsub.s32 2, %v2620
  %v2622 = vrot.slane %v2287, %v2621
  %2624 = vbcast.lane.b32.xlu0 %v2622, 256
  %v2625 = vpop.permute.xlu0 %2624
  %v2626 = vlaneseq
  %v2627 = vshrl.u32 %v2626, 7
  %v2628 = vsub.s32 3, %v2627
  %v2629 = vrot.slane %v2287, %v2628
  %2631 = vbcast.lane.b32.xlu0 %v2629, 256
  %v2632 = vpop.permute.xlu0 %2631
  %v2633 = vlaneseq
  %v2634 = vshrl.u32 %v2633, 7
  %v2635 = vsub.s32 4, %v2634
  %v2636 = vrot.slane %v2287, %v2635
  %2638 = vbcast.lane.b32.xlu0 %v2636, 256
  %v2639 = vpop.permute.xlu0 %2638
  %v2640 = vlaneseq
  %v2641 = vshrl.u32 %v2640, 7
  %v2642 = vsub.s32 5, %v2641
  %v2643 = vrot.slane %v2287, %v2642
  %2645 = vbcast.lane.b32.xlu0 %v2643, 256
  %v2646 = vpop.permute.xlu0 %2645
  %v2647 = vlaneseq
  %v2648 = vshrl.u32 %v2647, 7
  %v2649 = vsub.s32 6, %v2648
  %v2650 = vrot.slane %v2287, %v2649
  %2652 = vbcast.lane.b32.xlu0 %v2650, 256
  %v2653 = vpop.permute.xlu0 %2652
  %v2654 = vlaneseq
  %v2655 = vshrl.u32 %v2654, 7
  %v2656 = vsub.s32 7, %v2655
  %v2657 = vrot.slane %v2287, %v2656
  %2659 = vbcast.lane.b32.xlu0 %v2657, 256
  %v2660 = vpop.permute.xlu0 %2659
  %v2661 = vlaneseq
  %v2662 = vshrl.u32 %v2661, 7
  %v2663 = vsub.s32 0, %v2662
  %v2664 = vrot.slane %v2288, %v2663
  %2666 = vbcast.lane.b32.xlu0 %v2664, 256
  %v2667 = vpop.permute.xlu0 %2666
  %v2668 = vlaneseq
  %v2669 = vshrl.u32 %v2668, 7
  %v2670 = vsub.s32 1, %v2669
  %v2671 = vrot.slane %v2288, %v2670
  %2673 = vbcast.lane.b32.xlu0 %v2671, 256
  %v2674 = vpop.permute.xlu0 %2673
  %v2675 = vlaneseq
  %v2676 = vshrl.u32 %v2675, 7
  %v2677 = vsub.s32 2, %v2676
  %v2678 = vrot.slane %v2288, %v2677
  %2680 = vbcast.lane.b32.xlu0 %v2678, 256
  %v2681 = vpop.permute.xlu0 %2680
  %v2682 = vlaneseq
  %v2683 = vshrl.u32 %v2682, 7
  %v2684 = vsub.s32 3, %v2683
  %v2685 = vrot.slane %v2288, %v2684
  %2687 = vbcast.lane.b32.xlu0 %v2685, 256
  %v2688 = vpop.permute.xlu0 %2687
  %v2689 = vlaneseq
  %v2690 = vshrl.u32 %v2689, 7
  %v2691 = vsub.s32 4, %v2690
  %v2692 = vrot.slane %v2288, %v2691
  %2694 = vbcast.lane.b32.xlu0 %v2692, 256
  %v2695 = vpop.permute.xlu0 %2694
  %v2696 = vlaneseq
  %v2697 = vshrl.u32 %v2696, 7
  %v2698 = vsub.s32 5, %v2697
  %v2699 = vrot.slane %v2288, %v2698
  %2701 = vbcast.lane.b32.xlu0 %v2699, 256
  %v2702 = vpop.permute.xlu0 %2701
  %v2703 = vlaneseq
  %v2704 = vshrl.u32 %v2703, 7
  %v2705 = vsub.s32 6, %v2704
  %v2706 = vrot.slane %v2288, %v2705
  %2708 = vbcast.lane.b32.xlu0 %v2706, 256
  %v2709 = vpop.permute.xlu0 %2708
  %v2710 = vlaneseq
  %v2711 = vshrl.u32 %v2710, 7
  %v2712 = vsub.s32 7, %v2711
  %v2713 = vrot.slane %v2288, %v2712
  %2715 = vbcast.lane.b32.xlu0 %v2713, 256
  %v2716 = vpop.permute.xlu0 %2715
  %v2717 = vadd.f32 %v2589, %v2611
  %v2718 = vadd.f32 %v2590, %v2618
  %v2719 = vadd.f32 %v2591, %v2625
  %v2720 = vadd.f32 %v2592, %v2632
  %v2721 = vadd.f32 %v2593, %v2639
  %v2722 = vadd.f32 %v2594, %v2646
  %v2723 = vadd.f32 %v2595, %v2653
  %v2724 = vadd.f32 %v2596, %v2660
  %v2725 = vadd.f32 %v2597, %v2667
  %v2726 = vadd.f32 %v2598, %v2674
  %v2727 = vadd.f32 %v2599, %v2681
  %v2728 = vadd.f32 %v2600, %v2688
  %v2729 = vadd.f32 %v2601, %v2695
  %v2730 = vadd.f32 %v2602, %v2702
  %v2731 = vadd.f32 %v2603, %v2709
  %v2732 = vadd.f32 %v2604, %v2716
  %v2733 = vsel %vm2237, %v2717, -inf
  %2734 = vmax.xlane.f32.xlu0 %v2733
  %v2735 = vpop.xlane.xlu0 %2734
  %v2736 = vsel %vm2237, %v2718, -inf
  %2737 = vmax.xlane.f32.xlu0 %v2736
  %v2738 = vpop.xlane.xlu0 %2737
  %v2739 = vsel %vm2237, %v2719, -inf
  %2740 = vmax.xlane.f32.xlu0 %v2739
  %v2741 = vpop.xlane.xlu0 %2740
  %v2742 = vsel %vm2237, %v2720, -inf
  %2743 = vmax.xlane.f32.xlu0 %v2742
  %v2744 = vpop.xlane.xlu0 %2743
  %v2745 = vsel %vm2237, %v2721, -inf
  %2746 = vmax.xlane.f32.xlu0 %v2745
  %v2747 = vpop.xlane.xlu0 %2746
  %v2748 = vsel %vm2237, %v2722, -inf
  %2749 = vmax.xlane.f32.xlu0 %v2748
  %v2750 = vpop.xlane.xlu0 %2749
  %v2751 = vsel %vm2237, %v2723, -inf
  %2752 = vmax.xlane.f32.xlu0 %v2751
  %v2753 = vpop.xlane.xlu0 %2752
  %v2754 = vsel %vm2237, %v2724, -inf
  %2755 = vmax.xlane.f32.xlu0 %v2754
  %v2756 = vpop.xlane.xlu0 %2755
  %v2757 = vsel %vm2237, %v2725, -inf
  %2758 = vmax.xlane.f32.xlu0 %v2757
  %v2759 = vpop.xlane.xlu0 %2758
  %v2760 = vsel %vm2237, %v2726, -inf
  %2761 = vmax.xlane.f32.xlu0 %v2760
  %v2762 = vpop.xlane.xlu0 %2761
  %v2763 = vsel %vm2237, %v2727, -inf
  %2764 = vmax.xlane.f32.xlu0 %v2763
  %v2765 = vpop.xlane.xlu0 %2764
  %v2766 = vsel %vm2237, %v2728, -inf
  %2767 = vmax.xlane.f32.xlu0 %v2766
  %v2768 = vpop.xlane.xlu0 %2767
  %v2769 = vsel %vm2237, %v2729, -inf
  %2770 = vmax.xlane.f32.xlu0 %v2769
  %v2771 = vpop.xlane.xlu0 %2770
  %v2772 = vsel %vm2237, %v2730, -inf
  %2773 = vmax.xlane.f32.xlu0 %v2772
  %v2774 = vpop.xlane.xlu0 %2773
  %v2775 = vsel %vm2237, %v2731, -inf
  %2776 = vmax.xlane.f32.xlu0 %v2775
  %v2777 = vpop.xlane.xlu0 %2776
  %v2778 = vsel %vm2237, %v2732, -inf
  %2779 = vmax.xlane.f32.xlu0 %v2778
  %v2780 = vpop.xlane.xlu0 %2779
  %v2781 = vsub.f32 %v2717, %v2735
  %v2782 = vsub.f32 %v2718, %v2738
  %v2783 = vsub.f32 %v2719, %v2741
  %v2784 = vsub.f32 %v2720, %v2744
  %v2785 = vsub.f32 %v2721, %v2747
  %v2786 = vsub.f32 %v2722, %v2750
  %v2787 = vsub.f32 %v2723, %v2753
  %v2788 = vsub.f32 %v2724, %v2756
  %v2789 = vsub.f32 %v2725, %v2759
  %v2790 = vsub.f32 %v2726, %v2762
  %v2791 = vsub.f32 %v2727, %v2765
  %v2792 = vsub.f32 %v2728, %v2768
  %v2793 = vsub.f32 %v2729, %v2771
  %v2794 = vsub.f32 %v2730, %v2774
  %v2795 = vsub.f32 %v2731, %v2777
  %v2796 = vsub.f32 %v2732, %v2780
  %v2797 = vmul.f32 %v2781, 1.442695
  %v2798 = vpow.pop %v2797
  %v2799 = vmul.f32 %v2782, 1.442695
  %v2800 = vpow.pop %v2799
  %v2801 = vmul.f32 %v2783, 1.442695
  %v2802 = vpow.pop %v2801
  %v2803 = vmul.f32 %v2784, 1.442695
  %v2804 = vpow.pop %v2803
  %v2805 = vmul.f32 %v2785, 1.442695
  %v2806 = vpow.pop %v2805
  %v2807 = vmul.f32 %v2786, 1.442695
  %v2808 = vpow.pop %v2807
  %v2809 = vmul.f32 %v2787, 1.442695
  %v2810 = vpow.pop %v2809
  %v2811 = vmul.f32 %v2788, 1.442695
  %v2812 = vpow.pop %v2811
  %v2813 = vmul.f32 %v2789, 1.442695
  %v2814 = vpow.pop %v2813
  %v2815 = vmul.f32 %v2790, 1.442695
  %v2816 = vpow.pop %v2815
  %v2817 = vmul.f32 %v2791, 1.442695
  %v2818 = vpow.pop %v2817
  %v2819 = vmul.f32 %v2792, 1.442695
  %v2820 = vpow.pop %v2819
  %v2821 = vmul.f32 %v2793, 1.442695
  %v2822 = vpow.pop %v2821
  %v2823 = vmul.f32 %v2794, 1.442695
  %v2824 = vpow.pop %v2823
  %v2825 = vmul.f32 %v2795, 1.442695
  %v2826 = vpow.pop %v2825
  %v2827 = vmul.f32 %v2796, 1.442695
  %v2828 = vpow.pop %v2827
  %v2829 = vsel %vm2237, %v2798, 0.0
  %2830 = vadd.xlane.f32.xlu0 %v2829
  %v2831 = vpop.xlane.xlu0 %2830
  %v2832 = vsel %vm2237, %v2800, 0.0
  %2833 = vadd.xlane.f32.xlu0 %v2832
  %v2834 = vpop.xlane.xlu0 %2833
  %v2835 = vsel %vm2237, %v2802, 0.0
  %2836 = vadd.xlane.f32.xlu0 %v2835
  %v2837 = vpop.xlane.xlu0 %2836
  %v2838 = vsel %vm2237, %v2804, 0.0
  %2839 = vadd.xlane.f32.xlu0 %v2838
  %v2840 = vpop.xlane.xlu0 %2839
  %v2841 = vsel %vm2237, %v2806, 0.0
  %2842 = vadd.xlane.f32.xlu0 %v2841
  %v2843 = vpop.xlane.xlu0 %2842
  %v2844 = vsel %vm2237, %v2808, 0.0
  %2845 = vadd.xlane.f32.xlu0 %v2844
  %v2846 = vpop.xlane.xlu0 %2845
  %v2847 = vsel %vm2237, %v2810, 0.0
  %2848 = vadd.xlane.f32.xlu0 %v2847
  %v2849 = vpop.xlane.xlu0 %2848
  %v2850 = vsel %vm2237, %v2812, 0.0
  %2851 = vadd.xlane.f32.xlu0 %v2850
  %v2852 = vpop.xlane.xlu0 %2851
  %v2853 = vsel %vm2237, %v2814, 0.0
  %2854 = vadd.xlane.f32.xlu0 %v2853
  %v2855 = vpop.xlane.xlu0 %2854
  %v2856 = vsel %vm2237, %v2816, 0.0
  %2857 = vadd.xlane.f32.xlu0 %v2856
  %v2858 = vpop.xlane.xlu0 %2857
  %v2859 = vsel %vm2237, %v2818, 0.0
  %2860 = vadd.xlane.f32.xlu0 %v2859
  %v2861 = vpop.xlane.xlu0 %2860
  %v2862 = vsel %vm2237, %v2820, 0.0
  %2863 = vadd.xlane.f32.xlu0 %v2862
  %v2864 = vpop.xlane.xlu0 %2863
  %v2865 = vsel %vm2237, %v2822, 0.0
  %2866 = vadd.xlane.f32.xlu0 %v2865
  %v2867 = vpop.xlane.xlu0 %2866
  %v2868 = vsel %vm2237, %v2824, 0.0
  %2869 = vadd.xlane.f32.xlu0 %v2868
  %v2870 = vpop.xlane.xlu0 %2869
  %v2871 = vsel %vm2237, %v2826, 0.0
  %2872 = vadd.xlane.f32.xlu0 %v2871
  %v2873 = vpop.xlane.xlu0 %2872
  %v2874 = vsel %vm2237, %v2828, 0.0
  %2875 = vadd.xlane.f32.xlu0 %v2874
  %v2876 = vpop.xlane.xlu0 %2875
  %v2877 = vlog2.pop %v2831
  %v2878 = vmul.f32 %v2877, 0.6931472
  %v2879 = vlog2.pop %v2834
  %v2880 = vmul.f32 %v2879, 0.6931472
  %v2881 = vlog2.pop %v2837
  %v2882 = vmul.f32 %v2881, 0.6931472
  %v2883 = vlog2.pop %v2840
  %v2884 = vmul.f32 %v2883, 0.6931472
  %v2885 = vlog2.pop %v2843
  %v2886 = vmul.f32 %v2885, 0.6931472
  %v2887 = vlog2.pop %v2846
  %v2888 = vmul.f32 %v2887, 0.6931472
  %v2889 = vlog2.pop %v2849
  %v2890 = vmul.f32 %v2889, 0.6931472
  %v2891 = vlog2.pop %v2852
  %v2892 = vmul.f32 %v2891, 0.6931472
  %v2893 = vlog2.pop %v2855
  %v2894 = vmul.f32 %v2893, 0.6931472
  %v2895 = vlog2.pop %v2858
  %v2896 = vmul.f32 %v2895, 0.6931472
  %v2897 = vlog2.pop %v2861
  %v2898 = vmul.f32 %v2897, 0.6931472
  %v2899 = vlog2.pop %v2864
  %v2900 = vmul.f32 %v2899, 0.6931472
  %v2901 = vlog2.pop %v2867
  %v2902 = vmul.f32 %v2901, 0.6931472
  %v2903 = vlog2.pop %v2870
  %v2904 = vmul.f32 %v2903, 0.6931472
  %v2905 = vlog2.pop %v2873
  %v2906 = vmul.f32 %v2905, 0.6931472
  %v2907 = vlog2.pop %v2876
  %v2908 = vmul.f32 %v2907, 0.6931472
  %v2909 = vadd.f32 %v2735, %v2878
  %v2910 = vadd.f32 %v2738, %v2880
  %v2911 = vadd.f32 %v2741, %v2882
  %v2912 = vadd.f32 %v2744, %v2884
  %v2913 = vadd.f32 %v2747, %v2886
  %v2914 = vadd.f32 %v2750, %v2888
  %v2915 = vadd.f32 %v2753, %v2890
  %v2916 = vadd.f32 %v2756, %v2892
  %v2917 = vadd.f32 %v2759, %v2894
  %v2918 = vadd.f32 %v2762, %v2896
  %v2919 = vadd.f32 %v2765, %v2898
  %v2920 = vadd.f32 %v2768, %v2900
  %v2921 = vadd.f32 %v2771, %v2902
  %v2922 = vadd.f32 %v2774, %v2904
  %v2923 = vadd.f32 %v2777, %v2906
  %v2924 = vadd.f32 %v2780, %v2908
  %vm2925 = vcmp.gt.f32.partialorder %v2289, 0.5
  %vm2926 = vcmp.gt.f32.partialorder %v2290, 0.5
  %v2927 = vsel %vm2925, 1, 0
  %v2928 = vsel %vm2926, 1, 0
  %2929 = vset.pattern.permute.xlu0 0
  %2930 = vperm.xlu0 %2929, %v2927
  %v2931 = vpop.permute.xlu0 %2930
  %2932 = vset.pattern.permute.xlu0 0
  %2933 = vperm.xlu0 %2932, %v2928
  %v2934 = vpop.permute.xlu0 %2933
  %vm2935 = vcmp.eq.s32.totalorder %v2931, 1
  %vm2936 = vcmp.eq.s32.totalorder %v2934, 1
  %v2953 = vlaneseq
  %v2954 = vshrl.u32 %v2953, 7
  %v2955 = vsub.s32 %v2257, %v2954
  %v2956 = vrot.slane %v2909, %v2955
  %v2957 = vlaneseq
  %v2958 = vshrl.u32 %v2957, 7
  %v2959 = vsub.s32 %v2257, %v2958
  %v2960 = vrot.slane %v2910, %v2959
  %v2961 = vlaneseq
  %v2962 = vshrl.u32 %v2961, 7
  %v2963 = vsub.s32 %v2257, %v2962
  %v2964 = vrot.slane %v2911, %v2963
  %v2965 = vlaneseq
  %v2966 = vshrl.u32 %v2965, 7
  %v2967 = vsub.s32 %v2257, %v2966
  %v2968 = vrot.slane %v2912, %v2967
  %v2969 = vlaneseq
  %v2970 = vshrl.u32 %v2969, 7
  %v2971 = vsub.s32 %v2257, %v2970
  %v2972 = vrot.slane %v2913, %v2971
  %v2973 = vlaneseq
  %v2974 = vshrl.u32 %v2973, 7
  %v2975 = vsub.s32 %v2257, %v2974
  %v2976 = vrot.slane %v2914, %v2975
  %v2977 = vlaneseq
  %v2978 = vshrl.u32 %v2977, 7
  %v2979 = vsub.s32 %v2257, %v2978
  %v2980 = vrot.slane %v2915, %v2979
  %v2981 = vlaneseq
  %v2982 = vshrl.u32 %v2981, 7
  %v2983 = vsub.s32 %v2257, %v2982
  %v2984 = vrot.slane %v2916, %v2983
  %v2985 = vlaneseq
  %v2986 = vshrl.u32 %v2985, 7
  %v2987 = vsub.s32 %v2257, %v2986
  %v2988 = vrot.slane %v2917, %v2987
  %v2989 = vlaneseq
  %v2990 = vshrl.u32 %v2989, 7
  %v2991 = vsub.s32 %v2257, %v2990
  %v2992 = vrot.slane %v2918, %v2991
  %v2993 = vlaneseq
  %v2994 = vshrl.u32 %v2993, 7
  %v2995 = vsub.s32 %v2257, %v2994
  %v2996 = vrot.slane %v2919, %v2995
  %v2997 = vlaneseq
  %v2998 = vshrl.u32 %v2997, 7
  %v2999 = vsub.s32 %v2257, %v2998
  %v3000 = vrot.slane %v2920, %v2999
  %v3001 = vlaneseq
  %v3002 = vshrl.u32 %v3001, 7
  %v3003 = vsub.s32 %v2257, %v3002
  %v3004 = vrot.slane %v2921, %v3003
  %v3005 = vlaneseq
  %v3006 = vshrl.u32 %v3005, 7
  %v3007 = vsub.s32 %v2257, %v3006
  %v3008 = vrot.slane %v2922, %v3007
  %v3009 = vlaneseq
  %v3010 = vshrl.u32 %v3009, 7
  %v3011 = vsub.s32 %v2257, %v3010
  %v3012 = vrot.slane %v2923, %v3011
  %v3013 = vlaneseq
  %v3014 = vshrl.u32 %v3013, 7
  %v3015 = vsub.s32 %v2257, %v3014
  %v3016 = vrot.slane %v2924, %v3015
  %vm3017 = vcmask 1041409
  %v3018 = vsel %vm3017, %v2960, %v2956
  %vm3019 = vcmask 1042434
  %v3020 = vsel %vm3019, %v2964, %v3018
  %vm3021 = vcmask 1043459
  %v3022 = vsel %vm3021, %v2968, %v3020
  %vm3023 = vcmask 1044484
  %v3024 = vsel %vm3023, %v2972, %v3022
  %vm3025 = vcmask 1045509
  %v3026 = vsel %vm3025, %v2976, %v3024
  %vm3027 = vcmask 1046534
  %v3028 = vsel %vm3027, %v2980, %v3026
  %vm3029 = vcmask 1047559
  %v3030 = vsel %vm3029, %v2984, %v3028
  %v3031 = vsel %vm3017, %v2992, %v2988
  %v3032 = vsel %vm3019, %v2996, %v3031
  %v3033 = vsel %vm3021, %v3000, %v3032
  %v3034 = vsel %vm3023, %v3004, %v3033
  %v3035 = vsel %vm3025, %v3008, %v3034
  %v3036 = vsel %vm3027, %v3012, %v3035
  %v3037 = vsel %vm3029, %v3016, %v3036
  %v3040 = vsel %vm2935, %v3030, %v2258
  %v3041 = vsel %vm2936, %v3037, %v2259
  %s3042 = scalar_lea.vmem [#allocation4], 32
  %v3043 = vld [vmem:[%s3042] sm:$0xff]
  %v3044 = vld [vmem:[%s3042 + $0x8] sm:$0xff]
  %v3045 = vld [vmem:[%s770] sm:$0xff]
  %v3046 = vld [vmem:[%s770 + $0x8] sm:$0xff]
  %s3047 = scalar_lea.vmem %s2, 32
  %v3048 = vld [vmem:[%s3047] sm:$0xff]
  %v3049 = vld [vmem:[%s3047 + $0x8] sm:$0xff]
  %3050 = vset.pattern.permute.xlu0 0
  %3051 = vperm.xlu0 %3050, %v3048
  %v3052 = vpop.permute.xlu0 %3051
  %3053 = vset.pattern.permute.xlu0 0
  %3054 = vperm.xlu0 %3053, %v3049
  %v3055 = vpop.permute.xlu0 %3054
  %vm3056 = vcmp.eq.s32.totalorder %v3052, %v2257
  %vm3057 = vcmp.eq.s32.totalorder %v3055, %v2257
  %v3058 = vsel %vm3056, 1, 0
  %v3059 = vsel %vm3057, 1, 0
  %v3060 = vcvt.s32.f32 %v3058
  %v3061 = vcvt.s32.f32 %v3059
  %v3062 = vmul.f32 %v3043, %v3060
  %v3063 = vmul.f32 %v3044, %v3061
  %v3064 = vsel %vm2237, %v3062, 0.0
  %3065 = vadd.xlane.f32.xlu0 %v3064
  %v3066 = vpop.xlane.xlu0 %3065
  %v3067 = vsel %vm2237, %v3063, 0.0
  %3068 = vadd.xlane.f32.xlu0 %v3067
  %v3069 = vpop.xlane.xlu0 %3068
  %v3071 = vsel %vm2237, %v2304, 0
  %v3074 = vsel %vm2237, %v2305, 0
  %3076 = vmatprep.subr.mxu0 0.0
  %3077 = vmatpush1.msra.mxu0 %v2254
  %3078 = vmatprep.subr.mxu0 0.0
  %3079 = vmatpush1.msra.mxu0 0.0
  %3080 = vmatprep.subr.mxu0 0.0
  %3081 = vmatpush1.msra.mxu0 0.0
  %3082 = vmatprep.subr.mxu0 0.0
  %3083 = vmatpush1.msra.mxu0 0.0
  %3084 = vmatprep.subr.mxu0 0.0
  %3085 = vmatpush1.msra.mxu0 0.0
  %3086 = vmatprep.subr.mxu0 0.0
  %3087 = vmatpush1.msra.mxu0 0.0
  %3088 = vmatprep.subr.mxu0 0.0
  %3089 = vmatpush1.msra.mxu0 0.0
  %3090 = vmatprep.subr.mxu0 0.0
  %3091 = vmatpush1.msra.mxu0 0.0
  %3092 = vmatprep.subr.mxu0 0.0
  %3093 = vmatpush1.msra.mxu0 0.0
  %3094 = vmatprep.subr.mxu0 0.0
  %3095 = vmatpush1.msra.mxu0 0.0
  %3096 = vmatprep.subr.mxu0 0.0
  %3097 = vmatpush1.msra.mxu0 0.0
  %3098 = vmatprep.subr.mxu0 0.0
  %3099 = vmatpush1.msra.mxu0 0.0
  %3100 = vmatprep.subr.mxu0 0.0
  %3101 = vmatpush1.msra.mxu0 0.0
  %3102 = vmatprep.subr.mxu0 0.0
  %3103 = vmatpush1.msra.mxu0 0.0
  %3104 = vmatprep.subr.mxu0 0.0
  %3105 = vmatpush1.msra.mxu0 0.0
  %3106 = vmatprep.subr.mxu0 0.0
  %3107 = vmatpush1.msra.mxu0 0.0
  %3108 = vmatprep.subr.mxu0 0.0
  %3109 = vmatpush1.msra.mxu0 0.0
  %3110 = vmatprep.subr.mxu0 0.0
  %3111 = vmatpush1.msra.mxu0 0.0
  %3112 = vmatprep.subr.mxu0 0.0
  %3113 = vmatpush1.msra.mxu0 0.0
  %3114 = vmatprep.subr.mxu0 0.0
  %3115 = vmatpush1.msra.mxu0 0.0
  %3116 = vmatprep.subr.mxu0 0.0
  %3117 = vmatpush1.msra.mxu0 0.0
  %3118 = vmatprep.subr.mxu0 0.0
  %3119 = vmatpush1.msra.mxu0 0.0
  %3120 = vmatprep.subr.mxu0 0.0
  %3121 = vmatpush1.msra.mxu0 0.0
  %3122 = vmatprep.subr.mxu0 0.0
  %3123 = vmatpush1.msra.mxu0 0.0
  %3124 = vmatprep.subr.mxu0 0.0
  %3125 = vmatpush1.msra.mxu0 0.0
  %3126 = vmatprep.subr.mxu0 0.0
  %3127 = vmatpush1.msra.mxu0 0.0
  %3128 = vmatprep.subr.mxu0 0.0
  %3129 = vmatpush1.msra.mxu0 0.0
  %3130 = vmatprep.subr.mxu0 0.0
  %3131 = vmatpush1.msra.mxu0 0.0
  %3132 = vmatprep.subr.mxu0 0.0
  %3133 = vmatpush1.msra.mxu0 0.0
  %3134 = vmatprep.subr.mxu0 0.0
  %3135 = vmatpush1.msra.mxu0 0.0
  %3136 = vmatprep.subr.mxu0 0.0
  %3137 = vmatpush1.msra.mxu0 0.0
  %3138 = vmatprep.subr.mxu0 0.0
  %3139 = vmatpush1.msra.mxu0 0.0
  %3140 = vmatprep.mubr.f32.mxu0 0.0
  %3141 = vmatmul.mubr.f32.gmra.mrb[0].mxu0 %v3071
  %v3142 = vpop.f32.mrb[0].mxu0
  %v3143 = vadd.f32 0.0, %v3142
  %v3144 = vpop.f32.mrb[0].mxu0
  %3145 = vmatprep.mubr.f32.mxu0 0.0
  %3146 = vmatmul.mubr.f32.gmra.mrb[0].mxu0 %v3074
  %v3147 = vpop.f32.mrb[0].mxu0
  %v3148 = vadd.f32 0.0, %v3147
  %v3149 = vpop.f32.mrb[0].mxu0
  %3150 = vdwg.mxu0
  %v3151 = vmul.f32 %v3143, %v3060
  %v3152 = vmul.f32 %v3148, %v3061
  %v3153 = vsel %vm2237, %v3151, 0.0
  %3154 = vadd.xlane.f32.xlu0 %v3153
  %v3155 = vpop.xlane.xlu0 %3154
  %v3156 = vsel %vm2237, %v3152, 0.0
  %3157 = vadd.xlane.f32.xlu0 %v3156
  %v3158 = vpop.xlane.xlu0 %3157
  %v3159 = vadd.f32 %v3066, %v3155
  %v3160 = vadd.f32 %v3069, %v3158
  %v3161 = vmul.f32 %v3159, %v3045
  %v3162 = vmul.f32 %v3160, %v3046
  %v3163 = vadd.f32 %v2407, %v3161
  %v3164 = vadd.f32 %v2408, %v3162
  %v3167 = vcombine.high %v3040, %v3040
  %v3169 = vunpack.c.l.s4 1966171168
  %v3170 = vunpack.c.0.s8 %v3169
  %v3171 = vlaneseq
  %v3172 = vshrl.u32 %v3171, 7
  %v3173 = vsub.s32 %v3170, %v3172
  %v3174 = vrot.slane %v3040, %v3173
  %v3176 = vunpack.c.l.s4 1966171168
  %v3177 = vunpack.c.0.s8 %v3176
  %v3178 = vlaneseq
  %v3179 = vshrl.u32 %v3178, 7
  %v3180 = vsub.s32 %v3177, %v3179
  %v3181 = vrot.slane %v3167, %v3180
  %v3182 = vcombine.high %v3174, %v3174
  %v3183 = vcombine.high %v3181, %v3181
  %v3185 = vunpack.c.l.s4 1966171168
  %v3186 = vunpack.c.0.s8 %v3185
  %v3187 = vlaneseq
  %v3188 = vshrl.u32 %v3187, 7
  %v3189 = vsub.s32 %v3186, %v3188
  %v3190 = vrot.slane %v3174, %v3189
  %v3192 = vunpack.c.l.s4 1966171168
  %v3193 = vunpack.c.0.s8 %v3192
  %v3194 = vlaneseq
  %v3195 = vshrl.u32 %v3194, 7
  %v3196 = vsub.s32 %v3193, %v3195
  %v3197 = vrot.slane %v3181, %v3196
  %v3199 = vunpack.c.l.s4 1966171168
  %v3200 = vunpack.c.0.s8 %v3199
  %v3201 = vlaneseq
  %v3202 = vshrl.u32 %v3201, 7
  %v3203 = vsub.s32 %v3200, %v3202
  %v3204 = vrot.slane %v3182, %v3203
  %v3206 = vunpack.c.l.s4 1966171168
  %v3207 = vunpack.c.0.s8 %v3206
  %v3208 = vlaneseq
  %v3209 = vshrl.u32 %v3208, 7
  %v3210 = vsub.s32 %v3207, %v3209
  %v3211 = vrot.slane %v3183, %v3210
  %v3212 = vcombine.high %v3190, %v3190
  %v3213 = vcombine.high %v3197, %v3197
  %v3214 = vcombine.high %v3204, %v3204
  %v3215 = vcombine.high %v3211, %v3211
  %v3216 = vcombine.high %v3041, %v3041
  %v3218 = vunpack.c.l.s4 1966171168
  %v3219 = vunpack.c.0.s8 %v3218
  %v3220 = vlaneseq
  %v3221 = vshrl.u32 %v3220, 7
  %v3222 = vsub.s32 %v3219, %v3221
  %v3223 = vrot.slane %v3041, %v3222
  %v3225 = vunpack.c.l.s4 1966171168
  %v3226 = vunpack.c.0.s8 %v3225
  %v3227 = vlaneseq
  %v3228 = vshrl.u32 %v3227, 7
  %v3229 = vsub.s32 %v3226, %v3228
  %v3230 = vrot.slane %v3216, %v3229
  %v3231 = vcombine.high %v3223, %v3223
  %v3232 = vcombine.high %v3230, %v3230
  %v3234 = vunpack.c.l.s4 1966171168
  %v3235 = vunpack.c.0.s8 %v3234
  %v3236 = vlaneseq
  %v3237 = vshrl.u32 %v3236, 7
  %v3238 = vsub.s32 %v3235, %v3237
  %v3239 = vrot.slane %v3223, %v3238
  %v3241 = vunpack.c.l.s4 1966171168
  %v3242 = vunpack.c.0.s8 %v3241
  %v3243 = vlaneseq
  %v3244 = vshrl.u32 %v3243, 7
  %v3245 = vsub.s32 %v3242, %v3244
  %v3246 = vrot.slane %v3230, %v3245
  %v3248 = vunpack.c.l.s4 1966171168
  %v3249 = vunpack.c.0.s8 %v3248
  %v3250 = vlaneseq
  %v3251 = vshrl.u32 %v3250, 7
  %v3252 = vsub.s32 %v3249, %v3251
  %v3253 = vrot.slane %v3231, %v3252
  %v3255 = vunpack.c.l.s4 1966171168
  %v3256 = vunpack.c.0.s8 %v3255
  %v3257 = vlaneseq
  %v3258 = vshrl.u32 %v3257, 7
  %v3259 = vsub.s32 %v3256, %v3258
  %v3260 = vrot.slane %v3232, %v3259
  %v3261 = vcombine.high %v3239, %v3239
  %v3262 = vcombine.high %v3246, %v3246
  %v3263 = vcombine.high %v3253, %v3253
  %v3264 = vcombine.high %v3260, %v3260
  %v3265 = vlaneseq
  %v3266 = vshrl.u32 %v3265, 7
  %v3267 = vsub.s32 0, %v3266
  %v3268 = vrot.slane %v3190, %v3267
  %v3269 = vlaneseq
  %v3270 = vshrl.u32 %v3269, 7
  %v3271 = vsub.s32 0, %v3270
  %v3272 = vrot.slane %v3204, %v3271
  %v3273 = vlaneseq
  %v3274 = vshrl.u32 %v3273, 7
  %v3275 = vsub.s32 0, %v3274
  %v3276 = vrot.slane %v3212, %v3275
  %v3277 = vlaneseq
  %v3278 = vshrl.u32 %v3277, 7
  %v3279 = vsub.s32 0, %v3278
  %v3280 = vrot.slane %v3214, %v3279
  %v3281 = vlaneseq
  %v3282 = vshrl.u32 %v3281, 7
  %v3283 = vsub.s32 0, %v3282
  %v3284 = vrot.slane %v3197, %v3283
  %v3285 = vlaneseq
  %v3286 = vshrl.u32 %v3285, 7
  %v3287 = vsub.s32 0, %v3286
  %v3288 = vrot.slane %v3211, %v3287
  %v3289 = vlaneseq
  %v3290 = vshrl.u32 %v3289, 7
  %v3291 = vsub.s32 0, %v3290
  %v3292 = vrot.slane %v3213, %v3291
  %v3293 = vlaneseq
  %v3294 = vshrl.u32 %v3293, 7
  %v3295 = vsub.s32 0, %v3294
  %v3296 = vrot.slane %v3215, %v3295
  %v3297 = vlaneseq
  %v3298 = vshrl.u32 %v3297, 7
  %v3299 = vsub.s32 0, %v3298
  %v3300 = vrot.slane %v3239, %v3299
  %v3301 = vlaneseq
  %v3302 = vshrl.u32 %v3301, 7
  %v3303 = vsub.s32 0, %v3302
  %v3304 = vrot.slane %v3253, %v3303
  %v3305 = vlaneseq
  %v3306 = vshrl.u32 %v3305, 7
  %v3307 = vsub.s32 0, %v3306
  %v3308 = vrot.slane %v3261, %v3307
  %v3309 = vlaneseq
  %v3310 = vshrl.u32 %v3309, 7
  %v3311 = vsub.s32 0, %v3310
  %v3312 = vrot.slane %v3263, %v3311
  %v3313 = vlaneseq
  %v3314 = vshrl.u32 %v3313, 7
  %v3315 = vsub.s32 0, %v3314
  %v3316 = vrot.slane %v3246, %v3315
  %v3317 = vlaneseq
  %v3318 = vshrl.u32 %v3317, 7
  %v3319 = vsub.s32 0, %v3318
  %v3320 = vrot.slane %v3260, %v3319
  %v3321 = vlaneseq
  %v3322 = vshrl.u32 %v3321, 7
  %v3323 = vsub.s32 0, %v3322
  %v3324 = vrot.slane %v3262, %v3323
  %v3325 = vlaneseq
  %v3326 = vshrl.u32 %v3325, 7
  %v3327 = vsub.s32 0, %v3326
  %v3328 = vrot.slane %v3264, %v3327
  %v3345 = vadd.f32 %v3268, %v2255
  %v3346 = vadd.f32 %v3272, %v2255
  %v3347 = vadd.f32 %v3276, %v2255
  %v3348 = vadd.f32 %v3280, %v2255
  %v3349 = vadd.f32 %v3284, %v2255
  %v3350 = vadd.f32 %v3288, %v2255
  %v3351 = vadd.f32 %v3292, %v2255
  %v3352 = vadd.f32 %v3296, %v2255
  %v3353 = vadd.f32 %v3300, %v2255
  %v3354 = vadd.f32 %v3304, %v2255
  %v3355 = vadd.f32 %v3308, %v2255
  %v3356 = vadd.f32 %v3312, %v2255
  %v3357 = vadd.f32 %v3316, %v2255
  %v3358 = vadd.f32 %v3320, %v2255
  %v3359 = vadd.f32 %v3324, %v2255
  %v3360 = vadd.f32 %v3328, %v2255
  %v3361 = vlaneseq
  %v3362 = vshrl.u32 %v3361, 7
  %v3363 = vsub.s32 0, %v3362
  %v3364 = vrot.slane %v3043, %v3363
  %3366 = vbcast.lane.b32.xlu0 %v3364, 256
  %v3367 = vpop.permute.xlu0 %3366
  %v3368 = vlaneseq
  %v3369 = vshrl.u32 %v3368, 7
  %v3370 = vsub.s32 1, %v3369
  %v3371 = vrot.slane %v3043, %v3370
  %3373 = vbcast.lane.b32.xlu0 %v3371, 256
  %v3374 = vpop.permute.xlu0 %3373
  %v3375 = vlaneseq
  %v3376 = vshrl.u32 %v3375, 7
  %v3377 = vsub.s32 2, %v3376
  %v3378 = vrot.slane %v3043, %v3377
  %3380 = vbcast.lane.b32.xlu0 %v3378, 256
  %v3381 = vpop.permute.xlu0 %3380
  %v3382 = vlaneseq
  %v3383 = vshrl.u32 %v3382, 7
  %v3384 = vsub.s32 3, %v3383
  %v3385 = vrot.slane %v3043, %v3384
  %3387 = vbcast.lane.b32.xlu0 %v3385, 256
  %v3388 = vpop.permute.xlu0 %3387
  %v3389 = vlaneseq
  %v3390 = vshrl.u32 %v3389, 7
  %v3391 = vsub.s32 4, %v3390
  %v3392 = vrot.slane %v3043, %v3391
  %3394 = vbcast.lane.b32.xlu0 %v3392, 256
  %v3395 = vpop.permute.xlu0 %3394
  %v3396 = vlaneseq
  %v3397 = vshrl.u32 %v3396, 7
  %v3398 = vsub.s32 5, %v3397
  %v3399 = vrot.slane %v3043, %v3398
  %3401 = vbcast.lane.b32.xlu0 %v3399, 256
  %v3402 = vpop.permute.xlu0 %3401
  %v3403 = vlaneseq
  %v3404 = vshrl.u32 %v3403, 7
  %v3405 = vsub.s32 6, %v3404
  %v3406 = vrot.slane %v3043, %v3405
  %3408 = vbcast.lane.b32.xlu0 %v3406, 256
  %v3409 = vpop.permute.xlu0 %3408
  %v3410 = vlaneseq
  %v3411 = vshrl.u32 %v3410, 7
  %v3412 = vsub.s32 7, %v3411
  %v3413 = vrot.slane %v3043, %v3412
  %3415 = vbcast.lane.b32.xlu0 %v3413, 256
  %v3416 = vpop.permute.xlu0 %3415
  %v3417 = vlaneseq
  %v3418 = vshrl.u32 %v3417, 7
  %v3419 = vsub.s32 0, %v3418
  %v3420 = vrot.slane %v3044, %v3419
  %3422 = vbcast.lane.b32.xlu0 %v3420, 256
  %v3423 = vpop.permute.xlu0 %3422
  %v3424 = vlaneseq
  %v3425 = vshrl.u32 %v3424, 7
  %v3426 = vsub.s32 1, %v3425
  %v3427 = vrot.slane %v3044, %v3426
  %3429 = vbcast.lane.b32.xlu0 %v3427, 256
  %v3430 = vpop.permute.xlu0 %3429
  %v3431 = vlaneseq
  %v3432 = vshrl.u32 %v3431, 7
  %v3433 = vsub.s32 2, %v3432
  %v3434 = vrot.slane %v3044, %v3433
  %3436 = vbcast.lane.b32.xlu0 %v3434, 256
  %v3437 = vpop.permute.xlu0 %3436
  %v3438 = vlaneseq
  %v3439 = vshrl.u32 %v3438, 7
  %v3440 = vsub.s32 3, %v3439
  %v3441 = vrot.slane %v3044, %v3440
  %3443 = vbcast.lane.b32.xlu0 %v3441, 256
  %v3444 = vpop.permute.xlu0 %3443
  %v3445 = vlaneseq
  %v3446 = vshrl.u32 %v3445, 7
  %v3447 = vsub.s32 4, %v3446
  %v3448 = vrot.slane %v3044, %v3447
  %3450 = vbcast.lane.b32.xlu0 %v3448, 256
  %v3451 = vpop.permute.xlu0 %3450
  %v3452 = vlaneseq
  %v3453 = vshrl.u32 %v3452, 7
  %v3454 = vsub.s32 5, %v3453
  %v3455 = vrot.slane %v3044, %v3454
  %3457 = vbcast.lane.b32.xlu0 %v3455, 256
  %v3458 = vpop.permute.xlu0 %3457
  %v3459 = vlaneseq
  %v3460 = vshrl.u32 %v3459, 7
  %v3461 = vsub.s32 6, %v3460
  %v3462 = vrot.slane %v3044, %v3461
  %3464 = vbcast.lane.b32.xlu0 %v3462, 256
  %v3465 = vpop.permute.xlu0 %3464
  %v3466 = vlaneseq
  %v3467 = vshrl.u32 %v3466, 7
  %v3468 = vsub.s32 7, %v3467
  %v3469 = vrot.slane %v3044, %v3468
  %3471 = vbcast.lane.b32.xlu0 %v3469, 256
  %v3472 = vpop.permute.xlu0 %3471
  %v3473 = vadd.f32 %v3345, %v3367
  %v3474 = vadd.f32 %v3346, %v3374
  %v3475 = vadd.f32 %v3347, %v3381
  %v3476 = vadd.f32 %v3348, %v3388
  %v3477 = vadd.f32 %v3349, %v3395
  %v3478 = vadd.f32 %v3350, %v3402
  %v3479 = vadd.f32 %v3351, %v3409
  %v3480 = vadd.f32 %v3352, %v3416
  %v3481 = vadd.f32 %v3353, %v3423
  %v3482 = vadd.f32 %v3354, %v3430
  %v3483 = vadd.f32 %v3355, %v3437
  %v3484 = vadd.f32 %v3356, %v3444
  %v3485 = vadd.f32 %v3357, %v3451
  %v3486 = vadd.f32 %v3358, %v3458
  %v3487 = vadd.f32 %v3359, %v3465
  %v3488 = vadd.f32 %v3360, %v3472
  %v3489 = vsel %vm2237, %v3473, -inf
  %3490 = vmax.xlane.f32.xlu0 %v3489
  %v3491 = vpop.xlane.xlu0 %3490
  %v3492 = vsel %vm2237, %v3474, -inf
  %3493 = vmax.xlane.f32.xlu0 %v3492
  %v3494 = vpop.xlane.xlu0 %3493
  %v3495 = vsel %vm2237, %v3475, -inf
  %3496 = vmax.xlane.f32.xlu0 %v3495
  %v3497 = vpop.xlane.xlu0 %3496
  %v3498 = vsel %vm2237, %v3476, -inf
  %3499 = vmax.xlane.f32.xlu0 %v3498
  %v3500 = vpop.xlane.xlu0 %3499
  %v3501 = vsel %vm2237, %v3477, -inf
  %3502 = vmax.xlane.f32.xlu0 %v3501
  %v3503 = vpop.xlane.xlu0 %3502
  %v3504 = vsel %vm2237, %v3478, -inf
  %3505 = vmax.xlane.f32.xlu0 %v3504
  %v3506 = vpop.xlane.xlu0 %3505
  %v3507 = vsel %vm2237, %v3479, -inf
  %3508 = vmax.xlane.f32.xlu0 %v3507
  %v3509 = vpop.xlane.xlu0 %3508
  %v3510 = vsel %vm2237, %v3480, -inf
  %3511 = vmax.xlane.f32.xlu0 %v3510
  %v3512 = vpop.xlane.xlu0 %3511
  %v3513 = vsel %vm2237, %v3481, -inf
  %3514 = vmax.xlane.f32.xlu0 %v3513
  %v3515 = vpop.xlane.xlu0 %3514
  %v3516 = vsel %vm2237, %v3482, -inf
  %3517 = vmax.xlane.f32.xlu0 %v3516
  %v3518 = vpop.xlane.xlu0 %3517
  %v3519 = vsel %vm2237, %v3483, -inf
  %3520 = vmax.xlane.f32.xlu0 %v3519
  %v3521 = vpop.xlane.xlu0 %3520
  %v3522 = vsel %vm2237, %v3484, -inf
  %3523 = vmax.xlane.f32.xlu0 %v3522
  %v3524 = vpop.xlane.xlu0 %3523
  %v3525 = vsel %vm2237, %v3485, -inf
  %3526 = vmax.xlane.f32.xlu0 %v3525
  %v3527 = vpop.xlane.xlu0 %3526
  %v3528 = vsel %vm2237, %v3486, -inf
  %3529 = vmax.xlane.f32.xlu0 %v3528
  %v3530 = vpop.xlane.xlu0 %3529
  %v3531 = vsel %vm2237, %v3487, -inf
  %3532 = vmax.xlane.f32.xlu0 %v3531
  %v3533 = vpop.xlane.xlu0 %3532
  %v3534 = vsel %vm2237, %v3488, -inf
  %3535 = vmax.xlane.f32.xlu0 %v3534
  %v3536 = vpop.xlane.xlu0 %3535
  %v3537 = vsub.f32 %v3473, %v3491
  %v3538 = vsub.f32 %v3474, %v3494
  %v3539 = vsub.f32 %v3475, %v3497
  %v3540 = vsub.f32 %v3476, %v3500
  %v3541 = vsub.f32 %v3477, %v3503
  %v3542 = vsub.f32 %v3478, %v3506
  %v3543 = vsub.f32 %v3479, %v3509
  %v3544 = vsub.f32 %v3480, %v3512
  %v3545 = vsub.f32 %v3481, %v3515
  %v3546 = vsub.f32 %v3482, %v3518
  %v3547 = vsub.f32 %v3483, %v3521
  %v3548 = vsub.f32 %v3484, %v3524
  %v3549 = vsub.f32 %v3485, %v3527
  %v3550 = vsub.f32 %v3486, %v3530
  %v3551 = vsub.f32 %v3487, %v3533
  %v3552 = vsub.f32 %v3488, %v3536
  %v3553 = vmul.f32 %v3537, 1.442695
  %v3554 = vpow.pop %v3553
  %v3555 = vmul.f32 %v3538, 1.442695
  %v3556 = vpow.pop %v3555
  %v3557 = vmul.f32 %v3539, 1.442695
  %v3558 = vpow.pop %v3557
  %v3559 = vmul.f32 %v3540, 1.442695
  %v3560 = vpow.pop %v3559
  %v3561 = vmul.f32 %v3541, 1.442695
  %v3562 = vpow.pop %v3561
  %v3563 = vmul.f32 %v3542, 1.442695
  %v3564 = vpow.pop %v3563
  %v3565 = vmul.f32 %v3543, 1.442695
  %v3566 = vpow.pop %v3565
  %v3567 = vmul.f32 %v3544, 1.442695
  %v3568 = vpow.pop %v3567
  %v3569 = vmul.f32 %v3545, 1.442695
  %v3570 = vpow.pop %v3569
  %v3571 = vmul.f32 %v3546, 1.442695
  %v3572 = vpow.pop %v3571
  %v3573 = vmul.f32 %v3547, 1.442695
  %v3574 = vpow.pop %v3573
  %v3575 = vmul.f32 %v3548, 1.442695
  %v3576 = vpow.pop %v3575
  %v3577 = vmul.f32 %v3549, 1.442695
  %v3578 = vpow.pop %v3577
  %v3579 = vmul.f32 %v3550, 1.442695
  %v3580 = vpow.pop %v3579
  %v3581 = vmul.f32 %v3551, 1.442695
  %v3582 = vpow.pop %v3581
  %v3583 = vmul.f32 %v3552, 1.442695
  %v3584 = vpow.pop %v3583
  %v3585 = vsel %vm2237, %v3554, 0.0
  %3586 = vadd.xlane.f32.xlu0 %v3585
  %v3587 = vpop.xlane.xlu0 %3586
  %v3588 = vsel %vm2237, %v3556, 0.0
  %3589 = vadd.xlane.f32.xlu0 %v3588
  %v3590 = vpop.xlane.xlu0 %3589
  %v3591 = vsel %vm2237, %v3558, 0.0
  %3592 = vadd.xlane.f32.xlu0 %v3591
  %v3593 = vpop.xlane.xlu0 %3592
  %v3594 = vsel %vm2237, %v3560, 0.0
  %3595 = vadd.xlane.f32.xlu0 %v3594
  %v3596 = vpop.xlane.xlu0 %3595
  %v3597 = vsel %vm2237, %v3562, 0.0
  %3598 = vadd.xlane.f32.xlu0 %v3597
  %v3599 = vpop.xlane.xlu0 %3598
  %v3600 = vsel %vm2237, %v3564, 0.0
  %3601 = vadd.xlane.f32.xlu0 %v3600
  %v3602 = vpop.xlane.xlu0 %3601
  %v3603 = vsel %vm2237, %v3566, 0.0
  %3604 = vadd.xlane.f32.xlu0 %v3603
  %v3605 = vpop.xlane.xlu0 %3604
  %v3606 = vsel %vm2237, %v3568, 0.0
  %3607 = vadd.xlane.f32.xlu0 %v3606
  %v3608 = vpop.xlane.xlu0 %3607
  %v3609 = vsel %vm2237, %v3570, 0.0
  %3610 = vadd.xlane.f32.xlu0 %v3609
  %v3611 = vpop.xlane.xlu0 %3610
  %v3612 = vsel %vm2237, %v3572, 0.0
  %3613 = vadd.xlane.f32.xlu0 %v3612
  %v3614 = vpop.xlane.xlu0 %3613
  %v3615 = vsel %vm2237, %v3574, 0.0
  %3616 = vadd.xlane.f32.xlu0 %v3615
  %v3617 = vpop.xlane.xlu0 %3616
  %v3618 = vsel %vm2237, %v3576, 0.0
  %3619 = vadd.xlane.f32.xlu0 %v3618
  %v3620 = vpop.xlane.xlu0 %3619
  %v3621 = vsel %vm2237, %v3578, 0.0
  %3622 = vadd.xlane.f32.xlu0 %v3621
  %v3623 = vpop.xlane.xlu0 %3622
  %v3624 = vsel %vm2237, %v3580, 0.0
  %3625 = vadd.xlane.f32.xlu0 %v3624
  %v3626 = vpop.xlane.xlu0 %3625
  %v3627 = vsel %vm2237, %v3582, 0.0
  %3628 = vadd.xlane.f32.xlu0 %v3627
  %v3629 = vpop.xlane.xlu0 %3628
  %v3630 = vsel %vm2237, %v3584, 0.0
  %3631 = vadd.xlane.f32.xlu0 %v3630
  %v3632 = vpop.xlane.xlu0 %3631
  %v3633 = vlog2.pop %v3587
  %v3634 = vmul.f32 %v3633, 0.6931472
  %v3635 = vlog2.pop %v3590
  %v3636 = vmul.f32 %v3635, 0.6931472
  %v3637 = vlog2.pop %v3593
  %v3638 = vmul.f32 %v3637, 0.6931472
  %v3639 = vlog2.pop %v3596
  %v3640 = vmul.f32 %v3639, 0.6931472
  %v3641 = vlog2.pop %v3599
  %v3642 = vmul.f32 %v3641, 0.6931472
  %v3643 = vlog2.pop %v3602
  %v3644 = vmul.f32 %v3643, 0.6931472
  %v3645 = vlog2.pop %v3605
  %v3646 = vmul.f32 %v3645, 0.6931472
  %v3647 = vlog2.pop %v3608
  %v3648 = vmul.f32 %v3647, 0.6931472
  %v3649 = vlog2.pop %v3611
  %v3650 = vmul.f32 %v3649, 0.6931472
  %v3651 = vlog2.pop %v3614
  %v3652 = vmul.f32 %v3651, 0.6931472
  %v3653 = vlog2.pop %v3617
  %v3654 = vmul.f32 %v3653, 0.6931472
  %v3655 = vlog2.pop %v3620
  %v3656 = vmul.f32 %v3655, 0.6931472
  %v3657 = vlog2.pop %v3623
  %v3658 = vmul.f32 %v3657, 0.6931472
  %v3659 = vlog2.pop %v3626
  %v3660 = vmul.f32 %v3659, 0.6931472
  %v3661 = vlog2.pop %v3629
  %v3662 = vmul.f32 %v3661, 0.6931472
  %v3663 = vlog2.pop %v3632
  %v3664 = vmul.f32 %v3663, 0.6931472
  %v3665 = vadd.f32 %v3491, %v3634
  %v3666 = vadd.f32 %v3494, %v3636
  %v3667 = vadd.f32 %v3497, %v3638
  %v3668 = vadd.f32 %v3500, %v3640
  %v3669 = vadd.f32 %v3503, %v3642
  %v3670 = vadd.f32 %v3506, %v3644
  %v3671 = vadd.f32 %v3509, %v3646
  %v3672 = vadd.f32 %v3512, %v3648
  %v3673 = vadd.f32 %v3515, %v3650
  %v3674 = vadd.f32 %v3518, %v3652
  %v3675 = vadd.f32 %v3521, %v3654
  %v3676 = vadd.f32 %v3524, %v3656
  %v3677 = vadd.f32 %v3527, %v3658
  %v3678 = vadd.f32 %v3530, %v3660
  %v3679 = vadd.f32 %v3533, %v3662
  %v3680 = vadd.f32 %v3536, %v3664
  %vm3681 = vcmp.gt.f32.partialorder %v3045, 0.5
  %vm3682 = vcmp.gt.f32.partialorder %v3046, 0.5
  %v3683 = vsel %vm3681, 1, 0
  %v3684 = vsel %vm3682, 1, 0
  %3685 = vset.pattern.permute.xlu0 0
  %3686 = vperm.xlu0 %3685, %v3683
  %v3687 = vpop.permute.xlu0 %3686
  %3688 = vset.pattern.permute.xlu0 0
  %3689 = vperm.xlu0 %3688, %v3684
  %v3690 = vpop.permute.xlu0 %3689
  %vm3691 = vcmp.eq.s32.totalorder %v3687, 1
  %vm3692 = vcmp.eq.s32.totalorder %v3690, 1
  %v3709 = vlaneseq
  %v3710 = vshrl.u32 %v3709, 7
  %v3711 = vsub.s32 %v2257, %v3710
  %v3712 = vrot.slane %v3665, %v3711
  %v3713 = vlaneseq
  %v3714 = vshrl.u32 %v3713, 7
  %v3715 = vsub.s32 %v2257, %v3714
  %v3716 = vrot.slane %v3666, %v3715
  %v3717 = vlaneseq
  %v3718 = vshrl.u32 %v3717, 7
  %v3719 = vsub.s32 %v2257, %v3718
  %v3720 = vrot.slane %v3667, %v3719
  %v3721 = vlaneseq
  %v3722 = vshrl.u32 %v3721, 7
  %v3723 = vsub.s32 %v2257, %v3722
  %v3724 = vrot.slane %v3668, %v3723
  %v3725 = vlaneseq
  %v3726 = vshrl.u32 %v3725, 7
  %v3727 = vsub.s32 %v2257, %v3726
  %v3728 = vrot.slane %v3669, %v3727
  %v3729 = vlaneseq
  %v3730 = vshrl.u32 %v3729, 7
  %v3731 = vsub.s32 %v2257, %v3730
  %v3732 = vrot.slane %v3670, %v3731
  %v3733 = vlaneseq
  %v3734 = vshrl.u32 %v3733, 7
  %v3735 = vsub.s32 %v2257, %v3734
  %v3736 = vrot.slane %v3671, %v3735
  %v3737 = vlaneseq
  %v3738 = vshrl.u32 %v3737, 7
  %v3739 = vsub.s32 %v2257, %v3738
  %v3740 = vrot.slane %v3672, %v3739
  %v3741 = vlaneseq
  %v3742 = vshrl.u32 %v3741, 7
  %v3743 = vsub.s32 %v2257, %v3742
  %v3744 = vrot.slane %v3673, %v3743
  %v3745 = vlaneseq
  %v3746 = vshrl.u32 %v3745, 7
  %v3747 = vsub.s32 %v2257, %v3746
  %v3748 = vrot.slane %v3674, %v3747
  %v3749 = vlaneseq
  %v3750 = vshrl.u32 %v3749, 7
  %v3751 = vsub.s32 %v2257, %v3750
  %v3752 = vrot.slane %v3675, %v3751
  %v3753 = vlaneseq
  %v3754 = vshrl.u32 %v3753, 7
  %v3755 = vsub.s32 %v2257, %v3754
  %v3756 = vrot.slane %v3676, %v3755
  %v3757 = vlaneseq
  %v3758 = vshrl.u32 %v3757, 7
  %v3759 = vsub.s32 %v2257, %v3758
  %v3760 = vrot.slane %v3677, %v3759
  %v3761 = vlaneseq
  %v3762 = vshrl.u32 %v3761, 7
  %v3763 = vsub.s32 %v2257, %v3762
  %v3764 = vrot.slane %v3678, %v3763
  %v3765 = vlaneseq
  %v3766 = vshrl.u32 %v3765, 7
  %v3767 = vsub.s32 %v2257, %v3766
  %v3768 = vrot.slane %v3679, %v3767
  %v3769 = vlaneseq
  %v3770 = vshrl.u32 %v3769, 7
  %v3771 = vsub.s32 %v2257, %v3770
  %v3772 = vrot.slane %v3680, %v3771
  %v3773 = vsel %vm3017, %v3716, %v3712
  %v3774 = vsel %vm3019, %v3720, %v3773
  %v3775 = vsel %vm3021, %v3724, %v3774
  %v3776 = vsel %vm3023, %v3728, %v3775
  %v3777 = vsel %vm3025, %v3732, %v3776
  %v3778 = vsel %vm3027, %v3736, %v3777
  %v3779 = vsel %vm3029, %v3740, %v3778
  %v3780 = vsel %vm3017, %v3748, %v3744
  %v3781 = vsel %vm3019, %v3752, %v3780
  %v3782 = vsel %vm3021, %v3756, %v3781
  %v3783 = vsel %vm3023, %v3760, %v3782
  %v3784 = vsel %vm3025, %v3764, %v3783
  %v3785 = vsel %vm3027, %v3768, %v3784
  %v3786 = vsel %vm3029, %v3772, %v3785
  %v3789 = vsel %vm3691, %v3779, %v3040
  %v3790 = vsel %vm3692, %v3786, %v3041
  %s3791 = scalar_lea.vmem [#allocation4], 48
  %v3792 = vld [vmem:[%s3791] sm:$0xff]
  %v3793 = vld [vmem:[%s3791 + $0x8] sm:$0xff]
  %v3794 = vld [vmem:[%s995] sm:$0xff]
  %v3795 = vld [vmem:[%s995 + $0x8] sm:$0xff]
  %s3796 = scalar_lea.vmem %s2, 48
  %v3797 = vld [vmem:[%s3796] sm:$0xff]
  %v3798 = vld [vmem:[%s3796 + $0x8] sm:$0xff]
  %3799 = vset.pattern.permute.xlu0 0
  %3800 = vperm.xlu0 %3799, %v3797
  %v3801 = vpop.permute.xlu0 %3800
  %3802 = vset.pattern.permute.xlu0 0
  %3803 = vperm.xlu0 %3802, %v3798
  %v3804 = vpop.permute.xlu0 %3803
  %vm3805 = vcmp.eq.s32.totalorder %v3801, %v2257
  %vm3806 = vcmp.eq.s32.totalorder %v3804, %v2257
  %v3807 = vsel %vm3805, 1, 0
  %v3808 = vsel %vm3806, 1, 0
  %v3809 = vcvt.s32.f32 %v3807
  %v3810 = vcvt.s32.f32 %v3808
  %v3811 = vmul.f32 %v3792, %v3809
  %v3812 = vmul.f32 %v3793, %v3810
  %v3813 = vsel %vm2237, %v3811, 0.0
  %3814 = vadd.xlane.f32.xlu0 %v3813
  %v3815 = vpop.xlane.xlu0 %3814
  %v3816 = vsel %vm2237, %v3812, 0.0
  %3817 = vadd.xlane.f32.xlu0 %v3816
  %v3818 = vpop.xlane.xlu0 %3817
  %v3820 = vsel %vm2237, %v3060, 0
  %v3823 = vsel %vm2237, %v3061, 0
  %3825 = vmatprep.subr.mxu0 0.0
  %3826 = vmatpush1.msra.mxu0 %v2254
  %3827 = vmatprep.subr.mxu0 0.0
  %3828 = vmatpush1.msra.mxu0 0.0
  %3829 = vmatprep.subr.mxu0 0.0
  %3830 = vmatpush1.msra.mxu0 0.0
  %3831 = vmatprep.subr.mxu0 0.0
  %3832 = vmatpush1.msra.mxu0 0.0
  %3833 = vmatprep.subr.mxu0 0.0
  %3834 = vmatpush1.msra.mxu0 0.0
  %3835 = vmatprep.subr.mxu0 0.0
  %3836 = vmatpush1.msra.mxu0 0.0
  %3837 = vmatprep.subr.mxu0 0.0
  %3838 = vmatpush1.msra.mxu0 0.0
  %3839 = vmatprep.subr.mxu0 0.0
  %3840 = vmatpush1.msra.mxu0 0.0
  %3841 = vmatprep.subr.mxu0 0.0
  %3842 = vmatpush1.msra.mxu0 0.0
  %3843 = vmatprep.subr.mxu0 0.0
  %3844 = vmatpush1.msra.mxu0 0.0
  %3845 = vmatprep.subr.mxu0 0.0
  %3846 = vmatpush1.msra.mxu0 0.0
  %3847 = vmatprep.subr.mxu0 0.0
  %3848 = vmatpush1.msra.mxu0 0.0
  %3849 = vmatprep.subr.mxu0 0.0
  %3850 = vmatpush1.msra.mxu0 0.0
  %3851 = vmatprep.subr.mxu0 0.0
  %3852 = vmatpush1.msra.mxu0 0.0
  %3853 = vmatprep.subr.mxu0 0.0
  %3854 = vmatpush1.msra.mxu0 0.0
  %3855 = vmatprep.subr.mxu0 0.0
  %3856 = vmatpush1.msra.mxu0 0.0
  %3857 = vmatprep.subr.mxu0 0.0
  %3858 = vmatpush1.msra.mxu0 0.0
  %3859 = vmatprep.subr.mxu0 0.0
  %3860 = vmatpush1.msra.mxu0 0.0
  %3861 = vmatprep.subr.mxu0 0.0
  %3862 = vmatpush1.msra.mxu0 0.0
  %3863 = vmatprep.subr.mxu0 0.0
  %3864 = vmatpush1.msra.mxu0 0.0
  %3865 = vmatprep.subr.mxu0 0.0
  %3866 = vmatpush1.msra.mxu0 0.0
  %3867 = vmatprep.subr.mxu0 0.0
  %3868 = vmatpush1.msra.mxu0 0.0
  %3869 = vmatprep.subr.mxu0 0.0
  %3870 = vmatpush1.msra.mxu0 0.0
  %3871 = vmatprep.subr.mxu0 0.0
  %3872 = vmatpush1.msra.mxu0 0.0
  %3873 = vmatprep.subr.mxu0 0.0
  %3874 = vmatpush1.msra.mxu0 0.0
  %3875 = vmatprep.subr.mxu0 0.0
  %3876 = vmatpush1.msra.mxu0 0.0
  %3877 = vmatprep.subr.mxu0 0.0
  %3878 = vmatpush1.msra.mxu0 0.0
  %3879 = vmatprep.subr.mxu0 0.0
  %3880 = vmatpush1.msra.mxu0 0.0
  %3881 = vmatprep.subr.mxu0 0.0
  %3882 = vmatpush1.msra.mxu0 0.0
  %3883 = vmatprep.subr.mxu0 0.0
  %3884 = vmatpush1.msra.mxu0 0.0
  %3885 = vmatprep.subr.mxu0 0.0
  %3886 = vmatpush1.msra.mxu0 0.0
  %3887 = vmatprep.subr.mxu0 0.0
  %3888 = vmatpush1.msra.mxu0 0.0
  %3889 = vmatprep.mubr.f32.mxu0 0.0
  %3890 = vmatmul.mubr.f32.gmra.mrb[0].mxu0 %v3820
  %v3891 = vpop.f32.mrb[0].mxu0
  %v3892 = vadd.f32 0.0, %v3891
  %v3893 = vpop.f32.mrb[0].mxu0
  %3894 = vmatprep.mubr.f32.mxu0 0.0
  %3895 = vmatmul.mubr.f32.gmra.mrb[0].mxu0 %v3823
  %v3896 = vpop.f32.mrb[0].mxu0
  %v3897 = vadd.f32 0.0, %v3896
  %v3898 = vpop.f32.mrb[0].mxu0
  %3899 = vdwg.mxu0
  %v3900 = vmul.f32 %v3892, %v3809
  %v3901 = vmul.f32 %v3897, %v3810
  %v3902 = vsel %vm2237, %v3900, 0.0
  %3903 = vadd.xlane.f32.xlu0 %v3902
  %v3904 = vpop.xlane.xlu0 %3903
  %v3905 = vsel %vm2237, %v3901, 0.0
  %3906 = vadd.xlane.f32.xlu0 %v3905
  %v3907 = vpop.xlane.xlu0 %3906
  %v3908 = vadd.f32 %v3815, %v3904
  %v3909 = vadd.f32 %v3818, %v3907
  %v3910 = vmul.f32 %v3908, %v3794
  %v3911 = vmul.f32 %v3909, %v3795
  %v3912 = vadd.f32 %v3163, %v3910
  %v3913 = vadd.f32 %v3164, %v3911
  %v3916 = vcombine.high %v3789, %v3789
  %v3918 = vunpack.c.l.s4 1966171168
  %v3919 = vunpack.c.0.s8 %v3918
  %v3920 = vlaneseq
  %v3921 = vshrl.u32 %v3920, 7
  %v3922 = vsub.s32 %v3919, %v3921
  %v3923 = vrot.slane %v3789, %v3922
  %v3925 = vunpack.c.l.s4 1966171168
  %v3926 = vunpack.c.0.s8 %v3925
  %v3927 = vlaneseq
  %v3928 = vshrl.u32 %v3927, 7
  %v3929 = vsub.s32 %v3926, %v3928
  %v3930 = vrot.slane %v3916, %v3929
  %v3931 = vcombine.high %v3923, %v3923
  %v3932 = vcombine.high %v3930, %v3930
  %v3934 = vunpack.c.l.s4 1966171168
  %v3935 = vunpack.c.0.s8 %v3934
  %v3936 = vlaneseq
  %v3937 = vshrl.u32 %v3936, 7
  %v3938 = vsub.s32 %v3935, %v3937
  %v3939 = vrot.slane %v3923, %v3938
  %v3941 = vunpack.c.l.s4 1966171168
  %v3942 = vunpack.c.0.s8 %v3941
  %v3943 = vlaneseq
  %v3944 = vshrl.u32 %v3943, 7
  %v3945 = vsub.s32 %v3942, %v3944
  %v3946 = vrot.slane %v3930, %v3945
  %v3948 = vunpack.c.l.s4 1966171168
  %v3949 = vunpack.c.0.s8 %v3948
  %v3950 = vlaneseq
  %v3951 = vshrl.u32 %v3950, 7
  %v3952 = vsub.s32 %v3949, %v3951
  %v3953 = vrot.slane %v3931, %v3952
  %v3955 = vunpack.c.l.s4 1966171168
  %v3956 = vunpack.c.0.s8 %v3955
  %v3957 = vlaneseq
  %v3958 = vshrl.u32 %v3957, 7
  %v3959 = vsub.s32 %v3956, %v3958
  %v3960 = vrot.slane %v3932, %v3959
  %v3961 = vcombine.high %v3939, %v3939
  %v3962 = vcombine.high %v3946, %v3946
  %v3963 = vcombine.high %v3953, %v3953
  %v3964 = vcombine.high %v3960, %v3960
  %v3965 = vcombine.high %v3790, %v3790
  %v3967 = vunpack.c.l.s4 1966171168
  %v3968 = vunpack.c.0.s8 %v3967
  %v3969 = vlaneseq
  %v3970 = vshrl.u32 %v3969, 7
  %v3971 = vsub.s32 %v3968, %v3970
  %v3972 = vrot.slane %v3790, %v3971
  %v3974 = vunpack.c.l.s4 1966171168
  %v3975 = vunpack.c.0.s8 %v3974
  %v3976 = vlaneseq
  %v3977 = vshrl.u32 %v3976, 7
  %v3978 = vsub.s32 %v3975, %v3977
  %v3979 = vrot.slane %v3965, %v3978
  %v3980 = vcombine.high %v3972, %v3972
  %v3981 = vcombine.high %v3979, %v3979
  %v3983 = vunpack.c.l.s4 1966171168
  %v3984 = vunpack.c.0.s8 %v3983
  %v3985 = vlaneseq
  %v3986 = vshrl.u32 %v3985, 7
  %v3987 = vsub.s32 %v3984, %v3986
  %v3988 = vrot.slane %v3972, %v3987
  %v3990 = vunpack.c.l.s4 1966171168
  %v3991 = vunpack.c.0.s8 %v3990
  %v3992 = vlaneseq
  %v3993 = vshrl.u32 %v3992, 7
  %v3994 = vsub.s32 %v3991, %v3993
  %v3995 = vrot.slane %v3979, %v3994
  %v3997 = vunpack.c.l.s4 1966171168
  %v3998 = vunpack.c.0.s8 %v3997
  %v3999 = vlaneseq
  %v4000 = vshrl.u32 %v3999, 7
  %v4001 = vsub.s32 %v3998, %v4000
  %v4002 = vrot.slane %v3980, %v4001
  %v4004 = vunpack.c.l.s4 1966171168
  %v4005 = vunpack.c.0.s8 %v4004
  %v4006 = vlaneseq
  %v4007 = vshrl.u32 %v4006, 7
  %v4008 = vsub.s32 %v4005, %v4007
  %v4009 = vrot.slane %v3981, %v4008
  %v4010 = vcombine.high %v3988, %v3988
  %v4011 = vcombine.high %v3995, %v3995
  %v4012 = vcombine.high %v4002, %v4002
  %v4013 = vcombine.high %v4009, %v4009
  %v4014 = vlaneseq
  %v4015 = vshrl.u32 %v4014, 7
  %v4016 = vsub.s32 0, %v4015
  %v4017 = vrot.slane %v3939, %v4016
  %v4018 = vlaneseq
  %v4019 = vshrl.u32 %v4018, 7
  %v4020 = vsub.s32 0, %v4019
  %v4021 = vrot.slane %v3953, %v4020
  %v4022 = vlaneseq
  %v4023 = vshrl.u32 %v4022, 7
  %v4024 = vsub.s32 0, %v4023
  %v4025 = vrot.slane %v3961, %v4024
  %v4026 = vlaneseq
  %v4027 = vshrl.u32 %v4026, 7
  %v4028 = vsub.s32 0, %v4027
  %v4029 = vrot.slane %v3963, %v4028
  %v4030 = vlaneseq
  %v4031 = vshrl.u32 %v4030, 7
  %v4032 = vsub.s32 0, %v4031
  %v4033 = vrot.slane %v3946, %v4032
  %v4034 = vlaneseq
  %v4035 = vshrl.u32 %v4034, 7
  %v4036 = vsub.s32 0, %v4035
  %v4037 = vrot.slane %v3960, %v4036
  %v4038 = vlaneseq
  %v4039 = vshrl.u32 %v4038, 7
  %v4040 = vsub.s32 0, %v4039
  %v4041 = vrot.slane %v3962, %v4040
  %v4042 = vlaneseq
  %v4043 = vshrl.u32 %v4042, 7
  %v4044 = vsub.s32 0, %v4043
  %v4045 = vrot.slane %v3964, %v4044
  %v4046 = vlaneseq
  %v4047 = vshrl.u32 %v4046, 7
  %v4048 = vsub.s32 0, %v4047
  %v4049 = vrot.slane %v3988, %v4048
  %v4050 = vlaneseq
  %v4051 = vshrl.u32 %v4050, 7
  %v4052 = vsub.s32 0, %v4051
  %v4053 = vrot.slane %v4002, %v4052
  %v4054 = vlaneseq
  %v4055 = vshrl.u32 %v4054, 7
  %v4056 = vsub.s32 0, %v4055
  %v4057 = vrot.slane %v4010, %v4056
  %v4058 = vlaneseq
  %v4059 = vshrl.u32 %v4058, 7
  %v4060 = vsub.s32 0, %v4059
  %v4061 = vrot.slane %v4012, %v4060
  %v4062 = vlaneseq
  %v4063 = vshrl.u32 %v4062, 7
  %v4064 = vsub.s32 0, %v4063
  %v4065 = vrot.slane %v3995, %v4064
  %v4066 = vlaneseq
  %v4067 = vshrl.u32 %v4066, 7
  %v4068 = vsub.s32 0, %v4067
  %v4069 = vrot.slane %v4009, %v4068
  %v4070 = vlaneseq
  %v4071 = vshrl.u32 %v4070, 7
  %v4072 = vsub.s32 0, %v4071
  %v4073 = vrot.slane %v4011, %v4072
  %v4074 = vlaneseq
  %v4075 = vshrl.u32 %v4074, 7
  %v4076 = vsub.s32 0, %v4075
  %v4077 = vrot.slane %v4013, %v4076
  %v4094 = vadd.f32 %v4017, %v2255
  %v4095 = vadd.f32 %v4021, %v2255
  %v4096 = vadd.f32 %v4025, %v2255
  %v4097 = vadd.f32 %v4029, %v2255
  %v4098 = vadd.f32 %v4033, %v2255
  %v4099 = vadd.f32 %v4037, %v2255
  %v4100 = vadd.f32 %v4041, %v2255
  %v4101 = vadd.f32 %v4045, %v2255
  %v4102 = vadd.f32 %v4049, %v2255
  %v4103 = vadd.f32 %v4053, %v2255
  %v4104 = vadd.f32 %v4057, %v2255
  %v4105 = vadd.f32 %v4061, %v2255
  %v4106 = vadd.f32 %v4065, %v2255
  %v4107 = vadd.f32 %v4069, %v2255
  %v4108 = vadd.f32 %v4073, %v2255
  %v4109 = vadd.f32 %v4077, %v2255
  %v4110 = vlaneseq
  %v4111 = vshrl.u32 %v4110, 7
  %v4112 = vsub.s32 0, %v4111
  %v4113 = vrot.slane %v3792, %v4112
  %4115 = vbcast.lane.b32.xlu0 %v4113, 256
  %v4116 = vpop.permute.xlu0 %4115
  %v4117 = vlaneseq
  %v4118 = vshrl.u32 %v4117, 7
  %v4119 = vsub.s32 1, %v4118
  %v4120 = vrot.slane %v3792, %v4119
  %4122 = vbcast.lane.b32.xlu0 %v4120, 256
  %v4123 = vpop.permute.xlu0 %4122
  %v4124 = vlaneseq
  %v4125 = vshrl.u32 %v4124, 7
  %v4126 = vsub.s32 2, %v4125
  %v4127 = vrot.slane %v3792, %v4126
  %4129 = vbcast.lane.b32.xlu0 %v4127, 256
  %v4130 = vpop.permute.xlu0 %4129
  %v4131 = vlaneseq
  %v4132 = vshrl.u32 %v4131, 7
  %v4133 = vsub.s32 3, %v4132
  %v4134 = vrot.slane %v3792, %v4133
  %4136 = vbcast.lane.b32.xlu0 %v4134, 256
  %v4137 = vpop.permute.xlu0 %4136
  %v4138 = vlaneseq
  %v4139 = vshrl.u32 %v4138, 7
  %v4140 = vsub.s32 4, %v4139
  %v4141 = vrot.slane %v3792, %v4140
  %4143 = vbcast.lane.b32.xlu0 %v4141, 256
  %v4144 = vpop.permute.xlu0 %4143
  %v4145 = vlaneseq
  %v4146 = vshrl.u32 %v4145, 7
  %v4147 = vsub.s32 5, %v4146
  %v4148 = vrot.slane %v3792, %v4147
  %4150 = vbcast.lane.b32.xlu0 %v4148, 256
  %v4151 = vpop.permute.xlu0 %4150
  %v4152 = vlaneseq
  %v4153 = vshrl.u32 %v4152, 7
  %v4154 = vsub.s32 6, %v4153
  %v4155 = vrot.slane %v3792, %v4154
  %4157 = vbcast.lane.b32.xlu0 %v4155, 256
  %v4158 = vpop.permute.xlu0 %4157
  %v4159 = vlaneseq
  %v4160 = vshrl.u32 %v4159, 7
  %v4161 = vsub.s32 7, %v4160
  %v4162 = vrot.slane %v3792, %v4161
  %4164 = vbcast.lane.b32.xlu0 %v4162, 256
  %v4165 = vpop.permute.xlu0 %4164
  %v4166 = vlaneseq
  %v4167 = vshrl.u32 %v4166, 7
  %v4168 = vsub.s32 0, %v4167
  %v4169 = vrot.slane %v3793, %v4168
  %4171 = vbcast.lane.b32.xlu0 %v4169, 256
  %v4172 = vpop.permute.xlu0 %4171
  %v4173 = vlaneseq
  %v4174 = vshrl.u32 %v4173, 7
  %v4175 = vsub.s32 1, %v4174
  %v4176 = vrot.slane %v3793, %v4175
  %4178 = vbcast.lane.b32.xlu0 %v4176, 256
  %v4179 = vpop.permute.xlu0 %4178
  %v4180 = vlaneseq
  %v4181 = vshrl.u32 %v4180, 7
  %v4182 = vsub.s32 2, %v4181
  %v4183 = vrot.slane %v3793, %v4182
  %4185 = vbcast.lane.b32.xlu0 %v4183, 256
  %v4186 = vpop.permute.xlu0 %4185
  %v4187 = vlaneseq
  %v4188 = vshrl.u32 %v4187, 7
  %v4189 = vsub.s32 3, %v4188
  %v4190 = vrot.slane %v3793, %v4189
  %4192 = vbcast.lane.b32.xlu0 %v4190, 256
  %v4193 = vpop.permute.xlu0 %4192
  %v4194 = vlaneseq
  %v4195 = vshrl.u32 %v4194, 7
  %v4196 = vsub.s32 4, %v4195
  %v4197 = vrot.slane %v3793, %v4196
  %4199 = vbcast.lane.b32.xlu0 %v4197, 256
  %v4200 = vpop.permute.xlu0 %4199
  %v4201 = vlaneseq
  %v4202 = vshrl.u32 %v4201, 7
  %v4203 = vsub.s32 5, %v4202
  %v4204 = vrot.slane %v3793, %v4203
  %4206 = vbcast.lane.b32.xlu0 %v4204, 256
  %v4207 = vpop.permute.xlu0 %4206
  %v4208 = vlaneseq
  %v4209 = vshrl.u32 %v4208, 7
  %v4210 = vsub.s32 6, %v4209
  %v4211 = vrot.slane %v3793, %v4210
  %4213 = vbcast.lane.b32.xlu0 %v4211, 256
  %v4214 = vpop.permute.xlu0 %4213
  %v4215 = vlaneseq
  %v4216 = vshrl.u32 %v4215, 7
  %v4217 = vsub.s32 7, %v4216
  %v4218 = vrot.slane %v3793, %v4217
  %4220 = vbcast.lane.b32.xlu0 %v4218, 256
  %v4221 = vpop.permute.xlu0 %4220
  %v4222 = vadd.f32 %v4094, %v4116
  %v4223 = vadd.f32 %v4095, %v4123
  %v4224 = vadd.f32 %v4096, %v4130
  %v4225 = vadd.f32 %v4097, %v4137
  %v4226 = vadd.f32 %v4098, %v4144
  %v4227 = vadd.f32 %v4099, %v4151
  %v4228 = vadd.f32 %v4100, %v4158
  %v4229 = vadd.f32 %v4101, %v4165
  %v4230 = vadd.f32 %v4102, %v4172
  %v4231 = vadd.f32 %v4103, %v4179
  %v4232 = vadd.f32 %v4104, %v4186
  %v4233 = vadd.f32 %v4105, %v4193
  %v4234 = vadd.f32 %v4106, %v4200
  %v4235 = vadd.f32 %v4107, %v4207
  %v4236 = vadd.f32 %v4108, %v4214
  %v4237 = vadd.f32 %v4109, %v4221
  %v4238 = vsel %vm2237, %v4222, -inf
  %4239 = vmax.xlane.f32.xlu0 %v4238
  %v4240 = vpop.xlane.xlu0 %4239
  %v4241 = vsel %vm2237, %v4223, -inf
  %4242 = vmax.xlane.f32.xlu0 %v4241
  %v4243 = vpop.xlane.xlu0 %4242
  %v4244 = vsel %vm2237, %v4224, -inf
  %4245 = vmax.xlane.f32.xlu0 %v4244
  %v4246 = vpop.xlane.xlu0 %4245
  %v4247 = vsel %vm2237, %v4225, -inf
  %4248 = vmax.xlane.f32.xlu0 %v4247
  %v4249 = vpop.xlane.xlu0 %4248
  %v4250 = vsel %vm2237, %v4226, -inf
  %4251 = vmax.xlane.f32.xlu0 %v4250
  %v4252 = vpop.xlane.xlu0 %4251
  %v4253 = vsel %vm2237, %v4227, -inf
  %4254 = vmax.xlane.f32.xlu0 %v4253
  %v4255 = vpop.xlane.xlu0 %4254
  %v4256 = vsel %vm2237, %v4228, -inf
  %4257 = vmax.xlane.f32.xlu0 %v4256
  %v4258 = vpop.xlane.xlu0 %4257
  %v4259 = vsel %vm2237, %v4229, -inf
  %4260 = vmax.xlane.f32.xlu0 %v4259
  %v4261 = vpop.xlane.xlu0 %4260
  %v4262 = vsel %vm2237, %v4230, -inf
  %4263 = vmax.xlane.f32.xlu0 %v4262
  %v4264 = vpop.xlane.xlu0 %4263
  %v4265 = vsel %vm2237, %v4231, -inf
  %4266 = vmax.xlane.f32.xlu0 %v4265
  %v4267 = vpop.xlane.xlu0 %4266
  %v4268 = vsel %vm2237, %v4232, -inf
  %4269 = vmax.xlane.f32.xlu0 %v4268
  %v4270 = vpop.xlane.xlu0 %4269
  %v4271 = vsel %vm2237, %v4233, -inf
  %4272 = vmax.xlane.f32.xlu0 %v4271
  %v4273 = vpop.xlane.xlu0 %4272
  %v4274 = vsel %vm2237, %v4234, -inf
  %4275 = vmax.xlane.f32.xlu0 %v4274
  %v4276 = vpop.xlane.xlu0 %4275
  %v4277 = vsel %vm2237, %v4235, -inf
  %4278 = vmax.xlane.f32.xlu0 %v4277
  %v4279 = vpop.xlane.xlu0 %4278
  %v4280 = vsel %vm2237, %v4236, -inf
  %4281 = vmax.xlane.f32.xlu0 %v4280
  %v4282 = vpop.xlane.xlu0 %4281
  %v4283 = vsel %vm2237, %v4237, -inf
  %4284 = vmax.xlane.f32.xlu0 %v4283
  %v4285 = vpop.xlane.xlu0 %4284
  %v4286 = vsub.f32 %v4222, %v4240
  %v4287 = vsub.f32 %v4223, %v4243
  %v4288 = vsub.f32 %v4224, %v4246
  %v4289 = vsub.f32 %v4225, %v4249
  %v4290 = vsub.f32 %v4226, %v4252
  %v4291 = vsub.f32 %v4227, %v4255
  %v4292 = vsub.f32 %v4228, %v4258
  %v4293 = vsub.f32 %v4229, %v4261
  %v4294 = vsub.f32 %v4230, %v4264
  %v4295 = vsub.f32 %v4231, %v4267
  %v4296 = vsub.f32 %v4232, %v4270
  %v4297 = vsub.f32 %v4233, %v4273
  %v4298 = vsub.f32 %v4234, %v4276
  %v4299 = vsub.f32 %v4235, %v4279
  %v4300 = vsub.f32 %v4236, %v4282
  %v4301 = vsub.f32 %v4237, %v4285
  %v4302 = vmul.f32 %v4286, 1.442695
  %v4303 = vpow.pop %v4302
  %v4304 = vmul.f32 %v4287, 1.442695
  %v4305 = vpow.pop %v4304
  %v4306 = vmul.f32 %v4288, 1.442695
  %v4307 = vpow.pop %v4306
  %v4308 = vmul.f32 %v4289, 1.442695
  %v4309 = vpow.pop %v4308
  %v4310 = vmul.f32 %v4290, 1.442695
  %v4311 = vpow.pop %v4310
  %v4312 = vmul.f32 %v4291, 1.442695
  %v4313 = vpow.pop %v4312
  %v4314 = vmul.f32 %v4292, 1.442695
  %v4315 = vpow.pop %v4314
  %v4316 = vmul.f32 %v4293, 1.442695
  %v4317 = vpow.pop %v4316
  %v4318 = vmul.f32 %v4294, 1.442695
  %v4319 = vpow.pop %v4318
  %v4320 = vmul.f32 %v4295, 1.442695
  %v4321 = vpow.pop %v4320
  %v4322 = vmul.f32 %v4296, 1.442695
  %v4323 = vpow.pop %v4322
  %v4324 = vmul.f32 %v4297, 1.442695
  %v4325 = vpow.pop %v4324
  %v4326 = vmul.f32 %v4298, 1.442695
  %v4327 = vpow.pop %v4326
  %v4328 = vmul.f32 %v4299, 1.442695
  %v4329 = vpow.pop %v4328
  %v4330 = vmul.f32 %v4300, 1.442695
  %v4331 = vpow.pop %v4330
  %v4332 = vmul.f32 %v4301, 1.442695
  %v4333 = vpow.pop %v4332
  %v4334 = vsel %vm2237, %v4303, 0.0
  %4335 = vadd.xlane.f32.xlu0 %v4334
  %v4336 = vpop.xlane.xlu0 %4335
  %v4337 = vsel %vm2237, %v4305, 0.0
  %4338 = vadd.xlane.f32.xlu0 %v4337
  %v4339 = vpop.xlane.xlu0 %4338
  %v4340 = vsel %vm2237, %v4307, 0.0
  %4341 = vadd.xlane.f32.xlu0 %v4340
  %v4342 = vpop.xlane.xlu0 %4341
  %v4343 = vsel %vm2237, %v4309, 0.0
  %4344 = vadd.xlane.f32.xlu0 %v4343
  %v4345 = vpop.xlane.xlu0 %4344
  %v4346 = vsel %vm2237, %v4311, 0.0
  %4347 = vadd.xlane.f32.xlu0 %v4346
  %v4348 = vpop.xlane.xlu0 %4347
  %v4349 = vsel %vm2237, %v4313, 0.0
  %4350 = vadd.xlane.f32.xlu0 %v4349
  %v4351 = vpop.xlane.xlu0 %4350
  %v4352 = vsel %vm2237, %v4315, 0.0
  %4353 = vadd.xlane.f32.xlu0 %v4352
  %v4354 = vpop.xlane.xlu0 %4353
  %v4355 = vsel %vm2237, %v4317, 0.0
  %4356 = vadd.xlane.f32.xlu0 %v4355
  %v4357 = vpop.xlane.xlu0 %4356
  %v4358 = vsel %vm2237, %v4319, 0.0
  %4359 = vadd.xlane.f32.xlu0 %v4358
  %v4360 = vpop.xlane.xlu0 %4359
  %v4361 = vsel %vm2237, %v4321, 0.0
  %4362 = vadd.xlane.f32.xlu0 %v4361
  %v4363 = vpop.xlane.xlu0 %4362
  %v4364 = vsel %vm2237, %v4323, 0.0
  %4365 = vadd.xlane.f32.xlu0 %v4364
  %v4366 = vpop.xlane.xlu0 %4365
  %v4367 = vsel %vm2237, %v4325, 0.0
  %4368 = vadd.xlane.f32.xlu0 %v4367
  %v4369 = vpop.xlane.xlu0 %4368
  %v4370 = vsel %vm2237, %v4327, 0.0
  %4371 = vadd.xlane.f32.xlu0 %v4370
  %v4372 = vpop.xlane.xlu0 %4371
  %v4373 = vsel %vm2237, %v4329, 0.0
  %4374 = vadd.xlane.f32.xlu0 %v4373
  %v4375 = vpop.xlane.xlu0 %4374
  %v4376 = vsel %vm2237, %v4331, 0.0
  %4377 = vadd.xlane.f32.xlu0 %v4376
  %v4378 = vpop.xlane.xlu0 %4377
  %v4379 = vsel %vm2237, %v4333, 0.0
  %4380 = vadd.xlane.f32.xlu0 %v4379
  %v4381 = vpop.xlane.xlu0 %4380
  %v4382 = vlog2.pop %v4336
  %v4383 = vmul.f32 %v4382, 0.6931472
  %v4384 = vlog2.pop %v4339
  %v4385 = vmul.f32 %v4384, 0.6931472
  %v4386 = vlog2.pop %v4342
  %v4387 = vmul.f32 %v4386, 0.6931472
  %v4388 = vlog2.pop %v4345
  %v4389 = vmul.f32 %v4388, 0.6931472
  %v4390 = vlog2.pop %v4348
  %v4391 = vmul.f32 %v4390, 0.6931472
  %v4392 = vlog2.pop %v4351
  %v4393 = vmul.f32 %v4392, 0.6931472
  %v4394 = vlog2.pop %v4354
  %v4395 = vmul.f32 %v4394, 0.6931472
  %v4396 = vlog2.pop %v4357
  %v4397 = vmul.f32 %v4396, 0.6931472
  %v4398 = vlog2.pop %v4360
  %v4399 = vmul.f32 %v4398, 0.6931472
  %v4400 = vlog2.pop %v4363
  %v4401 = vmul.f32 %v4400, 0.6931472
  %v4402 = vlog2.pop %v4366
  %v4403 = vmul.f32 %v4402, 0.6931472
  %v4404 = vlog2.pop %v4369
  %v4405 = vmul.f32 %v4404, 0.6931472
  %v4406 = vlog2.pop %v4372
  %v4407 = vmul.f32 %v4406, 0.6931472
  %v4408 = vlog2.pop %v4375
  %v4409 = vmul.f32 %v4408, 0.6931472
  %v4410 = vlog2.pop %v4378
  %v4411 = vmul.f32 %v4410, 0.6931472
  %v4412 = vlog2.pop %v4381
  %v4413 = vmul.f32 %v4412, 0.6931472
  %v4414 = vadd.f32 %v4240, %v4383
  %v4415 = vadd.f32 %v4243, %v4385
  %v4416 = vadd.f32 %v4246, %v4387
  %v4417 = vadd.f32 %v4249, %v4389
  %v4418 = vadd.f32 %v4252, %v4391
  %v4419 = vadd.f32 %v4255, %v4393
  %v4420 = vadd.f32 %v4258, %v4395
  %v4421 = vadd.f32 %v4261, %v4397
  %v4422 = vadd.f32 %v4264, %v4399
  %v4423 = vadd.f32 %v4267, %v4401
  %v4424 = vadd.f32 %v4270, %v4403
  %v4425 = vadd.f32 %v4273, %v4405
  %v4426 = vadd.f32 %v4276, %v4407
  %v4427 = vadd.f32 %v4279, %v4409
  %v4428 = vadd.f32 %v4282, %v4411
  %v4429 = vadd.f32 %v4285, %v4413
  %vm4430 = vcmp.gt.f32.partialorder %v3794, 0.5
  %vm4431 = vcmp.gt.f32.partialorder %v3795, 0.5
  %v4432 = vsel %vm4430, 1, 0
  %v4433 = vsel %vm4431, 1, 0
  %4434 = vset.pattern.permute.xlu0 0
  %4435 = vperm.xlu0 %4434, %v4432
  %v4436 = vpop.permute.xlu0 %4435
  %4437 = vset.pattern.permute.xlu0 0
  %4438 = vperm.xlu0 %4437, %v4433
  %v4439 = vpop.permute.xlu0 %4438
  %vm4440 = vcmp.eq.s32.totalorder %v4436, 1
  %vm4441 = vcmp.eq.s32.totalorder %v4439, 1
  %v4458 = vlaneseq
  %v4459 = vshrl.u32 %v4458, 7
  %v4460 = vsub.s32 %v2257, %v4459
  %v4461 = vrot.slane %v4414, %v4460
  %v4462 = vlaneseq
  %v4463 = vshrl.u32 %v4462, 7
  %v4464 = vsub.s32 %v2257, %v4463
  %v4465 = vrot.slane %v4415, %v4464
  %v4466 = vlaneseq
  %v4467 = vshrl.u32 %v4466, 7
  %v4468 = vsub.s32 %v2257, %v4467
  %v4469 = vrot.slane %v4416, %v4468
  %v4470 = vlaneseq
  %v4471 = vshrl.u32 %v4470, 7
  %v4472 = vsub.s32 %v2257, %v4471
  %v4473 = vrot.slane %v4417, %v4472
  %v4474 = vlaneseq
  %v4475 = vshrl.u32 %v4474, 7
  %v4476 = vsub.s32 %v2257, %v4475
  %v4477 = vrot.slane %v4418, %v4476
  %v4478 = vlaneseq
  %v4479 = vshrl.u32 %v4478, 7
  %v4480 = vsub.s32 %v2257, %v4479
  %v4481 = vrot.slane %v4419, %v4480
  %v4482 = vlaneseq
  %v4483 = vshrl.u32 %v4482, 7
  %v4484 = vsub.s32 %v2257, %v4483
  %v4485 = vrot.slane %v4420, %v4484
  %v4486 = vlaneseq
  %v4487 = vshrl.u32 %v4486, 7
  %v4488 = vsub.s32 %v2257, %v4487
  %v4489 = vrot.slane %v4421, %v4488
  %v4490 = vlaneseq
  %v4491 = vshrl.u32 %v4490, 7
  %v4492 = vsub.s32 %v2257, %v4491
  %v4493 = vrot.slane %v4422, %v4492
  %v4494 = vlaneseq
  %v4495 = vshrl.u32 %v4494, 7
  %v4496 = vsub.s32 %v2257, %v4495
  %v4497 = vrot.slane %v4423, %v4496
  %v4498 = vlaneseq
  %v4499 = vshrl.u32 %v4498, 7
  %v4500 = vsub.s32 %v2257, %v4499
  %v4501 = vrot.slane %v4424, %v4500
  %v4502 = vlaneseq
  %v4503 = vshrl.u32 %v4502, 7
  %v4504 = vsub.s32 %v2257, %v4503
  %v4505 = vrot.slane %v4425, %v4504
  %v4506 = vlaneseq
  %v4507 = vshrl.u32 %v4506, 7
  %v4508 = vsub.s32 %v2257, %v4507
  %v4509 = vrot.slane %v4426, %v4508
  %v4510 = vlaneseq
  %v4511 = vshrl.u32 %v4510, 7
  %v4512 = vsub.s32 %v2257, %v4511
  %v4513 = vrot.slane %v4427, %v4512
  %v4514 = vlaneseq
  %v4515 = vshrl.u32 %v4514, 7
  %v4516 = vsub.s32 %v2257, %v4515
  %v4517 = vrot.slane %v4428, %v4516
  %v4518 = vlaneseq
  %v4519 = vshrl.u32 %v4518, 7
  %v4520 = vsub.s32 %v2257, %v4519
  %v4521 = vrot.slane %v4429, %v4520
  %v4522 = vsel %vm3017, %v4465, %v4461
  %v4523 = vsel %vm3019, %v4469, %v4522
  %v4524 = vsel %vm3021, %v4473, %v4523
  %v4525 = vsel %vm3023, %v4477, %v4524
  %v4526 = vsel %vm3025, %v4481, %v4525
  %v4527 = vsel %vm3027, %v4485, %v4526
  %v4528 = vsel %vm3029, %v4489, %v4527
  %v4529 = vsel %vm3017, %v4497, %v4493
  %v4530 = vsel %vm3019, %v4501, %v4529
  %v4531 = vsel %vm3021, %v4505, %v4530
  %v4532 = vsel %vm3023, %v4509, %v4531
  %v4533 = vsel %vm3025, %v4513, %v4532
  %v4534 = vsel %vm3027, %v4517, %v4533
  %v4535 = vsel %vm3029, %v4521, %v4534
  %v4538 = vsel %vm4440, %v4528, %v3789
  %v4539 = vsel %vm4441, %v4535, %v3790
  %s4540 = scalar_lea.vmem [#allocation4], 64
  %v4541 = vld [vmem:[%s4540] sm:$0xff]
  %v4542 = vld [vmem:[%s4540 + $0x8] sm:$0xff]
  %v4543 = vld [vmem:[%s998] sm:$0xff]
  %v4544 = vld [vmem:[%s998 + $0x8] sm:$0xff]
  %s4545 = scalar_lea.vmem %s2, 64
  %v4546 = vld [vmem:[%s4545] sm:$0xff]
  %v4547 = vld [vmem:[%s4545 + $0x8] sm:$0xff]
  %4548 = vset.pattern.permute.xlu0 0
  %4549 = vperm.xlu0 %4548, %v4546
  %v4550 = vpop.permute.xlu0 %4549
  %4551 = vset.pattern.permute.xlu0 0
  %4552 = vperm.xlu0 %4551, %v4547
  %v4553 = vpop.permute.xlu0 %4552
  %vm4554 = vcmp.eq.s32.totalorder %v4550, %v2257
  %vm4555 = vcmp.eq.s32.totalorder %v4553, %v2257
  %v4556 = vsel %vm4554, 1, 0
  %v4557 = vsel %vm4555, 1, 0
  %v4558 = vcvt.s32.f32 %v4556
  %v4559 = vcvt.s32.f32 %v4557
  %v4560 = vmul.f32 %v4541, %v4558
  %v4561 = vmul.f32 %v4542, %v4559
  %v4562 = vsel %vm2237, %v4560, 0.0
  %4563 = vadd.xlane.f32.xlu0 %v4562
  %v4564 = vpop.xlane.xlu0 %4563
  %v4565 = vsel %vm2237, %v4561, 0.0
  %4566 = vadd.xlane.f32.xlu0 %v4565
  %v4567 = vpop.xlane.xlu0 %4566
  %v4569 = vsel %vm2237, %v3809, 0
  %v4572 = vsel %vm2237, %v3810, 0
  %4574 = vmatprep.subr.mxu0 0.0
  %4575 = vmatpush1.msra.mxu0 %v2254
  %4576 = vmatprep.subr.mxu0 0.0
  %4577 = vmatpush1.msra.mxu0 0.0
  %4578 = vmatprep.subr.mxu0 0.0
  %4579 = vmatpush1.msra.mxu0 0.0
  %4580 = vmatprep.subr.mxu0 0.0
  %4581 = vmatpush1.msra.mxu0 0.0
  %4582 = vmatprep.subr.mxu0 0.0
  %4583 = vmatpush1.msra.mxu0 0.0
  %4584 = vmatprep.subr.mxu0 0.0
  %4585 = vmatpush1.msra.mxu0 0.0
  %4586 = vmatprep.subr.mxu0 0.0
  %4587 = vmatpush1.msra.mxu0 0.0
  %4588 = vmatprep.subr.mxu0 0.0
  %4589 = vmatpush1.msra.mxu0 0.0
  %4590 = vmatprep.subr.mxu0 0.0
  %4591 = vmatpush1.msra.mxu0 0.0
  %4592 = vmatprep.subr.mxu0 0.0
  %4593 = vmatpush1.msra.mxu0 0.0
  %4594 = vmatprep.subr.mxu0 0.0
  %4595 = vmatpush1.msra.mxu0 0.0
  %4596 = vmatprep.subr.mxu0 0.0
  %4597 = vmatpush1.msra.mxu0 0.0
  %4598 = vmatprep.subr.mxu0 0.0
  %4599 = vmatpush1.msra.mxu0 0.0
  %4600 = vmatprep.subr.mxu0 0.0
  %4601 = vmatpush1.msra.mxu0 0.0
  %4602 = vmatprep.subr.mxu0 0.0
  %4603 = vmatpush1.msra.mxu0 0.0
  %4604 = vmatprep.subr.mxu0 0.0
  %4605 = vmatpush1.msra.mxu0 0.0
  %4606 = vmatprep.subr.mxu0 0.0
  %4607 = vmatpush1.msra.mxu0 0.0
  %4608 = vmatprep.subr.mxu0 0.0
  %4609 = vmatpush1.msra.mxu0 0.0
  %4610 = vmatprep.subr.mxu0 0.0
  %4611 = vmatpush1.msra.mxu0 0.0
  %4612 = vmatprep.subr.mxu0 0.0
  %4613 = vmatpush1.msra.mxu0 0.0
  %4614 = vmatprep.subr.mxu0 0.0
  %4615 = vmatpush1.msra.mxu0 0.0
  %4616 = vmatprep.subr.mxu0 0.0
  %4617 = vmatpush1.msra.mxu0 0.0
  %4618 = vmatprep.subr.mxu0 0.0
  %4619 = vmatpush1.msra.mxu0 0.0
  %4620 = vmatprep.subr.mxu0 0.0
  %4621 = vmatpush1.msra.mxu0 0.0
  %4622 = vmatprep.subr.mxu0 0.0
  %4623 = vmatpush1.msra.mxu0 0.0
  %4624 = vmatprep.subr.mxu0 0.0
  %4625 = vmatpush1.msra.mxu0 0.0
  %4626 = vmatprep.subr.mxu0 0.0
  %4627 = vmatpush1.msra.mxu0 0.0
  %4628 = vmatprep.subr.mxu0 0.0
  %4629 = vmatpush1.msra.mxu0 0.0
  %4630 = vmatprep.subr.mxu0 0.0
  %4631 = vmatpush1.msra.mxu0 0.0
  %4632 = vmatprep.subr.mxu0 0.0
  %4633 = vmatpush1.msra.mxu0 0.0
  %4634 = vmatprep.subr.mxu0 0.0
  %4635 = vmatpush1.msra.mxu0 0.0
  %4636 = vmatprep.subr.mxu0 0.0
  %4637 = vmatpush1.msra.mxu0 0.0
  %4638 = vmatprep.mubr.f32.mxu0 0.0
  %4639 = vmatmul.mubr.f32.gmra.mrb[0].mxu0 %v4569
  %v4640 = vpop.f32.mrb[0].mxu0
  %v4641 = vadd.f32 0.0, %v4640
  %v4642 = vpop.f32.mrb[0].mxu0
  %4643 = vmatprep.mubr.f32.mxu0 0.0
  %4644 = vmatmul.mubr.f32.gmra.mrb[0].mxu0 %v4572
  %v4645 = vpop.f32.mrb[0].mxu0
  %v4646 = vadd.f32 0.0, %v4645
  %v4647 = vpop.f32.mrb[0].mxu0
  %4648 = vdwg.mxu0
  %v4649 = vmul.f32 %v4641, %v4558
  %v4650 = vmul.f32 %v4646, %v4559
  %v4651 = vsel %vm2237, %v4649, 0.0
  %4652 = vadd.xlane.f32.xlu0 %v4651
  %v4653 = vpop.xlane.xlu0 %4652
  %v4654 = vsel %vm2237, %v4650, 0.0
  %4655 = vadd.xlane.f32.xlu0 %v4654
  %v4656 = vpop.xlane.xlu0 %4655
  %v4657 = vadd.f32 %v4564, %v4653
  %v4658 = vadd.f32 %v4567, %v4656
  %v4659 = vmul.f32 %v4657, %v4543
  %v4660 = vmul.f32 %v4658, %v4544
  %v4661 = vadd.f32 %v3912, %v4659
  %v4662 = vadd.f32 %v3913, %v4660
  %v4665 = vcombine.high %v4538, %v4538
  %v4667 = vunpack.c.l.s4 1966171168
  %v4668 = vunpack.c.0.s8 %v4667
  %v4669 = vlaneseq
  %v4670 = vshrl.u32 %v4669, 7
  %v4671 = vsub.s32 %v4668, %v4670
  %v4672 = vrot.slane %v4538, %v4671
  %v4674 = vunpack.c.l.s4 1966171168
  %v4675 = vunpack.c.0.s8 %v4674
  %v4676 = vlaneseq
  %v4677 = vshrl.u32 %v4676, 7
  %v4678 = vsub.s32 %v4675, %v4677
  %v4679 = vrot.slane %v4665, %v4678
  %v4680 = vcombine.high %v4672, %v4672
  %v4681 = vcombine.high %v4679, %v4679
  %v4683 = vunpack.c.l.s4 1966171168
  %v4684 = vunpack.c.0.s8 %v4683
  %v4685 = vlaneseq
  %v4686 = vshrl.u32 %v4685, 7
  %v4687 = vsub.s32 %v4684, %v4686
  %v4688 = vrot.slane %v4672, %v4687
  %v4690 = vunpack.c.l.s4 1966171168
  %v4691 = vunpack.c.0.s8 %v4690
  %v4692 = vlaneseq
  %v4693 = vshrl.u32 %v4692, 7
  %v4694 = vsub.s32 %v4691, %v4693
  %v4695 = vrot.slane %v4679, %v4694
  %v4697 = vunpack.c.l.s4 1966171168
  %v4698 = vunpack.c.0.s8 %v4697
  %v4699 = vlaneseq
  %v4700 = vshrl.u32 %v4699, 7
  %v4701 = vsub.s32 %v4698, %v4700
  %v4702 = vrot.slane %v4680, %v4701
  %v4704 = vunpack.c.l.s4 1966171168
  %v4705 = vunpack.c.0.s8 %v4704
  %v4706 = vlaneseq
  %v4707 = vshrl.u32 %v4706, 7
  %v4708 = vsub.s32 %v4705, %v4707
  %v4709 = vrot.slane %v4681, %v4708
  %v4710 = vcombine.high %v4688, %v4688
  %v4711 = vcombine.high %v4695, %v4695
  %v4712 = vcombine.high %v4702, %v4702
  %v4713 = vcombine.high %v4709, %v4709
  %v4714 = vcombine.high %v4539, %v4539
  %v4716 = vunpack.c.l.s4 1966171168
  %v4717 = vunpack.c.0.s8 %v4716
  %v4718 = vlaneseq
  %v4719 = vshrl.u32 %v4718, 7
  %v4720 = vsub.s32 %v4717, %v4719
  %v4721 = vrot.slane %v4539, %v4720
  %v4723 = vunpack.c.l.s4 1966171168
  %v4724 = vunpack.c.0.s8 %v4723
  %v4725 = vlaneseq
  %v4726 = vshrl.u32 %v4725, 7
  %v4727 = vsub.s32 %v4724, %v4726
  %v4728 = vrot.slane %v4714, %v4727
  %v4729 = vcombine.high %v4721, %v4721
  %v4730 = vcombine.high %v4728, %v4728
  %v4732 = vunpack.c.l.s4 1966171168
  %v4733 = vunpack.c.0.s8 %v4732
  %v4734 = vlaneseq
  %v4735 = vshrl.u32 %v4734, 7
  %v4736 = vsub.s32 %v4733, %v4735
  %v4737 = vrot.slane %v4721, %v4736
  %v4739 = vunpack.c.l.s4 1966171168
  %v4740 = vunpack.c.0.s8 %v4739
  %v4741 = vlaneseq
  %v4742 = vshrl.u32 %v4741, 7
  %v4743 = vsub.s32 %v4740, %v4742
  %v4744 = vrot.slane %v4728, %v4743
  %v4746 = vunpack.c.l.s4 1966171168
  %v4747 = vunpack.c.0.s8 %v4746
  %v4748 = vlaneseq
  %v4749 = vshrl.u32 %v4748, 7
  %v4750 = vsub.s32 %v4747, %v4749
  %v4751 = vrot.slane %v4729, %v4750
  %v4753 = vunpack.c.l.s4 1966171168
  %v4754 = vunpack.c.0.s8 %v4753
  %v4755 = vlaneseq
  %v4756 = vshrl.u32 %v4755, 7
  %v4757 = vsub.s32 %v4754, %v4756
  %v4758 = vrot.slane %v4730, %v4757
  %v4759 = vcombine.high %v4737, %v4737
  %v4760 = vcombine.high %v4744, %v4744
  %v4761 = vcombine.high %v4751, %v4751
  %v4762 = vcombine.high %v4758, %v4758
  %v4763 = vlaneseq
  %v4764 = vshrl.u32 %v4763, 7
  %v4765 = vsub.s32 0, %v4764
  %v4766 = vrot.slane %v4688, %v4765
  %v4767 = vlaneseq
  %v4768 = vshrl.u32 %v4767, 7
  %v4769 = vsub.s32 0, %v4768
  %v4770 = vrot.slane %v4702, %v4769
  %v4771 = vlaneseq
  %v4772 = vshrl.u32 %v4771, 7
  %v4773 = vsub.s32 0, %v4772
  %v4774 = vrot.slane %v4710, %v4773
  %v4775 = vlaneseq
  %v4776 = vshrl.u32 %v4775, 7
  %v4777 = vsub.s32 0, %v4776
  %v4778 = vrot.slane %v4712, %v4777
  %v4779 = vlaneseq
  %v4780 = vshrl.u32 %v4779, 7
  %v4781 = vsub.s32 0, %v4780
  %v4782 = vrot.slane %v4695, %v4781
  %v4783 = vlaneseq
  %v4784 = vshrl.u32 %v4783, 7
  %v4785 = vsub.s32 0, %v4784
  %v4786 = vrot.slane %v4709, %v4785
  %v4787 = vlaneseq
  %v4788 = vshrl.u32 %v4787, 7
  %v4789 = vsub.s32 0, %v4788
  %v4790 = vrot.slane %v4711, %v4789
  %v4791 = vlaneseq
  %v4792 = vshrl.u32 %v4791, 7
  %v4793 = vsub.s32 0, %v4792
  %v4794 = vrot.slane %v4713, %v4793
  %v4795 = vlaneseq
  %v4796 = vshrl.u32 %v4795, 7
  %v4797 = vsub.s32 0, %v4796
  %v4798 = vrot.slane %v4737, %v4797
  %v4799 = vlaneseq
  %v4800 = vshrl.u32 %v4799, 7
  %v4801 = vsub.s32 0, %v4800
  %v4802 = vrot.slane %v4751, %v4801
  %v4803 = vlaneseq
  %v4804 = vshrl.u32 %v4803, 7
  %v4805 = vsub.s32 0, %v4804
  %v4806 = vrot.slane %v4759, %v4805
  %v4807 = vlaneseq
  %v4808 = vshrl.u32 %v4807, 7
  %v4809 = vsub.s32 0, %v4808
  %v4810 = vrot.slane %v4761, %v4809
  %v4811 = vlaneseq
  %v4812 = vshrl.u32 %v4811, 7
  %v4813 = vsub.s32 0, %v4812
  %v4814 = vrot.slane %v4744, %v4813
  %v4815 = vlaneseq
  %v4816 = vshrl.u32 %v4815, 7
  %v4817 = vsub.s32 0, %v4816
  %v4818 = vrot.slane %v4758, %v4817
  %v4819 = vlaneseq
  %v4820 = vshrl.u32 %v4819, 7
  %v4821 = vsub.s32 0, %v4820
  %v4822 = vrot.slane %v4760, %v4821
  %v4823 = vlaneseq
  %v4824 = vshrl.u32 %v4823, 7
  %v4825 = vsub.s32 0, %v4824
  %v4826 = vrot.slane %v4762, %v4825
  %v4843 = vadd.f32 %v4766, %v2255
  %v4844 = vadd.f32 %v4770, %v2255
  %v4845 = vadd.f32 %v4774, %v2255
  %v4846 = vadd.f32 %v4778, %v2255
  %v4847 = vadd.f32 %v4782, %v2255
  %v4848 = vadd.f32 %v4786, %v2255
  %v4849 = vadd.f32 %v4790, %v2255
  %v4850 = vadd.f32 %v4794, %v2255
  %v4851 = vadd.f32 %v4798, %v2255
  %v4852 = vadd.f32 %v4802, %v2255
  %v4853 = vadd.f32 %v4806, %v2255
  %v4854 = vadd.f32 %v4810, %v2255
  %v4855 = vadd.f32 %v4814, %v2255
  %v4856 = vadd.f32 %v4818, %v2255
  %v4857 = vadd.f32 %v4822, %v2255
  %v4858 = vadd.f32 %v4826, %v2255
  %v4859 = vlaneseq
  %v4860 = vshrl.u32 %v4859, 7
  %v4861 = vsub.s32 0, %v4860
  %v4862 = vrot.slane %v4541, %v4861
  %4864 = vbcast.lane.b32.xlu0 %v4862, 256
  %v4865 = vpop.permute.xlu0 %4864
  %v4866 = vlaneseq
  %v4867 = vshrl.u32 %v4866, 7
  %v4868 = vsub.s32 1, %v4867
  %v4869 = vrot.slane %v4541, %v4868
  %4871 = vbcast.lane.b32.xlu0 %v4869, 256
  %v4872 = vpop.permute.xlu0 %4871
  %v4873 = vlaneseq
  %v4874 = vshrl.u32 %v4873, 7
  %v4875 = vsub.s32 2, %v4874
  %v4876 = vrot.slane %v4541, %v4875
  %4878 = vbcast.lane.b32.xlu0 %v4876, 256
  %v4879 = vpop.permute.xlu0 %4878
  %v4880 = vlaneseq
  %v4881 = vshrl.u32 %v4880, 7
  %v4882 = vsub.s32 3, %v4881
  %v4883 = vrot.slane %v4541, %v4882
  %4885 = vbcast.lane.b32.xlu0 %v4883, 256
  %v4886 = vpop.permute.xlu0 %4885
  %v4887 = vlaneseq
  %v4888 = vshrl.u32 %v4887, 7
  %v4889 = vsub.s32 4, %v4888
  %v4890 = vrot.slane %v4541, %v4889
  %4892 = vbcast.lane.b32.xlu0 %v4890, 256
  %v4893 = vpop.permute.xlu0 %4892
  %v4894 = vlaneseq
  %v4895 = vshrl.u32 %v4894, 7
  %v4896 = vsub.s32 5, %v4895
  %v4897 = vrot.slane %v4541, %v4896
  %4899 = vbcast.lane.b32.xlu0 %v4897, 256
  %v4900 = vpop.permute.xlu0 %4899
  %v4901 = vlaneseq
  %v4902 = vshrl.u32 %v4901, 7
  %v4903 = vsub.s32 6, %v4902
  %v4904 = vrot.slane %v4541, %v4903
  %4906 = vbcast.lane.b32.xlu0 %v4904, 256
  %v4907 = vpop.permute.xlu0 %4906
  %v4908 = vlaneseq
  %v4909 = vshrl.u32 %v4908, 7
  %v4910 = vsub.s32 7, %v4909
  %v4911 = vrot.slane %v4541, %v4910
  %4913 = vbcast.lane.b32.xlu0 %v4911, 256
  %v4914 = vpop.permute.xlu0 %4913
  %v4915 = vlaneseq
  %v4916 = vshrl.u32 %v4915, 7
  %v4917 = vsub.s32 0, %v4916
  %v4918 = vrot.slane %v4542, %v4917
  %4920 = vbcast.lane.b32.xlu0 %v4918, 256
  %v4921 = vpop.permute.xlu0 %4920
  %v4922 = vlaneseq
  %v4923 = vshrl.u32 %v4922, 7
  %v4924 = vsub.s32 1, %v4923
  %v4925 = vrot.slane %v4542, %v4924
  %4927 = vbcast.lane.b32.xlu0 %v4925, 256
  %v4928 = vpop.permute.xlu0 %4927
  %v4929 = vlaneseq
  %v4930 = vshrl.u32 %v4929, 7
  %v4931 = vsub.s32 2, %v4930
  %v4932 = vrot.slane %v4542, %v4931
  %4934 = vbcast.lane.b32.xlu0 %v4932, 256
  %v4935 = vpop.permute.xlu0 %4934
  %v4936 = vlaneseq
  %v4937 = vshrl.u32 %v4936, 7
  %v4938 = vsub.s32 3, %v4937
  %v4939 = vrot.slane %v4542, %v4938
  %4941 = vbcast.lane.b32.xlu0 %v4939, 256
  %v4942 = vpop.permute.xlu0 %4941
  %v4943 = vlaneseq
  %v4944 = vshrl.u32 %v4943, 7
  %v4945 = vsub.s32 4, %v4944
  %v4946 = vrot.slane %v4542, %v4945
  %4948 = vbcast.lane.b32.xlu0 %v4946, 256
  %v4949 = vpop.permute.xlu0 %4948
  %v4950 = vlaneseq
  %v4951 = vshrl.u32 %v4950, 7
  %v4952 = vsub.s32 5, %v4951
  %v4953 = vrot.slane %v4542, %v4952
  %4955 = vbcast.lane.b32.xlu0 %v4953, 256
  %v4956 = vpop.permute.xlu0 %4955
  %v4957 = vlaneseq
  %v4958 = vshrl.u32 %v4957, 7
  %v4959 = vsub.s32 6, %v4958
  %v4960 = vrot.slane %v4542, %v4959
  %4962 = vbcast.lane.b32.xlu0 %v4960, 256
  %v4963 = vpop.permute.xlu0 %4962
  %v4964 = vlaneseq
  %v4965 = vshrl.u32 %v4964, 7
  %v4966 = vsub.s32 7, %v4965
  %v4967 = vrot.slane %v4542, %v4966
  %4969 = vbcast.lane.b32.xlu0 %v4967, 256
  %v4970 = vpop.permute.xlu0 %4969
  %v4971 = vadd.f32 %v4843, %v4865
  %v4972 = vadd.f32 %v4844, %v4872
  %v4973 = vadd.f32 %v4845, %v4879
  %v4974 = vadd.f32 %v4846, %v4886
  %v4975 = vadd.f32 %v4847, %v4893
  %v4976 = vadd.f32 %v4848, %v4900
  %v4977 = vadd.f32 %v4849, %v4907
  %v4978 = vadd.f32 %v4850, %v4914
  %v4979 = vadd.f32 %v4851, %v4921
  %v4980 = vadd.f32 %v4852, %v4928
  %v4981 = vadd.f32 %v4853, %v4935
  %v4982 = vadd.f32 %v4854, %v4942
  %v4983 = vadd.f32 %v4855, %v4949
  %v4984 = vadd.f32 %v4856, %v4956
  %v4985 = vadd.f32 %v4857, %v4963
  %v4986 = vadd.f32 %v4858, %v4970
  %v4987 = vsel %vm2237, %v4971, -inf
  %4988 = vmax.xlane.f32.xlu0 %v4987
  %v4989 = vpop.xlane.xlu0 %4988
  %v4990 = vsel %vm2237, %v4972, -inf
  %4991 = vmax.xlane.f32.xlu0 %v4990
  %v4992 = vpop.xlane.xlu0 %4991
  %v4993 = vsel %vm2237, %v4973, -inf
  %4994 = vmax.xlane.f32.xlu0 %v4993
  %v4995 = vpop.xlane.xlu0 %4994
  %v4996 = vsel %vm2237, %v4974, -inf
  %4997 = vmax.xlane.f32.xlu0 %v4996
  %v4998 = vpop.xlane.xlu0 %4997
  %v4999 = vsel %vm2237, %v4975, -inf
  %5000 = vmax.xlane.f32.xlu0 %v4999
  %v5001 = vpop.xlane.xlu0 %5000
  %v5002 = vsel %vm2237, %v4976, -inf
  %5003 = vmax.xlane.f32.xlu0 %v5002
  %v5004 = vpop.xlane.xlu0 %5003
  %v5005 = vsel %vm2237, %v4977, -inf
  %5006 = vmax.xlane.f32.xlu0 %v5005
  %v5007 = vpop.xlane.xlu0 %5006
  %v5008 = vsel %vm2237, %v4978, -inf
  %5009 = vmax.xlane.f32.xlu0 %v5008
  %v5010 = vpop.xlane.xlu0 %5009
  %v5011 = vsel %vm2237, %v4979, -inf
  %5012 = vmax.xlane.f32.xlu0 %v5011
  %v5013 = vpop.xlane.xlu0 %5012
  %v5014 = vsel %vm2237, %v4980, -inf
  %5015 = vmax.xlane.f32.xlu0 %v5014
  %v5016 = vpop.xlane.xlu0 %5015
  %v5017 = vsel %vm2237, %v4981, -inf
  %5018 = vmax.xlane.f32.xlu0 %v5017
  %v5019 = vpop.xlane.xlu0 %5018
  %v5020 = vsel %vm2237, %v4982, -inf
  %5021 = vmax.xlane.f32.xlu0 %v5020
  %v5022 = vpop.xlane.xlu0 %5021
  %v5023 = vsel %vm2237, %v4983, -inf
  %5024 = vmax.xlane.f32.xlu0 %v5023
  %v5025 = vpop.xlane.xlu0 %5024
  %v5026 = vsel %vm2237, %v4984, -inf
  %5027 = vmax.xlane.f32.xlu0 %v5026
  %v5028 = vpop.xlane.xlu0 %5027
  %v5029 = vsel %vm2237, %v4985, -inf
  %5030 = vmax.xlane.f32.xlu0 %v5029
  %v5031 = vpop.xlane.xlu0 %5030
  %v5032 = vsel %vm2237, %v4986, -inf
  %5033 = vmax.xlane.f32.xlu0 %v5032
  %v5034 = vpop.xlane.xlu0 %5033
  %v5035 = vsub.f32 %v4971, %v4989
  %v5036 = vsub.f32 %v4972, %v4992
  %v5037 = vsub.f32 %v4973, %v4995
  %v5038 = vsub.f32 %v4974, %v4998
  %v5039 = vsub.f32 %v4975, %v5001
  %v5040 = vsub.f32 %v4976, %v5004
  %v5041 = vsub.f32 %v4977, %v5007
  %v5042 = vsub.f32 %v4978, %v5010
  %v5043 = vsub.f32 %v4979, %v5013
  %v5044 = vsub.f32 %v4980, %v5016
  %v5045 = vsub.f32 %v4981, %v5019
  %v5046 = vsub.f32 %v4982, %v5022
  %v5047 = vsub.f32 %v4983, %v5025
  %v5048 = vsub.f32 %v4984, %v5028
  %v5049 = vsub.f32 %v4985, %v5031
  %v5050 = vsub.f32 %v4986, %v5034
  %v5051 = vmul.f32 %v5035, 1.442695
  %v5052 = vpow.pop %v5051
  %v5053 = vmul.f32 %v5036, 1.442695
  %v5054 = vpow.pop %v5053
  %v5055 = vmul.f32 %v5037, 1.442695
  %v5056 = vpow.pop %v5055
  %v5057 = vmul.f32 %v5038, 1.442695
  %v5058 = vpow.pop %v5057
  %v5059 = vmul.f32 %v5039, 1.442695
  %v5060 = vpow.pop %v5059
  %v5061 = vmul.f32 %v5040, 1.442695
  %v5062 = vpow.pop %v5061
  %v5063 = vmul.f32 %v5041, 1.442695
  %v5064 = vpow.pop %v5063
  %v5065 = vmul.f32 %v5042, 1.442695
  %v5066 = vpow.pop %v5065
  %v5067 = vmul.f32 %v5043, 1.442695
  %v5068 = vpow.pop %v5067
  %v5069 = vmul.f32 %v5044, 1.442695
  %v5070 = vpow.pop %v5069
  %v5071 = vmul.f32 %v5045, 1.442695
  %v5072 = vpow.pop %v5071
  %v5073 = vmul.f32 %v5046, 1.442695
  %v5074 = vpow.pop %v5073
  %v5075 = vmul.f32 %v5047, 1.442695
  %v5076 = vpow.pop %v5075
  %v5077 = vmul.f32 %v5048, 1.442695
  %v5078 = vpow.pop %v5077
  %v5079 = vmul.f32 %v5049, 1.442695
  %v5080 = vpow.pop %v5079
  %v5081 = vmul.f32 %v5050, 1.442695
  %v5082 = vpow.pop %v5081
  %v5083 = vsel %vm2237, %v5052, 0.0
  %5084 = vadd.xlane.f32.xlu0 %v5083
  %v5085 = vpop.xlane.xlu0 %5084
  %v5086 = vsel %vm2237, %v5054, 0.0
  %5087 = vadd.xlane.f32.xlu0 %v5086
  %v5088 = vpop.xlane.xlu0 %5087
  %v5089 = vsel %vm2237, %v5056, 0.0
  %5090 = vadd.xlane.f32.xlu0 %v5089
  %v5091 = vpop.xlane.xlu0 %5090
  %v5092 = vsel %vm2237, %v5058, 0.0
  %5093 = vadd.xlane.f32.xlu0 %v5092
  %v5094 = vpop.xlane.xlu0 %5093
  %v5095 = vsel %vm2237, %v5060, 0.0
  %5096 = vadd.xlane.f32.xlu0 %v5095
  %v5097 = vpop.xlane.xlu0 %5096
  %v5098 = vsel %vm2237, %v5062, 0.0
  %5099 = vadd.xlane.f32.xlu0 %v5098
  %v5100 = vpop.xlane.xlu0 %5099
  %v5101 = vsel %vm2237, %v5064, 0.0
  %5102 = vadd.xlane.f32.xlu0 %v5101
  %v5103 = vpop.xlane.xlu0 %5102
  %v5104 = vsel %vm2237, %v5066, 0.0
  %5105 = vadd.xlane.f32.xlu0 %v5104
  %v5106 = vpop.xlane.xlu0 %5105
  %v5107 = vsel %vm2237, %v5068, 0.0
  %5108 = vadd.xlane.f32.xlu0 %v5107
  %v5109 = vpop.xlane.xlu0 %5108
  %v5110 = vsel %vm2237, %v5070, 0.0
  %5111 = vadd.xlane.f32.xlu0 %v5110
  %v5112 = vpop.xlane.xlu0 %5111
  %v5113 = vsel %vm2237, %v5072, 0.0
  %5114 = vadd.xlane.f32.xlu0 %v5113
  %v5115 = vpop.xlane.xlu0 %5114
  %v5116 = vsel %vm2237, %v5074, 0.0
  %5117 = vadd.xlane.f32.xlu0 %v5116
  %v5118 = vpop.xlane.xlu0 %5117
  %v5119 = vsel %vm2237, %v5076, 0.0
  %5120 = vadd.xlane.f32.xlu0 %v5119
  %v5121 = vpop.xlane.xlu0 %5120
  %v5122 = vsel %vm2237, %v5078, 0.0
  %5123 = vadd.xlane.f32.xlu0 %v5122
  %v5124 = vpop.xlane.xlu0 %5123
  %v5125 = vsel %vm2237, %v5080, 0.0
  %5126 = vadd.xlane.f32.xlu0 %v5125
  %v5127 = vpop.xlane.xlu0 %5126
  %v5128 = vsel %vm2237, %v5082, 0.0
  %5129 = vadd.xlane.f32.xlu0 %v5128
  %v5130 = vpop.xlane.xlu0 %5129
  %v5131 = vlog2.pop %v5085
  %v5132 = vmul.f32 %v5131, 0.6931472
  %v5133 = vlog2.pop %v5088
  %v5134 = vmul.f32 %v5133, 0.6931472
  %v5135 = vlog2.pop %v5091
  %v5136 = vmul.f32 %v5135, 0.6931472
  %v5137 = vlog2.pop %v5094
  %v5138 = vmul.f32 %v5137, 0.6931472
  %v5139 = vlog2.pop %v5097
  %v5140 = vmul.f32 %v5139, 0.6931472
  %v5141 = vlog2.pop %v5100
  %v5142 = vmul.f32 %v5141, 0.6931472
  %v5143 = vlog2.pop %v5103
  %v5144 = vmul.f32 %v5143, 0.6931472
  %v5145 = vlog2.pop %v5106
  %v5146 = vmul.f32 %v5145, 0.6931472
  %v5147 = vlog2.pop %v5109
  %v5148 = vmul.f32 %v5147, 0.6931472
  %v5149 = vlog2.pop %v5112
  %v5150 = vmul.f32 %v5149, 0.6931472
  %v5151 = vlog2.pop %v5115
  %v5152 = vmul.f32 %v5151, 0.6931472
  %v5153 = vlog2.pop %v5118
  %v5154 = vmul.f32 %v5153, 0.6931472
  %v5155 = vlog2.pop %v5121
  %v5156 = vmul.f32 %v5155, 0.6931472
  %v5157 = vlog2.pop %v5124
  %v5158 = vmul.f32 %v5157, 0.6931472
  %v5159 = vlog2.pop %v5127
  %v5160 = vmul.f32 %v5159, 0.6931472
  %v5161 = vlog2.pop %v5130
  %v5162 = vmul.f32 %v5161, 0.6931472
  %v5163 = vadd.f32 %v4989, %v5132
  %v5164 = vadd.f32 %v4992, %v5134
  %v5165 = vadd.f32 %v4995, %v5136
  %v5166 = vadd.f32 %v4998, %v5138
  %v5167 = vadd.f32 %v5001, %v5140
  %v5168 = vadd.f32 %v5004, %v5142
  %v5169 = vadd.f32 %v5007, %v5144
  %v5170 = vadd.f32 %v5010, %v5146
  %v5171 = vadd.f32 %v5013, %v5148
  %v5172 = vadd.f32 %v5016, %v5150
  %v5173 = vadd.f32 %v5019, %v5152
  %v5174 = vadd.f32 %v5022, %v5154
  %v5175 = vadd.f32 %v5025, %v5156
  %v5176 = vadd.f32 %v5028, %v5158
  %v5177 = vadd.f32 %v5031, %v5160
  %v5178 = vadd.f32 %v5034, %v5162
  %vm5179 = vcmp.gt.f32.partialorder %v4543, 0.5
  %vm5180 = vcmp.gt.f32.partialorder %v4544, 0.5
  %v5181 = vsel %vm5179, 1, 0
  %v5182 = vsel %vm5180, 1, 0
  %5183 = vset.pattern.permute.xlu0 0
  %5184 = vperm.xlu0 %5183, %v5181
  %v5185 = vpop.permute.xlu0 %5184
  %5186 = vset.pattern.permute.xlu0 0
  %5187 = vperm.xlu0 %5186, %v5182
  %v5188 = vpop.permute.xlu0 %5187
  %vm5189 = vcmp.eq.s32.totalorder %v5185, 1
  %vm5190 = vcmp.eq.s32.totalorder %v5188, 1
  %v5207 = vlaneseq
  %v5208 = vshrl.u32 %v5207, 7
  %v5209 = vsub.s32 %v2257, %v5208
  %v5210 = vrot.slane %v5163, %v5209
  %v5211 = vlaneseq
  %v5212 = vshrl.u32 %v5211, 7
  %v5213 = vsub.s32 %v2257, %v5212
  %v5214 = vrot.slane %v5164, %v5213
  %v5215 = vlaneseq
  %v5216 = vshrl.u32 %v5215, 7
  %v5217 = vsub.s32 %v2257, %v5216
  %v5218 = vrot.slane %v5165, %v5217
  %v5219 = vlaneseq
  %v5220 = vshrl.u32 %v5219, 7
  %v5221 = vsub.s32 %v2257, %v5220
  %v5222 = vrot.slane %v5166, %v5221
  %v5223 = vlaneseq
  %v5224 = vshrl.u32 %v5223, 7
  %v5225 = vsub.s32 %v2257, %v5224
  %v5226 = vrot.slane %v5167, %v5225
  %v5227 = vlaneseq
  %v5228 = vshrl.u32 %v5227, 7
  %v5229 = vsub.s32 %v2257, %v5228
  %v5230 = vrot.slane %v5168, %v5229
  %v5231 = vlaneseq
  %v5232 = vshrl.u32 %v5231, 7
  %v5233 = vsub.s32 %v2257, %v5232
  %v5234 = vrot.slane %v5169, %v5233
  %v5235 = vlaneseq
  %v5236 = vshrl.u32 %v5235, 7
  %v5237 = vsub.s32 %v2257, %v5236
  %v5238 = vrot.slane %v5170, %v5237
  %v5239 = vlaneseq
  %v5240 = vshrl.u32 %v5239, 7
  %v5241 = vsub.s32 %v2257, %v5240
  %v5242 = vrot.slane %v5171, %v5241
  %v5243 = vlaneseq
  %v5244 = vshrl.u32 %v5243, 7
  %v5245 = vsub.s32 %v2257, %v5244
  %v5246 = vrot.slane %v5172, %v5245
  %v5247 = vlaneseq
  %v5248 = vshrl.u32 %v5247, 7
  %v5249 = vsub.s32 %v2257, %v5248
  %v5250 = vrot.slane %v5173, %v5249
  %v5251 = vlaneseq
  %v5252 = vshrl.u32 %v5251, 7
  %v5253 = vsub.s32 %v2257, %v5252
  %v5254 = vrot.slane %v5174, %v5253
  %v5255 = vlaneseq
  %v5256 = vshrl.u32 %v5255, 7
  %v5257 = vsub.s32 %v2257, %v5256
  %v5258 = vrot.slane %v5175, %v5257
  %v5259 = vlaneseq
  %v5260 = vshrl.u32 %v5259, 7
  %v5261 = vsub.s32 %v2257, %v5260
  %v5262 = vrot.slane %v5176, %v5261
  %v5263 = vlaneseq
  %v5264 = vshrl.u32 %v5263, 7
  %v5265 = vsub.s32 %v2257, %v5264
  %v5266 = vrot.slane %v5177, %v5265
  %v5267 = vlaneseq
  %v5268 = vshrl.u32 %v5267, 7
  %v5269 = vsub.s32 %v2257, %v5268
  %v5270 = vrot.slane %v5178, %v5269
  %v5271 = vsel %vm3017, %v5214, %v5210
  %v5272 = vsel %vm3019, %v5218, %v5271
  %v5273 = vsel %vm3021, %v5222, %v5272
  %v5274 = vsel %vm3023, %v5226, %v5273
  %v5275 = vsel %vm3025, %v5230, %v5274
  %v5276 = vsel %vm3027, %v5234, %v5275
  %v5277 = vsel %vm3029, %v5238, %v5276
  %v5278 = vsel %vm3017, %v5246, %v5242
  %v5279 = vsel %vm3019, %v5250, %v5278
  %v5280 = vsel %vm3021, %v5254, %v5279
  %v5281 = vsel %vm3023, %v5258, %v5280
  %v5282 = vsel %vm3025, %v5262, %v5281
  %v5283 = vsel %vm3027, %v5266, %v5282
  %v5284 = vsel %vm3029, %v5270, %v5283
  %v5287 = vsel %vm5189, %v5277, %v4538
  %v5288 = vsel %vm5190, %v5284, %v4539
  %s5289 = scalar_lea.vmem [#allocation4], 80
  %v5290 = vld [vmem:[%s5289] sm:$0xff]
  %v5291 = vld [vmem:[%s5289 + $0x8] sm:$0xff]
  %v5292 = vld [vmem:[%s773] sm:$0xff]
  %v5293 = vld [vmem:[%s773 + $0x8] sm:$0xff]
  %s5294 = scalar_lea.vmem %s2, 80
  %v5295 = vld [vmem:[%s5294] sm:$0xff]
  %v5296 = vld [vmem:[%s5294 + $0x8] sm:$0xff]
  %5297 = vset.pattern.permute.xlu0 0
  %5298 = vperm.xlu0 %5297, %v5295
  %v5299 = vpop.permute.xlu0 %5298
  %5300 = vset.pattern.permute.xlu0 0
  %5301 = vperm.xlu0 %5300, %v5296
  %v5302 = vpop.permute.xlu0 %5301
  %vm5303 = vcmp.eq.s32.totalorder %v5299, %v2257
  %vm5304 = vcmp.eq.s32.totalorder %v5302, %v2257
  %v5305 = vsel %vm5303, 1, 0
  %v5306 = vsel %vm5304, 1, 0
  %v5307 = vcvt.s32.f32 %v5305
  %v5308 = vcvt.s32.f32 %v5306
  %v5309 = vmul.f32 %v5290, %v5307
  %v5310 = vmul.f32 %v5291, %v5308
  %v5311 = vsel %vm2237, %v5309, 0.0
  %5312 = vadd.xlane.f32.xlu0 %v5311
  %v5313 = vpop.xlane.xlu0 %5312
  %v5314 = vsel %vm2237, %v5310, 0.0
  %5315 = vadd.xlane.f32.xlu0 %v5314
  %v5316 = vpop.xlane.xlu0 %5315
  %v5318 = vsel %vm2237, %v4558, 0
  %v5321 = vsel %vm2237, %v4559, 0
  %5323 = vmatprep.subr.mxu0 0.0
  %5324 = vmatpush1.msra.mxu0 %v2254
  %5325 = vmatprep.subr.mxu0 0.0
  %5326 = vmatpush1.msra.mxu0 0.0
  %5327 = vmatprep.subr.mxu0 0.0
  %5328 = vmatpush1.msra.mxu0 0.0
  %5329 = vmatprep.subr.mxu0 0.0
  %5330 = vmatpush1.msra.mxu0 0.0
  %5331 = vmatprep.subr.mxu0 0.0
  %5332 = vmatpush1.msra.mxu0 0.0
  %5333 = vmatprep.subr.mxu0 0.0
  %5334 = vmatpush1.msra.mxu0 0.0
  %5335 = vmatprep.subr.mxu0 0.0
  %5336 = vmatpush1.msra.mxu0 0.0
  %5337 = vmatprep.subr.mxu0 0.0
  %5338 = vmatpush1.msra.mxu0 0.0
  %5339 = vmatprep.subr.mxu0 0.0
  %5340 = vmatpush1.msra.mxu0 0.0
  %5341 = vmatprep.subr.mxu0 0.0
  %5342 = vmatpush1.msra.mxu0 0.0
  %5343 = vmatprep.subr.mxu0 0.0
  %5344 = vmatpush1.msra.mxu0 0.0
  %5345 = vmatprep.subr.mxu0 0.0
  %5346 = vmatpush1.msra.mxu0 0.0
  %5347 = vmatprep.subr.mxu0 0.0
  %5348 = vmatpush1.msra.mxu0 0.0
  %5349 = vmatprep.subr.mxu0 0.0
  %5350 = vmatpush1.msra.mxu0 0.0
  %5351 = vmatprep.subr.mxu0 0.0
  %5352 = vmatpush1.msra.mxu0 0.0
  %5353 = vmatprep.subr.mxu0 0.0
  %5354 = vmatpush1.msra.mxu0 0.0
  %5355 = vmatprep.subr.mxu0 0.0
  %5356 = vmatpush1.msra.mxu0 0.0
  %5357 = vmatprep.subr.mxu0 0.0
  %5358 = vmatpush1.msra.mxu0 0.0
  %5359 = vmatprep.subr.mxu0 0.0
  %5360 = vmatpush1.msra.mxu0 0.0
  %5361 = vmatprep.subr.mxu0 0.0
  %5362 = vmatpush1.msra.mxu0 0.0
  %5363 = vmatprep.subr.mxu0 0.0
  %5364 = vmatpush1.msra.mxu0 0.0
  %5365 = vmatprep.subr.mxu0 0.0
  %5366 = vmatpush1.msra.mxu0 0.0
  %5367 = vmatprep.subr.mxu0 0.0
  %5368 = vmatpush1.msra.mxu0 0.0
  %5369 = vmatprep.subr.mxu0 0.0
  %5370 = vmatpush1.msra.mxu0 0.0
  %5371 = vmatprep.subr.mxu0 0.0
  %5372 = vmatpush1.msra.mxu0 0.0
  %5373 = vmatprep.subr.mxu0 0.0
  %5374 = vmatpush1.msra.mxu0 0.0
  %5375 = vmatprep.subr.mxu0 0.0
  %5376 = vmatpush1.msra.mxu0 0.0
  %5377 = vmatprep.subr.mxu0 0.0
  %5378 = vmatpush1.msra.mxu0 0.0
  %5379 = vmatprep.subr.mxu0 0.0
  %5380 = vmatpush1.msra.mxu0 0.0
  %5381 = vmatprep.subr.mxu0 0.0
  %5382 = vmatpush1.msra.mxu0 0.0
  %5383 = vmatprep.subr.mxu0 0.0
  %5384 = vmatpush1.msra.mxu0 0.0
  %5385 = vmatprep.subr.mxu0 0.0
  %5386 = vmatpush1.msra.mxu0 0.0
  %5387 = vmatprep.mubr.f32.mxu0 0.0
  %5388 = vmatmul.mubr.f32.gmra.mrb[0].mxu0 %v5318
  %v5389 = vpop.f32.mrb[0].mxu0
  %v5390 = vadd.f32 0.0, %v5389
  %v5391 = vpop.f32.mrb[0].mxu0
  %5392 = vmatprep.mubr.f32.mxu0 0.0
  %5393 = vmatmul.mubr.f32.gmra.mrb[0].mxu0 %v5321
  %v5394 = vpop.f32.mrb[0].mxu0
  %v5395 = vadd.f32 0.0, %v5394
  %v5396 = vpop.f32.mrb[0].mxu0
  %5397 = vdwg.mxu0
  %v5398 = vmul.f32 %v5390, %v5307
  %v5399 = vmul.f32 %v5395, %v5308
  %v5400 = vsel %vm2237, %v5398, 0.0
  %5401 = vadd.xlane.f32.xlu0 %v5400
  %v5402 = vpop.xlane.xlu0 %5401
  %v5403 = vsel %vm2237, %v5399, 0.0
  %5404 = vadd.xlane.f32.xlu0 %v5403
  %v5405 = vpop.xlane.xlu0 %5404
  %v5406 = vadd.f32 %v5313, %v5402
  %v5407 = vadd.f32 %v5316, %v5405
  %v5408 = vmul.f32 %v5406, %v5292
  %v5409 = vmul.f32 %v5407, %v5293
  %v5410 = vadd.f32 %v4661, %v5408
  %v5411 = vadd.f32 %v4662, %v5409
  %v5414 = vcombine.high %v5287, %v5287
  %v5416 = vunpack.c.l.s4 1966171168
  %v5417 = vunpack.c.0.s8 %v5416
  %v5418 = vlaneseq
  %v5419 = vshrl.u32 %v5418, 7
  %v5420 = vsub.s32 %v5417, %v5419
  %v5421 = vrot.slane %v5287, %v5420
  %v5423 = vunpack.c.l.s4 1966171168
  %v5424 = vunpack.c.0.s8 %v5423
  %v5425 = vlaneseq
  %v5426 = vshrl.u32 %v5425, 7
  %v5427 = vsub.s32 %v5424, %v5426
  %v5428 = vrot.slane %v5414, %v5427
  %v5429 = vcombine.high %v5421, %v5421
  %v5430 = vcombine.high %v5428, %v5428
  %v5432 = vunpack.c.l.s4 1966171168
  %v5433 = vunpack.c.0.s8 %v5432
  %v5434 = vlaneseq
  %v5435 = vshrl.u32 %v5434, 7
  %v5436 = vsub.s32 %v5433, %v5435
  %v5437 = vrot.slane %v5421, %v5436
  %v5439 = vunpack.c.l.s4 1966171168
  %v5440 = vunpack.c.0.s8 %v5439
  %v5441 = vlaneseq
  %v5442 = vshrl.u32 %v5441, 7
  %v5443 = vsub.s32 %v5440, %v5442
  %v5444 = vrot.slane %v5428, %v5443
  %v5446 = vunpack.c.l.s4 1966171168
  %v5447 = vunpack.c.0.s8 %v5446
  %v5448 = vlaneseq
  %v5449 = vshrl.u32 %v5448, 7
  %v5450 = vsub.s32 %v5447, %v5449
  %v5451 = vrot.slane %v5429, %v5450
  %v5453 = vunpack.c.l.s4 1966171168
  %v5454 = vunpack.c.0.s8 %v5453
  %v5455 = vlaneseq
  %v5456 = vshrl.u32 %v5455, 7
  %v5457 = vsub.s32 %v5454, %v5456
  %v5458 = vrot.slane %v5430, %v5457
  %v5459 = vcombine.high %v5437, %v5437
  %v5460 = vcombine.high %v5444, %v5444
  %v5461 = vcombine.high %v5451, %v5451
  %v5462 = vcombine.high %v5458, %v5458
  %v5463 = vcombine.high %v5288, %v5288
  %v5465 = vunpack.c.l.s4 1966171168
  %v5466 = vunpack.c.0.s8 %v5465
  %v5467 = vlaneseq
  %v5468 = vshrl.u32 %v5467, 7
  %v5469 = vsub.s32 %v5466, %v5468
  %v5470 = vrot.slane %v5288, %v5469
  %v5472 = vunpack.c.l.s4 1966171168
  %v5473 = vunpack.c.0.s8 %v5472
  %v5474 = vlaneseq
  %v5475 = vshrl.u32 %v5474, 7
  %v5476 = vsub.s32 %v5473, %v5475
  %v5477 = vrot.slane %v5463, %v5476
  %v5478 = vcombine.high %v5470, %v5470
  %v5479 = vcombine.high %v5477, %v5477
  %v5481 = vunpack.c.l.s4 1966171168
  %v5482 = vunpack.c.0.s8 %v5481
  %v5483 = vlaneseq
  %v5484 = vshrl.u32 %v5483, 7
  %v5485 = vsub.s32 %v5482, %v5484
  %v5486 = vrot.slane %v5470, %v5485
  %v5488 = vunpack.c.l.s4 1966171168
  %v5489 = vunpack.c.0.s8 %v5488
  %v5490 = vlaneseq
  %v5491 = vshrl.u32 %v5490, 7
  %v5492 = vsub.s32 %v5489, %v5491
  %v5493 = vrot.slane %v5477, %v5492
  %v5495 = vunpack.c.l.s4 1966171168
  %v5496 = vunpack.c.0.s8 %v5495
  %v5497 = vlaneseq
  %v5498 = vshrl.u32 %v5497, 7
  %v5499 = vsub.s32 %v5496, %v5498
  %v5500 = vrot.slane %v5478, %v5499
  %v5502 = vunpack.c.l.s4 1966171168
  %v5503 = vunpack.c.0.s8 %v5502
  %v5504 = vlaneseq
  %v5505 = vshrl.u32 %v5504, 7
  %v5506 = vsub.s32 %v5503, %v5505
  %v5507 = vrot.slane %v5479, %v5506
  %v5508 = vcombine.high %v5486, %v5486
  %v5509 = vcombine.high %v5493, %v5493
  %v5510 = vcombine.high %v5500, %v5500
  %v5511 = vcombine.high %v5507, %v5507
  %v5512 = vlaneseq
  %v5513 = vshrl.u32 %v5512, 7
  %v5514 = vsub.s32 0, %v5513
  %v5515 = vrot.slane %v5437, %v5514
  %v5516 = vlaneseq
  %v5517 = vshrl.u32 %v5516, 7
  %v5518 = vsub.s32 0, %v5517
  %v5519 = vrot.slane %v5451, %v5518
  %v5520 = vlaneseq
  %v5521 = vshrl.u32 %v5520, 7
  %v5522 = vsub.s32 0, %v5521
  %v5523 = vrot.slane %v5459, %v5522
  %v5524 = vlaneseq
  %v5525 = vshrl.u32 %v5524, 7
  %v5526 = vsub.s32 0, %v5525
  %v5527 = vrot.slane %v5461, %v5526
  %v5528 = vlaneseq
  %v5529 = vshrl.u32 %v5528, 7
  %v5530 = vsub.s32 0, %v5529
  %v5531 = vrot.slane %v5444, %v5530
  %v5532 = vlaneseq
  %v5533 = vshrl.u32 %v5532, 7
  %v5534 = vsub.s32 0, %v5533
  %v5535 = vrot.slane %v5458, %v5534
  %v5536 = vlaneseq
  %v5537 = vshrl.u32 %v5536, 7
  %v5538 = vsub.s32 0, %v5537
  %v5539 = vrot.slane %v5460, %v5538
  %v5540 = vlaneseq
  %v5541 = vshrl.u32 %v5540, 7
  %v5542 = vsub.s32 0, %v5541
  %v5543 = vrot.slane %v5462, %v5542
  %v5544 = vlaneseq
  %v5545 = vshrl.u32 %v5544, 7
  %v5546 = vsub.s32 0, %v5545
  %v5547 = vrot.slane %v5486, %v5546
  %v5548 = vlaneseq
  %v5549 = vshrl.u32 %v5548, 7
  %v5550 = vsub.s32 0, %v5549
  %v5551 = vrot.slane %v5500, %v5550
  %v5552 = vlaneseq
  %v5553 = vshrl.u32 %v5552, 7
  %v5554 = vsub.s32 0, %v5553
  %v5555 = vrot.slane %v5508, %v5554
  %v5556 = vlaneseq
  %v5557 = vshrl.u32 %v5556, 7
  %v5558 = vsub.s32 0, %v5557
  %v5559 = vrot.slane %v5510, %v5558
  %v5560 = vlaneseq
  %v5561 = vshrl.u32 %v5560, 7
  %v5562 = vsub.s32 0, %v5561
  %v5563 = vrot.slane %v5493, %v5562
  %v5564 = vlaneseq
  %v5565 = vshrl.u32 %v5564, 7
  %v5566 = vsub.s32 0, %v5565
  %v5567 = vrot.slane %v5507, %v5566
  %v5568 = vlaneseq
  %v5569 = vshrl.u32 %v5568, 7
  %v5570 = vsub.s32 0, %v5569
  %v5571 = vrot.slane %v5509, %v5570
  %v5572 = vlaneseq
  %v5573 = vshrl.u32 %v5572, 7
  %v5574 = vsub.s32 0, %v5573
  %v5575 = vrot.slane %v5511, %v5574
  %v5592 = vadd.f32 %v5515, %v2255
  %v5593 = vadd.f32 %v5519, %v2255
  %v5594 = vadd.f32 %v5523, %v2255
  %v5595 = vadd.f32 %v5527, %v2255
  %v5596 = vadd.f32 %v5531, %v2255
  %v5597 = vadd.f32 %v5535, %v2255
  %v5598 = vadd.f32 %v5539, %v2255
  %v5599 = vadd.f32 %v5543, %v2255
  %v5600 = vadd.f32 %v5547, %v2255
  %v5601 = vadd.f32 %v5551, %v2255
  %v5602 = vadd.f32 %v5555, %v2255
  %v5603 = vadd.f32 %v5559, %v2255
  %v5604 = vadd.f32 %v5563, %v2255
  %v5605 = vadd.f32 %v5567, %v2255
  %v5606 = vadd.f32 %v5571, %v2255
  %v5607 = vadd.f32 %v5575, %v2255
  %v5608 = vlaneseq
  %v5609 = vshrl.u32 %v5608, 7
  %v5610 = vsub.s32 0, %v5609
  %v5611 = vrot.slane %v5290, %v5610
  %5613 = vbcast.lane.b32.xlu0 %v5611, 256
  %v5614 = vpop.permute.xlu0 %5613
  %v5615 = vlaneseq
  %v5616 = vshrl.u32 %v5615, 7
  %v5617 = vsub.s32 1, %v5616
  %v5618 = vrot.slane %v5290, %v5617
  %5620 = vbcast.lane.b32.xlu0 %v5618, 256
  %v5621 = vpop.permute.xlu0 %5620
  %v5622 = vlaneseq
  %v5623 = vshrl.u32 %v5622, 7
  %v5624 = vsub.s32 2, %v5623
  %v5625 = vrot.slane %v5290, %v5624
  %5627 = vbcast.lane.b32.xlu0 %v5625, 256
  %v5628 = vpop.permute.xlu0 %5627
  %v5629 = vlaneseq
  %v5630 = vshrl.u32 %v5629, 7
  %v5631 = vsub.s32 3, %v5630
  %v5632 = vrot.slane %v5290, %v5631
  %5634 = vbcast.lane.b32.xlu0 %v5632, 256
  %v5635 = vpop.permute.xlu0 %5634
  %v5636 = vlaneseq
  %v5637 = vshrl.u32 %v5636, 7
  %v5638 = vsub.s32 4, %v5637
  %v5639 = vrot.slane %v5290, %v5638
  %5641 = vbcast.lane.b32.xlu0 %v5639, 256
  %v5642 = vpop.permute.xlu0 %5641
  %v5643 = vlaneseq
  %v5644 = vshrl.u32 %v5643, 7
  %v5645 = vsub.s32 5, %v5644
  %v5646 = vrot.slane %v5290, %v5645
  %5648 = vbcast.lane.b32.xlu0 %v5646, 256
  %v5649 = vpop.permute.xlu0 %5648
  %v5650 = vlaneseq
  %v5651 = vshrl.u32 %v5650, 7
  %v5652 = vsub.s32 6, %v5651
  %v5653 = vrot.slane %v5290, %v5652
  %5655 = vbcast.lane.b32.xlu0 %v5653, 256
  %v5656 = vpop.permute.xlu0 %5655
  %v5657 = vlaneseq
  %v5658 = vshrl.u32 %v5657, 7
  %v5659 = vsub.s32 7, %v5658
  %v5660 = vrot.slane %v5290, %v5659
  %5662 = vbcast.lane.b32.xlu0 %v5660, 256
  %v5663 = vpop.permute.xlu0 %5662
  %v5664 = vlaneseq
  %v5665 = vshrl.u32 %v5664, 7
  %v5666 = vsub.s32 0, %v5665
  %v5667 = vrot.slane %v5291, %v5666
  %5669 = vbcast.lane.b32.xlu0 %v5667, 256
  %v5670 = vpop.permute.xlu0 %5669
  %v5671 = vlaneseq
  %v5672 = vshrl.u32 %v5671, 7
  %v5673 = vsub.s32 1, %v5672
  %v5674 = vrot.slane %v5291, %v5673
  %5676 = vbcast.lane.b32.xlu0 %v5674, 256
  %v5677 = vpop.permute.xlu0 %5676
  %v5678 = vlaneseq
  %v5679 = vshrl.u32 %v5678, 7
  %v5680 = vsub.s32 2, %v5679
  %v5681 = vrot.slane %v5291, %v5680
  %5683 = vbcast.lane.b32.xlu0 %v5681, 256
  %v5684 = vpop.permute.xlu0 %5683
  %v5685 = vlaneseq
  %v5686 = vshrl.u32 %v5685, 7
  %v5687 = vsub.s32 3, %v5686
  %v5688 = vrot.slane %v5291, %v5687
  %5690 = vbcast.lane.b32.xlu0 %v5688, 256
  %v5691 = vpop.permute.xlu0 %5690
  %v5692 = vlaneseq
  %v5693 = vshrl.u32 %v5692, 7
  %v5694 = vsub.s32 4, %v5693
  %v5695 = vrot.slane %v5291, %v5694
  %5697 = vbcast.lane.b32.xlu0 %v5695, 256
  %v5698 = vpop.permute.xlu0 %5697
  %v5699 = vlaneseq
  %v5700 = vshrl.u32 %v5699, 7
  %v5701 = vsub.s32 5, %v5700
  %v5702 = vrot.slane %v5291, %v5701
  %5704 = vbcast.lane.b32.xlu0 %v5702, 256
  %v5705 = vpop.permute.xlu0 %5704
  %v5706 = vlaneseq
  %v5707 = vshrl.u32 %v5706, 7
  %v5708 = vsub.s32 6, %v5707
  %v5709 = vrot.slane %v5291, %v5708
  %5711 = vbcast.lane.b32.xlu0 %v5709, 256
  %v5712 = vpop.permute.xlu0 %5711
  %v5713 = vlaneseq
  %v5714 = vshrl.u32 %v5713, 7
  %v5715 = vsub.s32 7, %v5714
  %v5716 = vrot.slane %v5291, %v5715
  %5718 = vbcast.lane.b32.xlu0 %v5716, 256
  %v5719 = vpop.permute.xlu0 %5718
  %v5720 = vadd.f32 %v5592, %v5614
  %v5721 = vadd.f32 %v5593, %v5621
  %v5722 = vadd.f32 %v5594, %v5628
  %v5723 = vadd.f32 %v5595, %v5635
  %v5724 = vadd.f32 %v5596, %v5642
  %v5725 = vadd.f32 %v5597, %v5649
  %v5726 = vadd.f32 %v5598, %v5656
  %v5727 = vadd.f32 %v5599, %v5663
  %v5728 = vadd.f32 %v5600, %v5670
  %v5729 = vadd.f32 %v5601, %v5677
  %v5730 = vadd.f32 %v5602, %v5684
  %v5731 = vadd.f32 %v5603, %v5691
  %v5732 = vadd.f32 %v5604, %v5698
  %v5733 = vadd.f32 %v5605, %v5705
  %v5734 = vadd.f32 %v5606, %v5712
  %v5735 = vadd.f32 %v5607, %v5719
  %v5736 = vsel %vm2237, %v5720, -inf
  %5737 = vmax.xlane.f32.xlu0 %v5736
  %v5738 = vpop.xlane.xlu0 %5737
  %v5739 = vsel %vm2237, %v5721, -inf
  %5740 = vmax.xlane.f32.xlu0 %v5739
  %v5741 = vpop.xlane.xlu0 %5740
  %v5742 = vsel %vm2237, %v5722, -inf
  %5743 = vmax.xlane.f32.xlu0 %v5742
  %v5744 = vpop.xlane.xlu0 %5743
  %v5745 = vsel %vm2237, %v5723, -inf
  %5746 = vmax.xlane.f32.xlu0 %v5745
  %v5747 = vpop.xlane.xlu0 %5746
  %v5748 = vsel %vm2237, %v5724, -inf
  %5749 = vmax.xlane.f32.xlu0 %v5748
  %v5750 = vpop.xlane.xlu0 %5749
  %v5751 = vsel %vm2237, %v5725, -inf
  %5752 = vmax.xlane.f32.xlu0 %v5751
  %v5753 = vpop.xlane.xlu0 %5752
  %v5754 = vsel %vm2237, %v5726, -inf
  %5755 = vmax.xlane.f32.xlu0 %v5754
  %v5756 = vpop.xlane.xlu0 %5755
  %v5757 = vsel %vm2237, %v5727, -inf
  %5758 = vmax.xlane.f32.xlu0 %v5757
  %v5759 = vpop.xlane.xlu0 %5758
  %v5760 = vsel %vm2237, %v5728, -inf
  %5761 = vmax.xlane.f32.xlu0 %v5760
  %v5762 = vpop.xlane.xlu0 %5761
  %v5763 = vsel %vm2237, %v5729, -inf
  %5764 = vmax.xlane.f32.xlu0 %v5763
  %v5765 = vpop.xlane.xlu0 %5764
  %v5766 = vsel %vm2237, %v5730, -inf
  %5767 = vmax.xlane.f32.xlu0 %v5766
  %v5768 = vpop.xlane.xlu0 %5767
  %v5769 = vsel %vm2237, %v5731, -inf
  %5770 = vmax.xlane.f32.xlu0 %v5769
  %v5771 = vpop.xlane.xlu0 %5770
  %v5772 = vsel %vm2237, %v5732, -inf
  %5773 = vmax.xlane.f32.xlu0 %v5772
  %v5774 = vpop.xlane.xlu0 %5773
  %v5775 = vsel %vm2237, %v5733, -inf
  %5776 = vmax.xlane.f32.xlu0 %v5775
  %v5777 = vpop.xlane.xlu0 %5776
  %v5778 = vsel %vm2237, %v5734, -inf
  %5779 = vmax.xlane.f32.xlu0 %v5778
  %v5780 = vpop.xlane.xlu0 %5779
  %v5781 = vsel %vm2237, %v5735, -inf
  %5782 = vmax.xlane.f32.xlu0 %v5781
  %v5783 = vpop.xlane.xlu0 %5782
  %v5784 = vsub.f32 %v5720, %v5738
  %v5785 = vsub.f32 %v5721, %v5741
  %v5786 = vsub.f32 %v5722, %v5744
  %v5787 = vsub.f32 %v5723, %v5747
  %v5788 = vsub.f32 %v5724, %v5750
  %v5789 = vsub.f32 %v5725, %v5753
  %v5790 = vsub.f32 %v5726, %v5756
  %v5791 = vsub.f32 %v5727, %v5759
  %v5792 = vsub.f32 %v5728, %v5762
  %v5793 = vsub.f32 %v5729, %v5765
  %v5794 = vsub.f32 %v5730, %v5768
  %v5795 = vsub.f32 %v5731, %v5771
  %v5796 = vsub.f32 %v5732, %v5774
  %v5797 = vsub.f32 %v5733, %v5777
  %v5798 = vsub.f32 %v5734, %v5780
  %v5799 = vsub.f32 %v5735, %v5783
  %v5800 = vmul.f32 %v5784, 1.442695
  %v5801 = vpow.pop %v5800
  %v5802 = vmul.f32 %v5785, 1.442695
  %v5803 = vpow.pop %v5802
  %v5804 = vmul.f32 %v5786, 1.442695
  %v5805 = vpow.pop %v5804
  %v5806 = vmul.f32 %v5787, 1.442695
  %v5807 = vpow.pop %v5806
  %v5808 = vmul.f32 %v5788, 1.442695
  %v5809 = vpow.pop %v5808
  %v5810 = vmul.f32 %v5789, 1.442695
  %v5811 = vpow.pop %v5810
  %v5812 = vmul.f32 %v5790, 1.442695
  %v5813 = vpow.pop %v5812
  %v5814 = vmul.f32 %v5791, 1.442695
  %v5815 = vpow.pop %v5814
  %v5816 = vmul.f32 %v5792, 1.442695
  %v5817 = vpow.pop %v5816
  %v5818 = vmul.f32 %v5793, 1.442695
  %v5819 = vpow.pop %v5818
  %v5820 = vmul.f32 %v5794, 1.442695
  %v5821 = vpow.pop %v5820
  %v5822 = vmul.f32 %v5795, 1.442695
  %v5823 = vpow.pop %v5822
  %v5824 = vmul.f32 %v5796, 1.442695
  %v5825 = vpow.pop %v5824
  %v5826 = vmul.f32 %v5797, 1.442695
  %v5827 = vpow.pop %v5826
  %v5828 = vmul.f32 %v5798, 1.442695
  %v5829 = vpow.pop %v5828
  %v5830 = vmul.f32 %v5799, 1.442695
  %v5831 = vpow.pop %v5830
  %v5832 = vsel %vm2237, %v5801, 0.0
  %5833 = vadd.xlane.f32.xlu0 %v5832
  %v5834 = vpop.xlane.xlu0 %5833
  %v5835 = vsel %vm2237, %v5803, 0.0
  %5836 = vadd.xlane.f32.xlu0 %v5835
  %v5837 = vpop.xlane.xlu0 %5836
  %v5838 = vsel %vm2237, %v5805, 0.0
  %5839 = vadd.xlane.f32.xlu0 %v5838
  %v5840 = vpop.xlane.xlu0 %5839
  %v5841 = vsel %vm2237, %v5807, 0.0
  %5842 = vadd.xlane.f32.xlu0 %v5841
  %v5843 = vpop.xlane.xlu0 %5842
  %v5844 = vsel %vm2237, %v5809, 0.0
  %5845 = vadd.xlane.f32.xlu0 %v5844
  %v5846 = vpop.xlane.xlu0 %5845
  %v5847 = vsel %vm2237, %v5811, 0.0
  %5848 = vadd.xlane.f32.xlu0 %v5847
  %v5849 = vpop.xlane.xlu0 %5848
  %v5850 = vsel %vm2237, %v5813, 0.0
  %5851 = vadd.xlane.f32.xlu0 %v5850
  %v5852 = vpop.xlane.xlu0 %5851
  %v5853 = vsel %vm2237, %v5815, 0.0
  %5854 = vadd.xlane.f32.xlu0 %v5853
  %v5855 = vpop.xlane.xlu0 %5854
  %v5856 = vsel %vm2237, %v5817, 0.0
  %5857 = vadd.xlane.f32.xlu0 %v5856
  %v5858 = vpop.xlane.xlu0 %5857
  %v5859 = vsel %vm2237, %v5819, 0.0
  %5860 = vadd.xlane.f32.xlu0 %v5859
  %v5861 = vpop.xlane.xlu0 %5860
  %v5862 = vsel %vm2237, %v5821, 0.0
  %5863 = vadd.xlane.f32.xlu0 %v5862
  %v5864 = vpop.xlane.xlu0 %5863
  %v5865 = vsel %vm2237, %v5823, 0.0
  %5866 = vadd.xlane.f32.xlu0 %v5865
  %v5867 = vpop.xlane.xlu0 %5866
  %v5868 = vsel %vm2237, %v5825, 0.0
  %5869 = vadd.xlane.f32.xlu0 %v5868
  %v5870 = vpop.xlane.xlu0 %5869
  %v5871 = vsel %vm2237, %v5827, 0.0
  %5872 = vadd.xlane.f32.xlu0 %v5871
  %v5873 = vpop.xlane.xlu0 %5872
  %v5874 = vsel %vm2237, %v5829, 0.0
  %5875 = vadd.xlane.f32.xlu0 %v5874
  %v5876 = vpop.xlane.xlu0 %5875
  %v5877 = vsel %vm2237, %v5831, 0.0
  %5878 = vadd.xlane.f32.xlu0 %v5877
  %v5879 = vpop.xlane.xlu0 %5878
  %v5880 = vlog2.pop %v5834
  %v5881 = vmul.f32 %v5880, 0.6931472
  %v5882 = vlog2.pop %v5837
  %v5883 = vmul.f32 %v5882, 0.6931472
  %v5884 = vlog2.pop %v5840
  %v5885 = vmul.f32 %v5884, 0.6931472
  %v5886 = vlog2.pop %v5843
  %v5887 = vmul.f32 %v5886, 0.6931472
  %v5888 = vlog2.pop %v5846
  %v5889 = vmul.f32 %v5888, 0.6931472
  %v5890 = vlog2.pop %v5849
  %v5891 = vmul.f32 %v5890, 0.6931472
  %v5892 = vlog2.pop %v5852
  %v5893 = vmul.f32 %v5892, 0.6931472
  %v5894 = vlog2.pop %v5855
  %v5895 = vmul.f32 %v5894, 0.6931472
  %v5896 = vlog2.pop %v5858
  %v5897 = vmul.f32 %v5896, 0.6931472
  %v5898 = vlog2.pop %v5861
  %v5899 = vmul.f32 %v5898, 0.6931472
  %v5900 = vlog2.pop %v5864
  %v5901 = vmul.f32 %v5900, 0.6931472
  %v5902 = vlog2.pop %v5867
  %v5903 = vmul.f32 %v5902, 0.6931472
  %v5904 = vlog2.pop %v5870
  %v5905 = vmul.f32 %v5904, 0.6931472
  %v5906 = vlog2.pop %v5873
  %v5907 = vmul.f32 %v5906, 0.6931472
  %v5908 = vlog2.pop %v5876
  %v5909 = vmul.f32 %v5908, 0.6931472
  %v5910 = vlog2.pop %v5879
  %v5911 = vmul.f32 %v5910, 0.6931472
  %v5912 = vadd.f32 %v5738, %v5881
  %v5913 = vadd.f32 %v5741, %v5883
  %v5914 = vadd.f32 %v5744, %v5885
  %v5915 = vadd.f32 %v5747, %v5887
  %v5916 = vadd.f32 %v5750, %v5889
  %v5917 = vadd.f32 %v5753, %v5891
  %v5918 = vadd.f32 %v5756, %v5893
  %v5919 = vadd.f32 %v5759, %v5895
  %v5920 = vadd.f32 %v5762, %v5897
  %v5921 = vadd.f32 %v5765, %v5899
  %v5922 = vadd.f32 %v5768, %v5901
  %v5923 = vadd.f32 %v5771, %v5903
  %v5924 = vadd.f32 %v5774, %v5905
  %v5925 = vadd.f32 %v5777, %v5907
  %v5926 = vadd.f32 %v5780, %v5909
  %v5927 = vadd.f32 %v5783, %v5911
  %vm5928 = vcmp.gt.f32.partialorder %v5292, 0.5
  %vm5929 = vcmp.gt.f32.partialorder %v5293, 0.5
  %v5930 = vsel %vm5928, 1, 0
  %v5931 = vsel %vm5929, 1, 0
  %5932 = vset.pattern.permute.xlu0 0
  %5933 = vperm.xlu0 %5932, %v5930
  %v5934 = vpop.permute.xlu0 %5933
  %5935 = vset.pattern.permute.xlu0 0
  %5936 = vperm.xlu0 %5935, %v5931
  %v5937 = vpop.permute.xlu0 %5936
  %vm5938 = vcmp.eq.s32.totalorder %v5934, 1
  %vm5939 = vcmp.eq.s32.totalorder %v5937, 1
  %v5956 = vlaneseq
  %v5957 = vshrl.u32 %v5956, 7
  %v5958 = vsub.s32 %v2257, %v5957
  %v5959 = vrot.slane %v5912, %v5958
  %v5960 = vlaneseq
  %v5961 = vshrl.u32 %v5960, 7
  %v5962 = vsub.s32 %v2257, %v5961
  %v5963 = vrot.slane %v5913, %v5962
  %v5964 = vlaneseq
  %v5965 = vshrl.u32 %v5964, 7
  %v5966 = vsub.s32 %v2257, %v5965
  %v5967 = vrot.slane %v5914, %v5966
  %v5968 = vlaneseq
  %v5969 = vshrl.u32 %v5968, 7
  %v5970 = vsub.s32 %v2257, %v5969
  %v5971 = vrot.slane %v5915, %v5970
  %v5972 = vlaneseq
  %v5973 = vshrl.u32 %v5972, 7
  %v5974 = vsub.s32 %v2257, %v5973
  %v5975 = vrot.slane %v5916, %v5974
  %v5976 = vlaneseq
  %v5977 = vshrl.u32 %v5976, 7
  %v5978 = vsub.s32 %v2257, %v5977
  %v5979 = vrot.slane %v5917, %v5978
  %v5980 = vlaneseq
  %v5981 = vshrl.u32 %v5980, 7
  %v5982 = vsub.s32 %v2257, %v5981
  %v5983 = vrot.slane %v5918, %v5982
  %v5984 = vlaneseq
  %v5985 = vshrl.u32 %v5984, 7
  %v5986 = vsub.s32 %v2257, %v5985
  %v5987 = vrot.slane %v5919, %v5986
  %v5988 = vlaneseq
  %v5989 = vshrl.u32 %v5988, 7
  %v5990 = vsub.s32 %v2257, %v5989
  %v5991 = vrot.slane %v5920, %v5990
  %v5992 = vlaneseq
  %v5993 = vshrl.u32 %v5992, 7
  %v5994 = vsub.s32 %v2257, %v5993
  %v5995 = vrot.slane %v5921, %v5994
  %v5996 = vlaneseq
  %v5997 = vshrl.u32 %v5996, 7
  %v5998 = vsub.s32 %v2257, %v5997
  %v5999 = vrot.slane %v5922, %v5998
  %v6000 = vlaneseq
  %v6001 = vshrl.u32 %v6000, 7
  %v6002 = vsub.s32 %v2257, %v6001
  %v6003 = vrot.slane %v5923, %v6002
  %v6004 = vlaneseq
  %v6005 = vshrl.u32 %v6004, 7
  %v6006 = vsub.s32 %v2257, %v6005
  %v6007 = vrot.slane %v5924, %v6006
  %v6008 = vlaneseq
  %v6009 = vshrl.u32 %v6008, 7
  %v6010 = vsub.s32 %v2257, %v6009
  %v6011 = vrot.slane %v5925, %v6010
  %v6012 = vlaneseq
  %v6013 = vshrl.u32 %v6012, 7
  %v6014 = vsub.s32 %v2257, %v6013
  %v6015 = vrot.slane %v5926, %v6014
  %v6016 = vlaneseq
  %v6017 = vshrl.u32 %v6016, 7
  %v6018 = vsub.s32 %v2257, %v6017
  %v6019 = vrot.slane %v5927, %v6018
  %v6020 = vsel %vm3017, %v5963, %v5959
  %v6021 = vsel %vm3019, %v5967, %v6020
  %v6022 = vsel %vm3021, %v5971, %v6021
  %v6023 = vsel %vm3023, %v5975, %v6022
  %v6024 = vsel %vm3025, %v5979, %v6023
  %v6025 = vsel %vm3027, %v5983, %v6024
  %v6026 = vsel %vm3029, %v5987, %v6025
  %v6027 = vsel %vm3017, %v5995, %v5991
  %v6028 = vsel %vm3019, %v5999, %v6027
  %v6029 = vsel %vm3021, %v6003, %v6028
  %v6030 = vsel %vm3023, %v6007, %v6029
  %v6031 = vsel %vm3025, %v6011, %v6030
  %v6032 = vsel %vm3027, %v6015, %v6031
  %v6033 = vsel %vm3029, %v6019, %v6032
  %v6036 = vsel %vm5938, %v6026, %v5287
  %v6037 = vsel %vm5939, %v6033, %v5288
  %s6038 = scalar_lea.vmem [#allocation4], 96
  %v6039 = vld [vmem:[%s6038] sm:$0xff]
  %v6040 = vld [vmem:[%s6038 + $0x8] sm:$0xff]
  %v6041 = vld [vmem:[%s548] sm:$0xff]
  %v6042 = vld [vmem:[%s548 + $0x8] sm:$0xff]
  %s6043 = scalar_lea.vmem %s2, 96
  %v6044 = vld [vmem:[%s6043] sm:$0xff]
  %v6045 = vld [vmem:[%s6043 + $0x8] sm:$0xff]
  %6046 = vset.pattern.permute.xlu0 0
  %6047 = vperm.xlu0 %6046, %v6044
  %v6048 = vpop.permute.xlu0 %6047
  %6049 = vset.pattern.permute.xlu0 0
  %6050 = vperm.xlu0 %6049, %v6045
  %v6051 = vpop.permute.xlu0 %6050
  %vm6052 = vcmp.eq.s32.totalorder %v6048, %v2257
  %vm6053 = vcmp.eq.s32.totalorder %v6051, %v2257
  %v6054 = vsel %vm6052, 1, 0
  %v6055 = vsel %vm6053, 1, 0
  %v6056 = vcvt.s32.f32 %v6054
  %v6057 = vcvt.s32.f32 %v6055
  %v6058 = vmul.f32 %v6039, %v6056
  %v6059 = vmul.f32 %v6040, %v6057
  %v6060 = vsel %vm2237, %v6058, 0.0
  %6061 = vadd.xlane.f32.xlu0 %v6060
  %v6062 = vpop.xlane.xlu0 %6061
  %v6063 = vsel %vm2237, %v6059, 0.0
  %6064 = vadd.xlane.f32.xlu0 %v6063
  %v6065 = vpop.xlane.xlu0 %6064
  %v6067 = vsel %vm2237, %v5307, 0
  %v6070 = vsel %vm2237, %v5308, 0
  %6072 = vmatprep.subr.mxu0 0.0
  %6073 = vmatpush1.msra.mxu0 %v2254
  %6074 = vmatprep.subr.mxu0 0.0
  %6075 = vmatpush1.msra.mxu0 0.0
  %6076 = vmatprep.subr.mxu0 0.0
  %6077 = vmatpush1.msra.mxu0 0.0
  %6078 = vmatprep.subr.mxu0 0.0
  %6079 = vmatpush1.msra.mxu0 0.0
  %6080 = vmatprep.subr.mxu0 0.0
  %6081 = vmatpush1.msra.mxu0 0.0
  %6082 = vmatprep.subr.mxu0 0.0
  %6083 = vmatpush1.msra.mxu0 0.0
  %6084 = vmatprep.subr.mxu0 0.0
  %6085 = vmatpush1.msra.mxu0 0.0
  %6086 = vmatprep.subr.mxu0 0.0
  %6087 = vmatpush1.msra.mxu0 0.0
  %6088 = vmatprep.subr.mxu0 0.0
  %6089 = vmatpush1.msra.mxu0 0.0
  %6090 = vmatprep.subr.mxu0 0.0
  %6091 = vmatpush1.msra.mxu0 0.0
  %6092 = vmatprep.subr.mxu0 0.0
  %6093 = vmatpush1.msra.mxu0 0.0
  %6094 = vmatprep.subr.mxu0 0.0
  %6095 = vmatpush1.msra.mxu0 0.0
  %6096 = vmatprep.subr.mxu0 0.0
  %6097 = vmatpush1.msra.mxu0 0.0
  %6098 = vmatprep.subr.mxu0 0.0
  %6099 = vmatpush1.msra.mxu0 0.0
  %6100 = vmatprep.subr.mxu0 0.0
  %6101 = vmatpush1.msra.mxu0 0.0
  %6102 = vmatprep.subr.mxu0 0.0
  %6103 = vmatpush1.msra.mxu0 0.0
  %6104 = vmatprep.subr.mxu0 0.0
  %6105 = vmatpush1.msra.mxu0 0.0
  %6106 = vmatprep.subr.mxu0 0.0
  %6107 = vmatpush1.msra.mxu0 0.0
  %6108 = vmatprep.subr.mxu0 0.0
  %6109 = vmatpush1.msra.mxu0 0.0
  %6110 = vmatprep.subr.mxu0 0.0
  %6111 = vmatpush1.msra.mxu0 0.0
  %6112 = vmatprep.subr.mxu0 0.0
  %6113 = vmatpush1.msra.mxu0 0.0
  %6114 = vmatprep.subr.mxu0 0.0
  %6115 = vmatpush1.msra.mxu0 0.0
  %6116 = vmatprep.subr.mxu0 0.0
  %6117 = vmatpush1.msra.mxu0 0.0
  %6118 = vmatprep.subr.mxu0 0.0
  %6119 = vmatpush1.msra.mxu0 0.0
  %6120 = vmatprep.subr.mxu0 0.0
  %6121 = vmatpush1.msra.mxu0 0.0
  %6122 = vmatprep.subr.mxu0 0.0
  %6123 = vmatpush1.msra.mxu0 0.0
  %6124 = vmatprep.subr.mxu0 0.0
  %6125 = vmatpush1.msra.mxu0 0.0
  %6126 = vmatprep.subr.mxu0 0.0
  %6127 = vmatpush1.msra.mxu0 0.0
  %6128 = vmatprep.subr.mxu0 0.0
  %6129 = vmatpush1.msra.mxu0 0.0
  %6130 = vmatprep.subr.mxu0 0.0
  %6131 = vmatpush1.msra.mxu0 0.0
  %6132 = vmatprep.subr.mxu0 0.0
  %6133 = vmatpush1.msra.mxu0 0.0
  %6134 = vmatprep.subr.mxu0 0.0
  %6135 = vmatpush1.msra.mxu0 0.0
  %6136 = vmatprep.mubr.f32.mxu0 0.0
  %6137 = vmatmul.mubr.f32.gmra.mrb[0].mxu0 %v6067
  %v6138 = vpop.f32.mrb[0].mxu0
  %v6139 = vadd.f32 0.0, %v6138
  %v6140 = vpop.f32.mrb[0].mxu0
  %6141 = vmatprep.mubr.f32.mxu0 0.0
  %6142 = vmatmul.mubr.f32.gmra.mrb[0].mxu0 %v6070
  %v6143 = vpop.f32.mrb[0].mxu0
  %v6144 = vadd.f32 0.0, %v6143
  %v6145 = vpop.f32.mrb[0].mxu0
  %6146 = vdwg.mxu0
  %v6147 = vmul.f32 %v6139, %v6056
  %v6148 = vmul.f32 %v6144, %v6057
  %v6149 = vsel %vm2237, %v6147, 0.0
  %6150 = vadd.xlane.f32.xlu0 %v6149
  %v6151 = vpop.xlane.xlu0 %6150
  %v6152 = vsel %vm2237, %v6148, 0.0
  %6153 = vadd.xlane.f32.xlu0 %v6152
  %v6154 = vpop.xlane.xlu0 %6153
  %v6155 = vadd.f32 %v6062, %v6151
  %v6156 = vadd.f32 %v6065, %v6154
  %v6157 = vmul.f32 %v6155, %v6041
  %v6158 = vmul.f32 %v6156, %v6042
  %v6159 = vadd.f32 %v5410, %v6157
  %v6160 = vadd.f32 %v5411, %v6158
  %v6163 = vcombine.high %v6036, %v6036
  %v6165 = vunpack.c.l.s4 1966171168
  %v6166 = vunpack.c.0.s8 %v6165
  %v6167 = vlaneseq
  %v6168 = vshrl.u32 %v6167, 7
  %v6169 = vsub.s32 %v6166, %v6168
  %v6170 = vrot.slane %v6036, %v6169
  %v6172 = vunpack.c.l.s4 1966171168
  %v6173 = vunpack.c.0.s8 %v6172
  %v6174 = vlaneseq
  %v6175 = vshrl.u32 %v6174, 7
  %v6176 = vsub.s32 %v6173, %v6175
  %v6177 = vrot.slane %v6163, %v6176
  %v6178 = vcombine.high %v6170, %v6170
  %v6179 = vcombine.high %v6177, %v6177
  %v6181 = vunpack.c.l.s4 1966171168
  %v6182 = vunpack.c.0.s8 %v6181
  %v6183 = vlaneseq
  %v6184 = vshrl.u32 %v6183, 7
  %v6185 = vsub.s32 %v6182, %v6184
  %v6186 = vrot.slane %v6170, %v6185
  %v6188 = vunpack.c.l.s4 1966171168
  %v6189 = vunpack.c.0.s8 %v6188
  %v6190 = vlaneseq
  %v6191 = vshrl.u32 %v6190, 7
  %v6192 = vsub.s32 %v6189, %v6191
  %v6193 = vrot.slane %v6177, %v6192
  %v6195 = vunpack.c.l.s4 1966171168
  %v6196 = vunpack.c.0.s8 %v6195
  %v6197 = vlaneseq
  %v6198 = vshrl.u32 %v6197, 7
  %v6199 = vsub.s32 %v6196, %v6198
  %v6200 = vrot.slane %v6178, %v6199
  %v6202 = vunpack.c.l.s4 1966171168
  %v6203 = vunpack.c.0.s8 %v6202
  %v6204 = vlaneseq
  %v6205 = vshrl.u32 %v6204, 7
  %v6206 = vsub.s32 %v6203, %v6205
  %v6207 = vrot.slane %v6179, %v6206
  %v6208 = vcombine.high %v6186, %v6186
  %v6209 = vcombine.high %v6193, %v6193
  %v6210 = vcombine.high %v6200, %v6200
  %v6211 = vcombine.high %v6207, %v6207
  %v6212 = vcombine.high %v6037, %v6037
  %v6214 = vunpack.c.l.s4 1966171168
  %v6215 = vunpack.c.0.s8 %v6214
  %v6216 = vlaneseq
  %v6217 = vshrl.u32 %v6216, 7
  %v6218 = vsub.s32 %v6215, %v6217
  %v6219 = vrot.slane %v6037, %v6218
  %v6221 = vunpack.c.l.s4 1966171168
  %v6222 = vunpack.c.0.s8 %v6221
  %v6223 = vlaneseq
  %v6224 = vshrl.u32 %v6223, 7
  %v6225 = vsub.s32 %v6222, %v6224
  %v6226 = vrot.slane %v6212, %v6225
  %v6227 = vcombine.high %v6219, %v6219
  %v6228 = vcombine.high %v6226, %v6226
  %v6230 = vunpack.c.l.s4 1966171168
  %v6231 = vunpack.c.0.s8 %v6230
  %v6232 = vlaneseq
  %v6233 = vshrl.u32 %v6232, 7
  %v6234 = vsub.s32 %v6231, %v6233
  %v6235 = vrot.slane %v6219, %v6234
  %v6237 = vunpack.c.l.s4 1966171168
  %v6238 = vunpack.c.0.s8 %v6237
  %v6239 = vlaneseq
  %v6240 = vshrl.u32 %v6239, 7
  %v6241 = vsub.s32 %v6238, %v6240
  %v6242 = vrot.slane %v6226, %v6241
  %v6244 = vunpack.c.l.s4 1966171168
  %v6245 = vunpack.c.0.s8 %v6244
  %v6246 = vlaneseq
  %v6247 = vshrl.u32 %v6246, 7
  %v6248 = vsub.s32 %v6245, %v6247
  %v6249 = vrot.slane %v6227, %v6248
  %v6251 = vunpack.c.l.s4 1966171168
  %v6252 = vunpack.c.0.s8 %v6251
  %v6253 = vlaneseq
  %v6254 = vshrl.u32 %v6253, 7
  %v6255 = vsub.s32 %v6252, %v6254
  %v6256 = vrot.slane %v6228, %v6255
  %v6257 = vcombine.high %v6235, %v6235
  %v6258 = vcombine.high %v6242, %v6242
  %v6259 = vcombine.high %v6249, %v6249
  %v6260 = vcombine.high %v6256, %v6256
  %v6261 = vlaneseq
  %v6262 = vshrl.u32 %v6261, 7
  %v6263 = vsub.s32 0, %v6262
  %v6264 = vrot.slane %v6186, %v6263
  %v6265 = vlaneseq
  %v6266 = vshrl.u32 %v6265, 7
  %v6267 = vsub.s32 0, %v6266
  %v6268 = vrot.slane %v6200, %v6267
  %v6269 = vlaneseq
  %v6270 = vshrl.u32 %v6269, 7
  %v6271 = vsub.s32 0, %v6270
  %v6272 = vrot.slane %v6208, %v6271
  %v6273 = vlaneseq
  %v6274 = vshrl.u32 %v6273, 7
  %v6275 = vsub.s32 0, %v6274
  %v6276 = vrot.slane %v6210, %v6275
  %v6277 = vlaneseq
  %v6278 = vshrl.u32 %v6277, 7
  %v6279 = vsub.s32 0, %v6278
  %v6280 = vrot.slane %v6193, %v6279
  %v6281 = vlaneseq
  %v6282 = vshrl.u32 %v6281, 7
  %v6283 = vsub.s32 0, %v6282
  %v6284 = vrot.slane %v6207, %v6283
  %v6285 = vlaneseq
  %v6286 = vshrl.u32 %v6285, 7
  %v6287 = vsub.s32 0, %v6286
  %v6288 = vrot.slane %v6209, %v6287
  %v6289 = vlaneseq
  %v6290 = vshrl.u32 %v6289, 7
  %v6291 = vsub.s32 0, %v6290
  %v6292 = vrot.slane %v6211, %v6291
  %v6293 = vlaneseq
  %v6294 = vshrl.u32 %v6293, 7
  %v6295 = vsub.s32 0, %v6294
  %v6296 = vrot.slane %v6235, %v6295
  %v6297 = vlaneseq
  %v6298 = vshrl.u32 %v6297, 7
  %v6299 = vsub.s32 0, %v6298
  %v6300 = vrot.slane %v6249, %v6299
  %v6301 = vlaneseq
  %v6302 = vshrl.u32 %v6301, 7
  %v6303 = vsub.s32 0, %v6302
  %v6304 = vrot.slane %v6257, %v6303
  %v6305 = vlaneseq
  %v6306 = vshrl.u32 %v6305, 7
  %v6307 = vsub.s32 0, %v6306
  %v6308 = vrot.slane %v6259, %v6307
  %v6309 = vlaneseq
  %v6310 = vshrl.u32 %v6309, 7
  %v6311 = vsub.s32 0, %v6310
  %v6312 = vrot.slane %v6242, %v6311
  %v6313 = vlaneseq
  %v6314 = vshrl.u32 %v6313, 7
  %v6315 = vsub.s32 0, %v6314
  %v6316 = vrot.slane %v6256, %v6315
  %v6317 = vlaneseq
  %v6318 = vshrl.u32 %v6317, 7
  %v6319 = vsub.s32 0, %v6318
  %v6320 = vrot.slane %v6258, %v6319
  %v6321 = vlaneseq
  %v6322 = vshrl.u32 %v6321, 7
  %v6323 = vsub.s32 0, %v6322
  %v6324 = vrot.slane %v6260, %v6323
  %v6341 = vadd.f32 %v6264, %v2255
  %v6342 = vadd.f32 %v6268, %v2255
  %v6343 = vadd.f32 %v6272, %v2255
  %v6344 = vadd.f32 %v6276, %v2255
  %v6345 = vadd.f32 %v6280, %v2255
  %v6346 = vadd.f32 %v6284, %v2255
  %v6347 = vadd.f32 %v6288, %v2255
  %v6348 = vadd.f32 %v6292, %v2255
  %v6349 = vadd.f32 %v6296, %v2255
  %v6350 = vadd.f32 %v6300, %v2255
  %v6351 = vadd.f32 %v6304, %v2255
  %v6352 = vadd.f32 %v6308, %v2255
  %v6353 = vadd.f32 %v6312, %v2255
  %v6354 = vadd.f32 %v6316, %v2255
  %v6355 = vadd.f32 %v6320, %v2255
  %v6356 = vadd.f32 %v6324, %v2255
  %v6357 = vlaneseq
  %v6358 = vshrl.u32 %v6357, 7
  %v6359 = vsub.s32 0, %v6358
  %v6360 = vrot.slane %v6039, %v6359
  %6362 = vbcast.lane.b32.xlu0 %v6360, 256
  %v6363 = vpop.permute.xlu0 %6362
  %v6364 = vlaneseq
  %v6365 = vshrl.u32 %v6364, 7
  %v6366 = vsub.s32 1, %v6365
  %v6367 = vrot.slane %v6039, %v6366
  %6369 = vbcast.lane.b32.xlu0 %v6367, 256
  %v6370 = vpop.permute.xlu0 %6369
  %v6371 = vlaneseq
  %v6372 = vshrl.u32 %v6371, 7
  %v6373 = vsub.s32 2, %v6372
  %v6374 = vrot.slane %v6039, %v6373
  %6376 = vbcast.lane.b32.xlu0 %v6374, 256
  %v6377 = vpop.permute.xlu0 %6376
  %v6378 = vlaneseq
  %v6379 = vshrl.u32 %v6378, 7
  %v6380 = vsub.s32 3, %v6379
  %v6381 = vrot.slane %v6039, %v6380
  %6383 = vbcast.lane.b32.xlu0 %v6381, 256
  %v6384 = vpop.permute.xlu0 %6383
  %v6385 = vlaneseq
  %v6386 = vshrl.u32 %v6385, 7
  %v6387 = vsub.s32 4, %v6386
  %v6388 = vrot.slane %v6039, %v6387
  %6390 = vbcast.lane.b32.xlu0 %v6388, 256
  %v6391 = vpop.permute.xlu0 %6390
  %v6392 = vlaneseq
  %v6393 = vshrl.u32 %v6392, 7
  %v6394 = vsub.s32 5, %v6393
  %v6395 = vrot.slane %v6039, %v6394
  %6397 = vbcast.lane.b32.xlu0 %v6395, 256
  %v6398 = vpop.permute.xlu0 %6397
  %v6399 = vlaneseq
  %v6400 = vshrl.u32 %v6399, 7
  %v6401 = vsub.s32 6, %v6400
  %v6402 = vrot.slane %v6039, %v6401
  %6404 = vbcast.lane.b32.xlu0 %v6402, 256
  %v6405 = vpop.permute.xlu0 %6404
  %v6406 = vlaneseq
  %v6407 = vshrl.u32 %v6406, 7
  %v6408 = vsub.s32 7, %v6407
  %v6409 = vrot.slane %v6039, %v6408
  %6411 = vbcast.lane.b32.xlu0 %v6409, 256
  %v6412 = vpop.permute.xlu0 %6411
  %v6413 = vlaneseq
  %v6414 = vshrl.u32 %v6413, 7
  %v6415 = vsub.s32 0, %v6414
  %v6416 = vrot.slane %v6040, %v6415
  %6418 = vbcast.lane.b32.xlu0 %v6416, 256
  %v6419 = vpop.permute.xlu0 %6418
  %v6420 = vlaneseq
  %v6421 = vshrl.u32 %v6420, 7
  %v6422 = vsub.s32 1, %v6421
  %v6423 = vrot.slane %v6040, %v6422
  %6425 = vbcast.lane.b32.xlu0 %v6423, 256
  %v6426 = vpop.permute.xlu0 %6425
  %v6427 = vlaneseq
  %v6428 = vshrl.u32 %v6427, 7
  %v6429 = vsub.s32 2, %v6428
  %v6430 = vrot.slane %v6040, %v6429
  %6432 = vbcast.lane.b32.xlu0 %v6430, 256
  %v6433 = vpop.permute.xlu0 %6432
  %v6434 = vlaneseq
  %v6435 = vshrl.u32 %v6434, 7
  %v6436 = vsub.s32 3, %v6435
  %v6437 = vrot.slane %v6040, %v6436
  %6439 = vbcast.lane.b32.xlu0 %v6437, 256
  %v6440 = vpop.permute.xlu0 %6439
  %v6441 = vlaneseq
  %v6442 = vshrl.u32 %v6441, 7
  %v6443 = vsub.s32 4, %v6442
  %v6444 = vrot.slane %v6040, %v6443
  %6446 = vbcast.lane.b32.xlu0 %v6444, 256
  %v6447 = vpop.permute.xlu0 %6446
  %v6448 = vlaneseq
  %v6449 = vshrl.u32 %v6448, 7
  %v6450 = vsub.s32 5, %v6449
  %v6451 = vrot.slane %v6040, %v6450
  %6453 = vbcast.lane.b32.xlu0 %v6451, 256
  %v6454 = vpop.permute.xlu0 %6453
  %v6455 = vlaneseq
  %v6456 = vshrl.u32 %v6455, 7
  %v6457 = vsub.s32 6, %v6456
  %v6458 = vrot.slane %v6040, %v6457
  %6460 = vbcast.lane.b32.xlu0 %v6458, 256
  %v6461 = vpop.permute.xlu0 %6460
  %v6462 = vlaneseq
  %v6463 = vshrl.u32 %v6462, 7
  %v6464 = vsub.s32 7, %v6463
  %v6465 = vrot.slane %v6040, %v6464
  %6467 = vbcast.lane.b32.xlu0 %v6465, 256
  %v6468 = vpop.permute.xlu0 %6467
  %v6469 = vadd.f32 %v6341, %v6363
  %v6470 = vadd.f32 %v6342, %v6370
  %v6471 = vadd.f32 %v6343, %v6377
  %v6472 = vadd.f32 %v6344, %v6384
  %v6473 = vadd.f32 %v6345, %v6391
  %v6474 = vadd.f32 %v6346, %v6398
  %v6475 = vadd.f32 %v6347, %v6405
  %v6476 = vadd.f32 %v6348, %v6412
  %v6477 = vadd.f32 %v6349, %v6419
  %v6478 = vadd.f32 %v6350, %v6426
  %v6479 = vadd.f32 %v6351, %v6433
  %v6480 = vadd.f32 %v6352, %v6440
  %v6481 = vadd.f32 %v6353, %v6447
  %v6482 = vadd.f32 %v6354, %v6454
  %v6483 = vadd.f32 %v6355, %v6461
  %v6484 = vadd.f32 %v6356, %v6468
  %v6485 = vsel %vm2237, %v6469, -inf
  %6486 = vmax.xlane.f32.xlu0 %v6485
  %v6487 = vpop.xlane.xlu0 %6486
  %v6488 = vsel %vm2237, %v6470, -inf
  %6489 = vmax.xlane.f32.xlu0 %v6488
  %v6490 = vpop.xlane.xlu0 %6489
  %v6491 = vsel %vm2237, %v6471, -inf
  %6492 = vmax.xlane.f32.xlu0 %v6491
  %v6493 = vpop.xlane.xlu0 %6492
  %v6494 = vsel %vm2237, %v6472, -inf
  %6495 = vmax.xlane.f32.xlu0 %v6494
  %v6496 = vpop.xlane.xlu0 %6495
  %v6497 = vsel %vm2237, %v6473, -inf
  %6498 = vmax.xlane.f32.xlu0 %v6497
  %v6499 = vpop.xlane.xlu0 %6498
  %v6500 = vsel %vm2237, %v6474, -inf
  %6501 = vmax.xlane.f32.xlu0 %v6500
  %v6502 = vpop.xlane.xlu0 %6501
  %v6503 = vsel %vm2237, %v6475, -inf
  %6504 = vmax.xlane.f32.xlu0 %v6503
  %v6505 = vpop.xlane.xlu0 %6504
  %v6506 = vsel %vm2237, %v6476, -inf
  %6507 = vmax.xlane.f32.xlu0 %v6506
  %v6508 = vpop.xlane.xlu0 %6507
  %v6509 = vsel %vm2237, %v6477, -inf
  %6510 = vmax.xlane.f32.xlu0 %v6509
  %v6511 = vpop.xlane.xlu0 %6510
  %v6512 = vsel %vm2237, %v6478, -inf
  %6513 = vmax.xlane.f32.xlu0 %v6512
  %v6514 = vpop.xlane.xlu0 %6513
  %v6515 = vsel %vm2237, %v6479, -inf
  %6516 = vmax.xlane.f32.xlu0 %v6515
  %v6517 = vpop.xlane.xlu0 %6516
  %v6518 = vsel %vm2237, %v6480, -inf
  %6519 = vmax.xlane.f32.xlu0 %v6518
  %v6520 = vpop.xlane.xlu0 %6519
  %v6521 = vsel %vm2237, %v6481, -inf
  %6522 = vmax.xlane.f32.xlu0 %v6521
  %v6523 = vpop.xlane.xlu0 %6522
  %v6524 = vsel %vm2237, %v6482, -inf
  %6525 = vmax.xlane.f32.xlu0 %v6524
  %v6526 = vpop.xlane.xlu0 %6525
  %v6527 = vsel %vm2237, %v6483, -inf
  %6528 = vmax.xlane.f32.xlu0 %v6527
  %v6529 = vpop.xlane.xlu0 %6528
  %v6530 = vsel %vm2237, %v6484, -inf
  %6531 = vmax.xlane.f32.xlu0 %v6530
  %v6532 = vpop.xlane.xlu0 %6531
  %v6533 = vsub.f32 %v6469, %v6487
  %v6534 = vsub.f32 %v6470, %v6490
  %v6535 = vsub.f32 %v6471, %v6493
  %v6536 = vsub.f32 %v6472, %v6496
  %v6537 = vsub.f32 %v6473, %v6499
  %v6538 = vsub.f32 %v6474, %v6502
  %v6539 = vsub.f32 %v6475, %v6505
  %v6540 = vsub.f32 %v6476, %v6508
  %v6541 = vsub.f32 %v6477, %v6511
  %v6542 = vsub.f32 %v6478, %v6514
  %v6543 = vsub.f32 %v6479, %v6517
  %v6544 = vsub.f32 %v6480, %v6520
  %v6545 = vsub.f32 %v6481, %v6523
  %v6546 = vsub.f32 %v6482, %v6526
  %v6547 = vsub.f32 %v6483, %v6529
  %v6548 = vsub.f32 %v6484, %v6532
  %v6549 = vmul.f32 %v6533, 1.442695
  %v6550 = vpow.pop %v6549
  %v6551 = vmul.f32 %v6534, 1.442695
  %v6552 = vpow.pop %v6551
  %v6553 = vmul.f32 %v6535, 1.442695
  %v6554 = vpow.pop %v6553
  %v6555 = vmul.f32 %v6536, 1.442695
  %v6556 = vpow.pop %v6555
  %v6557 = vmul.f32 %v6537, 1.442695
  %v6558 = vpow.pop %v6557
  %v6559 = vmul.f32 %v6538, 1.442695
  %v6560 = vpow.pop %v6559
  %v6561 = vmul.f32 %v6539, 1.442695
  %v6562 = vpow.pop %v6561
  %v6563 = vmul.f32 %v6540, 1.442695
  %v6564 = vpow.pop %v6563
  %v6565 = vmul.f32 %v6541, 1.442695
  %v6566 = vpow.pop %v6565
  %v6567 = vmul.f32 %v6542, 1.442695
  %v6568 = vpow.pop %v6567
  %v6569 = vmul.f32 %v6543, 1.442695
  %v6570 = vpow.pop %v6569
  %v6571 = vmul.f32 %v6544, 1.442695
  %v6572 = vpow.pop %v6571
  %v6573 = vmul.f32 %v6545, 1.442695
  %v6574 = vpow.pop %v6573
  %v6575 = vmul.f32 %v6546, 1.442695
  %v6576 = vpow.pop %v6575
  %v6577 = vmul.f32 %v6547, 1.442695
  %v6578 = vpow.pop %v6577
  %v6579 = vmul.f32 %v6548, 1.442695
  %v6580 = vpow.pop %v6579
  %v6581 = vsel %vm2237, %v6550, 0.0
  %6582 = vadd.xlane.f32.xlu0 %v6581
  %v6583 = vpop.xlane.xlu0 %6582
  %v6584 = vsel %vm2237, %v6552, 0.0
  %6585 = vadd.xlane.f32.xlu0 %v6584
  %v6586 = vpop.xlane.xlu0 %6585
  %v6587 = vsel %vm2237, %v6554, 0.0
  %6588 = vadd.xlane.f32.xlu0 %v6587
  %v6589 = vpop.xlane.xlu0 %6588
  %v6590 = vsel %vm2237, %v6556, 0.0
  %6591 = vadd.xlane.f32.xlu0 %v6590
  %v6592 = vpop.xlane.xlu0 %6591
  %v6593 = vsel %vm2237, %v6558, 0.0
  %6594 = vadd.xlane.f32.xlu0 %v6593
  %v6595 = vpop.xlane.xlu0 %6594
  %v6596 = vsel %vm2237, %v6560, 0.0
  %6597 = vadd.xlane.f32.xlu0 %v6596
  %v6598 = vpop.xlane.xlu0 %6597
  %v6599 = vsel %vm2237, %v6562, 0.0
  %6600 = vadd.xlane.f32.xlu0 %v6599
  %v6601 = vpop.xlane.xlu0 %6600
  %v6602 = vsel %vm2237, %v6564, 0.0
  %6603 = vadd.xlane.f32.xlu0 %v6602
  %v6604 = vpop.xlane.xlu0 %6603
  %v6605 = vsel %vm2237, %v6566, 0.0
  %6606 = vadd.xlane.f32.xlu0 %v6605
  %v6607 = vpop.xlane.xlu0 %6606
  %v6608 = vsel %vm2237, %v6568, 0.0
  %6609 = vadd.xlane.f32.xlu0 %v6608
  %v6610 = vpop.xlane.xlu0 %6609
  %v6611 = vsel %vm2237, %v6570, 0.0
  %6612 = vadd.xlane.f32.xlu0 %v6611
  %v6613 = vpop.xlane.xlu0 %6612
  %v6614 = vsel %vm2237, %v6572, 0.0
  %6615 = vadd.xlane.f32.xlu0 %v6614
  %v6616 = vpop.xlane.xlu0 %6615
  %v6617 = vsel %vm2237, %v6574, 0.0
  %6618 = vadd.xlane.f32.xlu0 %v6617
  %v6619 = vpop.xlane.xlu0 %6618
  %v6620 = vsel %vm2237, %v6576, 0.0
  %6621 = vadd.xlane.f32.xlu0 %v6620
  %v6622 = vpop.xlane.xlu0 %6621
  %v6623 = vsel %vm2237, %v6578, 0.0
  %6624 = vadd.xlane.f32.xlu0 %v6623
  %v6625 = vpop.xlane.xlu0 %6624
  %v6626 = vsel %vm2237, %v6580, 0.0
  %6627 = vadd.xlane.f32.xlu0 %v6626
  %v6628 = vpop.xlane.xlu0 %6627
  %v6629 = vlog2.pop %v6583
  %v6630 = vmul.f32 %v6629, 0.6931472
  %v6631 = vlog2.pop %v6586
  %v6632 = vmul.f32 %v6631, 0.6931472
  %v6633 = vlog2.pop %v6589
  %v6634 = vmul.f32 %v6633, 0.6931472
  %v6635 = vlog2.pop %v6592
  %v6636 = vmul.f32 %v6635, 0.6931472
  %v6637 = vlog2.pop %v6595
  %v6638 = vmul.f32 %v6637, 0.6931472
  %v6639 = vlog2.pop %v6598
  %v6640 = vmul.f32 %v6639, 0.6931472
  %v6641 = vlog2.pop %v6601
  %v6642 = vmul.f32 %v6641, 0.6931472
  %v6643 = vlog2.pop %v6604
  %v6644 = vmul.f32 %v6643, 0.6931472
  %v6645 = vlog2.pop %v6607
  %v6646 = vmul.f32 %v6645, 0.6931472
  %v6647 = vlog2.pop %v6610
  %v6648 = vmul.f32 %v6647, 0.6931472
  %v6649 = vlog2.pop %v6613
  %v6650 = vmul.f32 %v6649, 0.6931472
  %v6651 = vlog2.pop %v6616
  %v6652 = vmul.f32 %v6651, 0.6931472
  %v6653 = vlog2.pop %v6619
  %v6654 = vmul.f32 %v6653, 0.6931472
  %v6655 = vlog2.pop %v6622
  %v6656 = vmul.f32 %v6655, 0.6931472
  %v6657 = vlog2.pop %v6625
  %v6658 = vmul.f32 %v6657, 0.6931472
  %v6659 = vlog2.pop %v6628
  %v6660 = vmul.f32 %v6659, 0.6931472
  %v6661 = vadd.f32 %v6487, %v6630
  %v6662 = vadd.f32 %v6490, %v6632
  %v6663 = vadd.f32 %v6493, %v6634
  %v6664 = vadd.f32 %v6496, %v6636
  %v6665 = vadd.f32 %v6499, %v6638
  %v6666 = vadd.f32 %v6502, %v6640
  %v6667 = vadd.f32 %v6505, %v6642
  %v6668 = vadd.f32 %v6508, %v6644
  %v6669 = vadd.f32 %v6511, %v6646
  %v6670 = vadd.f32 %v6514, %v6648
  %v6671 = vadd.f32 %v6517, %v6650
  %v6672 = vadd.f32 %v6520, %v6652
  %v6673 = vadd.f32 %v6523, %v6654
  %v6674 = vadd.f32 %v6526, %v6656
  %v6675 = vadd.f32 %v6529, %v6658
  %v6676 = vadd.f32 %v6532, %v6660
  %vm6677 = vcmp.gt.f32.partialorder %v6041, 0.5
  %vm6678 = vcmp.gt.f32.partialorder %v6042, 0.5
  %v6679 = vsel %vm6677, 1, 0
  %v6680 = vsel %vm6678, 1, 0
  %6681 = vset.pattern.permute.xlu0 0
  %6682 = vperm.xlu0 %6681, %v6679
  %v6683 = vpop.permute.xlu0 %6682
  %6684 = vset.pattern.permute.xlu0 0
  %6685 = vperm.xlu0 %6684, %v6680
  %v6686 = vpop.permute.xlu0 %6685
  %vm6687 = vcmp.eq.s32.totalorder %v6683, 1
  %vm6688 = vcmp.eq.s32.totalorder %v6686, 1
  %v6705 = vlaneseq
  %v6706 = vshrl.u32 %v6705, 7
  %v6707 = vsub.s32 %v2257, %v6706
  %v6708 = vrot.slane %v6661, %v6707
  %v6709 = vlaneseq
  %v6710 = vshrl.u32 %v6709, 7
  %v6711 = vsub.s32 %v2257, %v6710
  %v6712 = vrot.slane %v6662, %v6711
  %v6713 = vlaneseq
  %v6714 = vshrl.u32 %v6713, 7
  %v6715 = vsub.s32 %v2257, %v6714
  %v6716 = vrot.slane %v6663, %v6715
  %v6717 = vlaneseq
  %v6718 = vshrl.u32 %v6717, 7
  %v6719 = vsub.s32 %v2257, %v6718
  %v6720 = vrot.slane %v6664, %v6719
  %v6721 = vlaneseq
  %v6722 = vshrl.u32 %v6721, 7
  %v6723 = vsub.s32 %v2257, %v6722
  %v6724 = vrot.slane %v6665, %v6723
  %v6725 = vlaneseq
  %v6726 = vshrl.u32 %v6725, 7
  %v6727 = vsub.s32 %v2257, %v6726
  %v6728 = vrot.slane %v6666, %v6727
  %v6729 = vlaneseq
  %v6730 = vshrl.u32 %v6729, 7
  %v6731 = vsub.s32 %v2257, %v6730
  %v6732 = vrot.slane %v6667, %v6731
  %v6733 = vlaneseq
  %v6734 = vshrl.u32 %v6733, 7
  %v6735 = vsub.s32 %v2257, %v6734
  %v6736 = vrot.slane %v6668, %v6735
  %v6737 = vlaneseq
  %v6738 = vshrl.u32 %v6737, 7
  %v6739 = vsub.s32 %v2257, %v6738
  %v6740 = vrot.slane %v6669, %v6739
  %v6741 = vlaneseq
  %v6742 = vshrl.u32 %v6741, 7
  %v6743 = vsub.s32 %v2257, %v6742
  %v6744 = vrot.slane %v6670, %v6743
  %v6745 = vlaneseq
  %v6746 = vshrl.u32 %v6745, 7
  %v6747 = vsub.s32 %v2257, %v6746
  %v6748 = vrot.slane %v6671, %v6747
  %v6749 = vlaneseq
  %v6750 = vshrl.u32 %v6749, 7
  %v6751 = vsub.s32 %v2257, %v6750
  %v6752 = vrot.slane %v6672, %v6751
  %v6753 = vlaneseq
  %v6754 = vshrl.u32 %v6753, 7
  %v6755 = vsub.s32 %v2257, %v6754
  %v6756 = vrot.slane %v6673, %v6755
  %v6757 = vlaneseq
  %v6758 = vshrl.u32 %v6757, 7
  %v6759 = vsub.s32 %v2257, %v6758
  %v6760 = vrot.slane %v6674, %v6759
  %v6761 = vlaneseq
  %v6762 = vshrl.u32 %v6761, 7
  %v6763 = vsub.s32 %v2257, %v6762
  %v6764 = vrot.slane %v6675, %v6763
  %v6765 = vlaneseq
  %v6766 = vshrl.u32 %v6765, 7
  %v6767 = vsub.s32 %v2257, %v6766
  %v6768 = vrot.slane %v6676, %v6767
  %v6769 = vsel %vm3017, %v6712, %v6708
  %v6770 = vsel %vm3019, %v6716, %v6769
  %v6771 = vsel %vm3021, %v6720, %v6770
  %v6772 = vsel %vm3023, %v6724, %v6771
  %v6773 = vsel %vm3025, %v6728, %v6772
  %v6774 = vsel %vm3027, %v6732, %v6773
  %v6775 = vsel %vm3029, %v6736, %v6774
  %v6776 = vsel %vm3017, %v6744, %v6740
  %v6777 = vsel %vm3019, %v6748, %v6776
  %v6778 = vsel %vm3021, %v6752, %v6777
  %v6779 = vsel %vm3023, %v6756, %v6778
  %v6780 = vsel %vm3025, %v6760, %v6779
  %v6781 = vsel %vm3027, %v6764, %v6780
  %v6782 = vsel %vm3029, %v6768, %v6781
  %v6785 = vsel %vm6687, %v6775, %v6036
  %v6786 = vsel %vm6688, %v6782, %v6037
  %s6787 = scalar_lea.vmem [#allocation4], 112
  %v6788 = vld [vmem:[%s6787] sm:$0xff]
  %v6789 = vld [vmem:[%s6787 + $0x8] sm:$0xff]
  %v6790 = vld [vmem:[%s312] sm:$0xff]
  %v6791 = vld [vmem:[%s312 + $0x8] sm:$0xff]
  %s6792 = scalar_lea.vmem %s2, 112
  %v6793 = vld [vmem:[%s6792] sm:$0xff]
  %v6794 = vld [vmem:[%s6792 + $0x8] sm:$0xff]
  %6795 = vset.pattern.permute.xlu0 0
  %6796 = vperm.xlu0 %6795, %v6793
  %v6797 = vpop.permute.xlu0 %6796
  %6798 = vset.pattern.permute.xlu0 0
  %6799 = vperm.xlu0 %6798, %v6794
  %v6800 = vpop.permute.xlu0 %6799
  %vm6801 = vcmp.eq.s32.totalorder %v6797, %v2257
  %vm6802 = vcmp.eq.s32.totalorder %v6800, %v2257
  %v6803 = vsel %vm6801, 1, 0
  %v6804 = vsel %vm6802, 1, 0
  %v6805 = vcvt.s32.f32 %v6803
  %v6806 = vcvt.s32.f32 %v6804
  %v6807 = vmul.f32 %v6788, %v6805
  %v6808 = vmul.f32 %v6789, %v6806
  %v6809 = vsel %vm2237, %v6807, 0.0
  %6810 = vadd.xlane.f32.xlu0 %v6809
  %v6811 = vpop.xlane.xlu0 %6810
  %v6812 = vsel %vm2237, %v6808, 0.0
  %6813 = vadd.xlane.f32.xlu0 %v6812
  %v6814 = vpop.xlane.xlu0 %6813
  %v6816 = vsel %vm2237, %v6056, 0
  %v6819 = vsel %vm2237, %v6057, 0
  %6821 = vmatprep.subr.mxu0 0.0
  %6822 = vmatpush1.msra.mxu0 %v2254
  %6823 = vmatprep.subr.mxu0 0.0
  %6824 = vmatpush1.msra.mxu0 0.0
  %6825 = vmatprep.subr.mxu0 0.0
  %6826 = vmatpush1.msra.mxu0 0.0
  %6827 = vmatprep.subr.mxu0 0.0
  %6828 = vmatpush1.msra.mxu0 0.0
  %6829 = vmatprep.subr.mxu0 0.0
  %6830 = vmatpush1.msra.mxu0 0.0
  %6831 = vmatprep.subr.mxu0 0.0
  %6832 = vmatpush1.msra.mxu0 0.0
  %6833 = vmatprep.subr.mxu0 0.0
  %6834 = vmatpush1.msra.mxu0 0.0
  %6835 = vmatprep.subr.mxu0 0.0
  %6836 = vmatpush1.msra.mxu0 0.0
  %6837 = vmatprep.subr.mxu0 0.0
  %6838 = vmatpush1.msra.mxu0 0.0
  %6839 = vmatprep.subr.mxu0 0.0
  %6840 = vmatpush1.msra.mxu0 0.0
  %6841 = vmatprep.subr.mxu0 0.0
  %6842 = vmatpush1.msra.mxu0 0.0
  %6843 = vmatprep.subr.mxu0 0.0
  %6844 = vmatpush1.msra.mxu0 0.0
  %6845 = vmatprep.subr.mxu0 0.0
  %6846 = vmatpush1.msra.mxu0 0.0
  %6847 = vmatprep.subr.mxu0 0.0
  %6848 = vmatpush1.msra.mxu0 0.0
  %6849 = vmatprep.subr.mxu0 0.0
  %6850 = vmatpush1.msra.mxu0 0.0
  %6851 = vmatprep.subr.mxu0 0.0
  %6852 = vmatpush1.msra.mxu0 0.0
  %6853 = vmatprep.subr.mxu0 0.0
  %6854 = vmatpush1.msra.mxu0 0.0
  %6855 = vmatprep.subr.mxu0 0.0
  %6856 = vmatpush1.msra.mxu0 0.0
  %6857 = vmatprep.subr.mxu0 0.0
  %6858 = vmatpush1.msra.mxu0 0.0
  %6859 = vmatprep.subr.mxu0 0.0
  %6860 = vmatpush1.msra.mxu0 0.0
  %6861 = vmatprep.subr.mxu0 0.0
  %6862 = vmatpush1.msra.mxu0 0.0
  %6863 = vmatprep.subr.mxu0 0.0
  %6864 = vmatpush1.msra.mxu0 0.0
  %6865 = vmatprep.subr.mxu0 0.0
  %6866 = vmatpush1.msra.mxu0 0.0
  %6867 = vmatprep.subr.mxu0 0.0
  %6868 = vmatpush1.msra.mxu0 0.0
  %6869 = vmatprep.subr.mxu0 0.0
  %6870 = vmatpush1.msra.mxu0 0.0
  %6871 = vmatprep.subr.mxu0 0.0
  %6872 = vmatpush1.msra.mxu0 0.0
  %6873 = vmatprep.subr.mxu0 0.0
  %6874 = vmatpush1.msra.mxu0 0.0
  %6875 = vmatprep.subr.mxu0 0.0
  %6876 = vmatpush1.msra.mxu0 0.0
  %6877 = vmatprep.subr.mxu0 0.0
  %6878 = vmatpush1.msra.mxu0 0.0
  %6879 = vmatprep.subr.mxu0 0.0
  %6880 = vmatpush1.msra.mxu0 0.0
  %6881 = vmatprep.subr.mxu0 0.0
  %6882 = vmatpush1.msra.mxu0 0.0
  %6883 = vmatprep.subr.mxu0 0.0
  %6884 = vmatpush1.msra.mxu0 0.0
  %6885 = vmatprep.mubr.f32.mxu0 0.0
  %6886 = vmatmul.mubr.f32.gmra.mrb[0].mxu0 %v6816
  %v6887 = vpop.f32.mrb[0].mxu0
  %v6888 = vadd.f32 0.0, %v6887
  %v6889 = vpop.f32.mrb[0].mxu0
  %6890 = vmatprep.mubr.f32.mxu0 0.0
  %6891 = vmatmul.mubr.f32.gmra.mrb[0].mxu0 %v6819
  %v6892 = vpop.f32.mrb[0].mxu0
  %v6893 = vadd.f32 0.0, %v6892
  %v6894 = vpop.f32.mrb[0].mxu0
  %6895 = vdwg.mxu0
  %v6896 = vmul.f32 %v6888, %v6805
  %v6897 = vmul.f32 %v6893, %v6806
  %v6898 = vsel %vm2237, %v6896, 0.0
  %6899 = vadd.xlane.f32.xlu0 %v6898
  %v6900 = vpop.xlane.xlu0 %6899
  %v6901 = vsel %vm2237, %v6897, 0.0
  %6902 = vadd.xlane.f32.xlu0 %v6901
  %v6903 = vpop.xlane.xlu0 %6902
  %v6904 = vadd.f32 %v6811, %v6900
  %v6905 = vadd.f32 %v6814, %v6903
  %v6906 = vmul.f32 %v6904, %v6790
  %v6907 = vmul.f32 %v6905, %v6791
  %v6908 = vadd.f32 %v6159, %v6906
  %v6909 = vadd.f32 %v6160, %v6907
  %v6912 = vcombine.high %v6785, %v6785
  %v6914 = vunpack.c.l.s4 1966171168
  %v6915 = vunpack.c.0.s8 %v6914
  %v6916 = vlaneseq
  %v6917 = vshrl.u32 %v6916, 7
  %v6918 = vsub.s32 %v6915, %v6917
  %v6919 = vrot.slane %v6785, %v6918
  %v6921 = vunpack.c.l.s4 1966171168
  %v6922 = vunpack.c.0.s8 %v6921
  %v6923 = vlaneseq
  %v6924 = vshrl.u32 %v6923, 7
  %v6925 = vsub.s32 %v6922, %v6924
  %v6926 = vrot.slane %v6912, %v6925
  %v6927 = vcombine.high %v6919, %v6919
  %v6928 = vcombine.high %v6926, %v6926
  %v6930 = vunpack.c.l.s4 1966171168
  %v6931 = vunpack.c.0.s8 %v6930
  %v6932 = vlaneseq
  %v6933 = vshrl.u32 %v6932, 7
  %v6934 = vsub.s32 %v6931, %v6933
  %v6935 = vrot.slane %v6919, %v6934
  %v6937 = vunpack.c.l.s4 1966171168
  %v6938 = vunpack.c.0.s8 %v6937
  %v6939 = vlaneseq
  %v6940 = vshrl.u32 %v6939, 7
  %v6941 = vsub.s32 %v6938, %v6940
  %v6942 = vrot.slane %v6926, %v6941
  %v6944 = vunpack.c.l.s4 1966171168
  %v6945 = vunpack.c.0.s8 %v6944
  %v6946 = vlaneseq
  %v6947 = vshrl.u32 %v6946, 7
  %v6948 = vsub.s32 %v6945, %v6947
  %v6949 = vrot.slane %v6927, %v6948
  %v6951 = vunpack.c.l.s4 1966171168
  %v6952 = vunpack.c.0.s8 %v6951
  %v6953 = vlaneseq
  %v6954 = vshrl.u32 %v6953, 7
  %v6955 = vsub.s32 %v6952, %v6954
  %v6956 = vrot.slane %v6928, %v6955
  %v6957 = vcombine.high %v6935, %v6935
  %v6958 = vcombine.high %v6942, %v6942
  %v6959 = vcombine.high %v6949, %v6949
  %v6960 = vcombine.high %v6956, %v6956
  %v6961 = vcombine.high %v6786, %v6786
  %v6963 = vunpack.c.l.s4 1966171168
  %v6964 = vunpack.c.0.s8 %v6963
  %v6965 = vlaneseq
  %v6966 = vshrl.u32 %v6965, 7
  %v6967 = vsub.s32 %v6964, %v6966
  %v6968 = vrot.slane %v6786, %v6967
  %v6970 = vunpack.c.l.s4 1966171168
  %v6971 = vunpack.c.0.s8 %v6970
  %v6972 = vlaneseq
  %v6973 = vshrl.u32 %v6972, 7
  %v6974 = vsub.s32 %v6971, %v6973
  %v6975 = vrot.slane %v6961, %v6974
  %v6976 = vcombine.high %v6968, %v6968
  %v6977 = vcombine.high %v6975, %v6975
  %v6979 = vunpack.c.l.s4 1966171168
  %v6980 = vunpack.c.0.s8 %v6979
  %v6981 = vlaneseq
  %v6982 = vshrl.u32 %v6981, 7
  %v6983 = vsub.s32 %v6980, %v6982
  %v6984 = vrot.slane %v6968, %v6983
  %v6986 = vunpack.c.l.s4 1966171168
  %v6987 = vunpack.c.0.s8 %v6986
  %v6988 = vlaneseq
  %v6989 = vshrl.u32 %v6988, 7
  %v6990 = vsub.s32 %v6987, %v6989
  %v6991 = vrot.slane %v6975, %v6990
  %v6993 = vunpack.c.l.s4 1966171168
  %v6994 = vunpack.c.0.s8 %v6993
  %v6995 = vlaneseq
  %v6996 = vshrl.u32 %v6995, 7
  %v6997 = vsub.s32 %v6994, %v6996
  %v6998 = vrot.slane %v6976, %v6997
  %v7000 = vunpack.c.l.s4 1966171168
  %v7001 = vunpack.c.0.s8 %v7000
  %v7002 = vlaneseq
  %v7003 = vshrl.u32 %v7002, 7
  %v7004 = vsub.s32 %v7001, %v7003
  %v7005 = vrot.slane %v6977, %v7004
  %v7006 = vcombine.high %v6984, %v6984
  %v7007 = vcombine.high %v6991, %v6991
  %v7008 = vcombine.high %v6998, %v6998
  %v7009 = vcombine.high %v7005, %v7005
  %v7010 = vlaneseq
  %v7011 = vshrl.u32 %v7010, 7
  %v7012 = vsub.s32 0, %v7011
  %v7013 = vrot.slane %v6935, %v7012
  %v7014 = vlaneseq
  %v7015 = vshrl.u32 %v7014, 7
  %v7016 = vsub.s32 0, %v7015
  %v7017 = vrot.slane %v6949, %v7016
  %v7018 = vlaneseq
  %v7019 = vshrl.u32 %v7018, 7
  %v7020 = vsub.s32 0, %v7019
  %v7021 = vrot.slane %v6957, %v7020
  %v7022 = vlaneseq
  %v7023 = vshrl.u32 %v7022, 7
  %v7024 = vsub.s32 0, %v7023
  %v7025 = vrot.slane %v6959, %v7024
  %v7026 = vlaneseq
  %v7027 = vshrl.u32 %v7026, 7
  %v7028 = vsub.s32 0, %v7027
  %v7029 = vrot.slane %v6942, %v7028
  %v7030 = vlaneseq
  %v7031 = vshrl.u32 %v7030, 7
  %v7032 = vsub.s32 0, %v7031
  %v7033 = vrot.slane %v6956, %v7032
  %v7034 = vlaneseq
  %v7035 = vshrl.u32 %v7034, 7
  %v7036 = vsub.s32 0, %v7035
  %v7037 = vrot.slane %v6958, %v7036
  %v7038 = vlaneseq
  %v7039 = vshrl.u32 %v7038, 7
  %v7040 = vsub.s32 0, %v7039
  %v7041 = vrot.slane %v6960, %v7040
  %v7042 = vlaneseq
  %v7043 = vshrl.u32 %v7042, 7
  %v7044 = vsub.s32 0, %v7043
  %v7045 = vrot.slane %v6984, %v7044
  %v7046 = vlaneseq
  %v7047 = vshrl.u32 %v7046, 7
  %v7048 = vsub.s32 0, %v7047
  %v7049 = vrot.slane %v6998, %v7048
  %v7050 = vlaneseq
  %v7051 = vshrl.u32 %v7050, 7
  %v7052 = vsub.s32 0, %v7051
  %v7053 = vrot.slane %v7006, %v7052
  %v7054 = vlaneseq
  %v7055 = vshrl.u32 %v7054, 7
  %v7056 = vsub.s32 0, %v7055
  %v7057 = vrot.slane %v7008, %v7056
  %v7058 = vlaneseq
  %v7059 = vshrl.u32 %v7058, 7
  %v7060 = vsub.s32 0, %v7059
  %v7061 = vrot.slane %v6991, %v7060
  %v7062 = vlaneseq
  %v7063 = vshrl.u32 %v7062, 7
  %v7064 = vsub.s32 0, %v7063
  %v7065 = vrot.slane %v7005, %v7064
  %v7066 = vlaneseq
  %v7067 = vshrl.u32 %v7066, 7
  %v7068 = vsub.s32 0, %v7067
  %v7069 = vrot.slane %v7007, %v7068
  %v7070 = vlaneseq
  %v7071 = vshrl.u32 %v7070, 7
  %v7072 = vsub.s32 0, %v7071
  %v7073 = vrot.slane %v7009, %v7072
  %v7090 = vadd.f32 %v7013, %v2255
  %v7091 = vadd.f32 %v7017, %v2255
  %v7092 = vadd.f32 %v7021, %v2255
  %v7093 = vadd.f32 %v7025, %v2255
  %v7094 = vadd.f32 %v7029, %v2255
  %v7095 = vadd.f32 %v7033, %v2255
  %v7096 = vadd.f32 %v7037, %v2255
  %v7097 = vadd.f32 %v7041, %v2255
  %v7098 = vadd.f32 %v7045, %v2255
  %v7099 = vadd.f32 %v7049, %v2255
  %v7100 = vadd.f32 %v7053, %v2255
  %v7101 = vadd.f32 %v7057, %v2255
  %v7102 = vadd.f32 %v7061, %v2255
  %v7103 = vadd.f32 %v7065, %v2255
  %v7104 = vadd.f32 %v7069, %v2255
  %v7105 = vadd.f32 %v7073, %v2255
  %v7106 = vlaneseq
  %v7107 = vshrl.u32 %v7106, 7
  %v7108 = vsub.s32 0, %v7107
  %v7109 = vrot.slane %v6788, %v7108
  %7111 = vbcast.lane.b32.xlu0 %v7109, 256
  %v7112 = vpop.permute.xlu0 %7111
  %v7113 = vlaneseq
  %v7114 = vshrl.u32 %v7113, 7
  %v7115 = vsub.s32 1, %v7114
  %v7116 = vrot.slane %v6788, %v7115
  %7118 = vbcast.lane.b32.xlu0 %v7116, 256
  %v7119 = vpop.permute.xlu0 %7118
  %v7120 = vlaneseq
  %v7121 = vshrl.u32 %v7120, 7
  %v7122 = vsub.s32 2, %v7121
  %v7123 = vrot.slane %v6788, %v7122
  %7125 = vbcast.lane.b32.xlu0 %v7123, 256
  %v7126 = vpop.permute.xlu0 %7125
  %v7127 = vlaneseq
  %v7128 = vshrl.u32 %v7127, 7
  %v7129 = vsub.s32 3, %v7128
  %v7130 = vrot.slane %v6788, %v7129
  %7132 = vbcast.lane.b32.xlu0 %v7130, 256
  %v7133 = vpop.permute.xlu0 %7132
  %v7134 = vlaneseq
  %v7135 = vshrl.u32 %v7134, 7
  %v7136 = vsub.s32 4, %v7135
  %v7137 = vrot.slane %v6788, %v7136
  %7139 = vbcast.lane.b32.xlu0 %v7137, 256
  %v7140 = vpop.permute.xlu0 %7139
  %v7141 = vlaneseq
  %v7142 = vshrl.u32 %v7141, 7
  %v7143 = vsub.s32 5, %v7142
  %v7144 = vrot.slane %v6788, %v7143
  %7146 = vbcast.lane.b32.xlu0 %v7144, 256
  %v7147 = vpop.permute.xlu0 %7146
  %v7148 = vlaneseq
  %v7149 = vshrl.u32 %v7148, 7
  %v7150 = vsub.s32 6, %v7149
  %v7151 = vrot.slane %v6788, %v7150
  %7153 = vbcast.lane.b32.xlu0 %v7151, 256
  %v7154 = vpop.permute.xlu0 %7153
  %v7155 = vlaneseq
  %v7156 = vshrl.u32 %v7155, 7
  %v7157 = vsub.s32 7, %v7156
  %v7158 = vrot.slane %v6788, %v7157
  %7160 = vbcast.lane.b32.xlu0 %v7158, 256
  %v7161 = vpop.permute.xlu0 %7160
  %v7162 = vlaneseq
  %v7163 = vshrl.u32 %v7162, 7
  %v7164 = vsub.s32 0, %v7163
  %v7165 = vrot.slane %v6789, %v7164
  %7167 = vbcast.lane.b32.xlu0 %v7165, 256
  %v7168 = vpop.permute.xlu0 %7167
  %v7169 = vlaneseq
  %v7170 = vshrl.u32 %v7169, 7
  %v7171 = vsub.s32 1, %v7170
  %v7172 = vrot.slane %v6789, %v7171
  %7174 = vbcast.lane.b32.xlu0 %v7172, 256
  %v7175 = vpop.permute.xlu0 %7174
  %v7176 = vlaneseq
  %v7177 = vshrl.u32 %v7176, 7
  %v7178 = vsub.s32 2, %v7177
  %v7179 = vrot.slane %v6789, %v7178
  %7181 = vbcast.lane.b32.xlu0 %v7179, 256
  %v7182 = vpop.permute.xlu0 %7181
  %v7183 = vlaneseq
  %v7184 = vshrl.u32 %v7183, 7
  %v7185 = vsub.s32 3, %v7184
  %v7186 = vrot.slane %v6789, %v7185
  %7188 = vbcast.lane.b32.xlu0 %v7186, 256
  %v7189 = vpop.permute.xlu0 %7188
  %v7190 = vlaneseq
  %v7191 = vshrl.u32 %v7190, 7
  %v7192 = vsub.s32 4, %v7191
  %v7193 = vrot.slane %v6789, %v7192
  %7195 = vbcast.lane.b32.xlu0 %v7193, 256
  %v7196 = vpop.permute.xlu0 %7195
  %v7197 = vlaneseq
  %v7198 = vshrl.u32 %v7197, 7
  %v7199 = vsub.s32 5, %v7198
  %v7200 = vrot.slane %v6789, %v7199
  %7202 = vbcast.lane.b32.xlu0 %v7200, 256
  %v7203 = vpop.permute.xlu0 %7202
  %v7204 = vlaneseq
  %v7205 = vshrl.u32 %v7204, 7
  %v7206 = vsub.s32 6, %v7205
  %v7207 = vrot.slane %v6789, %v7206
  %7209 = vbcast.lane.b32.xlu0 %v7207, 256
  %v7210 = vpop.permute.xlu0 %7209
  %v7211 = vlaneseq
  %v7212 = vshrl.u32 %v7211, 7
  %v7213 = vsub.s32 7, %v7212
  %v7214 = vrot.slane %v6789, %v7213
  %7216 = vbcast.lane.b32.xlu0 %v7214, 256
  %v7217 = vpop.permute.xlu0 %7216
  %v7218 = vadd.f32 %v7090, %v7112
  %v7219 = vadd.f32 %v7091, %v7119
  %v7220 = vadd.f32 %v7092, %v7126
  %v7221 = vadd.f32 %v7093, %v7133
  %v7222 = vadd.f32 %v7094, %v7140
  %v7223 = vadd.f32 %v7095, %v7147
  %v7224 = vadd.f32 %v7096, %v7154
  %v7225 = vadd.f32 %v7097, %v7161
  %v7226 = vadd.f32 %v7098, %v7168
  %v7227 = vadd.f32 %v7099, %v7175
  %v7228 = vadd.f32 %v7100, %v7182
  %v7229 = vadd.f32 %v7101, %v7189
  %v7230 = vadd.f32 %v7102, %v7196
  %v7231 = vadd.f32 %v7103, %v7203
  %v7232 = vadd.f32 %v7104, %v7210
  %v7233 = vadd.f32 %v7105, %v7217
  %v7234 = vsel %vm2237, %v7218, -inf
  %7235 = vmax.xlane.f32.xlu0 %v7234
  %v7236 = vpop.xlane.xlu0 %7235
  %v7237 = vsel %vm2237, %v7219, -inf
  %7238 = vmax.xlane.f32.xlu0 %v7237
  %v7239 = vpop.xlane.xlu0 %7238
  %v7240 = vsel %vm2237, %v7220, -inf
  %7241 = vmax.xlane.f32.xlu0 %v7240
  %v7242 = vpop.xlane.xlu0 %7241
  %v7243 = vsel %vm2237, %v7221, -inf
  %7244 = vmax.xlane.f32.xlu0 %v7243
  %v7245 = vpop.xlane.xlu0 %7244
  %v7246 = vsel %vm2237, %v7222, -inf
  %7247 = vmax.xlane.f32.xlu0 %v7246
  %v7248 = vpop.xlane.xlu0 %7247
  %v7249 = vsel %vm2237, %v7223, -inf
  %7250 = vmax.xlane.f32.xlu0 %v7249
  %v7251 = vpop.xlane.xlu0 %7250
  %v7252 = vsel %vm2237, %v7224, -inf
  %7253 = vmax.xlane.f32.xlu0 %v7252
  %v7254 = vpop.xlane.xlu0 %7253
  %v7255 = vsel %vm2237, %v7225, -inf
  %7256 = vmax.xlane.f32.xlu0 %v7255
  %v7257 = vpop.xlane.xlu0 %7256
  %v7258 = vsel %vm2237, %v7226, -inf
  %7259 = vmax.xlane.f32.xlu0 %v7258
  %v7260 = vpop.xlane.xlu0 %7259
  %v7261 = vsel %vm2237, %v7227, -inf
  %7262 = vmax.xlane.f32.xlu0 %v7261
  %v7263 = vpop.xlane.xlu0 %7262
  %v7264 = vsel %vm2237, %v7228, -inf
  %7265 = vmax.xlane.f32.xlu0 %v7264
  %v7266 = vpop.xlane.xlu0 %7265
  %v7267 = vsel %vm2237, %v7229, -inf
  %7268 = vmax.xlane.f32.xlu0 %v7267
  %v7269 = vpop.xlane.xlu0 %7268
  %v7270 = vsel %vm2237, %v7230, -inf
  %7271 = vmax.xlane.f32.xlu0 %v7270
  %v7272 = vpop.xlane.xlu0 %7271
  %v7273 = vsel %vm2237, %v7231, -inf
  %7274 = vmax.xlane.f32.xlu0 %v7273
  %v7275 = vpop.xlane.xlu0 %7274
  %v7276 = vsel %vm2237, %v7232, -inf
  %7277 = vmax.xlane.f32.xlu0 %v7276
  %v7278 = vpop.xlane.xlu0 %7277
  %v7279 = vsel %vm2237, %v7233, -inf
  %7280 = vmax.xlane.f32.xlu0 %v7279
  %v7281 = vpop.xlane.xlu0 %7280
  %v7282 = vsub.f32 %v7218, %v7236
  %v7283 = vsub.f32 %v7219, %v7239
  %v7284 = vsub.f32 %v7220, %v7242
  %v7285 = vsub.f32 %v7221, %v7245
  %v7286 = vsub.f32 %v7222, %v7248
  %v7287 = vsub.f32 %v7223, %v7251
  %v7288 = vsub.f32 %v7224, %v7254
  %v7289 = vsub.f32 %v7225, %v7257
  %v7290 = vsub.f32 %v7226, %v7260
  %v7291 = vsub.f32 %v7227, %v7263
  %v7292 = vsub.f32 %v7228, %v7266
  %v7293 = vsub.f32 %v7229, %v7269
  %v7294 = vsub.f32 %v7230, %v7272
  %v7295 = vsub.f32 %v7231, %v7275
  %v7296 = vsub.f32 %v7232, %v7278
  %v7297 = vsub.f32 %v7233, %v7281
  %v7298 = vmul.f32 %v7282, 1.442695
  %v7299 = vpow.pop %v7298
  %v7300 = vmul.f32 %v7283, 1.442695
  %v7301 = vpow.pop %v7300
  %v7302 = vmul.f32 %v7284, 1.442695
  %v7303 = vpow.pop %v7302
  %v7304 = vmul.f32 %v7285, 1.442695
  %v7305 = vpow.pop %v7304
  %v7306 = vmul.f32 %v7286, 1.442695
  %v7307 = vpow.pop %v7306
  %v7308 = vmul.f32 %v7287, 1.442695
  %v7309 = vpow.pop %v7308
  %v7310 = vmul.f32 %v7288, 1.442695
  %v7311 = vpow.pop %v7310
  %v7312 = vmul.f32 %v7289, 1.442695
  %v7313 = vpow.pop %v7312
  %v7314 = vmul.f32 %v7290, 1.442695
  %v7315 = vpow.pop %v7314
  %v7316 = vmul.f32 %v7291, 1.442695
  %v7317 = vpow.pop %v7316
  %v7318 = vmul.f32 %v7292, 1.442695
  %v7319 = vpow.pop %v7318
  %v7320 = vmul.f32 %v7293, 1.442695
  %v7321 = vpow.pop %v7320
  %v7322 = vmul.f32 %v7294, 1.442695
  %v7323 = vpow.pop %v7322
  %v7324 = vmul.f32 %v7295, 1.442695
  %v7325 = vpow.pop %v7324
  %v7326 = vmul.f32 %v7296, 1.442695
  %v7327 = vpow.pop %v7326
  %v7328 = vmul.f32 %v7297, 1.442695
  %v7329 = vpow.pop %v7328
  %v7330 = vsel %vm2237, %v7299, 0.0
  %7331 = vadd.xlane.f32.xlu0 %v7330
  %v7332 = vpop.xlane.xlu0 %7331
  %v7333 = vsel %vm2237, %v7301, 0.0
  %7334 = vadd.xlane.f32.xlu0 %v7333
  %v7335 = vpop.xlane.xlu0 %7334
  %v7336 = vsel %vm2237, %v7303, 0.0
  %7337 = vadd.xlane.f32.xlu0 %v7336
  %v7338 = vpop.xlane.xlu0 %7337
  %v7339 = vsel %vm2237, %v7305, 0.0
  %7340 = vadd.xlane.f32.xlu0 %v7339
  %v7341 = vpop.xlane.xlu0 %7340
  %v7342 = vsel %vm2237, %v7307, 0.0
  %7343 = vadd.xlane.f32.xlu0 %v7342
  %v7344 = vpop.xlane.xlu0 %7343
  %v7345 = vsel %vm2237, %v7309, 0.0
  %7346 = vadd.xlane.f32.xlu0 %v7345
  %v7347 = vpop.xlane.xlu0 %7346
  %v7348 = vsel %vm2237, %v7311, 0.0
  %7349 = vadd.xlane.f32.xlu0 %v7348
  %v7350 = vpop.xlane.xlu0 %7349
  %v7351 = vsel %vm2237, %v7313, 0.0
  %7352 = vadd.xlane.f32.xlu0 %v7351
  %v7353 = vpop.xlane.xlu0 %7352
  %v7354 = vsel %vm2237, %v7315, 0.0
  %7355 = vadd.xlane.f32.xlu0 %v7354
  %v7356 = vpop.xlane.xlu0 %7355
  %v7357 = vsel %vm2237, %v7317, 0.0
  %7358 = vadd.xlane.f32.xlu0 %v7357
  %v7359 = vpop.xlane.xlu0 %7358
  %v7360 = vsel %vm2237, %v7319, 0.0
  %7361 = vadd.xlane.f32.xlu0 %v7360
  %v7362 = vpop.xlane.xlu0 %7361
  %v7363 = vsel %vm2237, %v7321, 0.0
  %7364 = vadd.xlane.f32.xlu0 %v7363
  %v7365 = vpop.xlane.xlu0 %7364
  %v7366 = vsel %vm2237, %v7323, 0.0
  %7367 = vadd.xlane.f32.xlu0 %v7366
  %v7368 = vpop.xlane.xlu0 %7367
  %v7369 = vsel %vm2237, %v7325, 0.0
  %7370 = vadd.xlane.f32.xlu0 %v7369
  %v7371 = vpop.xlane.xlu0 %7370
  %v7372 = vsel %vm2237, %v7327, 0.0
  %7373 = vadd.xlane.f32.xlu0 %v7372
  %v7374 = vpop.xlane.xlu0 %7373
  %v7375 = vsel %vm2237, %v7329, 0.0
  %7376 = vadd.xlane.f32.xlu0 %v7375
  %v7377 = vpop.xlane.xlu0 %7376
  %v7378 = vlog2.pop %v7332
  %v7379 = vmul.f32 %v7378, 0.6931472
  %v7380 = vlog2.pop %v7335
  %v7381 = vmul.f32 %v7380, 0.6931472
  %v7382 = vlog2.pop %v7338
  %v7383 = vmul.f32 %v7382, 0.6931472
  %v7384 = vlog2.pop %v7341
  %v7385 = vmul.f32 %v7384, 0.6931472
  %v7386 = vlog2.pop %v7344
  %v7387 = vmul.f32 %v7386, 0.6931472
  %v7388 = vlog2.pop %v7347
  %v7389 = vmul.f32 %v7388, 0.6931472
  %v7390 = vlog2.pop %v7350
  %v7391 = vmul.f32 %v7390, 0.6931472
  %v7392 = vlog2.pop %v7353
  %v7393 = vmul.f32 %v7392, 0.6931472
  %v7394 = vlog2.pop %v7356
  %v7395 = vmul.f32 %v7394, 0.6931472
  %v7396 = vlog2.pop %v7359
  %v7397 = vmul.f32 %v7396, 0.6931472
  %v7398 = vlog2.pop %v7362
  %v7399 = vmul.f32 %v7398, 0.6931472
  %v7400 = vlog2.pop %v7365
  %v7401 = vmul.f32 %v7400, 0.6931472
  %v7402 = vlog2.pop %v7368
  %v7403 = vmul.f32 %v7402, 0.6931472
  %v7404 = vlog2.pop %v7371
  %v7405 = vmul.f32 %v7404, 0.6931472
  %v7406 = vlog2.pop %v7374
  %v7407 = vmul.f32 %v7406, 0.6931472
  %v7408 = vlog2.pop %v7377
  %v7409 = vmul.f32 %v7408, 0.6931472
  %v7410 = vadd.f32 %v7236, %v7379
  %v7411 = vadd.f32 %v7239, %v7381
  %v7412 = vadd.f32 %v7242, %v7383
  %v7413 = vadd.f32 %v7245, %v7385
  %v7414 = vadd.f32 %v7248, %v7387
  %v7415 = vadd.f32 %v7251, %v7389
  %v7416 = vadd.f32 %v7254, %v7391
  %v7417 = vadd.f32 %v7257, %v7393
  %v7418 = vadd.f32 %v7260, %v7395
  %v7419 = vadd.f32 %v7263, %v7397
  %v7420 = vadd.f32 %v7266, %v7399
  %v7421 = vadd.f32 %v7269, %v7401
  %v7422 = vadd.f32 %v7272, %v7403
  %v7423 = vadd.f32 %v7275, %v7405
  %v7424 = vadd.f32 %v7278, %v7407
  %v7425 = vadd.f32 %v7281, %v7409
  %vm7426 = vcmp.gt.f32.partialorder %v6790, 0.5
  %vm7427 = vcmp.gt.f32.partialorder %v6791, 0.5
  %v7428 = vsel %vm7426, 1, 0
  %v7429 = vsel %vm7427, 1, 0
  %7430 = vset.pattern.permute.xlu0 0
  %7431 = vperm.xlu0 %7430, %v7428
  %v7432 = vpop.permute.xlu0 %7431
  %7433 = vset.pattern.permute.xlu0 0
  %7434 = vperm.xlu0 %7433, %v7429
  %v7435 = vpop.permute.xlu0 %7434
  %vm7436 = vcmp.eq.s32.totalorder %v7432, 1
  %vm7437 = vcmp.eq.s32.totalorder %v7435, 1
  %v7454 = vlaneseq
  %v7455 = vshrl.u32 %v7454, 7
  %v7456 = vsub.s32 %v2257, %v7455
  %v7457 = vrot.slane %v7410, %v7456
  %v7458 = vlaneseq
  %v7459 = vshrl.u32 %v7458, 7
  %v7460 = vsub.s32 %v2257, %v7459
  %v7461 = vrot.slane %v7411, %v7460
  %v7462 = vlaneseq
  %v7463 = vshrl.u32 %v7462, 7
  %v7464 = vsub.s32 %v2257, %v7463
  %v7465 = vrot.slane %v7412, %v7464
  %v7466 = vlaneseq
  %v7467 = vshrl.u32 %v7466, 7
  %v7468 = vsub.s32 %v2257, %v7467
  %v7469 = vrot.slane %v7413, %v7468
  %v7470 = vlaneseq
  %v7471 = vshrl.u32 %v7470, 7
  %v7472 = vsub.s32 %v2257, %v7471
  %v7473 = vrot.slane %v7414, %v7472
  %v7474 = vlaneseq
  %v7475 = vshrl.u32 %v7474, 7
  %v7476 = vsub.s32 %v2257, %v7475
  %v7477 = vrot.slane %v7415, %v7476
  %v7478 = vlaneseq
  %v7479 = vshrl.u32 %v7478, 7
  %v7480 = vsub.s32 %v2257, %v7479
  %v7481 = vrot.slane %v7416, %v7480
  %v7482 = vlaneseq
  %v7483 = vshrl.u32 %v7482, 7
  %v7484 = vsub.s32 %v2257, %v7483
  %v7485 = vrot.slane %v7417, %v7484
  %v7486 = vlaneseq
  %v7487 = vshrl.u32 %v7486, 7
  %v7488 = vsub.s32 %v2257, %v7487
  %v7489 = vrot.slane %v7418, %v7488
  %v7490 = vlaneseq
  %v7491 = vshrl.u32 %v7490, 7
  %v7492 = vsub.s32 %v2257, %v7491
  %v7493 = vrot.slane %v7419, %v7492
  %v7494 = vlaneseq
  %v7495 = vshrl.u32 %v7494, 7
  %v7496 = vsub.s32 %v2257, %v7495
  %v7497 = vrot.slane %v7420, %v7496
  %v7498 = vlaneseq
  %v7499 = vshrl.u32 %v7498, 7
  %v7500 = vsub.s32 %v2257, %v7499
  %v7501 = vrot.slane %v7421, %v7500
  %v7502 = vlaneseq
  %v7503 = vshrl.u32 %v7502, 7
  %v7504 = vsub.s32 %v2257, %v7503
  %v7505 = vrot.slane %v7422, %v7504
  %v7506 = vlaneseq
  %v7507 = vshrl.u32 %v7506, 7
  %v7508 = vsub.s32 %v2257, %v7507
  %v7509 = vrot.slane %v7423, %v7508
  %v7510 = vlaneseq
  %v7511 = vshrl.u32 %v7510, 7
  %v7512 = vsub.s32 %v2257, %v7511
  %v7513 = vrot.slane %v7424, %v7512
  %v7514 = vlaneseq
  %v7515 = vshrl.u32 %v7514, 7
  %v7516 = vsub.s32 %v2257, %v7515
  %v7517 = vrot.slane %v7425, %v7516
  %v7518 = vsel %vm3017, %v7461, %v7457
  %v7519 = vsel %vm3019, %v7465, %v7518
  %v7520 = vsel %vm3021, %v7469, %v7519
  %v7521 = vsel %vm3023, %v7473, %v7520
  %v7522 = vsel %vm3025, %v7477, %v7521
  %v7523 = vsel %vm3027, %v7481, %v7522
  %v7524 = vsel %vm3029, %v7485, %v7523
  %v7525 = vsel %vm3017, %v7493, %v7489
  %v7526 = vsel %vm3019, %v7497, %v7525
  %v7527 = vsel %vm3021, %v7501, %v7526
  %v7528 = vsel %vm3023, %v7505, %v7527
  %v7529 = vsel %vm3025, %v7509, %v7528
  %v7530 = vsel %vm3027, %v7513, %v7529
  %v7531 = vsel %vm3029, %v7517, %v7530
  %v7534 = vsel %vm7436, %v7524, %v6785
  %v7535 = vsel %vm7437, %v7531, %v6786
  %v7536 = vsel %vm2237, %v7534, -inf
  %7537 = vmax.xlane.f32.xlu0 %v7536
  %v7538 = vpop.xlane.xlu0 %7537
  %v7539 = vsel %vm2237, %v7535, -inf
  %7540 = vmax.xlane.f32.xlu0 %v7539
  %v7541 = vpop.xlane.xlu0 %7540
  %v7542 = vsub.f32 %v7534, %v7538
  %v7543 = vsub.f32 %v7535, %v7541
  %v7544 = vmul.f32 %v7542, 1.442695
  %v7545 = vpow.pop %v7544
  %v7546 = vmul.f32 %v7543, 1.442695
  %v7547 = vpow.pop %v7546
  %v7548 = vsel %vm2237, %v7545, 0.0
  %7549 = vadd.xlane.f32.xlu0 %v7548
  %v7550 = vpop.xlane.xlu0 %7549
  %v7551 = vsel %vm2237, %v7547, 0.0
  %7552 = vadd.xlane.f32.xlu0 %v7551
  %v7553 = vpop.xlane.xlu0 %7552
  %v7554 = vlog2.pop %v7550
  %v7555 = vmul.f32 %v7554, 0.6931472
  %v7556 = vlog2.pop %v7553
  %v7557 = vmul.f32 %v7556, 0.6931472
  %v7558 = vadd.f32 %v7538, %v7555
  %v7559 = vadd.f32 %v7541, %v7557
  %v7560 = vsub.f32 %v7558, %v6908
  %v7561 = vsub.f32 %v7559, %v6909
  %vm7562 = vcmask 7168
  %7563 = vst.msk [vmem:[%s10] sm:$0xff] %vm7562, %v7560
  %7564 = vst.msk [vmem:[%s10 + $0x8] sm:$0xff] %vm7562, %v7561
  // Predicated region
  $region42: #{tpu_custom_call.1} parent=0 // pred_check
    _
  $region43: #{tpu_custom_call.1} parent=0 // pred_check_branch
    %7566 = sbr.rel (0) target = $region45
  $region44: #{tpu_custom_call.1} parent=0 // pred_region
    _
  $region45: #{tpu_custom_call.1} parent=0 // pred_fallthru
    _
  // Predicated region
  $region46: #{tpu_custom_call.1} parent=0 // pred_check
    _
  $region47: #{tpu_custom_call.1} parent=0 // pred_check_branch
    %7568 = sbr.rel (0) target = $region49
  $region48: #{tpu_custom_call.1} parent=0 // pred_region
    _
  $region49: #{tpu_custom_call.1} parent=0 // pred_fallthru
    _

</llo_original>
